<compile_context>
chip_gen: v5e
topology: v5e:2x2
jax: 0.10.0
libtpu: 0.0.40
codegen_flags: <defaults>
</compile_context>

<pallas_src>
from functools import partial

import jax
import jax.numpy as jnp
from jax.experimental import pallas as pl
from jax.experimental.pallas import tpu as pltpu


# ----------------------------------------------------------------------------
# Fused Pallas kernel
# ----------------------------------------------------------------------------
def _fused_core_kernel(x_p_ref, u_p_ref, aux_ref, w_dx_ref, w_du_ref,
                       w_core_ref, b_ref, out_ref, fbuf_ref, *, h_dim, W, pad):
    """One grid step == one image (Mb = H*W rows, channels on lanes)."""
    Mb = aux_ref.shape[0]
    n_aux = aux_ref.shape[1]

    # 1) downsample_x / downsample_u: stride-4 4x4 convs as bf16 MXU matmuls.
    x_d = jnp.dot(x_p_ref[...], w_dx_ref[...], preferred_element_type=jnp.float32)
    u_d = jnp.dot(u_p_ref[...], w_du_ref[...], preferred_element_type=jnp.float32)

    # 2) assemble the ConvLSTM input feature map, channel order
    #    [h_e | x_d | v | r | h_g | u_d]  (aux = [h_e | v | r | h_g | c_e]).
    aux = aux_ref[...]
    h_prev = aux[:, :h_dim]
    mid = aux[:, h_dim:n_aux - h_dim]          # [v, r, h_g]
    c_prev = aux[:, n_aux - h_dim:]            # c_e
    full = jnp.concatenate([h_prev, x_d, mid, u_d], axis=-1)   # (Mb, Cin) f32

    # 3) stage it in a zero-padded VMEM scratch so every 5x5 tap below is a plain
    #    static sublane-offset load (no HBM im2col / 25x traffic blowup).
    fbuf_ref[...] = jnp.zeros_like(fbuf_ref)
    fbuf_ref[pad:pad + Mb, :] = full

    # column-validity masks for horizontal taps (vertical out-of-range rows land
    # in the zeroed scratch padding automatically).
    m_idx = jax.lax.broadcasted_iota(jnp.int32, (Mb, 1), 0)
    x_pos = m_idx % W
    col_ok = {d: jnp.logical_and(x_pos + d >= 0, x_pos + d < W)
              for d in (-2, -1, 1, 2)}

    # 4) 5x5 gate conv as 25 accumulating bf16 tap matmuls (f32 accumulator).
    n_gate = w_core_ref.shape[2]
    acc = jnp.zeros((Mb, n_gate), jnp.float32)
    for t in range(w_core_ref.shape[0]):                 # 25 taps, unrolled
        ddy, ddx = t // 5 - 2, t % 5 - 2
        start = pad + ddy * W + ddx
        tap = fbuf_ref[start:start + Mb, :]
        if ddx != 0:
            tap = jnp.where(col_ok[ddx], tap, 0.0)
        acc = acc + jnp.dot(tap.astype(jnp.bfloat16), w_core_ref[t],
                            preferred_element_type=jnp.float32)

    gates = acc + b_ref[...]                             # (Mb, 4*h_dim) f32

    # 5) LSTM element-wise update in f32; divide goes to the EUP via approx recip.
    def sig(z):
        return pl.reciprocal(1.0 + jnp.exp(-z), approx=True)

    f = sig(gates[:, 0 * h_dim:1 * h_dim])
    i = sig(gates[:, 1 * h_dim:2 * h_dim])
    o = sig(gates[:, 2 * h_dim:3 * h_dim])
    g = jnp.tanh(gates[:, 3 * h_dim:4 * h_dim])
    c_new = f * c_prev + i * g
    h_new = o * jnp.tanh(c_new)

    # single packed store (c|h) instead of two separate sub-128-lane stores.
    out_ref[...] = jnp.concatenate([c_new, h_new], axis=-1)


def _fused_pallas(x_p, u_p, aux, w_dx, w_du, w_core, b, *, B, H, W, h_dim):
    Mb = H * W
    M = B * Mb
    n_aux = aux.shape[1]
    cin = (n_aux - h_dim) + w_dx.shape[1] + w_du.shape[1]
    assert w_core.shape == (25, cin, 4 * h_dim), (w_core.shape, cin, h_dim)
    assert x_p.shape == (M, w_dx.shape[0]) and u_p.shape == (M, w_du.shape[0])

    pad = ((2 * W + 2 + 7) // 8) * 8          # halo rows, sublane-aligned
    row = lambda i: (i, 0)

    return pl.pallas_call(
        partial(_fused_core_kernel, h_dim=h_dim, W=W, pad=pad),
        out_shape=jax.ShapeDtypeStruct((M, 2 * h_dim), jnp.float32),
        grid=(B,),
        in_specs=[
            pl.BlockSpec((Mb, x_p.shape[1]), row),
            pl.BlockSpec((Mb, u_p.shape[1]), row),
            pl.BlockSpec((Mb, n_aux), row),
            pl.BlockSpec(w_dx.shape, lambda i: (0, 0)),
            pl.BlockSpec(w_du.shape, lambda i: (0, 0)),
            pl.BlockSpec(w_core.shape, lambda i: (0, 0, 0)),
            pl.BlockSpec(b.shape, lambda i: (0, 0)),
        ],
        out_specs=pl.BlockSpec((Mb, 2 * h_dim), row),
        scratch_shapes=[pltpu.VMEM((Mb + 2 * pad, cin), jnp.float32)],
        compiler_params=pltpu.CompilerParams(
            dimension_semantics=("parallel",)),
    )(x_p, u_p, aux, w_dx, w_du, w_core, b)


# ----------------------------------------------------------------------------
# Host-side layout plumbing (pure reshapes/transposes, no compute)
# ----------------------------------------------------------------------------
def _nchw_to_flat(t):
    B, C, H, W = t.shape
    return jnp.transpose(t, (0, 2, 3, 1)).reshape(B * H * W, C)


def _patches4(x):
    """Non-overlapping 4x4 patches: (B,C,H,W) -> (B*(H//4)*(W//4), 16*C),
    flatten order (kh, kw, c) to match the packed conv weight."""
    B, C, H, W = x.shape
    Ho, Wo = H // 4, W // 4
    t = x.reshape(B, C, Ho, 4, Wo, 4)
    t = jnp.transpose(t, (0, 2, 4, 3, 5, 1))          # (B, Ho, Wo, 4, 4, C)
    return t.reshape(B * Ho * Wo, 16 * C)


def prepare_params(params):
    """One-time weight packing (outside the jitted step)."""
    def conv_w_to_mat(w):                              # (O, I, kh, kw) -> (kh*kw*I, O)
        o, i, kh, kw = w.shape
        return jnp.transpose(w, (2, 3, 1, 0)).reshape(kh * kw * i, o)

    o, i, kh, kw = params["w_core"].shape
    return {
        "w_dx": conv_w_to_mat(params["w_dx"]).astype(jnp.bfloat16),
        "w_du": conv_w_to_mat(params["w_du"]).astype(jnp.bfloat16),
        "w_core": jnp.transpose(params["w_core"], (2, 3, 1, 0))
                     .reshape(kh * kw, i, o).astype(jnp.bfloat16),
        "b": params["b_core"].reshape(1, -1).astype(jnp.float32),
    }


def inference_core_forward(packed, x, v, r, c_e, h_e, h_g, u):
    B, h_dim, Hh, Wh = c_e.shape
    M = B * Hh * Wh

    x_p = _patches4(x).astype(jnp.bfloat16)            # (M, 16*c_dim)
    u_p = _patches4(u).astype(jnp.bfloat16)            # (M, 16*h_dim)

    if r.shape[2] != Hh:                               # nn.Upsample(size=(16,16)), nearest
        r = jax.image.resize(r, (r.shape[0], r.shape[1], Hh, Wh), method="nearest")

    pieces = [_nchw_to_flat(h_e)]
    if v is not None:                                  # upsample from 1x1 == broadcast
        v_up = jnp.broadcast_to(v.reshape(B, 1, 1, v.shape[1]),
                                (B, Hh, Wh, v.shape[1]))
        pieces.append(v_up.reshape(M, v.shape[1]))
    pieces += [_nchw_to_flat(r), _nchw_to_flat(h_g), _nchw_to_flat(c_e)]
    aux = jnp.concatenate(pieces, axis=-1)             # [h_e | (v) | r | h_g | c_e]

    out = _fused_pallas(x_p, u_p, aux, packed["w_dx"], packed["w_du"],
                        packed["w_core"], packed["b"],
                        B=B, H=Hh, W=Wh, h_dim=h_dim)

    out4 = out.reshape(B, Hh, Wh, 2 * h_dim)
    c_new = jnp.transpose(out4[..., :h_dim], (0, 3, 1, 2))
    h_new = jnp.transpose(out4[..., h_dim:], (0, 3, 1, 2))
    return c_new, h_new


# ----------------------------------------------------------------------------
# Pure-JAX f32 reference (same cell definition) for a correctness check
# ----------------------------------------------------------------------------
def reference_forward(params, x, v, r, c_e, h_e, h_g, u):
    conv = lambda lhs, w, s, p: jax.lax.conv_general_dilated(
        lhs, w, window_strides=(s, s), padding=p,
        dimension_numbers=("NCHW", "OIHW", "NCHW"))
    x_d = conv(x, params["w_dx"], 4, "VALID")
    u_d = conv(u, params["w_du"], 4, "VALID")
    B, h_dim, Hh, Wh = c_e.shape
    if r.shape[2] != Hh:
        r = jax.image.resize(r, (r.shape[0], r.shape[1], Hh, Wh), method="nearest")
    if v is not None:
        v_up = jnp.broadcast_to(v.reshape(B, -1, 1, 1), (B, v.shape[1], Hh, Wh))
        inp = jnp.concatenate((x_d, v_up, r, h_g, u_d), axis=1)
    else:
        inp = jnp.concatenate((x_d, r, h_g, u_d), axis=1)
    full = jnp.concatenate((h_e, inp), axis=1)
    gates = conv(full, params["w_core"], 1, ((2, 2), (2, 2)))
    gates = gates + params["b_core"].reshape(1, -1, 1, 1)
    f, i, o, g = jnp.split(gates, 4, axis=1)
    f, i, o, g = jax.nn.sigmoid(f), jax.nn.sigmoid(i), jax.nn.sigmoid(o), jnp.tanh(g)
    c_new = f * c_e + i * g
    h_new = o * jnp.tanh(c_new)
    return c_new, h_new


# ----------------------------------------------------------------------------
# Deterministic setup + run
# ----------------------------------------------------------------------------
if __name__ == "__main__":
    c_dim, v_dim, r_dim, h_dim = 4, 4, 4, 8
    B = 2

    key = jax.random.PRNGKey(0)
    ks = jax.random.split(key, 12)

    cin_core = h_dim + (c_dim + v_dim + r_dim + 2 * h_dim)     # hidden + cat(x,v,r,h_g,u)
    params = {
        "w_dx": 0.05 * jax.random.normal(ks[0], (c_dim, c_dim, 4, 4), jnp.float32),
        "w_du": 0.05 * jax.random.normal(ks[1], (h_dim, h_dim, 4, 4), jnp.float32),
        "w_core": 0.05 * jax.random.normal(ks[2], (4 * h_dim, cin_core, 5, 5), jnp.float32),
        "b_core": 0.05 * jax.random.normal(ks[3], (4 * h_dim,), jnp.float32),
    }

    x = jax.random.normal(ks[4], (B, c_dim, 64, 64), jnp.float32)
    v = jax.random.normal(ks[5], (B, v_dim), jnp.float32)
    r = jax.random.normal(ks[6], (B, r_dim, 1, 1), jnp.float32)
    c_e = jax.random.normal(ks[7], (B, h_dim, 16, 16), jnp.float32)
    h_e = jax.random.normal(ks[8], (B, h_dim, 16, 16), jnp.float32)
    h_g = jax.random.normal(ks[9], (B, h_dim, 16, 16), jnp.float32)
    u = jax.random.normal(ks[10], (B, h_dim, 64, 64), jnp.float32)

    packed = prepare_params(params)                 # one-time packing, outside jit
    fwd = jax.jit(partial(inference_core_forward, packed))
    c_out, h_out = fwd(x, v, r, c_e, h_e, h_g, u)
    jax.block_until_ready((c_out, h_out))

    assert c_out.shape == (B, h_dim, 16, 16) and h_out.shape == (B, h_dim, 16, 16)
    assert bool(jnp.all(jnp.isfinite(c_out))) and bool(jnp.all(jnp.isfinite(h_out)))

    # correctness vs pure-JAX f32 reference (bf16 MXU + approx recip => loose tol)
    c_ref, h_ref = jax.jit(partial(reference_forward, params))(x, v, r, c_e, h_e, h_g, u)
    err_c = float(jnp.max(jnp.abs(c_out - c_ref)))
    err_h = float(jnp.max(jnp.abs(h_out - h_ref)))
    assert err_c < 1e-1 and err_h < 1e-1, (err_c, err_h)

    print("KERNEL_OK")
</pallas_src>

<mosaic_0001>
module attributes {stable_mosaic.version = 11 : i64} {
  func.func @_fused_core_kernel(%arg0: i32, %arg1: memref<256x64xbf16, #tpu.memory_space<vmem>>, %arg2: memref<256x128xbf16, #tpu.memory_space<vmem>>, %arg3: memref<256x32xf32, #tpu.memory_space<vmem>>, %arg4: memref<64x4xbf16, #tpu.memory_space<vmem>>, %arg5: memref<128x8xbf16, #tpu.memory_space<vmem>>, %arg6: memref<25x36x32xbf16, #tpu.memory_space<vmem>>, %arg7: memref<1x32xf32, #tpu.memory_space<vmem>>, %arg8: memref<256x16xf32, #tpu.memory_space<vmem>>, %arg9: memref<336x36xf32, #tpu.memory_space<vmem>>) attributes {dimension_semantics = [#tpu.dimension_semantics<parallel>], iteration_bounds = array<i64: 2>, scalar_prefetch = 0 : i64, scratch_operands = 1 : i64, tpu.core_type = #tpu.core_type<tc>, window_params = [{transform_indices = @transform_0, window_bounds = array<i64: 256, 64>}, {transform_indices = @transform_1, window_bounds = array<i64: 256, 128>}, {transform_indices = @transform_2, window_bounds = array<i64: 256, 32>}, {pipeline_mode = #tpu.pipeline_mode<synchronous>, transform_indices = @transform_3, window_bounds = array<i64: 64, 4>}, {pipeline_mode = #tpu.pipeline_mode<synchronous>, transform_indices = @transform_4, window_bounds = array<i64: 128, 8>}, {pipeline_mode = #tpu.pipeline_mode<synchronous>, transform_indices = @transform_5, window_bounds = array<i64: 25, 36, 32>}, {pipeline_mode = #tpu.pipeline_mode<synchronous>, transform_indices = @transform_6, window_bounds = array<i64: 1, 32>}, {transform_indices = @transform_7, window_bounds = array<i64: 256, 16>}]} {
    %c0 = arith.constant 0 : index
    %c0_0 = arith.constant 0 : index
    %0 = vector.load %arg1[%c0, %c0_0] : memref<256x64xbf16, #tpu.memory_space<vmem>>, vector<256x64xbf16>
    %c0_1 = arith.constant 0 : index
    %c0_2 = arith.constant 0 : index
    %1 = vector.load %arg4[%c0_1, %c0_2] : memref<64x4xbf16, #tpu.memory_space<vmem>>, vector<64x4xbf16>
    %cst = arith.constant dense<0.000000e+00> : vector<256x4xf32>
    %2 = tpu.matmul %0, %1, %cst {dimension_numbers = #tpu.dot_dimension_numbers<[1], [0], [0], [1], [0, 0, 1, 1], [], []>} : vector<256x64xbf16>, vector<64x4xbf16>, vector<256x4xf32> -> vector<256x4xf32>
    %c0_3 = arith.constant 0 : index
    %c0_4 = arith.constant 0 : index
    %3 = vector.load %arg2[%c0_3, %c0_4] : memref<256x128xbf16, #tpu.memory_space<vmem>>, vector<256x128xbf16>
    %c0_5 = arith.constant 0 : index
    %c0_6 = arith.constant 0 : index
    %4 = vector.load %arg5[%c0_5, %c0_6] : memref<128x8xbf16, #tpu.memory_space<vmem>>, vector<128x8xbf16>
    %cst_7 = arith.constant dense<0.000000e+00> : vector<256x8xf32>
    %5 = tpu.matmul %3, %4, %cst_7 {dimension_numbers = #tpu.dot_dimension_numbers<[1], [0], [0], [1], [0, 0, 1, 1], [], []>} : vector<256x128xbf16>, vector<128x8xbf16>, vector<256x8xf32> -> vector<256x8xf32>
    %c0_8 = arith.constant 0 : index
    %c0_9 = arith.constant 0 : index
    %6 = vector.load %arg3[%c0_8, %c0_9] : memref<256x32xf32, #tpu.memory_space<vmem>>, vector<256x32xf32>
    %7 = vector.extract_strided_slice %6 {offsets = [0, 0], sizes = [256, 8], strides = [1, 1]} : vector<256x32xf32> to vector<256x8xf32>
    %8 = vector.extract_strided_slice %6 {offsets = [0, 8], sizes = [256, 16], strides = [1, 1]} : vector<256x32xf32> to vector<256x16xf32>
    %9 = vector.extract_strided_slice %6 {offsets = [0, 24], sizes = [256, 8], strides = [1, 1]} : vector<256x32xf32> to vector<256x8xf32>
    %10 = tpu.concatenate %7, %2, %8, %5 in 1 : vector<256x8xf32>, vector<256x4xf32>, vector<256x16xf32>, vector<256x8xf32> -> vector<256x36xf32>
    %cst_10 = arith.constant 0.000000e+00 : f32
    %11 = vector.broadcast %cst_10 : f32 to vector<336x36xf32>
    %c0_11 = arith.constant 0 : index
    %c0_12 = arith.constant 0 : index
    %12 = vector.load %arg9[%c0_11, %c0_12] : memref<336x36xf32, #tpu.memory_space<vmem>>, vector<336x36xf32>
    tpu.vector_store %arg9[%c0_11, %c0_12], %11 {strides = array<i32>} : memref<336x36xf32, #tpu.memory_space<vmem>>, vector<336x36xf32>,
    %c40 = arith.constant 40 : index
    %c0_13 = arith.constant 0 : index
    %13 = vector.load %arg9[%c40, %c0_13] : memref<336x36xf32, #tpu.memory_space<vmem>>, vector<256x36xf32>
    tpu.vector_store %arg9[%c40, %c0_13], %10 {strides = array<i32>} : memref<336x36xf32, #tpu.memory_space<vmem>>, vector<256x36xf32>,
    %14 = tpu.iota {dimensions = array<i32: 0>} : vector<256x1xi32>
    %c16_i32 = arith.constant 16 : i32
    %c0_i32 = arith.constant 0 : i32
    %15 = arith.cmpi eq, %c16_i32, %c0_i32 : i32
    %c1_i32 = arith.constant 1 : i32
    %16 = arith.select %15, %c1_i32, %c16_i32 : i32
    %17 = vector.broadcast %16 : i32 to vector<256x1xi32>
    %18 = arith.remsi %14, %17 : vector<256x1xi32>
    %c0_i32_14 = arith.constant 0 : i32
    %19 = vector.broadcast %c0_i32_14 : i32 to vector<256x1xi32>
    %20 = arith.cmpi ne, %18, %19 : vector<256x1xi32>
    %c0_i32_15 = arith.constant 0 : i32
    %21 = vector.broadcast %c0_i32_15 : i32 to vector<256x1xi32>
    %22 = arith.cmpi slt, %18, %21 : vector<256x1xi32>
    %c0_i32_16 = arith.constant 0 : i32
    %23 = arith.cmpi slt, %16, %c0_i32_16 : i32
    %24 = vector.broadcast %23 : i1 to vector<256x1xi1>
    %25 = vector.broadcast %24 : vector<256x1xi1> to vector<256x1xi1>
    %26 = arith.xori %22, %25 : vector<256x1xi1>
    %27 = arith.andi %26, %20 : vector<256x1xi1>
    %28 = vector.broadcast %16 : i32 to vector<256x1xi32>
    %29 = arith.addi %18, %28 : vector<256x1xi32>
    %30 = arith.select %27, %29, %18 : vector<256x1xi1>, vector<256x1xi32>
    %c-2_i32 = arith.constant -2 : i32
    %31 = vector.broadcast %c-2_i32 : i32 to vector<256x1xi32>
    %32 = arith.addi %30, %31 : vector<256x1xi32>
    %c0_i32_17 = arith.constant 0 : i32
    %33 = vector.broadcast %c0_i32_17 : i32 to vector<256x1xi32>
    %34 = arith.cmpi sge, %32, %33 : vector<256x1xi32>
    %c-2_i32_18 = arith.constant -2 : i32
    %35 = vector.broadcast %c-2_i32_18 : i32 to vector<256x1xi32>
    %36 = arith.addi %30, %35 : vector<256x1xi32>
    %c16_i32_19 = arith.constant 16 : i32
    %37 = vector.broadcast %c16_i32_19 : i32 to vector<256x1xi32>
    %38 = arith.cmpi slt, %36, %37 : vector<256x1xi32>
    %39 = arith.andi %34, %38 : vector<256x1xi1>
    %c-1_i32 = arith.constant -1 : i32
    %40 = vector.broadcast %c-1_i32 : i32 to vector<256x1xi32>
    %41 = arith.addi %30, %40 : vector<256x1xi32>
    %c0_i32_20 = arith.constant 0 : i32
    %42 = vector.broadcast %c0_i32_20 : i32 to vector<256x1xi32>
    %43 = arith.cmpi sge, %41, %42 : vector<256x1xi32>
    %c-1_i32_21 = arith.constant -1 : i32
    %44 = vector.broadcast %c-1_i32_21 : i32 to vector<256x1xi32>
    %45 = arith.addi %30, %44 : vector<256x1xi32>
    %c16_i32_22 = arith.constant 16 : i32
    %46 = vector.broadcast %c16_i32_22 : i32 to vector<256x1xi32>
    %47 = arith.cmpi slt, %45, %46 : vector<256x1xi32>
    %48 = arith.andi %43, %47 : vector<256x1xi1>
    %c1_i32_23 = arith.constant 1 : i32
    %49 = vector.broadcast %c1_i32_23 : i32 to vector<256x1xi32>
    %50 = arith.addi %30, %49 : vector<256x1xi32>
    %c0_i32_24 = arith.constant 0 : i32
    %51 = vector.broadcast %c0_i32_24 : i32 to vector<256x1xi32>
    %52 = arith.cmpi sge, %50, %51 : vector<256x1xi32>
    %c1_i32_25 = arith.constant 1 : i32
    %53 = vector.broadcast %c1_i32_25 : i32 to vector<256x1xi32>
    %54 = arith.addi %30, %53 : vector<256x1xi32>
    %c16_i32_26 = arith.constant 16 : i32
    %55 = vector.broadcast %c16_i32_26 : i32 to vector<256x1xi32>
    %56 = arith.cmpi slt, %54, %55 : vector<256x1xi32>
    %57 = arith.andi %52, %56 : vector<256x1xi1>
    %c2_i32 = arith.constant 2 : i32
    %58 = vector.broadcast %c2_i32 : i32 to vector<256x1xi32>
    %59 = arith.addi %30, %58 : vector<256x1xi32>
    %c0_i32_27 = arith.constant 0 : i32
    %60 = vector.broadcast %c0_i32_27 : i32 to vector<256x1xi32>
    %61 = arith.cmpi sge, %59, %60 : vector<256x1xi32>
    %c2_i32_28 = arith.constant 2 : i32
    %62 = vector.broadcast %c2_i32_28 : i32 to vector<256x1xi32>
    %63 = arith.addi %30, %62 : vector<256x1xi32>
    %c16_i32_29 = arith.constant 16 : i32
    %64 = vector.broadcast %c16_i32_29 : i32 to vector<256x1xi32>
    %65 = arith.cmpi slt, %63, %64 : vector<256x1xi32>
    %66 = arith.andi %61, %65 : vector<256x1xi1>
    %cst_30 = arith.constant 0.000000e+00 : f32
    %67 = vector.broadcast %cst_30 : f32 to vector<256x32xf32>
    %c6 = arith.constant 6 : index
    %c0_31 = arith.constant 0 : index
    %68 = vector.load %arg9[%c6, %c0_31] : memref<336x36xf32, #tpu.memory_space<vmem>>, vector<256x36xf32>
    %cst_32 = arith.constant 0.000000e+00 : f32
    %69 = vector.shape_cast %39 : vector<256x1xi1> to vector<256x1xi1>
    %70 = vector.broadcast %69 : vector<256x1xi1> to vector<256x36xi1>
    %71 = vector.broadcast %cst_32 : f32 to vector<256x36xf32>
    %72 = arith.select %70, %68, %71 : vector<256x36xi1>, vector<256x36xf32>
    %73 = arith.truncf %72 : vector<256x36xf32> to vector<256x36xbf16>
    %c0_33 = arith.constant 0 : index
    %c0_34 = arith.constant 0 : index
    %c0_35 = arith.constant 0 : index
    %74 = vector.load %arg6[%c0_33, %c0_34, %c0_35] : memref<25x36x32xbf16, #tpu.memory_space<vmem>>, vector<1x36x32xbf16>
    %75 = vector.shape_cast %74 : vector<1x36x32xbf16> to vector<36x32xbf16>
    %cst_36 = arith.constant dense<0.000000e+00> : vector<256x32xf32>
    %76 = tpu.matmul %73, %75, %cst_36 {dimension_numbers = #tpu.dot_dimension_numbers<[1], [0], [0], [1], [0, 0, 1, 1], [], []>} : vector<256x36xbf16>, vector<36x32xbf16>, vector<256x32xf32> -> vector<256x32xf32>
    %77 = arith.addf %67, %76 : vector<256x32xf32>
    %c7 = arith.constant 7 : index
    %c0_37 = arith.constant 0 : index
    %78 = vector.load %arg9[%c7, %c0_37] : memref<336x36xf32, #tpu.memory_space<vmem>>, vector<256x36xf32>
    %cst_38 = arith.constant 0.000000e+00 : f32
    %79 = vector.shape_cast %48 : vector<256x1xi1> to vector<256x1xi1>
    %80 = vector.broadcast %79 : vector<256x1xi1> to vector<256x36xi1>
    %81 = vector.broadcast %cst_38 : f32 to vector<256x36xf32>
    %82 = arith.select %80, %78, %81 : vector<256x36xi1>, vector<256x36xf32>
    %83 = arith.truncf %82 : vector<256x36xf32> to vector<256x36xbf16>
    %c1 = arith.constant 1 : index
    %c0_39 = arith.constant 0 : index
    %c0_40 = arith.constant 0 : index
    %84 = vector.load %arg6[%c1, %c0_39, %c0_40] : memref<25x36x32xbf16, #tpu.memory_space<vmem>>, vector<1x36x32xbf16>
    %85 = vector.shape_cast %84 : vector<1x36x32xbf16> to vector<36x32xbf16>
    %cst_41 = arith.constant dense<0.000000e+00> : vector<256x32xf32>
    %86 = tpu.matmul %83, %85, %cst_41 {dimension_numbers = #tpu.dot_dimension_numbers<[1], [0], [0], [1], [0, 0, 1, 1], [], []>} : vector<256x36xbf16>, vector<36x32xbf16>, vector<256x32xf32> -> vector<256x32xf32>
    %87 = arith.addf %77, %86 : vector<256x32xf32>
    %c8 = arith.constant 8 : index
    %c0_42 = arith.constant 0 : index
    %88 = vector.load %arg9[%c8, %c0_42] : memref<336x36xf32, #tpu.memory_space<vmem>>, vector<256x36xf32>
    %89 = arith.truncf %88 : vector<256x36xf32> to vector<256x36xbf16>
    %c2 = arith.constant 2 : index
    %c0_43 = arith.constant 0 : index
    %c0_44 = arith.constant 0 : index
    %90 = vector.load %arg6[%c2, %c0_43, %c0_44] : memref<25x36x32xbf16, #tpu.memory_space<vmem>>, vector<1x36x32xbf16>
    %91 = vector.shape_cast %90 : vector<1x36x32xbf16> to vector<36x32xbf16>
    %cst_45 = arith.constant dense<0.000000e+00> : vector<256x32xf32>
    %92 = tpu.matmul %89, %91, %cst_45 {dimension_numbers = #tpu.dot_dimension_numbers<[1], [0], [0], [1], [0, 0, 1, 1], [], []>} : vector<256x36xbf16>, vector<36x32xbf16>, vector<256x32xf32> -> vector<256x32xf32>
    %93 = arith.addf %87, %92 : vector<256x32xf32>
    %c9 = arith.constant 9 : index
    %c0_46 = arith.constant 0 : index
    %94 = vector.load %arg9[%c9, %c0_46] : memref<336x36xf32, #tpu.memory_space<vmem>>, vector<256x36xf32>
    %cst_47 = arith.constant 0.000000e+00 : f32
    %95 = vector.shape_cast %57 : vector<256x1xi1> to vector<256x1xi1>
    %96 = vector.broadcast %95 : vector<256x1xi1> to vector<256x36xi1>
    %97 = vector.broadcast %cst_47 : f32 to vector<256x36xf32>
    %98 = arith.select %96, %94, %97 : vector<256x36xi1>, vector<256x36xf32>
    %99 = arith.truncf %98 : vector<256x36xf32> to vector<256x36xbf16>
    %c3 = arith.constant 3 : index
    %c0_48 = arith.constant 0 : index
    %c0_49 = arith.constant 0 : index
    %100 = vector.load %arg6[%c3, %c0_48, %c0_49] : memref<25x36x32xbf16, #tpu.memory_space<vmem>>, vector<1x36x32xbf16>
    %101 = vector.shape_cast %100 : vector<1x36x32xbf16> to vector<36x32xbf16>
    %cst_50 = arith.constant dense<0.000000e+00> : vector<256x32xf32>
    %102 = tpu.matmul %99, %101, %cst_50 {dimension_numbers = #tpu.dot_dimension_numbers<[1], [0], [0], [1], [0, 0, 1, 1], [], []>} : vector<256x36xbf16>, vector<36x32xbf16>, vector<256x32xf32> -> vector<256x32xf32>
    %103 = arith.addf %93, %102 : vector<256x32xf32>
    %c10 = arith.constant 10 : index
    %c0_51 = arith.constant 0 : index
    %104 = vector.load %arg9[%c10, %c0_51] : memref<336x36xf32, #tpu.memory_space<vmem>>, vector<256x36xf32>
    %cst_52 = arith.constant 0.000000e+00 : f32
    %105 = vector.shape_cast %66 : vector<256x1xi1> to vector<256x1xi1>
    %106 = vector.broadcast %105 : vector<256x1xi1> to vector<256x36xi1>
    %107 = vector.broadcast %cst_52 : f32 to vector<256x36xf32>
    %108 = arith.select %106, %104, %107 : vector<256x36xi1>, vector<256x36xf32>
    %109 = arith.truncf %108 : vector<256x36xf32> to vector<256x36xbf16>
    %c4 = arith.constant 4 : index
    %c0_53 = arith.constant 0 : index
    %c0_54 = arith.constant 0 : index
    %110 = vector.load %arg6[%c4, %c0_53, %c0_54] : memref<25x36x32xbf16, #tpu.memory_space<vmem>>, vector<1x36x32xbf16>
    %111 = vector.shape_cast %110 : vector<1x36x32xbf16> to vector<36x32xbf16>
    %cst_55 = arith.constant dense<0.000000e+00> : vector<256x32xf32>
    %112 = tpu.matmul %109, %111, %cst_55 {dimension_numbers = #tpu.dot_dimension_numbers<[1], [0], [0], [1], [0, 0, 1, 1], [], []>} : vector<256x36xbf16>, vector<36x32xbf16>, vector<256x32xf32> -> vector<256x32xf32>
    %113 = arith.addf %103, %112 : vector<256x32xf32>
    %c22 = arith.constant 22 : index
    %c0_56 = arith.constant 0 : index
    %114 = vector.load %arg9[%c22, %c0_56] : memref<336x36xf32, #tpu.memory_space<vmem>>, vector<256x36xf32>
    %cst_57 = arith.constant 0.000000e+00 : f32
    %115 = vector.shape_cast %39 : vector<256x1xi1> to vector<256x1xi1>
    %116 = vector.broadcast %115 : vector<256x1xi1> to vector<256x36xi1>
    %117 = vector.broadcast %cst_57 : f32 to vector<256x36xf32>
    %118 = arith.select %116, %114, %117 : vector<256x36xi1>, vector<256x36xf32>
    %119 = arith.truncf %118 : vector<256x36xf32> to vector<256x36xbf16>
    %c5 = arith.constant 5 : index
    %c0_58 = arith.constant 0 : index
    %c0_59 = arith.constant 0 : index
    %120 = vector.load %arg6[%c5, %c0_58, %c0_59] : memref<25x36x32xbf16, #tpu.memory_space<vmem>>, vector<1x36x32xbf16>
    %121 = vector.shape_cast %120 : vector<1x36x32xbf16> to vector<36x32xbf16>
    %cst_60 = arith.constant dense<0.000000e+00> : vector<256x32xf32>
    %122 = tpu.matmul %119, %121, %cst_60 {dimension_numbers = #tpu.dot_dimension_numbers<[1], [0], [0], [1], [0, 0, 1, 1], [], []>} : vector<256x36xbf16>, vector<36x32xbf16>, vector<256x32xf32> -> vector<256x32xf32>
    %123 = arith.addf %113, %122 : vector<256x32xf32>
    %c23 = arith.constant 23 : index
    %c0_61 = arith.constant 0 : index
    %124 = vector.load %arg9[%c23, %c0_61] : memref<336x36xf32, #tpu.memory_space<vmem>>, vector<256x36xf32>
    %cst_62 = arith.constant 0.000000e+00 : f32
    %125 = vector.shape_cast %48 : vector<256x1xi1> to vector<256x1xi1>
    %126 = vector.broadcast %125 : vector<256x1xi1> to vector<256x36xi1>
    %127 = vector.broadcast %cst_62 : f32 to vector<256x36xf32>
    %128 = arith.select %126, %124, %127 : vector<256x36xi1>, vector<256x36xf32>
    %129 = arith.truncf %128 : vector<256x36xf32> to vector<256x36xbf16>
    %c6_63 = arith.constant 6 : index
    %c0_64 = arith.constant 0 : index
    %c0_65 = arith.constant 0 : index
    %130 = vector.load %arg6[%c6_63, %c0_64, %c0_65] : memref<25x36x32xbf16, #tpu.memory_space<vmem>>, vector<1x36x32xbf16>
    %131 = vector.shape_cast %130 : vector<1x36x32xbf16> to vector<36x32xbf16>
    %cst_66 = arith.constant dense<0.000000e+00> : vector<256x32xf32>
    %132 = tpu.matmul %129, %131, %cst_66 {dimension_numbers = #tpu.dot_dimension_numbers<[1], [0], [0], [1], [0, 0, 1, 1], [], []>} : vector<256x36xbf16>, vector<36x32xbf16>, vector<256x32xf32> -> vector<256x32xf32>
    %133 = arith.addf %123, %132 : vector<256x32xf32>
    %c24 = arith.constant 24 : index
    %c0_67 = arith.constant 0 : index
    %134 = vector.load %arg9[%c24, %c0_67] : memref<336x36xf32, #tpu.memory_space<vmem>>, vector<256x36xf32>
    %135 = arith.truncf %134 : vector<256x36xf32> to vector<256x36xbf16>
    %c7_68 = arith.constant 7 : index
    %c0_69 = arith.constant 0 : index
    %c0_70 = arith.constant 0 : index
    %136 = vector.load %arg6[%c7_68, %c0_69, %c0_70] : memref<25x36x32xbf16, #tpu.memory_space<vmem>>, vector<1x36x32xbf16>
    %137 = vector.shape_cast %136 : vector<1x36x32xbf16> to vector<36x32xbf16>
    %cst_71 = arith.constant dense<0.000000e+00> : vector<256x32xf32>
    %138 = tpu.matmul %135, %137, %cst_71 {dimension_numbers = #tpu.dot_dimension_numbers<[1], [0], [0], [1], [0, 0, 1, 1], [], []>} : vector<256x36xbf16>, vector<36x32xbf16>, vector<256x32xf32> -> vector<256x32xf32>
    %139 = arith.addf %133, %138 : vector<256x32xf32>
    %c25 = arith.constant 25 : index
    %c0_72 = arith.constant 0 : index
    %140 = vector.load %arg9[%c25, %c0_72] : memref<336x36xf32, #tpu.memory_space<vmem>>, vector<256x36xf32>
    %cst_73 = arith.constant 0.000000e+00 : f32
    %141 = vector.shape_cast %57 : vector<256x1xi1> to vector<256x1xi1>
    %142 = vector.broadcast %141 : vector<256x1xi1> to vector<256x36xi1>
    %143 = vector.broadcast %cst_73 : f32 to vector<256x36xf32>
    %144 = arith.select %142, %140, %143 : vector<256x36xi1>, vector<256x36xf32>
    %145 = arith.truncf %144 : vector<256x36xf32> to vector<256x36xbf16>
    %c8_74 = arith.constant 8 : index
    %c0_75 = arith.constant 0 : index
    %c0_76 = arith.constant 0 : index
    %146 = vector.load %arg6[%c8_74, %c0_75, %c0_76] : memref<25x36x32xbf16, #tpu.memory_space<vmem>>, vector<1x36x32xbf16>
    %147 = vector.shape_cast %146 : vector<1x36x32xbf16> to vector<36x32xbf16>
    %cst_77 = arith.constant dense<0.000000e+00> : vector<256x32xf32>
    %148 = tpu.matmul %145, %147, %cst_77 {dimension_numbers = #tpu.dot_dimension_numbers<[1], [0], [0], [1], [0, 0, 1, 1], [], []>} : vector<256x36xbf16>, vector<36x32xbf16>, vector<256x32xf32> -> vector<256x32xf32>
    %149 = arith.addf %139, %148 : vector<256x32xf32>
    %c26 = arith.constant 26 : index
    %c0_78 = arith.constant 0 : index
    %150 = vector.load %arg9[%c26, %c0_78] : memref<336x36xf32, #tpu.memory_space<vmem>>, vector<256x36xf32>
    %cst_79 = arith.constant 0.000000e+00 : f32
    %151 = vector.shape_cast %66 : vector<256x1xi1> to vector<256x1xi1>
    %152 = vector.broadcast %151 : vector<256x1xi1> to vector<256x36xi1>
    %153 = vector.broadcast %cst_79 : f32 to vector<256x36xf32>
    %154 = arith.select %152, %150, %153 : vector<256x36xi1>, vector<256x36xf32>
    %155 = arith.truncf %154 : vector<256x36xf32> to vector<256x36xbf16>
    %c9_80 = arith.constant 9 : index
    %c0_81 = arith.constant 0 : index
    %c0_82 = arith.constant 0 : index
    %156 = vector.load %arg6[%c9_80, %c0_81, %c0_82] : memref<25x36x32xbf16, #tpu.memory_space<vmem>>, vector<1x36x32xbf16>
    %157 = vector.shape_cast %156 : vector<1x36x32xbf16> to vector<36x32xbf16>
    %cst_83 = arith.constant dense<0.000000e+00> : vector<256x32xf32>
    %158 = tpu.matmul %155, %157, %cst_83 {dimension_numbers = #tpu.dot_dimension_numbers<[1], [0], [0], [1], [0, 0, 1, 1], [], []>} : vector<256x36xbf16>, vector<36x32xbf16>, vector<256x32xf32> -> vector<256x32xf32>
    %159 = arith.addf %149, %158 : vector<256x32xf32>
    %c38 = arith.constant 38 : index
    %c0_84 = arith.constant 0 : index
    %160 = vector.load %arg9[%c38, %c0_84] : memref<336x36xf32, #tpu.memory_space<vmem>>, vector<256x36xf32>
    %cst_85 = arith.constant 0.000000e+00 : f32
    %161 = vector.shape_cast %39 : vector<256x1xi1> to vector<256x1xi1>
    %162 = vector.broadcast %161 : vector<256x1xi1> to vector<256x36xi1>
    %163 = vector.broadcast %cst_85 : f32 to vector<256x36xf32>
    %164 = arith.select %162, %160, %163 : vector<256x36xi1>, vector<256x36xf32>
    %165 = arith.truncf %164 : vector<256x36xf32> to vector<256x36xbf16>
    %c10_86 = arith.constant 10 : index
    %c0_87 = arith.constant 0 : index
    %c0_88 = arith.constant 0 : index
    %166 = vector.load %arg6[%c10_86, %c0_87, %c0_88] : memref<25x36x32xbf16, #tpu.memory_space<vmem>>, vector<1x36x32xbf16>
    %167 = vector.shape_cast %166 : vector<1x36x32xbf16> to vector<36x32xbf16>
    %cst_89 = arith.constant dense<0.000000e+00> : vector<256x32xf32>
    %168 = tpu.matmul %165, %167, %cst_89 {dimension_numbers = #tpu.dot_dimension_numbers<[1], [0], [0], [1], [0, 0, 1, 1], [], []>} : vector<256x36xbf16>, vector<36x32xbf16>, vector<256x32xf32> -> vector<256x32xf32>
    %169 = arith.addf %159, %168 : vector<256x32xf32>
    %c39 = arith.constant 39 : index
    %c0_90 = arith.constant 0 : index
    %170 = vector.load %arg9[%c39, %c0_90] : memref<336x36xf32, #tpu.memory_space<vmem>>, vector<256x36xf32>
    %cst_91 = arith.constant 0.000000e+00 : f32
    %171 = vector.shape_cast %48 : vector<256x1xi1> to vector<256x1xi1>
    %172 = vector.broadcast %171 : vector<256x1xi1> to vector<256x36xi1>
    %173 = vector.broadcast %cst_91 : f32 to vector<256x36xf32>
    %174 = arith.select %172, %170, %173 : vector<256x36xi1>, vector<256x36xf32>
    %175 = arith.truncf %174 : vector<256x36xf32> to vector<256x36xbf16>
    %c11 = arith.constant 11 : index
    %c0_92 = arith.constant 0 : index
    %c0_93 = arith.constant 0 : index
    %176 = vector.load %arg6[%c11, %c0_92, %c0_93] : memref<25x36x32xbf16, #tpu.memory_space<vmem>>, vector<1x36x32xbf16>
    %177 = vector.shape_cast %176 : vector<1x36x32xbf16> to vector<36x32xbf16>
    %cst_94 = arith.constant dense<0.000000e+00> : vector<256x32xf32>
    %178 = tpu.matmul %175, %177, %cst_94 {dimension_numbers = #tpu.dot_dimension_numbers<[1], [0], [0], [1], [0, 0, 1, 1], [], []>} : vector<256x36xbf16>, vector<36x32xbf16>, vector<256x32xf32> -> vector<256x32xf32>
    %179 = arith.addf %169, %178 : vector<256x32xf32>
    %c40_95 = arith.constant 40 : index
    %c0_96 = arith.constant 0 : index
    %180 = vector.load %arg9[%c40_95, %c0_96] : memref<336x36xf32, #tpu.memory_space<vmem>>, vector<256x36xf32>
    %181 = arith.truncf %180 : vector<256x36xf32> to vector<256x36xbf16>
    %c12 = arith.constant 12 : index
    %c0_97 = arith.constant 0 : index
    %c0_98 = arith.constant 0 : index
    %182 = vector.load %arg6[%c12, %c0_97, %c0_98] : memref<25x36x32xbf16, #tpu.memory_space<vmem>>, vector<1x36x32xbf16>
    %183 = vector.shape_cast %182 : vector<1x36x32xbf16> to vector<36x32xbf16>
    %cst_99 = arith.constant dense<0.000000e+00> : vector<256x32xf32>
    %184 = tpu.matmul %181, %183, %cst_99 {dimension_numbers = #tpu.dot_dimension_numbers<[1], [0], [0], [1], [0, 0, 1, 1], [], []>} : vector<256x36xbf16>, vector<36x32xbf16>, vector<256x32xf32> -> vector<256x32xf32>
    %185 = arith.addf %179, %184 : vector<256x32xf32>
    %c41 = arith.constant 41 : index
    %c0_100 = arith.constant 0 : index
    %186 = vector.load %arg9[%c41, %c0_100] : memref<336x36xf32, #tpu.memory_space<vmem>>, vector<256x36xf32>
    %cst_101 = arith.constant 0.000000e+00 : f32
    %187 = vector.shape_cast %57 : vector<256x1xi1> to vector<256x1xi1>
    %188 = vector.broadcast %187 : vector<256x1xi1> to vector<256x36xi1>
    %189 = vector.broadcast %cst_101 : f32 to vector<256x36xf32>
    %190 = arith.select %188, %186, %189 : vector<256x36xi1>, vector<256x36xf32>
    %191 = arith.truncf %190 : vector<256x36xf32> to vector<256x36xbf16>
    %c13 = arith.constant 13 : index
    %c0_102 = arith.constant 0 : index
    %c0_103 = arith.constant 0 : index
    %192 = vector.load %arg6[%c13, %c0_102, %c0_103] : memref<25x36x32xbf16, #tpu.memory_space<vmem>>, vector<1x36x32xbf16>
    %193 = vector.shape_cast %192 : vector<1x36x32xbf16> to vector<36x32xbf16>
    %cst_104 = arith.constant dense<0.000000e+00> : vector<256x32xf32>
    %194 = tpu.matmul %191, %193, %cst_104 {dimension_numbers = #tpu.dot_dimension_numbers<[1], [0], [0], [1], [0, 0, 1, 1], [], []>} : vector<256x36xbf16>, vector<36x32xbf16>, vector<256x32xf32> -> vector<256x32xf32>
    %195 = arith.addf %185, %194 : vector<256x32xf32>
    %c42 = arith.constant 42 : index
    %c0_105 = arith.constant 0 : index
    %196 = vector.load %arg9[%c42, %c0_105] : memref<336x36xf32, #tpu.memory_space<vmem>>, vector<256x36xf32>
    %cst_106 = arith.constant 0.000000e+00 : f32
    %197 = vector.shape_cast %66 : vector<256x1xi1> to vector<256x1xi1>
    %198 = vector.broadcast %197 : vector<256x1xi1> to vector<256x36xi1>
    %199 = vector.broadcast %cst_106 : f32 to vector<256x36xf32>
    %200 = arith.select %198, %196, %199 : vector<256x36xi1>, vector<256x36xf32>
    %201 = arith.truncf %200 : vector<256x36xf32> to vector<256x36xbf16>
    %c14 = arith.constant 14 : index
    %c0_107 = arith.constant 0 : index
    %c0_108 = arith.constant 0 : index
    %202 = vector.load %arg6[%c14, %c0_107, %c0_108] : memref<25x36x32xbf16, #tpu.memory_space<vmem>>, vector<1x36x32xbf16>
    %203 = vector.shape_cast %202 : vector<1x36x32xbf16> to vector<36x32xbf16>
    %cst_109 = arith.constant dense<0.000000e+00> : vector<256x32xf32>
    %204 = tpu.matmul %201, %203, %cst_109 {dimension_numbers = #tpu.dot_dimension_numbers<[1], [0], [0], [1], [0, 0, 1, 1], [], []>} : vector<256x36xbf16>, vector<36x32xbf16>, vector<256x32xf32> -> vector<256x32xf32>
    %205 = arith.addf %195, %204 : vector<256x32xf32>
    %c54 = arith.constant 54 : index
    %c0_110 = arith.constant 0 : index
    %206 = vector.load %arg9[%c54, %c0_110] : memref<336x36xf32, #tpu.memory_space<vmem>>, vector<256x36xf32>
    %cst_111 = arith.constant 0.000000e+00 : f32
    %207 = vector.shape_cast %39 : vector<256x1xi1> to vector<256x1xi1>
    %208 = vector.broadcast %207 : vector<256x1xi1> to vector<256x36xi1>
    %209 = vector.broadcast %cst_111 : f32 to vector<256x36xf32>
    %210 = arith.select %208, %206, %209 : vector<256x36xi1>, vector<256x36xf32>
    %211 = arith.truncf %210 : vector<256x36xf32> to vector<256x36xbf16>
    %c15 = arith.constant 15 : index
    %c0_112 = arith.constant 0 : index
    %c0_113 = arith.constant 0 : index
    %212 = vector.load %arg6[%c15, %c0_112, %c0_113] : memref<25x36x32xbf16, #tpu.memory_space<vmem>>, vector<1x36x32xbf16>
    %213 = vector.shape_cast %212 : vector<1x36x32xbf16> to vector<36x32xbf16>
    %cst_114 = arith.constant dense<0.000000e+00> : vector<256x32xf32>
    %214 = tpu.matmul %211, %213, %cst_114 {dimension_numbers = #tpu.dot_dimension_numbers<[1], [0], [0], [1], [0, 0, 1, 1], [], []>} : vector<256x36xbf16>, vector<36x32xbf16>, vector<256x32xf32> -> vector<256x32xf32>
    %215 = arith.addf %205, %214 : vector<256x32xf32>
    %c55 = arith.constant 55 : index
    %c0_115 = arith.constant 0 : index
    %216 = vector.load %arg9[%c55, %c0_115] : memref<336x36xf32, #tpu.memory_space<vmem>>, vector<256x36xf32>
    %cst_116 = arith.constant 0.000000e+00 : f32
    %217 = vector.shape_cast %48 : vector<256x1xi1> to vector<256x1xi1>
    %218 = vector.broadcast %217 : vector<256x1xi1> to vector<256x36xi1>
    %219 = vector.broadcast %cst_116 : f32 to vector<256x36xf32>
    %220 = arith.select %218, %216, %219 : vector<256x36xi1>, vector<256x36xf32>
    %221 = arith.truncf %220 : vector<256x36xf32> to vector<256x36xbf16>
    %c16 = arith.constant 16 : index
    %c0_117 = arith.constant 0 : index
    %c0_118 = arith.constant 0 : index
    %222 = vector.load %arg6[%c16, %c0_117, %c0_118] : memref<25x36x32xbf16, #tpu.memory_space<vmem>>, vector<1x36x32xbf16>
    %223 = vector.shape_cast %222 : vector<1x36x32xbf16> to vector<36x32xbf16>
    %cst_119 = arith.constant dense<0.000000e+00> : vector<256x32xf32>
    %224 = tpu.matmul %221, %223, %cst_119 {dimension_numbers = #tpu.dot_dimension_numbers<[1], [0], [0], [1], [0, 0, 1, 1], [], []>} : vector<256x36xbf16>, vector<36x32xbf16>, vector<256x32xf32> -> vector<256x32xf32>
    %225 = arith.addf %215, %224 : vector<256x32xf32>
    %c56 = arith.constant 56 : index
    %c0_120 = arith.constant 0 : index
    %226 = vector.load %arg9[%c56, %c0_120] : memref<336x36xf32, #tpu.memory_space<vmem>>, vector<256x36xf32>
    %227 = arith.truncf %226 : vector<256x36xf32> to vector<256x36xbf16>
    %c17 = arith.constant 17 : index
    %c0_121 = arith.constant 0 : index
    %c0_122 = arith.constant 0 : index
    %228 = vector.load %arg6[%c17, %c0_121, %c0_122] : memref<25x36x32xbf16, #tpu.memory_space<vmem>>, vector<1x36x32xbf16>
    %229 = vector.shape_cast %228 : vector<1x36x32xbf16> to vector<36x32xbf16>
    %cst_123 = arith.constant dense<0.000000e+00> : vector<256x32xf32>
    %230 = tpu.matmul %227, %229, %cst_123 {dimension_numbers = #tpu.dot_dimension_numbers<[1], [0], [0], [1], [0, 0, 1, 1], [], []>} : vector<256x36xbf16>, vector<36x32xbf16>, vector<256x32xf32> -> vector<256x32xf32>
    %231 = arith.addf %225, %230 : vector<256x32xf32>
    %c57 = arith.constant 57 : index
    %c0_124 = arith.constant 0 : index
    %232 = vector.load %arg9[%c57, %c0_124] : memref<336x36xf32, #tpu.memory_space<vmem>>, vector<256x36xf32>
    %cst_125 = arith.constant 0.000000e+00 : f32
    %233 = vector.shape_cast %57 : vector<256x1xi1> to vector<256x1xi1>
    %234 = vector.broadcast %233 : vector<256x1xi1> to vector<256x36xi1>
    %235 = vector.broadcast %cst_125 : f32 to vector<256x36xf32>
    %236 = arith.select %234, %232, %235 : vector<256x36xi1>, vector<256x36xf32>
    %237 = arith.truncf %236 : vector<256x36xf32> to vector<256x36xbf16>
    %c18 = arith.constant 18 : index
    %c0_126 = arith.constant 0 : index
    %c0_127 = arith.constant 0 : index
    %238 = vector.load %arg6[%c18, %c0_126, %c0_127] : memref<25x36x32xbf16, #tpu.memory_space<vmem>>, vector<1x36x32xbf16>
    %239 = vector.shape_cast %238 : vector<1x36x32xbf16> to vector<36x32xbf16>
    %cst_128 = arith.constant dense<0.000000e+00> : vector<256x32xf32>
    %240 = tpu.matmul %237, %239, %cst_128 {dimension_numbers = #tpu.dot_dimension_numbers<[1], [0], [0], [1], [0, 0, 1, 1], [], []>} : vector<256x36xbf16>, vector<36x32xbf16>, vector<256x32xf32> -> vector<256x32xf32>
    %241 = arith.addf %231, %240 : vector<256x32xf32>
    %c58 = arith.constant 58 : index
    %c0_129 = arith.constant 0 : index
    %242 = vector.load %arg9[%c58, %c0_129] : memref<336x36xf32, #tpu.memory_space<vmem>>, vector<256x36xf32>
    %cst_130 = arith.constant 0.000000e+00 : f32
    %243 = vector.shape_cast %66 : vector<256x1xi1> to vector<256x1xi1>
    %244 = vector.broadcast %243 : vector<256x1xi1> to vector<256x36xi1>
    %245 = vector.broadcast %cst_130 : f32 to vector<256x36xf32>
    %246 = arith.select %244, %242, %245 : vector<256x36xi1>, vector<256x36xf32>
    %247 = arith.truncf %246 : vector<256x36xf32> to vector<256x36xbf16>
    %c19 = arith.constant 19 : index
    %c0_131 = arith.constant 0 : index
    %c0_132 = arith.constant 0 : index
    %248 = vector.load %arg6[%c19, %c0_131, %c0_132] : memref<25x36x32xbf16, #tpu.memory_space<vmem>>, vector<1x36x32xbf16>
    %249 = vector.shape_cast %248 : vector<1x36x32xbf16> to vector<36x32xbf16>
    %cst_133 = arith.constant dense<0.000000e+00> : vector<256x32xf32>
    %250 = tpu.matmul %247, %249, %cst_133 {dimension_numbers = #tpu.dot_dimension_numbers<[1], [0], [0], [1], [0, 0, 1, 1], [], []>} : vector<256x36xbf16>, vector<36x32xbf16>, vector<256x32xf32> -> vector<256x32xf32>
    %251 = arith.addf %241, %250 : vector<256x32xf32>
    %c70 = arith.constant 70 : index
    %c0_134 = arith.constant 0 : index
    %252 = vector.load %arg9[%c70, %c0_134] : memref<336x36xf32, #tpu.memory_space<vmem>>, vector<256x36xf32>
    %cst_135 = arith.constant 0.000000e+00 : f32
    %253 = vector.shape_cast %39 : vector<256x1xi1> to vector<256x1xi1>
    %254 = vector.broadcast %253 : vector<256x1xi1> to vector<256x36xi1>
    %255 = vector.broadcast %cst_135 : f32 to vector<256x36xf32>
    %256 = arith.select %254, %252, %255 : vector<256x36xi1>, vector<256x36xf32>
    %257 = arith.truncf %256 : vector<256x36xf32> to vector<256x36xbf16>
    %c20 = arith.constant 20 : index
    %c0_136 = arith.constant 0 : index
    %c0_137 = arith.constant 0 : index
    %258 = vector.load %arg6[%c20, %c0_136, %c0_137] : memref<25x36x32xbf16, #tpu.memory_space<vmem>>, vector<1x36x32xbf16>
    %259 = vector.shape_cast %258 : vector<1x36x32xbf16> to vector<36x32xbf16>
    %cst_138 = arith.constant dense<0.000000e+00> : vector<256x32xf32>
    %260 = tpu.matmul %257, %259, %cst_138 {dimension_numbers = #tpu.dot_dimension_numbers<[1], [0], [0], [1], [0, 0, 1, 1], [], []>} : vector<256x36xbf16>, vector<36x32xbf16>, vector<256x32xf32> -> vector<256x32xf32>
    %261 = arith.addf %251, %260 : vector<256x32xf32>
    %c71 = arith.constant 71 : index
    %c0_139 = arith.constant 0 : index
    %262 = vector.load %arg9[%c71, %c0_139] : memref<336x36xf32, #tpu.memory_space<vmem>>, vector<256x36xf32>
    %cst_140 = arith.constant 0.000000e+00 : f32
    %263 = vector.shape_cast %48 : vector<256x1xi1> to vector<256x1xi1>
    %264 = vector.broadcast %263 : vector<256x1xi1> to vector<256x36xi1>
    %265 = vector.broadcast %cst_140 : f32 to vector<256x36xf32>
    %266 = arith.select %264, %262, %265 : vector<256x36xi1>, vector<256x36xf32>
    %267 = arith.truncf %266 : vector<256x36xf32> to vector<256x36xbf16>
    %c21 = arith.constant 21 : index
    %c0_141 = arith.constant 0 : index
    %c0_142 = arith.constant 0 : index
    %268 = vector.load %arg6[%c21, %c0_141, %c0_142] : memref<25x36x32xbf16, #tpu.memory_space<vmem>>, vector<1x36x32xbf16>
    %269 = vector.shape_cast %268 : vector<1x36x32xbf16> to vector<36x32xbf16>
    %cst_143 = arith.constant dense<0.000000e+00> : vector<256x32xf32>
    %270 = tpu.matmul %267, %269, %cst_143 {dimension_numbers = #tpu.dot_dimension_numbers<[1], [0], [0], [1], [0, 0, 1, 1], [], []>} : vector<256x36xbf16>, vector<36x32xbf16>, vector<256x32xf32> -> vector<256x32xf32>
    %271 = arith.addf %261, %270 : vector<256x32xf32>
    %c72 = arith.constant 72 : index
    %c0_144 = arith.constant 0 : index
    %272 = vector.load %arg9[%c72, %c0_144] : memref<336x36xf32, #tpu.memory_space<vmem>>, vector<256x36xf32>
    %273 = arith.truncf %272 : vector<256x36xf32> to vector<256x36xbf16>
    %c22_145 = arith.constant 22 : index
    %c0_146 = arith.constant 0 : index
    %c0_147 = arith.constant 0 : index
    %274 = vector.load %arg6[%c22_145, %c0_146, %c0_147] : memref<25x36x32xbf16, #tpu.memory_space<vmem>>, vector<1x36x32xbf16>
    %275 = vector.shape_cast %274 : vector<1x36x32xbf16> to vector<36x32xbf16>
    %cst_148 = arith.constant dense<0.000000e+00> : vector<256x32xf32>
    %276 = tpu.matmul %273, %275, %cst_148 {dimension_numbers = #tpu.dot_dimension_numbers<[1], [0], [0], [1], [0, 0, 1, 1], [], []>} : vector<256x36xbf16>, vector<36x32xbf16>, vector<256x32xf32> -> vector<256x32xf32>
    %277 = arith.addf %271, %276 : vector<256x32xf32>
    %c73 = arith.constant 73 : index
    %c0_149 = arith.constant 0 : index
    %278 = vector.load %arg9[%c73, %c0_149] : memref<336x36xf32, #tpu.memory_space<vmem>>, vector<256x36xf32>
    %cst_150 = arith.constant 0.000000e+00 : f32
    %279 = vector.shape_cast %57 : vector<256x1xi1> to vector<256x1xi1>
    %280 = vector.broadcast %279 : vector<256x1xi1> to vector<256x36xi1>
    %281 = vector.broadcast %cst_150 : f32 to vector<256x36xf32>
    %282 = arith.select %280, %278, %281 : vector<256x36xi1>, vector<256x36xf32>
    %283 = arith.truncf %282 : vector<256x36xf32> to vector<256x36xbf16>
    %c23_151 = arith.constant 23 : index
    %c0_152 = arith.constant 0 : index
    %c0_153 = arith.constant 0 : index
    %284 = vector.load %arg6[%c23_151, %c0_152, %c0_153] : memref<25x36x32xbf16, #tpu.memory_space<vmem>>, vector<1x36x32xbf16>
    %285 = vector.shape_cast %284 : vector<1x36x32xbf16> to vector<36x32xbf16>
    %cst_154 = arith.constant dense<0.000000e+00> : vector<256x32xf32>
    %286 = tpu.matmul %283, %285, %cst_154 {dimension_numbers = #tpu.dot_dimension_numbers<[1], [0], [0], [1], [0, 0, 1, 1], [], []>} : vector<256x36xbf16>, vector<36x32xbf16>, vector<256x32xf32> -> vector<256x32xf32>
    %287 = arith.addf %277, %286 : vector<256x32xf32>
    %c74 = arith.constant 74 : index
    %c0_155 = arith.constant 0 : index
    %288 = vector.load %arg9[%c74, %c0_155] : memref<336x36xf32, #tpu.memory_space<vmem>>, vector<256x36xf32>
    %cst_156 = arith.constant 0.000000e+00 : f32
    %289 = vector.shape_cast %66 : vector<256x1xi1> to vector<256x1xi1>
    %290 = vector.broadcast %289 : vector<256x1xi1> to vector<256x36xi1>
    %291 = vector.broadcast %cst_156 : f32 to vector<256x36xf32>
    %292 = arith.select %290, %288, %291 : vector<256x36xi1>, vector<256x36xf32>
    %293 = arith.truncf %292 : vector<256x36xf32> to vector<256x36xbf16>
    %c24_157 = arith.constant 24 : index
    %c0_158 = arith.constant 0 : index
    %c0_159 = arith.constant 0 : index
    %294 = vector.load %arg6[%c24_157, %c0_158, %c0_159] : memref<25x36x32xbf16, #tpu.memory_space<vmem>>, vector<1x36x32xbf16>
    %295 = vector.shape_cast %294 : vector<1x36x32xbf16> to vector<36x32xbf16>
    %cst_160 = arith.constant dense<0.000000e+00> : vector<256x32xf32>
    %296 = tpu.matmul %293, %295, %cst_160 {dimension_numbers = #tpu.dot_dimension_numbers<[1], [0], [0], [1], [0, 0, 1, 1], [], []>} : vector<256x36xbf16>, vector<36x32xbf16>, vector<256x32xf32> -> vector<256x32xf32>
    %297 = arith.addf %287, %296 : vector<256x32xf32>
    %c0_161 = arith.constant 0 : index
    %c0_162 = arith.constant 0 : index
    %298 = vector.load %arg7[%c0_161, %c0_162] : memref<1x32xf32, #tpu.memory_space<vmem>>, vector<1x32xf32>
    %299 = vector.broadcast %298 : vector<1x32xf32> to vector<256x32xf32>
    %300 = arith.addf %297, %299 : vector<256x32xf32>
    %301 = vector.extract_strided_slice %300 {offsets = [0, 0], sizes = [256, 8], strides = [1, 1]} : vector<256x32xf32> to vector<256x8xf32>
    %cst_163 = arith.constant 0.000000e+00 : f32
    %302 = vector.broadcast %cst_163 : f32 to vector<256x8xf32>
    %303 = arith.subf %302, %301 : vector<256x8xf32>
    %304 = math.exp %303 : vector<256x8xf32>
    %cst_164 = arith.constant 1.000000e+00 : f32
    %305 = vector.broadcast %cst_164 : f32 to vector<256x8xf32>
    %306 = arith.addf %305, %304 : vector<256x8xf32>
    %307 = tpu.reciprocal %306 {approx = true} : vector<256x8xf32> -> vector<256x8xf32>
    %308 = vector.extract_strided_slice %300 {offsets = [0, 8], sizes = [256, 8], strides = [1, 1]} : vector<256x32xf32> to vector<256x8xf32>
    %cst_165 = arith.constant 0.000000e+00 : f32
    %309 = vector.broadcast %cst_165 : f32 to vector<256x8xf32>
    %310 = arith.subf %309, %308 : vector<256x8xf32>
    %311 = math.exp %310 : vector<256x8xf32>
    %cst_166 = arith.constant 1.000000e+00 : f32
    %312 = vector.broadcast %cst_166 : f32 to vector<256x8xf32>
    %313 = arith.addf %312, %311 : vector<256x8xf32>
    %314 = tpu.reciprocal %313 {approx = true} : vector<256x8xf32> -> vector<256x8xf32>
    %315 = vector.extract_strided_slice %300 {offsets = [0, 16], sizes = [256, 8], strides = [1, 1]} : vector<256x32xf32> to vector<256x8xf32>
    %cst_167 = arith.constant 0.000000e+00 : f32
    %316 = vector.broadcast %cst_167 : f32 to vector<256x8xf32>
    %317 = arith.subf %316, %315 : vector<256x8xf32>
    %318 = math.exp %317 : vector<256x8xf32>
    %cst_168 = arith.constant 1.000000e+00 : f32
    %319 = vector.broadcast %cst_168 : f32 to vector<256x8xf32>
    %320 = arith.addf %319, %318 : vector<256x8xf32>
    %321 = tpu.reciprocal %320 {approx = true} : vector<256x8xf32> -> vector<256x8xf32>
    %322 = vector.extract_strided_slice %300 {offsets = [0, 24], sizes = [256, 8], strides = [1, 1]} : vector<256x32xf32> to vector<256x8xf32>
    %323 = math.tanh %322 : vector<256x8xf32>
    %324 = arith.mulf %307, %9 : vector<256x8xf32>
    %325 = arith.mulf %314, %323 : vector<256x8xf32>
    %326 = arith.addf %324, %325 : vector<256x8xf32>
    %327 = math.tanh %326 : vector<256x8xf32>
    %328 = arith.mulf %321, %327 : vector<256x8xf32>
    %329 = tpu.concatenate %326, %328 in 1 : vector<256x8xf32>, vector<256x8xf32> -> vector<256x16xf32>
    %c0_169 = arith.constant 0 : index
    %c0_170 = arith.constant 0 : index
    %330 = vector.load %arg8[%c0_169, %c0_170] : memref<256x16xf32, #tpu.memory_space<vmem>>, vector<256x16xf32>
    tpu.vector_store %arg8[%c0_169, %c0_170], %329 {strides = array<i32>} : memref<256x16xf32, #tpu.memory_space<vmem>>, vector<256x16xf32>,
    return
  }
  func.func @transform_0(%arg0: i32) -> (i32, i32) {
    %c0_i32 = arith.constant 0 : i32
    %c0_i32_0 = arith.constant 0 : i32
    return %arg0, %c0_i32 : i32, i32
  }
  func.func @transform_1(%arg0: i32) -> (i32, i32) {
    %c0_i32 = arith.constant 0 : i32
    %c0_i32_0 = arith.constant 0 : i32
    return %arg0, %c0_i32 : i32, i32
  }
  func.func @transform_2(%arg0: i32) -> (i32, i32) {
    %c0_i32 = arith.constant 0 : i32
    %c0_i32_0 = arith.constant 0 : i32
    return %arg0, %c0_i32 : i32, i32
  }
  func.func @transform_3(%arg0: i32) -> (i32, i32) {
    %c0_i32 = arith.constant 0 : i32
    %c0_i32_0 = arith.constant 0 : i32
    %c0_i32_1 = arith.constant 0 : i32
    return %c0_i32, %c0_i32_0 : i32, i32
  }
  func.func @transform_4(%arg0: i32) -> (i32, i32) {
    %c0_i32 = arith.constant 0 : i32
    %c0_i32_0 = arith.constant 0 : i32
    %c0_i32_1 = arith.constant 0 : i32
    return %c0_i32, %c0_i32_0 : i32, i32
  }
  func.func @transform_5(%arg0: i32) -> (i32, i32, i32) {
    %c0_i32 = arith.constant 0 : i32
    %c0_i32_0 = arith.constant 0 : i32
    %c0_i32_1 = arith.constant 0 : i32
    %c0_i32_2 = arith.constant 0 : i32
    return %c0_i32, %c0_i32_0, %c0_i32_1 : i32, i32, i32
  }
  func.func @transform_6(%arg0: i32) -> (i32, i32) {
    %c0_i32 = arith.constant 0 : i32
    %c0_i32_0 = arith.constant 0 : i32
    %c0_i32_1 = arith.constant 0 : i32
    return %c0_i32, %c0_i32_0 : i32, i32
  }
  func.func @transform_7(%arg0: i32) -> (i32, i32) {
    %c0_i32 = arith.constant 0 : i32
    %c0_i32_0 = arith.constant 0 : i32
    return %arg0, %c0_i32 : i32, i32
  }
}

</mosaic_0001>

<llo_original>
// kernel: inference_core_forward.1
$region0: #{inference_core_forward.1}
  #allocation0 [shape = 'u32[]', space=smem, size = 0x4, offset = 0x4, fixed_abs, tag = 'smem constant byte address 0x4 - core index']
  #allocation1 [shape = 'u32[72,128]{1,0:T(1,128)}', space=vmem, size = 0x9000, scoped, tag = 'internal scratch']
  #allocation2 [shape = 'f32[336,36]{1,0:T(8,128)}', space=vmem, size = 0x2a000, scoped, tag = 'scratch operand']
  %s0 = inlined_call_operand.vmem [shape: bf16[512,64], index: 0, kind: input, shape index: {}]
  %s1 = inlined_call_operand.vmem [shape: bf16[512,128], index: 1, kind: input, shape index: {}]
  %s2 = inlined_call_operand.vmem [shape: f32[512,32], index: 2, kind: input, shape index: {}]
  %s3 = inlined_call_operand.vmem [shape: bf16[64,4], index: 3, kind: input, shape index: {}]
  %s4 = inlined_call_operand.vmem [shape: bf16[128,8], index: 4, kind: input, shape index: {}]
  %s5 = inlined_call_operand.vmem [shape: bf16[25,36,32], index: 5, kind: input, shape index: {}]
  %s6 = inlined_call_operand.vmem [shape: f32[1,32], index: 6, kind: input, shape index: {}]
  %s7 = inlined_call_operand.vmem [shape: f32[512,16], index: 7, kind: output, shape index: {}]
  %s8 = sld [smem:[#allocation0]]
  $region61: #{inference_core_forward.1} parent=0
    _
  %s10 = ssub.s32 1, %s8
  %s11 = scalar_select 0, %s10, %s8
  loop: start=0, step=1, limit=4
  $region2: #{inference_core_forward.1} parent=0 // loop_pre_header
    _
  $region3: #{inference_core_forward.1} parent=0 // loop_header
    %s13 = sphi 0, %s17
    %p14 = scmp.ge.s32.totalorder %s13, 4
    %s23 = sphi 0, %s25
    %s26 = sphi 0, %s23
    %s27 = sphi 0, %s26
    %s43 = sphi 0, %s27
    %s49 = sphi 0, %s51
    %s52 = sphi 0, %s49
    %s53 = sphi 0, %s52
    %s69 = sphi 0, %s53
    %s75 = sphi 0, %s77
    %s78 = sphi 0, %s75
    %s79 = sphi 0, %s78
    %s95 = sphi 0, %s79
    %s99 = sphi 0, %s99
    %s101 = sphi 0, %s99
    %s102 = sphi 0, %s101
    %s116 = sphi 0, %s102
    %s120 = sphi 0, %s120
    %s122 = sphi 0, %s120
    %s123 = sphi 0, %s122
    %s137 = sphi 0, %s123
    %s141 = sphi 0, %s141
    %s143 = sphi 0, %s141
    %s144 = sphi 0, %s143
    %s158 = sphi 0, %s144
    %s162 = sphi 0, %s162
    %s164 = sphi 0, %s162
    %s165 = sphi 0, %s164
    %s179 = sphi 0, %s165
    %s185 = sphi 0, %s187
    %s188 = sphi 0, %s185
    %s189 = sphi 0, %s188
    %s205 = sphi 0, %s189
  $region4: #{inference_core_forward.1} parent=0 // loop_header_branch
    %16 = sbr.rel (%p14) target = $region8
  $region5: #{inference_core_forward.1} parent=0 // loop_body
    %s18 = ssub.s32 %s13, 1
    %s19 = ssub.s32 %s13, 2
    %s20 = sadd.s32 %s13, 1
    %s21 = ssub.s32 %s13, %s20
    %p22 = scmp.eq.s32.totalorder %s21, 0
    %s24 = sadd.s32 %s23, 1
    %s25 = scalar_select %p22, %s23, %s24
    %p28 = pneg %p22
    %p29 = scmp.eq.s32.totalorder %s13, 1
    %p30 = por %p28, %p29
    %p31 = scmp.ne.s32.totalorder %s23, %s26
    %p32 = scmp.eq.s32.totalorder %s13, 0
    %p33 = por %p31, %p32
    %p34 = scmp.ne.s32.totalorder %s23, %s26
    %p35 = scmp.eq.s32.totalorder %s18, 1
    %p36 = por %p34, %p35
    %p37 = scmp.ne.s32.totalorder %s26, %s27
    %p38 = scmp.eq.s32.totalorder %s18, 0
    %p39 = por %p37, %p38
    %p40 = scmp.ne.s32.totalorder %s26, %s27
    %p41 = scmp.eq.s32.totalorder %s19, 1
    %p42 = por %p40, %p41
    %p44 = scmp.ne.s32.totalorder %s27, %s43
    %p45 = scmp.eq.s32.totalorder %s19, 0
    %p46 = por %p44, %p45
    %s47 = ssub.s32 %s13, %s20
    %p48 = scmp.eq.s32.totalorder %s47, 0
    %s50 = sadd.s32 %s49, 1
    %s51 = scalar_select %p48, %s49, %s50
    %p54 = pneg %p48
    %p55 = scmp.eq.s32.totalorder %s13, 1
    %p56 = por %p54, %p55
    %p57 = scmp.ne.s32.totalorder %s49, %s52
    %p58 = scmp.eq.s32.totalorder %s13, 0
    %p59 = por %p57, %p58
    %p60 = scmp.ne.s32.totalorder %s49, %s52
    %p61 = scmp.eq.s32.totalorder %s18, 1
    %p62 = por %p60, %p61
    %p63 = scmp.ne.s32.totalorder %s52, %s53
    %p64 = scmp.eq.s32.totalorder %s18, 0
    %p65 = por %p63, %p64
    %p66 = scmp.ne.s32.totalorder %s52, %s53
    %p67 = scmp.eq.s32.totalorder %s19, 1
    %p68 = por %p66, %p67
    %p70 = scmp.ne.s32.totalorder %s53, %s69
    %p71 = scmp.eq.s32.totalorder %s19, 0
    %p72 = por %p70, %p71
    %s73 = ssub.s32 %s13, %s20
    %p74 = scmp.eq.s32.totalorder %s73, 0
    %s76 = sadd.s32 %s75, 1
    %s77 = scalar_select %p74, %s75, %s76
    %p80 = pneg %p74
    %p81 = scmp.eq.s32.totalorder %s13, 1
    %p82 = por %p80, %p81
    %p83 = scmp.ne.s32.totalorder %s75, %s78
    %p84 = scmp.eq.s32.totalorder %s13, 0
    %p85 = por %p83, %p84
    %p86 = scmp.ne.s32.totalorder %s75, %s78
    %p87 = scmp.eq.s32.totalorder %s18, 1
    %p88 = por %p86, %p87
    %p89 = scmp.ne.s32.totalorder %s78, %s79
    %p90 = scmp.eq.s32.totalorder %s18, 0
    %p91 = por %p89, %p90
    %p92 = scmp.ne.s32.totalorder %s78, %s79
    %p93 = scmp.eq.s32.totalorder %s19, 1
    %p94 = por %p92, %p93
    %p96 = scmp.ne.s32.totalorder %s79, %s95
    %p97 = scmp.eq.s32.totalorder %s19, 0
    %p98 = por %p96, %p97
    %s100 = sadd.s32 %s99, 1
    %p103 = scmp.eq.s32.totalorder %s13, 1
    %p104 = scmp.ne.s32.totalorder %s99, %s101
    %p105 = scmp.eq.s32.totalorder %s13, 0
    %p106 = por %p104, %p105
    %p107 = scmp.ne.s32.totalorder %s99, %s101
    %p108 = scmp.eq.s32.totalorder %s18, 1
    %p109 = por %p107, %p108
    %p110 = scmp.ne.s32.totalorder %s101, %s102
    %p111 = scmp.eq.s32.totalorder %s18, 0
    %p112 = por %p110, %p111
    %p113 = scmp.ne.s32.totalorder %s101, %s102
    %p114 = scmp.eq.s32.totalorder %s19, 1
    %p115 = por %p113, %p114
    %p117 = scmp.ne.s32.totalorder %s102, %s116
    %p118 = scmp.eq.s32.totalorder %s19, 0
    %p119 = por %p117, %p118
    %s121 = sadd.s32 %s120, 1
    %p124 = scmp.eq.s32.totalorder %s13, 1
    %p125 = scmp.ne.s32.totalorder %s120, %s122
    %p126 = scmp.eq.s32.totalorder %s13, 0
    %p127 = por %p125, %p126
    %p128 = scmp.ne.s32.totalorder %s120, %s122
    %p129 = scmp.eq.s32.totalorder %s18, 1
    %p130 = por %p128, %p129
    %p131 = scmp.ne.s32.totalorder %s122, %s123
    %p132 = scmp.eq.s32.totalorder %s18, 0
    %p133 = por %p131, %p132
    %p134 = scmp.ne.s32.totalorder %s122, %s123
    %p135 = scmp.eq.s32.totalorder %s19, 1
    %p136 = por %p134, %p135
    %p138 = scmp.ne.s32.totalorder %s123, %s137
    %p139 = scmp.eq.s32.totalorder %s19, 0
    %p140 = por %p138, %p139
    %s142 = sadd.s32 %s141, 1
    %p145 = scmp.eq.s32.totalorder %s13, 1
    %p146 = scmp.ne.s32.totalorder %s141, %s143
    %p147 = scmp.eq.s32.totalorder %s13, 0
    %p148 = por %p146, %p147
    %p149 = scmp.ne.s32.totalorder %s141, %s143
    %p150 = scmp.eq.s32.totalorder %s18, 1
    %p151 = por %p149, %p150
    %p152 = scmp.ne.s32.totalorder %s143, %s144
    %p153 = scmp.eq.s32.totalorder %s18, 0
    %p154 = por %p152, %p153
    %p155 = scmp.ne.s32.totalorder %s143, %s144
    %p156 = scmp.eq.s32.totalorder %s19, 1
    %p157 = por %p155, %p156
    %p159 = scmp.ne.s32.totalorder %s144, %s158
    %p160 = scmp.eq.s32.totalorder %s19, 0
    %p161 = por %p159, %p160
    %s163 = sadd.s32 %s162, 1
    %p166 = scmp.eq.s32.totalorder %s13, 1
    %p167 = scmp.ne.s32.totalorder %s162, %s164
    %p168 = scmp.eq.s32.totalorder %s13, 0
    %p169 = por %p167, %p168
    %p170 = scmp.ne.s32.totalorder %s162, %s164
    %p171 = scmp.eq.s32.totalorder %s18, 1
    %p172 = por %p170, %p171
    %p173 = scmp.ne.s32.totalorder %s164, %s165
    %p174 = scmp.eq.s32.totalorder %s18, 0
    %p175 = por %p173, %p174
    %p176 = scmp.ne.s32.totalorder %s164, %s165
    %p177 = scmp.eq.s32.totalorder %s19, 1
    %p178 = por %p176, %p177
    %p180 = scmp.ne.s32.totalorder %s165, %s179
    %p181 = scmp.eq.s32.totalorder %s19, 0
    %p182 = por %p180, %p181
    %s183 = ssub.s32 %s13, %s20
    %p184 = scmp.eq.s32.totalorder %s183, 0
    %s186 = sadd.s32 %s185, 1
    %s187 = scalar_select %p184, %s185, %s186
    %p190 = pneg %p184
    %p191 = scmp.eq.s32.totalorder %s13, 1
    %p192 = por %p190, %p191
    %p193 = scmp.ne.s32.totalorder %s185, %s188
    %p194 = scmp.eq.s32.totalorder %s13, 0
    %p195 = por %p193, %p194
    %p196 = scmp.ne.s32.totalorder %s185, %s188
    %p197 = scmp.eq.s32.totalorder %s18, 1
    %p198 = por %p196, %p197
    %p199 = scmp.ne.s32.totalorder %s188, %s189
    %p200 = scmp.eq.s32.totalorder %s18, 0
    %p201 = por %p199, %p200
    %p202 = scmp.ne.s32.totalorder %s188, %s189
    %p203 = scmp.eq.s32.totalorder %s19, 1
    %p204 = por %p202, %p203
    %p206 = scmp.ne.s32.totalorder %s189, %s205
    %p207 = scmp.eq.s32.totalorder %s19, 0
    %p208 = por %p206, %p207
    %p209 = scmp.le.s32.totalorder 1, %s13
    %p210 = scmp.lt.s32.totalorder %s13, 3
    %p211 = pnand %p209, %p210
    %p212 = pneg %p211
    // Predicated region
    $region9: #{inference_core_forward.1} parent=5 // pred_check
      _
    $region10: #{inference_core_forward.1} parent=5 // pred_check_branch
      %214 = sbr.rel (%p211) target = $region12
    $region11: #{inference_core_forward.1} parent=5 // pred_region
      %s215 = ssub.s32 %s13, 1
      // Predicated region
      $region13: #{inference_core_forward.1} parent=11 // pred_check
        %p216 = pneg %p112
      $region14: #{inference_core_forward.1} parent=11 // pred_check_branch
        %218 = sbr.rel (%p216) target = $region16
      $region15: #{inference_core_forward.1} parent=11 // pred_region
        _
      $region16: #{inference_core_forward.1} parent=11 // pred_fallthru
        _
      // Predicated region
      $region17: #{inference_core_forward.1} parent=11 // pred_check
        %p219 = pneg %p133
      $region18: #{inference_core_forward.1} parent=11 // pred_check_branch
        %221 = sbr.rel (%p219) target = $region20
      $region19: #{inference_core_forward.1} parent=11 // pred_region
        _
      $region20: #{inference_core_forward.1} parent=11 // pred_fallthru
        _
      // Predicated region
      $region21: #{inference_core_forward.1} parent=11 // pred_check
        %p222 = pneg %p154
      $region22: #{inference_core_forward.1} parent=11 // pred_check_branch
        %224 = sbr.rel (%p222) target = $region24
      $region23: #{inference_core_forward.1} parent=11 // pred_region
        _
      $region24: #{inference_core_forward.1} parent=11 // pred_fallthru
        _
      // Predicated region
      $region25: #{inference_core_forward.1} parent=11 // pred_check
        %p225 = pneg %p175
      $region26: #{inference_core_forward.1} parent=11 // pred_check_branch
        %227 = sbr.rel (%p225) target = $region28
      $region27: #{inference_core_forward.1} parent=11 // pred_region
        _
      $region28: #{inference_core_forward.1} parent=11 // pred_fallthru
        _
    $region12: #{inference_core_forward.1} parent=5 // pred_fallthru
      _
    %p228 = scmp.lt.s32.totalorder %s13, 2
    // Predicated region
    $region29: #{inference_core_forward.1} parent=5 // pred_check
      %p229 = pneg %p228
    $region30: #{inference_core_forward.1} parent=5 // pred_check_branch
      %231 = sbr.rel (%p229) target = $region32
    $region31: #{inference_core_forward.1} parent=5 // pred_region
      // Predicated region
      $region33: #{inference_core_forward.1} parent=31 // pred_check
        %p232 = pneg %p33
      $region34: #{inference_core_forward.1} parent=31 // pred_check_branch
        %234 = sbr.rel (%p232) target = $region36
      $region35: #{inference_core_forward.1} parent=31 // pred_region
        %s235 = smul.u32 32, %s13
        %p236 = scmp.lt.s32.totalorder %s235, 63
        %s237 = scalar_select %p236, %s235, 63
        %s238 = smul.addr %s237, 4
        %s239 = scalar_lea.vmem %s0, %s238
        %s240 = smul.u32 32, %s13
      $region36: #{inference_core_forward.1} parent=31 // pred_fallthru
        _
      // Predicated region
      $region37: #{inference_core_forward.1} parent=31 // pred_check
        %p241 = pneg %p59
      $region38: #{inference_core_forward.1} parent=31 // pred_check_branch
        %243 = sbr.rel (%p241) target = $region40
      $region39: #{inference_core_forward.1} parent=31 // pred_region
        %s244 = smul.u32 32, %s13
        %p245 = scmp.lt.s32.totalorder %s244, 63
        %s246 = scalar_select %p245, %s244, 63
        %s247 = smul.addr %s246, 4
        %s248 = scalar_lea.vmem %s1, %s247
        %s249 = smul.u32 32, %s13
      $region40: #{inference_core_forward.1} parent=31 // pred_fallthru
        _
      // Predicated region
      $region41: #{inference_core_forward.1} parent=31 // pred_check
        %p250 = pneg %p85
      $region42: #{inference_core_forward.1} parent=31 // pred_check_branch
        %252 = sbr.rel (%p250) target = $region44
      $region43: #{inference_core_forward.1} parent=31 // pred_region
        %s253 = smul.u32 32, %s13
        %p254 = scmp.lt.s32.totalorder %s253, 63
        %s255 = scalar_select %p254, %s253, 63
        %s256 = smul.addr %s255, 8
        %s257 = scalar_lea.vmem %s2, %s256
        %s258 = smul.u32 32, %s13
      $region44: #{inference_core_forward.1} parent=31 // pred_fallthru
        _
    $region32: #{inference_core_forward.1} parent=5 // pred_fallthru
      _
    %p259 = scmp.le.s32.totalorder 1, %s13
    %p260 = scmp.lt.s32.totalorder %s13, 3
    %p261 = pnand %p259, %p260
    %p262 = pneg %p261
    // Predicated region
    $region45: #{inference_core_forward.1} parent=5 // pred_check
      _
    $region46: #{inference_core_forward.1} parent=5 // pred_check_branch
      %264 = sbr.rel (%p261) target = $region48
    $region47: #{inference_core_forward.1} parent=5 // pred_region
      %s265 = ssub.s32 %s13, 1
      %s266 = smul.u32 32, %s18
      %p267 = scmp.lt.s32.totalorder %s266, 63
      %s268 = scalar_select %p267, %s266, 63
      %s269 = smul.addr %s268, 4
      %s270 = scalar_lea.vmem %s0, %s269
      %p271 = pneg %p39
      %p272 = pneg %p36
      %s273 = smul.u32 32, %s18
      %p274 = scmp.lt.s32.totalorder %s273, 63
      %s275 = scalar_select %p274, %s273, 63
      %s276 = smul.addr %s275, 4
      %s277 = scalar_lea.vmem %s1, %s276
      %p278 = pneg %p65
      %p279 = pneg %p62
      %s280 = smul.u32 32, %s18
      %p281 = scmp.lt.s32.totalorder %s280, 63
      %s282 = scalar_select %p281, %s280, 63
      %s283 = smul.addr %s282, 8
      %s284 = scalar_lea.vmem %s2, %s283
      %p285 = pneg %p91
      %p286 = pneg %p88
      %p287 = pneg %p112
      %p288 = pneg %p109
      %p289 = pneg %p133
      %p290 = pneg %p130
      %p291 = pneg %p154
      %p292 = pneg %p151
      %p293 = pneg %p175
      %p294 = pneg %p172
      %p295 = pneg %p201
      %p296 = pneg %p198
      %s297 = smul.u32 32, %s18
      %p298 = scmp.lt.s32.totalorder %s297, 63
      %s299 = scalar_select %p298, %s297, 63
      %s300 = smul.addr %s299, 8
      %s301 = scalar_lea.vmem %s7, %s300
      %s302 = smul.u32 32, %s18
      %p303 = scmp.lt.s32.totalorder %s302, 63
      %s304 = scalar_select %p303, %s302, 63
      %s305 = smul.addr %s304, 4
      %s306 = scalar_lea.vmem %s0, %s305
      %s307 = smul.u32 32, %s18
      %s308 = smul.u32 32, %s18
      %p309 = scmp.lt.s32.totalorder %s308, 63
      %s310 = scalar_select %p309, %s308, 63
      %s311 = smul.addr %s310, 4
      %s312 = scalar_lea.vmem %s1, %s311
      %s313 = smul.u32 32, %s18
      %s314 = smul.u32 32, %s18
      %p315 = scmp.lt.s32.totalorder %s314, 63
      %s316 = scalar_select %p315, %s314, 63
      %s317 = smul.addr %s316, 8
      %s318 = scalar_lea.vmem %s2, %s317
      %s319 = smul.u32 32, %s18
      %s320 = smul.u32 32, %s18
      %p321 = scmp.lt.s32.totalorder %s320, 63
      %s322 = scalar_select %p321, %s320, 63
      %s323 = smul.addr %s322, 8
      %s324 = scalar_lea.vmem %s7, %s323
      %s325 = smul.u32 32, %s18
      %v327 = vld [vmem:[%s306] sm:$0xf]
      %v328 = vld [vmem:[%s306 + $0x4] sm:$0xf]
      %v329 = vld [vmem:[%s306 + $0x8] sm:$0xf]
      %v330 = vld [vmem:[%s306 + $0xc] sm:$0xf]
      %v331 = vld [vmem:[%s306 + $0x10] sm:$0xf]
      %v332 = vld [vmem:[%s306 + $0x14] sm:$0xf]
      %v333 = vld [vmem:[%s306 + $0x18] sm:$0xf]
      %v334 = vld [vmem:[%s306 + $0x1c] sm:$0xf]
      %v335 = vld [vmem:[%s306 + $0x20] sm:$0xf]
      %v336 = vld [vmem:[%s306 + $0x24] sm:$0xf]
      %v337 = vld [vmem:[%s306 + $0x28] sm:$0xf]
      %v338 = vld [vmem:[%s306 + $0x2c] sm:$0xf]
      %v339 = vld [vmem:[%s306 + $0x30] sm:$0xf]
      %v340 = vld [vmem:[%s306 + $0x34] sm:$0xf]
      %v341 = vld [vmem:[%s306 + $0x38] sm:$0xf]
      %v342 = vld [vmem:[%s306 + $0x3c] sm:$0xf]
      %v343 = vld [vmem:[%s306 + $0x40] sm:$0xf]
      %v344 = vld [vmem:[%s306 + $0x44] sm:$0xf]
      %v345 = vld [vmem:[%s306 + $0x48] sm:$0xf]
      %v346 = vld [vmem:[%s306 + $0x4c] sm:$0xf]
      %v347 = vld [vmem:[%s306 + $0x50] sm:$0xf]
      %v348 = vld [vmem:[%s306 + $0x54] sm:$0xf]
      %v349 = vld [vmem:[%s306 + $0x58] sm:$0xf]
      %v350 = vld [vmem:[%s306 + $0x5c] sm:$0xf]
      %v351 = vld [vmem:[%s306 + $0x60] sm:$0xf]
      %v352 = vld [vmem:[%s306 + $0x64] sm:$0xf]
      %v353 = vld [vmem:[%s306 + $0x68] sm:$0xf]
      %v354 = vld [vmem:[%s306 + $0x6c] sm:$0xf]
      %v355 = vld [vmem:[%s306 + $0x70] sm:$0xf]
      %v356 = vld [vmem:[%s306 + $0x74] sm:$0xf]
      %v357 = vld [vmem:[%s306 + $0x78] sm:$0xf]
      %v358 = vld [vmem:[%s306 + $0x7c] sm:$0xf]
      %v359 = vld [vmem:[%s3] sm:$0xf]
      %v360 = vld [vmem:[%s3 + $0x4] sm:$0xf]
      %v361 = vld [vmem:[%s3 + $0x8] sm:$0xf]
      %v362 = vld [vmem:[%s3 + $0xc] sm:$0xf]
      %v363 = vld [vmem:[%s3 + $0x10] sm:$0xf]
      %v364 = vld [vmem:[%s3 + $0x14] sm:$0xf]
      %v365 = vld [vmem:[%s3 + $0x18] sm:$0xf]
      %v366 = vld [vmem:[%s3 + $0x1c] sm:$0xf]
      %v399 = vunpack.c.l.b16 %v327
      %v400 = vunpack.c.l.b16 %v328
      %v401 = vunpack.c.l.b16 %v329
      %v402 = vunpack.c.l.b16 %v330
      %v403 = vunpack.c.l.b16 %v331
      %v404 = vunpack.c.l.b16 %v332
      %v405 = vunpack.c.l.b16 %v333
      %v406 = vunpack.c.l.b16 %v334
      %v407 = vunpack.c.l.b16 %v335
      %v408 = vunpack.c.l.b16 %v336
      %v409 = vunpack.c.l.b16 %v337
      %v410 = vunpack.c.l.b16 %v338
      %v411 = vunpack.c.l.b16 %v339
      %v412 = vunpack.c.l.b16 %v340
      %v413 = vunpack.c.l.b16 %v341
      %v414 = vunpack.c.l.b16 %v342
      %v415 = vunpack.c.l.b16 %v343
      %v416 = vunpack.c.l.b16 %v344
      %v417 = vunpack.c.l.b16 %v345
      %v418 = vunpack.c.l.b16 %v346
      %v419 = vunpack.c.l.b16 %v347
      %v420 = vunpack.c.l.b16 %v348
      %v421 = vunpack.c.l.b16 %v349
      %v422 = vunpack.c.l.b16 %v350
      %v423 = vunpack.c.l.b16 %v351
      %v424 = vunpack.c.l.b16 %v352
      %v425 = vunpack.c.l.b16 %v353
      %v426 = vunpack.c.l.b16 %v354
      %v427 = vunpack.c.l.b16 %v355
      %v428 = vunpack.c.l.b16 %v356
      %v429 = vunpack.c.l.b16 %v357
      %v430 = vunpack.c.l.b16 %v358
      %v431 = vpack.c.b16 %v400, %v399
      %v432 = vpack.c.b16 %v402, %v401
      %v433 = vpack.c.b16 %v404, %v403
      %v434 = vpack.c.b16 %v406, %v405
      %v435 = vpack.c.b16 %v408, %v407
      %v436 = vpack.c.b16 %v410, %v409
      %v437 = vpack.c.b16 %v412, %v411
      %v438 = vpack.c.b16 %v414, %v413
      %v439 = vpack.c.b16 %v416, %v415
      %v440 = vpack.c.b16 %v418, %v417
      %v441 = vpack.c.b16 %v420, %v419
      %v442 = vpack.c.b16 %v422, %v421
      %v443 = vpack.c.b16 %v424, %v423
      %v444 = vpack.c.b16 %v426, %v425
      %v445 = vpack.c.b16 %v428, %v427
      %v446 = vpack.c.b16 %v430, %v429
      %v455 = vunpack.c.l.b16 %v359
      %v456 = vunpack.c.l.b16 %v360
      %v457 = vunpack.c.l.b16 %v361
      %v458 = vunpack.c.l.b16 %v362
      %v459 = vunpack.c.l.b16 %v363
      %v460 = vunpack.c.l.b16 %v364
      %v461 = vunpack.c.l.b16 %v365
      %v462 = vunpack.c.l.b16 %v366
      %v463 = vpack.c.b16 %v456, %v455
      %v464 = vpack.c.b16 %v458, %v457
      %v465 = vpack.c.b16 %v460, %v459
      %v466 = vpack.c.b16 %v462, %v461
      %vm471 = vcmask 523264
      %v473 = vsel %vm471, %v431, 0
      %v476 = vsel %vm471, %v432, 0
      %v479 = vsel %vm471, %v433, 0
      %v482 = vsel %vm471, %v434, 0
      %v485 = vsel %vm471, %v435, 0
      %v488 = vsel %vm471, %v436, 0
      %v491 = vsel %vm471, %v437, 0
      %v494 = vsel %vm471, %v438, 0
      %v497 = vsel %vm471, %v439, 0
      %v500 = vsel %vm471, %v440, 0
      %v503 = vsel %vm471, %v441, 0
      %v506 = vsel %vm471, %v442, 0
      %v509 = vsel %vm471, %v443, 0
      %v512 = vsel %vm471, %v444, 0
      %v515 = vsel %vm471, %v445, 0
      %v518 = vsel %vm471, %v446, 0
      %520 = vmatpush.bf16.msra.mxu0 0
      %521 = vmatpush.bf16.msra.mxu0 0
      %522 = vmatpush.bf16.msra.mxu0 0
      %523 = vmatpush.bf16.msra.mxu0 0
      %524 = vmatpush.bf16.msra.mxu0 %v466
      %525 = vmatpush.bf16.msra.mxu0 %v465
      %526 = vmatpush.bf16.msra.mxu0 %v464
      %527 = vmatpush.bf16.msra.mxu0 %v463
      %528 = vmatmul.bf16.gmra.mxu0 %v473
      %v529 = vpop.f32.mrf.mxu0
      %v530 = vadd.f32 0.0, %v529
      %v531 = vpop.f32.mrf.mxu0
      %v532 = vadd.f32 0.0, %v531
      %533 = vmatmul.bf16.gmra.mxu0 %v476
      %v534 = vpop.f32.mrf.mxu0
      %v535 = vadd.f32 0.0, %v534
      %v536 = vpop.f32.mrf.mxu0
      %v537 = vadd.f32 0.0, %v536
      %538 = vmatmul.bf16.gmra.mxu0 %v479
      %v539 = vpop.f32.mrf.mxu0
      %v540 = vadd.f32 0.0, %v539
      %v541 = vpop.f32.mrf.mxu0
      %v542 = vadd.f32 0.0, %v541
      %543 = vmatmul.bf16.gmra.mxu0 %v482
      %v544 = vpop.f32.mrf.mxu0
      %v545 = vadd.f32 0.0, %v544
      %v546 = vpop.f32.mrf.mxu0
      %v547 = vadd.f32 0.0, %v546
      %548 = vmatmul.bf16.gmra.mxu0 %v485
      %v549 = vpop.f32.mrf.mxu0
      %v550 = vadd.f32 0.0, %v549
      %v551 = vpop.f32.mrf.mxu0
      %v552 = vadd.f32 0.0, %v551
      %553 = vmatmul.bf16.gmra.mxu0 %v488
      %v554 = vpop.f32.mrf.mxu0
      %v555 = vadd.f32 0.0, %v554
      %v556 = vpop.f32.mrf.mxu0
      %v557 = vadd.f32 0.0, %v556
      %558 = vmatmul.bf16.gmra.mxu0 %v491
      %v559 = vpop.f32.mrf.mxu0
      %v560 = vadd.f32 0.0, %v559
      %v561 = vpop.f32.mrf.mxu0
      %v562 = vadd.f32 0.0, %v561
      %563 = vmatmul.bf16.gmra.mxu0 %v494
      %v564 = vpop.f32.mrf.mxu0
      %v565 = vadd.f32 0.0, %v564
      %v566 = vpop.f32.mrf.mxu0
      %v567 = vadd.f32 0.0, %v566
      %568 = vmatmul.bf16.gmra.mxu0 %v497
      %v569 = vpop.f32.mrf.mxu0
      %v570 = vadd.f32 0.0, %v569
      %v571 = vpop.f32.mrf.mxu0
      %v572 = vadd.f32 0.0, %v571
      %573 = vmatmul.bf16.gmra.mxu0 %v500
      %v574 = vpop.f32.mrf.mxu0
      %v575 = vadd.f32 0.0, %v574
      %v576 = vpop.f32.mrf.mxu0
      %v577 = vadd.f32 0.0, %v576
      %578 = vmatmul.bf16.gmra.mxu0 %v503
      %v579 = vpop.f32.mrf.mxu0
      %v580 = vadd.f32 0.0, %v579
      %v581 = vpop.f32.mrf.mxu0
      %v582 = vadd.f32 0.0, %v581
      %583 = vmatmul.bf16.gmra.mxu0 %v506
      %v584 = vpop.f32.mrf.mxu0
      %v585 = vadd.f32 0.0, %v584
      %v586 = vpop.f32.mrf.mxu0
      %v587 = vadd.f32 0.0, %v586
      %588 = vmatmul.bf16.gmra.mxu0 %v509
      %v589 = vpop.f32.mrf.mxu0
      %v590 = vadd.f32 0.0, %v589
      %v591 = vpop.f32.mrf.mxu0
      %v592 = vadd.f32 0.0, %v591
      %593 = vmatmul.bf16.gmra.mxu0 %v512
      %v594 = vpop.f32.mrf.mxu0
      %v595 = vadd.f32 0.0, %v594
      %v596 = vpop.f32.mrf.mxu0
      %v597 = vadd.f32 0.0, %v596
      %598 = vmatmul.bf16.gmra.mxu0 %v515
      %v599 = vpop.f32.mrf.mxu0
      %v600 = vadd.f32 0.0, %v599
      %v601 = vpop.f32.mrf.mxu0
      %v602 = vadd.f32 0.0, %v601
      %603 = vmatmul.bf16.gmra.mxu0 %v518
      %v604 = vpop.f32.mrf.mxu0
      %v605 = vadd.f32 0.0, %v604
      %v606 = vpop.f32.mrf.mxu0
      %v607 = vadd.f32 0.0, %v606
      %608 = vdwg.mxu0
      %v609 = vld [vmem:[%s312] sm:$0xf]
      %v610 = vld [vmem:[%s312 + $0x4] sm:$0xf]
      %v611 = vld [vmem:[%s312 + $0x8] sm:$0xf]
      %v612 = vld [vmem:[%s312 + $0xc] sm:$0xf]
      %v613 = vld [vmem:[%s312 + $0x10] sm:$0xf]
      %v614 = vld [vmem:[%s312 + $0x14] sm:$0xf]
      %v615 = vld [vmem:[%s312 + $0x18] sm:$0xf]
      %v616 = vld [vmem:[%s312 + $0x1c] sm:$0xf]
      %v617 = vld [vmem:[%s312 + $0x20] sm:$0xf]
      %v618 = vld [vmem:[%s312 + $0x24] sm:$0xf]
      %v619 = vld [vmem:[%s312 + $0x28] sm:$0xf]
      %v620 = vld [vmem:[%s312 + $0x2c] sm:$0xf]
      %v621 = vld [vmem:[%s312 + $0x30] sm:$0xf]
      %v622 = vld [vmem:[%s312 + $0x34] sm:$0xf]
      %v623 = vld [vmem:[%s312 + $0x38] sm:$0xf]
      %v624 = vld [vmem:[%s312 + $0x3c] sm:$0xf]
      %v625 = vld [vmem:[%s312 + $0x40] sm:$0xf]
      %v626 = vld [vmem:[%s312 + $0x44] sm:$0xf]
      %v627 = vld [vmem:[%s312 + $0x48] sm:$0xf]
      %v628 = vld [vmem:[%s312 + $0x4c] sm:$0xf]
      %v629 = vld [vmem:[%s312 + $0x50] sm:$0xf]
      %v630 = vld [vmem:[%s312 + $0x54] sm:$0xf]
      %v631 = vld [vmem:[%s312 + $0x58] sm:$0xf]
      %v632 = vld [vmem:[%s312 + $0x5c] sm:$0xf]
      %v633 = vld [vmem:[%s312 + $0x60] sm:$0xf]
      %v634 = vld [vmem:[%s312 + $0x64] sm:$0xf]
      %v635 = vld [vmem:[%s312 + $0x68] sm:$0xf]
      %v636 = vld [vmem:[%s312 + $0x6c] sm:$0xf]
      %v637 = vld [vmem:[%s312 + $0x70] sm:$0xf]
      %v638 = vld [vmem:[%s312 + $0x74] sm:$0xf]
      %v639 = vld [vmem:[%s312 + $0x78] sm:$0xf]
      %v640 = vld [vmem:[%s312 + $0x7c] sm:$0xf]
      %v641 = vld [vmem:[%s4] sm:$0xf]
      %v642 = vld [vmem:[%s4 + $0x4] sm:$0xf]
      %v643 = vld [vmem:[%s4 + $0x8] sm:$0xf]
      %v644 = vld [vmem:[%s4 + $0xc] sm:$0xf]
      %v645 = vld [vmem:[%s4 + $0x10] sm:$0xf]
      %v646 = vld [vmem:[%s4 + $0x14] sm:$0xf]
      %v647 = vld [vmem:[%s4 + $0x18] sm:$0xf]
      %v648 = vld [vmem:[%s4 + $0x1c] sm:$0xf]
      %v649 = vld [vmem:[%s4 + $0x20] sm:$0xf]
      %v650 = vld [vmem:[%s4 + $0x24] sm:$0xf]
      %v651 = vld [vmem:[%s4 + $0x28] sm:$0xf]
      %v652 = vld [vmem:[%s4 + $0x2c] sm:$0xf]
      %v653 = vld [vmem:[%s4 + $0x30] sm:$0xf]
      %v654 = vld [vmem:[%s4 + $0x34] sm:$0xf]
      %v655 = vld [vmem:[%s4 + $0x38] sm:$0xf]
      %v656 = vld [vmem:[%s4 + $0x3c] sm:$0xf]
      %v689 = vunpack.c.l.b16 %v609
      %v690 = vunpack.c.l.b16 %v610
      %v691 = vunpack.c.l.b16 %v611
      %v692 = vunpack.c.l.b16 %v612
      %v693 = vunpack.c.l.b16 %v613
      %v694 = vunpack.c.l.b16 %v614
      %v695 = vunpack.c.l.b16 %v615
      %v696 = vunpack.c.l.b16 %v616
      %v697 = vunpack.c.l.b16 %v617
      %v698 = vunpack.c.l.b16 %v618
      %v699 = vunpack.c.l.b16 %v619
      %v700 = vunpack.c.l.b16 %v620
      %v701 = vunpack.c.l.b16 %v621
      %v702 = vunpack.c.l.b16 %v622
      %v703 = vunpack.c.l.b16 %v623
      %v704 = vunpack.c.l.b16 %v624
      %v705 = vunpack.c.l.b16 %v625
      %v706 = vunpack.c.l.b16 %v626
      %v707 = vunpack.c.l.b16 %v627
      %v708 = vunpack.c.l.b16 %v628
      %v709 = vunpack.c.l.b16 %v629
      %v710 = vunpack.c.l.b16 %v630
      %v711 = vunpack.c.l.b16 %v631
      %v712 = vunpack.c.l.b16 %v632
      %v713 = vunpack.c.l.b16 %v633
      %v714 = vunpack.c.l.b16 %v634
      %v715 = vunpack.c.l.b16 %v635
      %v716 = vunpack.c.l.b16 %v636
      %v717 = vunpack.c.l.b16 %v637
      %v718 = vunpack.c.l.b16 %v638
      %v719 = vunpack.c.l.b16 %v639
      %v720 = vunpack.c.l.b16 %v640
      %v721 = vpack.c.b16 %v690, %v689
      %v722 = vpack.c.b16 %v692, %v691
      %v723 = vpack.c.b16 %v694, %v693
      %v724 = vpack.c.b16 %v696, %v695
      %v725 = vpack.c.b16 %v698, %v697
      %v726 = vpack.c.b16 %v700, %v699
      %v727 = vpack.c.b16 %v702, %v701
      %v728 = vpack.c.b16 %v704, %v703
      %v729 = vpack.c.b16 %v706, %v705
      %v730 = vpack.c.b16 %v708, %v707
      %v731 = vpack.c.b16 %v710, %v709
      %v732 = vpack.c.b16 %v712, %v711
      %v733 = vpack.c.b16 %v714, %v713
      %v734 = vpack.c.b16 %v716, %v715
      %v735 = vpack.c.b16 %v718, %v717
      %v736 = vpack.c.b16 %v720, %v719
      %v769 = vunpack.c.l.b16 %v641
      %v770 = vunpack.c.l.b16 %v642
      %v771 = vunpack.c.l.b16 %v643
      %v772 = vunpack.c.l.b16 %v644
      %v773 = vunpack.c.l.b16 %v645
      %v774 = vunpack.c.l.b16 %v646
      %v775 = vunpack.c.l.b16 %v647
      %v776 = vunpack.c.l.b16 %v648
      %v777 = vunpack.c.l.b16 %v649
      %v778 = vunpack.c.l.b16 %v650
      %v779 = vunpack.c.l.b16 %v651
      %v780 = vunpack.c.l.b16 %v652
      %v781 = vunpack.c.l.b16 %v653
      %v782 = vunpack.c.l.b16 %v654
      %v783 = vunpack.c.l.b16 %v655
      %v784 = vunpack.c.l.b16 %v656
      %v785 = vpack.c.b16 %v770, %v769
      %v786 = vpack.c.b16 %v772, %v771
      %v787 = vpack.c.b16 %v774, %v773
      %v788 = vpack.c.b16 %v776, %v775
      %v789 = vpack.c.b16 %v778, %v777
      %v790 = vpack.c.b16 %v780, %v779
      %v791 = vpack.c.b16 %v782, %v781
      %v792 = vpack.c.b16 %v784, %v783
      %801 = vmatpush.bf16.msra.mxu0 %v792
      %802 = vmatpush.bf16.msra.mxu0 %v791
      %803 = vmatpush.bf16.msra.mxu0 %v790
      %804 = vmatpush.bf16.msra.mxu0 %v789
      %805 = vmatpush.bf16.msra.mxu0 %v788
      %806 = vmatpush.bf16.msra.mxu0 %v787
      %807 = vmatpush.bf16.msra.mxu0 %v786
      %808 = vmatpush.bf16.msra.mxu0 %v785
      %809 = vmatmul.bf16.gmra.mxu0 %v721
      %v810 = vpop.f32.mrf.mxu0
      %v811 = vadd.f32 0.0, %v810
      %v812 = vpop.f32.mrf.mxu0
      %v813 = vadd.f32 0.0, %v812
      %814 = vmatmul.bf16.gmra.mxu0 %v722
      %v815 = vpop.f32.mrf.mxu0
      %v816 = vadd.f32 0.0, %v815
      %v817 = vpop.f32.mrf.mxu0
      %v818 = vadd.f32 0.0, %v817
      %819 = vmatmul.bf16.gmra.mxu0 %v723
      %v820 = vpop.f32.mrf.mxu0
      %v821 = vadd.f32 0.0, %v820
      %v822 = vpop.f32.mrf.mxu0
      %v823 = vadd.f32 0.0, %v822
      %824 = vmatmul.bf16.gmra.mxu0 %v724
      %v825 = vpop.f32.mrf.mxu0
      %v826 = vadd.f32 0.0, %v825
      %v827 = vpop.f32.mrf.mxu0
      %v828 = vadd.f32 0.0, %v827
      %829 = vmatmul.bf16.gmra.mxu0 %v725
      %v830 = vpop.f32.mrf.mxu0
      %v831 = vadd.f32 0.0, %v830
      %v832 = vpop.f32.mrf.mxu0
      %v833 = vadd.f32 0.0, %v832
      %834 = vmatmul.bf16.gmra.mxu0 %v726
      %v835 = vpop.f32.mrf.mxu0
      %v836 = vadd.f32 0.0, %v835
      %v837 = vpop.f32.mrf.mxu0
      %v838 = vadd.f32 0.0, %v837
      %839 = vmatmul.bf16.gmra.mxu0 %v727
      %v840 = vpop.f32.mrf.mxu0
      %v841 = vadd.f32 0.0, %v840
      %v842 = vpop.f32.mrf.mxu0
      %v843 = vadd.f32 0.0, %v842
      %844 = vmatmul.bf16.gmra.mxu0 %v728
      %v845 = vpop.f32.mrf.mxu0
      %v846 = vadd.f32 0.0, %v845
      %v847 = vpop.f32.mrf.mxu0
      %v848 = vadd.f32 0.0, %v847
      %849 = vmatmul.bf16.gmra.mxu0 %v729
      %v850 = vpop.f32.mrf.mxu0
      %v851 = vadd.f32 0.0, %v850
      %v852 = vpop.f32.mrf.mxu0
      %v853 = vadd.f32 0.0, %v852
      %854 = vmatmul.bf16.gmra.mxu0 %v730
      %v855 = vpop.f32.mrf.mxu0
      %v856 = vadd.f32 0.0, %v855
      %v857 = vpop.f32.mrf.mxu0
      %v858 = vadd.f32 0.0, %v857
      %859 = vmatmul.bf16.gmra.mxu0 %v731
      %v860 = vpop.f32.mrf.mxu0
      %v861 = vadd.f32 0.0, %v860
      %v862 = vpop.f32.mrf.mxu0
      %v863 = vadd.f32 0.0, %v862
      %864 = vmatmul.bf16.gmra.mxu0 %v732
      %v865 = vpop.f32.mrf.mxu0
      %v866 = vadd.f32 0.0, %v865
      %v867 = vpop.f32.mrf.mxu0
      %v868 = vadd.f32 0.0, %v867
      %869 = vmatmul.bf16.gmra.mxu0 %v733
      %v870 = vpop.f32.mrf.mxu0
      %v871 = vadd.f32 0.0, %v870
      %v872 = vpop.f32.mrf.mxu0
      %v873 = vadd.f32 0.0, %v872
      %874 = vmatmul.bf16.gmra.mxu0 %v734
      %v875 = vpop.f32.mrf.mxu0
      %v876 = vadd.f32 0.0, %v875
      %v877 = vpop.f32.mrf.mxu0
      %v878 = vadd.f32 0.0, %v877
      %879 = vmatmul.bf16.gmra.mxu0 %v735
      %v880 = vpop.f32.mrf.mxu0
      %v881 = vadd.f32 0.0, %v880
      %v882 = vpop.f32.mrf.mxu0
      %v883 = vadd.f32 0.0, %v882
      %884 = vmatmul.bf16.gmra.mxu0 %v736
      %v885 = vpop.f32.mrf.mxu0
      %v886 = vadd.f32 0.0, %v885
      %v887 = vpop.f32.mrf.mxu0
      %v888 = vadd.f32 0.0, %v887
      %889 = vdwg.mxu0
      %v890 = vld [vmem:[%s318] sm:$0xff]
      %v891 = vld [vmem:[%s318 + $0x8] sm:$0xff]
      %v892 = vld [vmem:[%s318 + $0x10] sm:$0xff]
      %v893 = vld [vmem:[%s318 + $0x18] sm:$0xff]
      %v894 = vld [vmem:[%s318 + $0x20] sm:$0xff]
      %v895 = vld [vmem:[%s318 + $0x28] sm:$0xff]
      %v896 = vld [vmem:[%s318 + $0x30] sm:$0xff]
      %v897 = vld [vmem:[%s318 + $0x38] sm:$0xff]
      %v898 = vld [vmem:[%s318 + $0x40] sm:$0xff]
      %v899 = vld [vmem:[%s318 + $0x48] sm:$0xff]
      %v900 = vld [vmem:[%s318 + $0x50] sm:$0xff]
      %v901 = vld [vmem:[%s318 + $0x58] sm:$0xff]
      %v902 = vld [vmem:[%s318 + $0x60] sm:$0xff]
      %v903 = vld [vmem:[%s318 + $0x68] sm:$0xff]
      %v904 = vld [vmem:[%s318 + $0x70] sm:$0xff]
      %v905 = vld [vmem:[%s318 + $0x78] sm:$0xff]
      %v906 = vld [vmem:[%s318 + $0x80] sm:$0xff]
      %v907 = vld [vmem:[%s318 + $0x88] sm:$0xff]
      %v908 = vld [vmem:[%s318 + $0x90] sm:$0xff]
      %v909 = vld [vmem:[%s318 + $0x98] sm:$0xff]
      %v910 = vld [vmem:[%s318 + $0xa0] sm:$0xff]
      %v911 = vld [vmem:[%s318 + $0xa8] sm:$0xff]
      %v912 = vld [vmem:[%s318 + $0xb0] sm:$0xff]
      %v913 = vld [vmem:[%s318 + $0xb8] sm:$0xff]
      %v914 = vld [vmem:[%s318 + $0xc0] sm:$0xff]
      %v915 = vld [vmem:[%s318 + $0xc8] sm:$0xff]
      %v916 = vld [vmem:[%s318 + $0xd0] sm:$0xff]
      %v917 = vld [vmem:[%s318 + $0xd8] sm:$0xff]
      %v918 = vld [vmem:[%s318 + $0xe0] sm:$0xff]
      %v919 = vld [vmem:[%s318 + $0xe8] sm:$0xff]
      %v920 = vld [vmem:[%s318 + $0xf0] sm:$0xff]
      %v921 = vld [vmem:[%s318 + $0xf8] sm:$0xff]
      %954 = vrot.lane.b32.xlu0 %v530, 8
      %v955 = vpop.permute.xlu0 %954
      %956 = vrot.lane.b32.xlu0 %v532, 8
      %v957 = vpop.permute.xlu0 %956
      %958 = vrot.lane.b32.xlu0 %v535, 8
      %v959 = vpop.permute.xlu0 %958
      %960 = vrot.lane.b32.xlu0 %v537, 8
      %v961 = vpop.permute.xlu0 %960
      %962 = vrot.lane.b32.xlu0 %v540, 8
      %v963 = vpop.permute.xlu0 %962
      %964 = vrot.lane.b32.xlu0 %v542, 8
      %v965 = vpop.permute.xlu0 %964
      %966 = vrot.lane.b32.xlu0 %v545, 8
      %v967 = vpop.permute.xlu0 %966
      %968 = vrot.lane.b32.xlu0 %v547, 8
      %v969 = vpop.permute.xlu0 %968
      %970 = vrot.lane.b32.xlu0 %v550, 8
      %v971 = vpop.permute.xlu0 %970
      %972 = vrot.lane.b32.xlu0 %v552, 8
      %v973 = vpop.permute.xlu0 %972
      %974 = vrot.lane.b32.xlu0 %v555, 8
      %v975 = vpop.permute.xlu0 %974
      %976 = vrot.lane.b32.xlu0 %v557, 8
      %v977 = vpop.permute.xlu0 %976
      %978 = vrot.lane.b32.xlu0 %v560, 8
      %v979 = vpop.permute.xlu0 %978
      %980 = vrot.lane.b32.xlu0 %v562, 8
      %v981 = vpop.permute.xlu0 %980
      %982 = vrot.lane.b32.xlu0 %v565, 8
      %v983 = vpop.permute.xlu0 %982
      %984 = vrot.lane.b32.xlu0 %v567, 8
      %v985 = vpop.permute.xlu0 %984
      %986 = vrot.lane.b32.xlu0 %v570, 8
      %v987 = vpop.permute.xlu0 %986
      %988 = vrot.lane.b32.xlu0 %v572, 8
      %v989 = vpop.permute.xlu0 %988
      %990 = vrot.lane.b32.xlu0 %v575, 8
      %v991 = vpop.permute.xlu0 %990
      %992 = vrot.lane.b32.xlu0 %v577, 8
      %v993 = vpop.permute.xlu0 %992
      %994 = vrot.lane.b32.xlu0 %v580, 8
      %v995 = vpop.permute.xlu0 %994
      %996 = vrot.lane.b32.xlu0 %v582, 8
      %v997 = vpop.permute.xlu0 %996
      %998 = vrot.lane.b32.xlu0 %v585, 8
      %v999 = vpop.permute.xlu0 %998
      %1000 = vrot.lane.b32.xlu0 %v587, 8
      %v1001 = vpop.permute.xlu0 %1000
      %1002 = vrot.lane.b32.xlu0 %v590, 8
      %v1003 = vpop.permute.xlu0 %1002
      %1004 = vrot.lane.b32.xlu0 %v592, 8
      %v1005 = vpop.permute.xlu0 %1004
      %1006 = vrot.lane.b32.xlu0 %v595, 8
      %v1007 = vpop.permute.xlu0 %1006
      %1008 = vrot.lane.b32.xlu0 %v597, 8
      %v1009 = vpop.permute.xlu0 %1008
      %1010 = vrot.lane.b32.xlu0 %v600, 8
      %v1011 = vpop.permute.xlu0 %1010
      %1012 = vrot.lane.b32.xlu0 %v602, 8
      %v1013 = vpop.permute.xlu0 %1012
      %1014 = vrot.lane.b32.xlu0 %v605, 8
      %v1015 = vpop.permute.xlu0 %1014
      %1016 = vrot.lane.b32.xlu0 %v607, 8
      %v1017 = vpop.permute.xlu0 %1016
      %1082 = vrot.lane.b32.xlu0 %v890, 4
      %v1083 = vpop.permute.xlu0 %1082
      %1084 = vrot.lane.b32.xlu0 %v891, 4
      %v1085 = vpop.permute.xlu0 %1084
      %1086 = vrot.lane.b32.xlu0 %v892, 4
      %v1087 = vpop.permute.xlu0 %1086
      %1088 = vrot.lane.b32.xlu0 %v893, 4
      %v1089 = vpop.permute.xlu0 %1088
      %1090 = vrot.lane.b32.xlu0 %v894, 4
      %v1091 = vpop.permute.xlu0 %1090
      %1092 = vrot.lane.b32.xlu0 %v895, 4
      %v1093 = vpop.permute.xlu0 %1092
      %1094 = vrot.lane.b32.xlu0 %v896, 4
      %v1095 = vpop.permute.xlu0 %1094
      %1096 = vrot.lane.b32.xlu0 %v897, 4
      %v1097 = vpop.permute.xlu0 %1096
      %1098 = vrot.lane.b32.xlu0 %v898, 4
      %v1099 = vpop.permute.xlu0 %1098
      %1100 = vrot.lane.b32.xlu0 %v899, 4
      %v1101 = vpop.permute.xlu0 %1100
      %1102 = vrot.lane.b32.xlu0 %v900, 4
      %v1103 = vpop.permute.xlu0 %1102
      %1104 = vrot.lane.b32.xlu0 %v901, 4
      %v1105 = vpop.permute.xlu0 %1104
      %1106 = vrot.lane.b32.xlu0 %v902, 4
      %v1107 = vpop.permute.xlu0 %1106
      %1108 = vrot.lane.b32.xlu0 %v903, 4
      %v1109 = vpop.permute.xlu0 %1108
      %1110 = vrot.lane.b32.xlu0 %v904, 4
      %v1111 = vpop.permute.xlu0 %1110
      %1112 = vrot.lane.b32.xlu0 %v905, 4
      %v1113 = vpop.permute.xlu0 %1112
      %1114 = vrot.lane.b32.xlu0 %v906, 4
      %v1115 = vpop.permute.xlu0 %1114
      %1116 = vrot.lane.b32.xlu0 %v907, 4
      %v1117 = vpop.permute.xlu0 %1116
      %1118 = vrot.lane.b32.xlu0 %v908, 4
      %v1119 = vpop.permute.xlu0 %1118
      %1120 = vrot.lane.b32.xlu0 %v909, 4
      %v1121 = vpop.permute.xlu0 %1120
      %1122 = vrot.lane.b32.xlu0 %v910, 4
      %v1123 = vpop.permute.xlu0 %1122
      %1124 = vrot.lane.b32.xlu0 %v911, 4
      %v1125 = vpop.permute.xlu0 %1124
      %1126 = vrot.lane.b32.xlu0 %v912, 4
      %v1127 = vpop.permute.xlu0 %1126
      %1128 = vrot.lane.b32.xlu0 %v913, 4
      %v1129 = vpop.permute.xlu0 %1128
      %1130 = vrot.lane.b32.xlu0 %v914, 4
      %v1131 = vpop.permute.xlu0 %1130
      %1132 = vrot.lane.b32.xlu0 %v915, 4
      %v1133 = vpop.permute.xlu0 %1132
      %1134 = vrot.lane.b32.xlu0 %v916, 4
      %v1135 = vpop.permute.xlu0 %1134
      %1136 = vrot.lane.b32.xlu0 %v917, 4
      %v1137 = vpop.permute.xlu0 %1136
      %1138 = vrot.lane.b32.xlu0 %v918, 4
      %v1139 = vpop.permute.xlu0 %1138
      %1140 = vrot.lane.b32.xlu0 %v919, 4
      %v1141 = vpop.permute.xlu0 %1140
      %1142 = vrot.lane.b32.xlu0 %v920, 4
      %v1143 = vpop.permute.xlu0 %1142
      %1144 = vrot.lane.b32.xlu0 %v921, 4
      %v1145 = vpop.permute.xlu0 %1144
      %1210 = vrot.lane.b32.xlu0 %v811, 28
      %v1211 = vpop.permute.xlu0 %1210
      %1212 = vrot.lane.b32.xlu0 %v813, 28
      %v1213 = vpop.permute.xlu0 %1212
      %1214 = vrot.lane.b32.xlu0 %v816, 28
      %v1215 = vpop.permute.xlu0 %1214
      %1216 = vrot.lane.b32.xlu0 %v818, 28
      %v1217 = vpop.permute.xlu0 %1216
      %1218 = vrot.lane.b32.xlu0 %v821, 28
      %v1219 = vpop.permute.xlu0 %1218
      %1220 = vrot.lane.b32.xlu0 %v823, 28
      %v1221 = vpop.permute.xlu0 %1220
      %1222 = vrot.lane.b32.xlu0 %v826, 28
      %v1223 = vpop.permute.xlu0 %1222
      %1224 = vrot.lane.b32.xlu0 %v828, 28
      %v1225 = vpop.permute.xlu0 %1224
      %1226 = vrot.lane.b32.xlu0 %v831, 28
      %v1227 = vpop.permute.xlu0 %1226
      %1228 = vrot.lane.b32.xlu0 %v833, 28
      %v1229 = vpop.permute.xlu0 %1228
      %1230 = vrot.lane.b32.xlu0 %v836, 28
      %v1231 = vpop.permute.xlu0 %1230
      %1232 = vrot.lane.b32.xlu0 %v838, 28
      %v1233 = vpop.permute.xlu0 %1232
      %1234 = vrot.lane.b32.xlu0 %v841, 28
      %v1235 = vpop.permute.xlu0 %1234
      %1236 = vrot.lane.b32.xlu0 %v843, 28
      %v1237 = vpop.permute.xlu0 %1236
      %1238 = vrot.lane.b32.xlu0 %v846, 28
      %v1239 = vpop.permute.xlu0 %1238
      %1240 = vrot.lane.b32.xlu0 %v848, 28
      %v1241 = vpop.permute.xlu0 %1240
      %1242 = vrot.lane.b32.xlu0 %v851, 28
      %v1243 = vpop.permute.xlu0 %1242
      %1244 = vrot.lane.b32.xlu0 %v853, 28
      %v1245 = vpop.permute.xlu0 %1244
      %1246 = vrot.lane.b32.xlu0 %v856, 28
      %v1247 = vpop.permute.xlu0 %1246
      %1248 = vrot.lane.b32.xlu0 %v858, 28
      %v1249 = vpop.permute.xlu0 %1248
      %1250 = vrot.lane.b32.xlu0 %v861, 28
      %v1251 = vpop.permute.xlu0 %1250
      %1252 = vrot.lane.b32.xlu0 %v863, 28
      %v1253 = vpop.permute.xlu0 %1252
      %1254 = vrot.lane.b32.xlu0 %v866, 28
      %v1255 = vpop.permute.xlu0 %1254
      %1256 = vrot.lane.b32.xlu0 %v868, 28
      %v1257 = vpop.permute.xlu0 %1256
      %1258 = vrot.lane.b32.xlu0 %v871, 28
      %v1259 = vpop.permute.xlu0 %1258
      %1260 = vrot.lane.b32.xlu0 %v873, 28
      %v1261 = vpop.permute.xlu0 %1260
      %1262 = vrot.lane.b32.xlu0 %v876, 28
      %v1263 = vpop.permute.xlu0 %1262
      %1264 = vrot.lane.b32.xlu0 %v878, 28
      %v1265 = vpop.permute.xlu0 %1264
      %1266 = vrot.lane.b32.xlu0 %v881, 28
      %v1267 = vpop.permute.xlu0 %1266
      %1268 = vrot.lane.b32.xlu0 %v883, 28
      %v1269 = vpop.permute.xlu0 %1268
      %1270 = vrot.lane.b32.xlu0 %v886, 28
      %v1271 = vpop.permute.xlu0 %1270
      %1272 = vrot.lane.b32.xlu0 %v888, 28
      %v1273 = vpop.permute.xlu0 %1272
      %vm1306 = vcmask 64512
      %v1307 = vsel %vm1306, %v890, %v955
      %v1308 = vsel %vm1306, %v891, %v957
      %v1309 = vsel %vm1306, %v892, %v959
      %v1310 = vsel %vm1306, %v893, %v961
      %v1311 = vsel %vm1306, %v894, %v963
      %v1312 = vsel %vm1306, %v895, %v965
      %v1313 = vsel %vm1306, %v896, %v967
      %v1314 = vsel %vm1306, %v897, %v969
      %v1315 = vsel %vm1306, %v898, %v971
      %v1316 = vsel %vm1306, %v899, %v973
      %v1317 = vsel %vm1306, %v900, %v975
      %v1318 = vsel %vm1306, %v901, %v977
      %v1319 = vsel %vm1306, %v902, %v979
      %v1320 = vsel %vm1306, %v903, %v981
      %v1321 = vsel %vm1306, %v904, %v983
      %v1322 = vsel %vm1306, %v905, %v985
      %v1323 = vsel %vm1306, %v906, %v987
      %v1324 = vsel %vm1306, %v907, %v989
      %v1325 = vsel %vm1306, %v908, %v991
      %v1326 = vsel %vm1306, %v909, %v993
      %v1327 = vsel %vm1306, %v910, %v995
      %v1328 = vsel %vm1306, %v911, %v997
      %v1329 = vsel %vm1306, %v912, %v999
      %v1330 = vsel %vm1306, %v913, %v1001
      %v1331 = vsel %vm1306, %v914, %v1003
      %v1332 = vsel %vm1306, %v915, %v1005
      %v1333 = vsel %vm1306, %v916, %v1007
      %v1334 = vsel %vm1306, %v917, %v1009
      %v1335 = vsel %vm1306, %v918, %v1011
      %v1336 = vsel %vm1306, %v919, %v1013
      %v1337 = vsel %vm1306, %v920, %v1015
      %v1338 = vsel %vm1306, %v921, %v1017
      %vm1339 = vcmask 97280
      %v1340 = vsel %vm1339, %v1307, %v1083
      %v1341 = vsel %vm1339, %v1308, %v1085
      %v1342 = vsel %vm1339, %v1309, %v1087
      %v1343 = vsel %vm1339, %v1310, %v1089
      %v1344 = vsel %vm1339, %v1311, %v1091
      %v1345 = vsel %vm1339, %v1312, %v1093
      %v1346 = vsel %vm1339, %v1313, %v1095
      %v1347 = vsel %vm1339, %v1314, %v1097
      %v1348 = vsel %vm1339, %v1315, %v1099
      %v1349 = vsel %vm1339, %v1316, %v1101
      %v1350 = vsel %vm1339, %v1317, %v1103
      %v1351 = vsel %vm1339, %v1318, %v1105
      %v1352 = vsel %vm1339, %v1319, %v1107
      %v1353 = vsel %vm1339, %v1320, %v1109
      %v1354 = vsel %vm1339, %v1321, %v1111
      %v1355 = vsel %vm1339, %v1322, %v1113
      %v1356 = vsel %vm1339, %v1323, %v1115
      %v1357 = vsel %vm1339, %v1324, %v1117
      %v1358 = vsel %vm1339, %v1325, %v1119
      %v1359 = vsel %vm1339, %v1326, %v1121
      %v1360 = vsel %vm1339, %v1327, %v1123
      %v1361 = vsel %vm1339, %v1328, %v1125
      %v1362 = vsel %vm1339, %v1329, %v1127
      %v1363 = vsel %vm1339, %v1330, %v1129
      %v1364 = vsel %vm1339, %v1331, %v1131
      %v1365 = vsel %vm1339, %v1332, %v1133
      %v1366 = vsel %vm1339, %v1333, %v1135
      %v1367 = vsel %vm1339, %v1334, %v1137
      %v1368 = vsel %vm1339, %v1335, %v1139
      %v1369 = vsel %vm1339, %v1336, %v1141
      %v1370 = vsel %vm1339, %v1337, %v1143
      %v1371 = vsel %vm1339, %v1338, %v1145
      %vm1372 = vcmask 228352
      %v1373 = vsel %vm1372, %v1340, %v1211
      %v1374 = vsel %vm1372, %v1341, %v1213
      %v1375 = vsel %vm1372, %v1342, %v1215
      %v1376 = vsel %vm1372, %v1343, %v1217
      %v1377 = vsel %vm1372, %v1344, %v1219
      %v1378 = vsel %vm1372, %v1345, %v1221
      %v1379 = vsel %vm1372, %v1346, %v1223
      %v1380 = vsel %vm1372, %v1347, %v1225
      %v1381 = vsel %vm1372, %v1348, %v1227
      %v1382 = vsel %vm1372, %v1349, %v1229
      %v1383 = vsel %vm1372, %v1350, %v1231
      %v1384 = vsel %vm1372, %v1351, %v1233
      %v1385 = vsel %vm1372, %v1352, %v1235
      %v1386 = vsel %vm1372, %v1353, %v1237
      %v1387 = vsel %vm1372, %v1354, %v1239
      %v1388 = vsel %vm1372, %v1355, %v1241
      %v1389 = vsel %vm1372, %v1356, %v1243
      %v1390 = vsel %vm1372, %v1357, %v1245
      %v1391 = vsel %vm1372, %v1358, %v1247
      %v1392 = vsel %vm1372, %v1359, %v1249
      %v1393 = vsel %vm1372, %v1360, %v1251
      %v1394 = vsel %vm1372, %v1361, %v1253
      %v1395 = vsel %vm1372, %v1362, %v1255
      %v1396 = vsel %vm1372, %v1363, %v1257
      %v1397 = vsel %vm1372, %v1364, %v1259
      %v1398 = vsel %vm1372, %v1365, %v1261
      %v1399 = vsel %vm1372, %v1366, %v1263
      %v1400 = vsel %vm1372, %v1367, %v1265
      %v1401 = vsel %vm1372, %v1368, %v1267
      %v1402 = vsel %vm1372, %v1369, %v1269
      %v1403 = vsel %vm1372, %v1370, %v1271
      %v1404 = vsel %vm1372, %v1371, %v1273
      %vm1405 = vcmask 293888
      %1406 = vst.msk [vmem:[#allocation2] sm:$0xff] %vm1405, 0.0
      %1407 = vst.msk [vmem:[#allocation2 + $0x8] sm:$0xff] %vm1405, 0.0
      %1408 = vst.msk [vmem:[#allocation2 + $0x10] sm:$0xff] %vm1405, 0.0
      %1409 = vst.msk [vmem:[#allocation2 + $0x18] sm:$0xff] %vm1405, 0.0
      %1410 = vst.msk [vmem:[#allocation2 + $0x20] sm:$0xff] %vm1405, 0.0
      %1411 = vst.msk [vmem:[#allocation2 + $0x28] sm:$0xff] %vm1405, 0.0
      %1412 = vst.msk [vmem:[#allocation2 + $0x30] sm:$0xff] %vm1405, 0.0
      %1413 = vst.msk [vmem:[#allocation2 + $0x38] sm:$0xff] %vm1405, 0.0
      %1414 = vst.msk [vmem:[#allocation2 + $0x40] sm:$0xff] %vm1405, 0.0
      %1415 = vst.msk [vmem:[#allocation2 + $0x48] sm:$0xff] %vm1405, 0.0
      %1416 = vst.msk [vmem:[#allocation2 + $0x50] sm:$0xff] %vm1405, 0.0
      %1417 = vst.msk [vmem:[#allocation2 + $0x58] sm:$0xff] %vm1405, 0.0
      %1418 = vst.msk [vmem:[#allocation2 + $0x60] sm:$0xff] %vm1405, 0.0
      %1419 = vst.msk [vmem:[#allocation2 + $0x68] sm:$0xff] %vm1405, 0.0
      %1420 = vst.msk [vmem:[#allocation2 + $0x70] sm:$0xff] %vm1405, 0.0
      %1421 = vst.msk [vmem:[#allocation2 + $0x78] sm:$0xff] %vm1405, 0.0
      %1422 = vst.msk [vmem:[#allocation2 + $0x80] sm:$0xff] %vm1405, 0.0
      %1423 = vst.msk [vmem:[#allocation2 + $0x88] sm:$0xff] %vm1405, 0.0
      %1424 = vst.msk [vmem:[#allocation2 + $0x90] sm:$0xff] %vm1405, 0.0
      %1425 = vst.msk [vmem:[#allocation2 + $0x98] sm:$0xff] %vm1405, 0.0
      %1426 = vst.msk [vmem:[#allocation2 + $0xa0] sm:$0xff] %vm1405, 0.0
      %1427 = vst.msk [vmem:[#allocation2 + $0xa8] sm:$0xff] %vm1405, 0.0
      %1428 = vst.msk [vmem:[#allocation2 + $0xb0] sm:$0xff] %vm1405, 0.0
      %1429 = vst.msk [vmem:[#allocation2 + $0xb8] sm:$0xff] %vm1405, 0.0
      %1430 = vst.msk [vmem:[#allocation2 + $0xc0] sm:$0xff] %vm1405, 0.0
      %1431 = vst.msk [vmem:[#allocation2 + $0xc8] sm:$0xff] %vm1405, 0.0
      %1432 = vst.msk [vmem:[#allocation2 + $0xd0] sm:$0xff] %vm1405, 0.0
      %1433 = vst.msk [vmem:[#allocation2 + $0xd8] sm:$0xff] %vm1405, 0.0
      %1434 = vst.msk [vmem:[#allocation2 + $0xe0] sm:$0xff] %vm1405, 0.0
      %1435 = vst.msk [vmem:[#allocation2 + $0xe8] sm:$0xff] %vm1405, 0.0
      %1436 = vst.msk [vmem:[#allocation2 + $0xf0] sm:$0xff] %vm1405, 0.0
      %1437 = vst.msk [vmem:[#allocation2 + $0xf8] sm:$0xff] %vm1405, 0.0
      %1438 = vst.msk [vmem:[#allocation2 + $0x100] sm:$0xff] %vm1405, 0.0
      %1439 = vst.msk [vmem:[#allocation2 + $0x108] sm:$0xff] %vm1405, 0.0
      %1440 = vst.msk [vmem:[#allocation2 + $0x110] sm:$0xff] %vm1405, 0.0
      %1441 = vst.msk [vmem:[#allocation2 + $0x118] sm:$0xff] %vm1405, 0.0
      %1442 = vst.msk [vmem:[#allocation2 + $0x120] sm:$0xff] %vm1405, 0.0
      %1443 = vst.msk [vmem:[#allocation2 + $0x128] sm:$0xff] %vm1405, 0.0
      %1444 = vst.msk [vmem:[#allocation2 + $0x130] sm:$0xff] %vm1405, 0.0
      %1445 = vst.msk [vmem:[#allocation2 + $0x138] sm:$0xff] %vm1405, 0.0
      %1446 = vst.msk [vmem:[#allocation2 + $0x140] sm:$0xff] %vm1405, 0.0
      %1447 = vst.msk [vmem:[#allocation2 + $0x148] sm:$0xff] %vm1405, 0.0
      %1448 = vst.msk [vmem:[#allocation2 + $0x28] sm:$0xff] %vm1405, %v1373
      %1449 = vst.msk [vmem:[#allocation2 + $0x30] sm:$0xff] %vm1405, %v1374
      %1450 = vst.msk [vmem:[#allocation2 + $0x38] sm:$0xff] %vm1405, %v1375
      %1451 = vst.msk [vmem:[#allocation2 + $0x40] sm:$0xff] %vm1405, %v1376
      %1452 = vst.msk [vmem:[#allocation2 + $0x48] sm:$0xff] %vm1405, %v1377
      %1453 = vst.msk [vmem:[#allocation2 + $0x50] sm:$0xff] %vm1405, %v1378
      %1454 = vst.msk [vmem:[#allocation2 + $0x58] sm:$0xff] %vm1405, %v1379
      %1455 = vst.msk [vmem:[#allocation2 + $0x60] sm:$0xff] %vm1405, %v1380
      %1456 = vst.msk [vmem:[#allocation2 + $0x68] sm:$0xff] %vm1405, %v1381
      %1457 = vst.msk [vmem:[#allocation2 + $0x70] sm:$0xff] %vm1405, %v1382
      %1458 = vst.msk [vmem:[#allocation2 + $0x78] sm:$0xff] %vm1405, %v1383
      %1459 = vst.msk [vmem:[#allocation2 + $0x80] sm:$0xff] %vm1405, %v1384
      %1460 = vst.msk [vmem:[#allocation2 + $0x88] sm:$0xff] %vm1405, %v1385
      %1461 = vst.msk [vmem:[#allocation2 + $0x90] sm:$0xff] %vm1405, %v1386
      %1462 = vst.msk [vmem:[#allocation2 + $0x98] sm:$0xff] %vm1405, %v1387
      %1463 = vst.msk [vmem:[#allocation2 + $0xa0] sm:$0xff] %vm1405, %v1388
      %1464 = vst.msk [vmem:[#allocation2 + $0xa8] sm:$0xff] %vm1405, %v1389
      %1465 = vst.msk [vmem:[#allocation2 + $0xb0] sm:$0xff] %vm1405, %v1390
      %1466 = vst.msk [vmem:[#allocation2 + $0xb8] sm:$0xff] %vm1405, %v1391
      %1467 = vst.msk [vmem:[#allocation2 + $0xc0] sm:$0xff] %vm1405, %v1392
      %1468 = vst.msk [vmem:[#allocation2 + $0xc8] sm:$0xff] %vm1405, %v1393
      %1469 = vst.msk [vmem:[#allocation2 + $0xd0] sm:$0xff] %vm1405, %v1394
      %1470 = vst.msk [vmem:[#allocation2 + $0xd8] sm:$0xff] %vm1405, %v1395
      %1471 = vst.msk [vmem:[#allocation2 + $0xe0] sm:$0xff] %vm1405, %v1396
      %1472 = vst.msk [vmem:[#allocation2 + $0xe8] sm:$0xff] %vm1405, %v1397
      %1473 = vst.msk [vmem:[#allocation2 + $0xf0] sm:$0xff] %vm1405, %v1398
      %1474 = vst.msk [vmem:[#allocation2 + $0xf8] sm:$0xff] %vm1405, %v1399
      %1475 = vst.msk [vmem:[#allocation2 + $0x100] sm:$0xff] %vm1405, %v1400
      %1476 = vst.msk [vmem:[#allocation2 + $0x108] sm:$0xff] %vm1405, %v1401
      %1477 = vst.msk [vmem:[#allocation2 + $0x110] sm:$0xff] %vm1405, %v1402
      %1478 = vst.msk [vmem:[#allocation2 + $0x118] sm:$0xff] %vm1405, %v1403
      %1479 = vst.msk [vmem:[#allocation2 + $0x120] sm:$0xff] %vm1405, %v1404
      %v1480 = vlaneseq
      %v1481 = vshrl.u32 %v1480, 7
      %v1482 = vadd.s32 %v1481, 8
      %v1483 = vadd.s32 %v1481, 16
      %v1484 = vadd.s32 %v1481, 24
      %v1485 = vadd.s32 %v1481, 32
      %v1486 = vadd.s32 %v1481, 40
      %v1487 = vadd.s32 %v1481, 48
      %v1488 = vadd.s32 %v1481, 56
      %v1489 = vadd.s32 %v1481, 64
      %v1490 = vadd.s32 %v1481, 72
      %v1491 = vadd.s32 %v1481, 80
      %v1492 = vadd.s32 %v1481, 88
      %v1493 = vadd.s32 %v1481, 96
      %v1494 = vadd.s32 %v1481, 104
      %v1495 = vadd.s32 %v1481, 112
      %v1496 = vadd.s32 %v1481, 120
      %v1497 = vadd.s32 %v1481, 128
      %v1498 = vadd.s32 %v1481, 136
      %v1499 = vadd.s32 %v1481, 144
      %v1500 = vadd.s32 %v1481, 152
      %v1501 = vadd.s32 %v1481, 160
      %v1502 = vadd.s32 %v1481, 168
      %v1503 = vadd.s32 %v1481, 176
      %v1504 = vadd.s32 %v1481, 184
      %v1505 = vadd.s32 %v1481, 192
      %v1506 = vadd.s32 %v1481, 200
      %v1507 = vadd.s32 %v1481, 208
      %v1508 = vadd.s32 %v1481, 216
      %v1509 = vadd.s32 %v1481, 224
      %v1510 = vadd.s32 %v1481, 232
      %v1511 = vadd.s32 %v1481, 240
      %v1512 = vadd.s32 %v1481, 248
      %vm1513 = vcmp.lt.s32.totalorder %v1481, 0
      %v1514 = vsub.s32 0, %v1481
      %v1515 = vsel %vm1513, %v1514, %v1481
      %v1516 = vshrl.u32 %v1515, 4
      %v1517 = vand.u32 %v1515, 15
      %v1518 = vsub.s32 0, %v1517
      %v1519 = vsel %vm1513, %v1518, %v1517
      %vm1520 = vcmp.lt.s32.totalorder %v1482, 0
      %v1521 = vsub.s32 0, %v1482
      %v1522 = vsel %vm1520, %v1521, %v1482
      %v1523 = vshrl.u32 %v1522, 4
      %v1524 = vand.u32 %v1522, 15
      %v1525 = vsub.s32 0, %v1524
      %v1526 = vsel %vm1520, %v1525, %v1524
      %vm1527 = vcmp.lt.s32.totalorder %v1483, 0
      %v1528 = vsub.s32 0, %v1483
      %v1529 = vsel %vm1527, %v1528, %v1483
      %v1530 = vshrl.u32 %v1529, 4
      %v1531 = vand.u32 %v1529, 15
      %v1532 = vsub.s32 0, %v1531
      %v1533 = vsel %vm1527, %v1532, %v1531
      %vm1534 = vcmp.lt.s32.totalorder %v1484, 0
      %v1535 = vsub.s32 0, %v1484
      %v1536 = vsel %vm1534, %v1535, %v1484
      %v1537 = vshrl.u32 %v1536, 4
      %v1538 = vand.u32 %v1536, 15
      %v1539 = vsub.s32 0, %v1538
      %v1540 = vsel %vm1534, %v1539, %v1538
      %vm1541 = vcmp.lt.s32.totalorder %v1485, 0
      %v1542 = vsub.s32 0, %v1485
      %v1543 = vsel %vm1541, %v1542, %v1485
      %v1544 = vshrl.u32 %v1543, 4
      %v1545 = vand.u32 %v1543, 15
      %v1546 = vsub.s32 0, %v1545
      %v1547 = vsel %vm1541, %v1546, %v1545
      %vm1548 = vcmp.lt.s32.totalorder %v1486, 0
      %v1549 = vsub.s32 0, %v1486
      %v1550 = vsel %vm1548, %v1549, %v1486
      %v1551 = vshrl.u32 %v1550, 4
      %v1552 = vand.u32 %v1550, 15
      %v1553 = vsub.s32 0, %v1552
      %v1554 = vsel %vm1548, %v1553, %v1552
      %vm1555 = vcmp.lt.s32.totalorder %v1487, 0
      %v1556 = vsub.s32 0, %v1487
      %v1557 = vsel %vm1555, %v1556, %v1487
      %v1558 = vshrl.u32 %v1557, 4
      %v1559 = vand.u32 %v1557, 15
      %v1560 = vsub.s32 0, %v1559
      %v1561 = vsel %vm1555, %v1560, %v1559
      %vm1562 = vcmp.lt.s32.totalorder %v1488, 0
      %v1563 = vsub.s32 0, %v1488
      %v1564 = vsel %vm1562, %v1563, %v1488
      %v1565 = vshrl.u32 %v1564, 4
      %v1566 = vand.u32 %v1564, 15
      %v1567 = vsub.s32 0, %v1566
      %v1568 = vsel %vm1562, %v1567, %v1566
      %vm1569 = vcmp.lt.s32.totalorder %v1489, 0
      %v1570 = vsub.s32 0, %v1489
      %v1571 = vsel %vm1569, %v1570, %v1489
      %v1572 = vshrl.u32 %v1571, 4
      %v1573 = vand.u32 %v1571, 15
      %v1574 = vsub.s32 0, %v1573
      %v1575 = vsel %vm1569, %v1574, %v1573
      %vm1576 = vcmp.lt.s32.totalorder %v1490, 0
      %v1577 = vsub.s32 0, %v1490
      %v1578 = vsel %vm1576, %v1577, %v1490
      %v1579 = vshrl.u32 %v1578, 4
      %v1580 = vand.u32 %v1578, 15
      %v1581 = vsub.s32 0, %v1580
      %v1582 = vsel %vm1576, %v1581, %v1580
      %vm1583 = vcmp.lt.s32.totalorder %v1491, 0
      %v1584 = vsub.s32 0, %v1491
      %v1585 = vsel %vm1583, %v1584, %v1491
      %v1586 = vshrl.u32 %v1585, 4
      %v1587 = vand.u32 %v1585, 15
      %v1588 = vsub.s32 0, %v1587
      %v1589 = vsel %vm1583, %v1588, %v1587
      %vm1590 = vcmp.lt.s32.totalorder %v1492, 0
      %v1591 = vsub.s32 0, %v1492
      %v1592 = vsel %vm1590, %v1591, %v1492
      %v1593 = vshrl.u32 %v1592, 4
      %v1594 = vand.u32 %v1592, 15
      %v1595 = vsub.s32 0, %v1594
      %v1596 = vsel %vm1590, %v1595, %v1594
      %vm1597 = vcmp.lt.s32.totalorder %v1493, 0
      %v1598 = vsub.s32 0, %v1493
      %v1599 = vsel %vm1597, %v1598, %v1493
      %v1600 = vshrl.u32 %v1599, 4
      %v1601 = vand.u32 %v1599, 15
      %v1602 = vsub.s32 0, %v1601
      %v1603 = vsel %vm1597, %v1602, %v1601
      %vm1604 = vcmp.lt.s32.totalorder %v1494, 0
      %v1605 = vsub.s32 0, %v1494
      %v1606 = vsel %vm1604, %v1605, %v1494
      %v1607 = vshrl.u32 %v1606, 4
      %v1608 = vand.u32 %v1606, 15
      %v1609 = vsub.s32 0, %v1608
      %v1610 = vsel %vm1604, %v1609, %v1608
      %vm1611 = vcmp.lt.s32.totalorder %v1495, 0
      %v1612 = vsub.s32 0, %v1495
      %v1613 = vsel %vm1611, %v1612, %v1495
      %v1614 = vshrl.u32 %v1613, 4
      %v1615 = vand.u32 %v1613, 15
      %v1616 = vsub.s32 0, %v1615
      %v1617 = vsel %vm1611, %v1616, %v1615
      %vm1618 = vcmp.lt.s32.totalorder %v1496, 0
      %v1619 = vsub.s32 0, %v1496
      %v1620 = vsel %vm1618, %v1619, %v1496
      %v1621 = vshrl.u32 %v1620, 4
      %v1622 = vand.u32 %v1620, 15
      %v1623 = vsub.s32 0, %v1622
      %v1624 = vsel %vm1618, %v1623, %v1622
      %vm1625 = vcmp.lt.s32.totalorder %v1497, 0
      %v1626 = vsub.s32 0, %v1497
      %v1627 = vsel %vm1625, %v1626, %v1497
      %v1628 = vshrl.u32 %v1627, 4
      %v1629 = vand.u32 %v1627, 15
      %v1630 = vsub.s32 0, %v1629
      %v1631 = vsel %vm1625, %v1630, %v1629
      %vm1632 = vcmp.lt.s32.totalorder %v1498, 0
      %v1633 = vsub.s32 0, %v1498
      %v1634 = vsel %vm1632, %v1633, %v1498
      %v1635 = vshrl.u32 %v1634, 4
      %v1636 = vand.u32 %v1634, 15
      %v1637 = vsub.s32 0, %v1636
      %v1638 = vsel %vm1632, %v1637, %v1636
      %vm1639 = vcmp.lt.s32.totalorder %v1499, 0
      %v1640 = vsub.s32 0, %v1499
      %v1641 = vsel %vm1639, %v1640, %v1499
      %v1642 = vshrl.u32 %v1641, 4
      %v1643 = vand.u32 %v1641, 15
      %v1644 = vsub.s32 0, %v1643
      %v1645 = vsel %vm1639, %v1644, %v1643
      %vm1646 = vcmp.lt.s32.totalorder %v1500, 0
      %v1647 = vsub.s32 0, %v1500
      %v1648 = vsel %vm1646, %v1647, %v1500
      %v1649 = vshrl.u32 %v1648, 4
      %v1650 = vand.u32 %v1648, 15
      %v1651 = vsub.s32 0, %v1650
      %v1652 = vsel %vm1646, %v1651, %v1650
      %vm1653 = vcmp.lt.s32.totalorder %v1501, 0
      %v1654 = vsub.s32 0, %v1501
      %v1655 = vsel %vm1653, %v1654, %v1501
      %v1656 = vshrl.u32 %v1655, 4
      %v1657 = vand.u32 %v1655, 15
      %v1658 = vsub.s32 0, %v1657
      %v1659 = vsel %vm1653, %v1658, %v1657
      %vm1660 = vcmp.lt.s32.totalorder %v1502, 0
      %v1661 = vsub.s32 0, %v1502
      %v1662 = vsel %vm1660, %v1661, %v1502
      %v1663 = vshrl.u32 %v1662, 4
      %v1664 = vand.u32 %v1662, 15
      %v1665 = vsub.s32 0, %v1664
      %v1666 = vsel %vm1660, %v1665, %v1664
      %vm1667 = vcmp.lt.s32.totalorder %v1503, 0
      %v1668 = vsub.s32 0, %v1503
      %v1669 = vsel %vm1667, %v1668, %v1503
      %v1670 = vshrl.u32 %v1669, 4
      %v1671 = vand.u32 %v1669, 15
      %v1672 = vsub.s32 0, %v1671
      %v1673 = vsel %vm1667, %v1672, %v1671
      %vm1674 = vcmp.lt.s32.totalorder %v1504, 0
      %v1675 = vsub.s32 0, %v1504
      %v1676 = vsel %vm1674, %v1675, %v1504
      %v1677 = vshrl.u32 %v1676, 4
      %v1678 = vand.u32 %v1676, 15
      %v1679 = vsub.s32 0, %v1678
      %v1680 = vsel %vm1674, %v1679, %v1678
      %vm1681 = vcmp.lt.s32.totalorder %v1505, 0
      %v1682 = vsub.s32 0, %v1505
      %v1683 = vsel %vm1681, %v1682, %v1505
      %v1684 = vshrl.u32 %v1683, 4
      %v1685 = vand.u32 %v1683, 15
      %v1686 = vsub.s32 0, %v1685
      %v1687 = vsel %vm1681, %v1686, %v1685
      %vm1688 = vcmp.lt.s32.totalorder %v1506, 0
      %v1689 = vsub.s32 0, %v1506
      %v1690 = vsel %vm1688, %v1689, %v1506
      %v1691 = vshrl.u32 %v1690, 4
      %v1692 = vand.u32 %v1690, 15
      %v1693 = vsub.s32 0, %v1692
      %v1694 = vsel %vm1688, %v1693, %v1692
      %vm1695 = vcmp.lt.s32.totalorder %v1507, 0
      %v1696 = vsub.s32 0, %v1507
      %v1697 = vsel %vm1695, %v1696, %v1507
      %v1698 = vshrl.u32 %v1697, 4
      %v1699 = vand.u32 %v1697, 15
      %v1700 = vsub.s32 0, %v1699
      %v1701 = vsel %vm1695, %v1700, %v1699
      %vm1702 = vcmp.lt.s32.totalorder %v1508, 0
      %v1703 = vsub.s32 0, %v1508
      %v1704 = vsel %vm1702, %v1703, %v1508
      %v1705 = vshrl.u32 %v1704, 4
      %v1706 = vand.u32 %v1704, 15
      %v1707 = vsub.s32 0, %v1706
      %v1708 = vsel %vm1702, %v1707, %v1706
      %vm1709 = vcmp.lt.s32.totalorder %v1509, 0
      %v1710 = vsub.s32 0, %v1509
      %v1711 = vsel %vm1709, %v1710, %v1509
      %v1712 = vshrl.u32 %v1711, 4
      %v1713 = vand.u32 %v1711, 15
      %v1714 = vsub.s32 0, %v1713
      %v1715 = vsel %vm1709, %v1714, %v1713
      %vm1716 = vcmp.lt.s32.totalorder %v1510, 0
      %v1717 = vsub.s32 0, %v1510
      %v1718 = vsel %vm1716, %v1717, %v1510
      %v1719 = vshrl.u32 %v1718, 4
      %v1720 = vand.u32 %v1718, 15
      %v1721 = vsub.s32 0, %v1720
      %v1722 = vsel %vm1716, %v1721, %v1720
      %vm1723 = vcmp.lt.s32.totalorder %v1511, 0
      %v1724 = vsub.s32 0, %v1511
      %v1725 = vsel %vm1723, %v1724, %v1511
      %v1726 = vshrl.u32 %v1725, 4
      %v1727 = vand.u32 %v1725, 15
      %v1728 = vsub.s32 0, %v1727
      %v1729 = vsel %vm1723, %v1728, %v1727
      %vm1730 = vcmp.lt.s32.totalorder %v1512, 0
      %v1731 = vsub.s32 0, %v1512
      %v1732 = vsel %vm1730, %v1731, %v1512
      %v1733 = vshrl.u32 %v1732, 4
      %v1734 = vand.u32 %v1732, 15
      %v1735 = vsub.s32 0, %v1734
      %v1736 = vsel %vm1730, %v1735, %v1734
      %vm1737 = vcmp.ne.s32.totalorder %v1519, 0
      %vm1738 = vcmp.ne.s32.totalorder %v1526, 0
      %vm1739 = vcmp.ne.s32.totalorder %v1533, 0
      %vm1740 = vcmp.ne.s32.totalorder %v1540, 0
      %vm1741 = vcmp.ne.s32.totalorder %v1547, 0
      %vm1742 = vcmp.ne.s32.totalorder %v1554, 0
      %vm1743 = vcmp.ne.s32.totalorder %v1561, 0
      %vm1744 = vcmp.ne.s32.totalorder %v1568, 0
      %vm1745 = vcmp.ne.s32.totalorder %v1575, 0
      %vm1746 = vcmp.ne.s32.totalorder %v1582, 0
      %vm1747 = vcmp.ne.s32.totalorder %v1589, 0
      %vm1748 = vcmp.ne.s32.totalorder %v1596, 0
      %vm1749 = vcmp.ne.s32.totalorder %v1603, 0
      %vm1750 = vcmp.ne.s32.totalorder %v1610, 0
      %vm1751 = vcmp.ne.s32.totalorder %v1617, 0
      %vm1752 = vcmp.ne.s32.totalorder %v1624, 0
      %vm1753 = vcmp.ne.s32.totalorder %v1631, 0
      %vm1754 = vcmp.ne.s32.totalorder %v1638, 0
      %vm1755 = vcmp.ne.s32.totalorder %v1645, 0
      %vm1756 = vcmp.ne.s32.totalorder %v1652, 0
      %vm1757 = vcmp.ne.s32.totalorder %v1659, 0
      %vm1758 = vcmp.ne.s32.totalorder %v1666, 0
      %vm1759 = vcmp.ne.s32.totalorder %v1673, 0
      %vm1760 = vcmp.ne.s32.totalorder %v1680, 0
      %vm1761 = vcmp.ne.s32.totalorder %v1687, 0
      %vm1762 = vcmp.ne.s32.totalorder %v1694, 0
      %vm1763 = vcmp.ne.s32.totalorder %v1701, 0
      %vm1764 = vcmp.ne.s32.totalorder %v1708, 0
      %vm1765 = vcmp.ne.s32.totalorder %v1715, 0
      %vm1766 = vcmp.ne.s32.totalorder %v1722, 0
      %vm1767 = vcmp.ne.s32.totalorder %v1729, 0
      %vm1768 = vcmp.ne.s32.totalorder %v1736, 0
      %vm1769 = vcmp.lt.s32.totalorder %v1519, 0
      %vm1770 = vcmp.lt.s32.totalorder %v1526, 0
      %vm1771 = vcmp.lt.s32.totalorder %v1533, 0
      %vm1772 = vcmp.lt.s32.totalorder %v1540, 0
      %vm1773 = vcmp.lt.s32.totalorder %v1547, 0
      %vm1774 = vcmp.lt.s32.totalorder %v1554, 0
      %vm1775 = vcmp.lt.s32.totalorder %v1561, 0
      %vm1776 = vcmp.lt.s32.totalorder %v1568, 0
      %vm1777 = vcmp.lt.s32.totalorder %v1575, 0
      %vm1778 = vcmp.lt.s32.totalorder %v1582, 0
      %vm1779 = vcmp.lt.s32.totalorder %v1589, 0
      %vm1780 = vcmp.lt.s32.totalorder %v1596, 0
      %vm1781 = vcmp.lt.s32.totalorder %v1603, 0
      %vm1782 = vcmp.lt.s32.totalorder %v1610, 0
      %vm1783 = vcmp.lt.s32.totalorder %v1617, 0
      %vm1784 = vcmp.lt.s32.totalorder %v1624, 0
      %vm1785 = vcmp.lt.s32.totalorder %v1631, 0
      %vm1786 = vcmp.lt.s32.totalorder %v1638, 0
      %vm1787 = vcmp.lt.s32.totalorder %v1645, 0
      %vm1788 = vcmp.lt.s32.totalorder %v1652, 0
      %vm1789 = vcmp.lt.s32.totalorder %v1659, 0
      %vm1790 = vcmp.lt.s32.totalorder %v1666, 0
      %vm1791 = vcmp.lt.s32.totalorder %v1673, 0
      %vm1792 = vcmp.lt.s32.totalorder %v1680, 0
      %vm1793 = vcmp.lt.s32.totalorder %v1687, 0
      %vm1794 = vcmp.lt.s32.totalorder %v1694, 0
      %vm1795 = vcmp.lt.s32.totalorder %v1701, 0
      %vm1796 = vcmp.lt.s32.totalorder %v1708, 0
      %vm1797 = vcmp.lt.s32.totalorder %v1715, 0
      %vm1798 = vcmp.lt.s32.totalorder %v1722, 0
      %vm1799 = vcmp.lt.s32.totalorder %v1729, 0
      %vm1800 = vcmp.lt.s32.totalorder %v1736, 0
      %vm1801 = vmand %vm1769, %vm1737
      %vm1802 = vmand %vm1770, %vm1738
      %vm1803 = vmand %vm1771, %vm1739
      %vm1804 = vmand %vm1772, %vm1740
      %vm1805 = vmand %vm1773, %vm1741
      %vm1806 = vmand %vm1774, %vm1742
      %vm1807 = vmand %vm1775, %vm1743
      %vm1808 = vmand %vm1776, %vm1744
      %vm1809 = vmand %vm1777, %vm1745
      %vm1810 = vmand %vm1778, %vm1746
      %vm1811 = vmand %vm1779, %vm1747
      %vm1812 = vmand %vm1780, %vm1748
      %vm1813 = vmand %vm1781, %vm1749
      %vm1814 = vmand %vm1782, %vm1750
      %vm1815 = vmand %vm1783, %vm1751
      %vm1816 = vmand %vm1784, %vm1752
      %vm1817 = vmand %vm1785, %vm1753
      %vm1818 = vmand %vm1786, %vm1754
      %vm1819 = vmand %vm1787, %vm1755
      %vm1820 = vmand %vm1788, %vm1756
      %vm1821 = vmand %vm1789, %vm1757
      %vm1822 = vmand %vm1790, %vm1758
      %vm1823 = vmand %vm1791, %vm1759
      %vm1824 = vmand %vm1792, %vm1760
      %vm1825 = vmand %vm1793, %vm1761
      %vm1826 = vmand %vm1794, %vm1762
      %vm1827 = vmand %vm1795, %vm1763
      %vm1828 = vmand %vm1796, %vm1764
      %vm1829 = vmand %vm1797, %vm1765
      %vm1830 = vmand %vm1798, %vm1766
      %vm1831 = vmand %vm1799, %vm1767
      %vm1832 = vmand %vm1800, %vm1768
      %v1833 = vadd.s32 %v1519, 16
      %v1834 = vadd.s32 %v1526, 16
      %v1835 = vadd.s32 %v1533, 16
      %v1836 = vadd.s32 %v1540, 16
      %v1837 = vadd.s32 %v1547, 16
      %v1838 = vadd.s32 %v1554, 16
      %v1839 = vadd.s32 %v1561, 16
      %v1840 = vadd.s32 %v1568, 16
      %v1841 = vadd.s32 %v1575, 16
      %v1842 = vadd.s32 %v1582, 16
      %v1843 = vadd.s32 %v1589, 16
      %v1844 = vadd.s32 %v1596, 16
      %v1845 = vadd.s32 %v1603, 16
      %v1846 = vadd.s32 %v1610, 16
      %v1847 = vadd.s32 %v1617, 16
      %v1848 = vadd.s32 %v1624, 16
      %v1849 = vadd.s32 %v1631, 16
      %v1850 = vadd.s32 %v1638, 16
      %v1851 = vadd.s32 %v1645, 16
      %v1852 = vadd.s32 %v1652, 16
      %v1853 = vadd.s32 %v1659, 16
      %v1854 = vadd.s32 %v1666, 16
      %v1855 = vadd.s32 %v1673, 16
      %v1856 = vadd.s32 %v1680, 16
      %v1857 = vadd.s32 %v1687, 16
      %v1858 = vadd.s32 %v1694, 16
      %v1859 = vadd.s32 %v1701, 16
      %v1860 = vadd.s32 %v1708, 16
      %v1861 = vadd.s32 %v1715, 16
      %v1862 = vadd.s32 %v1722, 16
      %v1863 = vadd.s32 %v1729, 16
      %v1864 = vadd.s32 %v1736, 16
      %v1865 = vsel %vm1801, %v1833, %v1519
      %v1866 = vsel %vm1802, %v1834, %v1526
      %v1867 = vsel %vm1803, %v1835, %v1533
      %v1868 = vsel %vm1804, %v1836, %v1540
      %v1869 = vsel %vm1805, %v1837, %v1547
      %v1870 = vsel %vm1806, %v1838, %v1554
      %v1871 = vsel %vm1807, %v1839, %v1561
      %v1872 = vsel %vm1808, %v1840, %v1568
      %v1873 = vsel %vm1809, %v1841, %v1575
      %v1874 = vsel %vm1810, %v1842, %v1582
      %v1875 = vsel %vm1811, %v1843, %v1589
      %v1876 = vsel %vm1812, %v1844, %v1596
      %v1877 = vsel %vm1813, %v1845, %v1603
      %v1878 = vsel %vm1814, %v1846, %v1610
      %v1879 = vsel %vm1815, %v1847, %v1617
      %v1880 = vsel %vm1816, %v1848, %v1624
      %v1881 = vsel %vm1817, %v1849, %v1631
      %v1882 = vsel %vm1818, %v1850, %v1638
      %v1883 = vsel %vm1819, %v1851, %v1645
      %v1884 = vsel %vm1820, %v1852, %v1652
      %v1885 = vsel %vm1821, %v1853, %v1659
      %v1886 = vsel %vm1822, %v1854, %v1666
      %v1887 = vsel %vm1823, %v1855, %v1673
      %v1888 = vsel %vm1824, %v1856, %v1680
      %v1889 = vsel %vm1825, %v1857, %v1687
      %v1890 = vsel %vm1826, %v1858, %v1694
      %v1891 = vsel %vm1827, %v1859, %v1701
      %v1892 = vsel %vm1828, %v1860, %v1708
      %v1893 = vsel %vm1829, %v1861, %v1715
      %v1894 = vsel %vm1830, %v1862, %v1722
      %v1895 = vsel %vm1831, %v1863, %v1729
      %v1896 = vsel %vm1832, %v1864, %v1736
      %v1897 = vadd.s32 %v1865, 4294967294
      %v1898 = vadd.s32 %v1866, 4294967294
      %v1899 = vadd.s32 %v1867, 4294967294
      %v1900 = vadd.s32 %v1868, 4294967294
      %v1901 = vadd.s32 %v1869, 4294967294
      %v1902 = vadd.s32 %v1870, 4294967294
      %v1903 = vadd.s32 %v1871, 4294967294
      %v1904 = vadd.s32 %v1872, 4294967294
      %v1905 = vadd.s32 %v1873, 4294967294
      %v1906 = vadd.s32 %v1874, 4294967294
      %v1907 = vadd.s32 %v1875, 4294967294
      %v1908 = vadd.s32 %v1876, 4294967294
      %v1909 = vadd.s32 %v1877, 4294967294
      %v1910 = vadd.s32 %v1878, 4294967294
      %v1911 = vadd.s32 %v1879, 4294967294
      %v1912 = vadd.s32 %v1880, 4294967294
      %v1913 = vadd.s32 %v1881, 4294967294
      %v1914 = vadd.s32 %v1882, 4294967294
      %v1915 = vadd.s32 %v1883, 4294967294
      %v1916 = vadd.s32 %v1884, 4294967294
      %v1917 = vadd.s32 %v1885, 4294967294
      %v1918 = vadd.s32 %v1886, 4294967294
      %v1919 = vadd.s32 %v1887, 4294967294
      %v1920 = vadd.s32 %v1888, 4294967294
      %v1921 = vadd.s32 %v1889, 4294967294
      %v1922 = vadd.s32 %v1890, 4294967294
      %v1923 = vadd.s32 %v1891, 4294967294
      %v1924 = vadd.s32 %v1892, 4294967294
      %v1925 = vadd.s32 %v1893, 4294967294
      %v1926 = vadd.s32 %v1894, 4294967294
      %v1927 = vadd.s32 %v1895, 4294967294
      %v1928 = vadd.s32 %v1896, 4294967294
      %vm1929 = vcmp.ge.s32.totalorder %v1897, 0
      %vm1930 = vcmp.ge.s32.totalorder %v1898, 0
      %vm1931 = vcmp.ge.s32.totalorder %v1899, 0
      %vm1932 = vcmp.ge.s32.totalorder %v1900, 0
      %vm1933 = vcmp.ge.s32.totalorder %v1901, 0
      %vm1934 = vcmp.ge.s32.totalorder %v1902, 0
      %vm1935 = vcmp.ge.s32.totalorder %v1903, 0
      %vm1936 = vcmp.ge.s32.totalorder %v1904, 0
      %vm1937 = vcmp.ge.s32.totalorder %v1905, 0
      %vm1938 = vcmp.ge.s32.totalorder %v1906, 0
      %vm1939 = vcmp.ge.s32.totalorder %v1907, 0
      %vm1940 = vcmp.ge.s32.totalorder %v1908, 0
      %vm1941 = vcmp.ge.s32.totalorder %v1909, 0
      %vm1942 = vcmp.ge.s32.totalorder %v1910, 0
      %vm1943 = vcmp.ge.s32.totalorder %v1911, 0
      %vm1944 = vcmp.ge.s32.totalorder %v1912, 0
      %vm1945 = vcmp.ge.s32.totalorder %v1913, 0
      %vm1946 = vcmp.ge.s32.totalorder %v1914, 0
      %vm1947 = vcmp.ge.s32.totalorder %v1915, 0
      %vm1948 = vcmp.ge.s32.totalorder %v1916, 0
      %vm1949 = vcmp.ge.s32.totalorder %v1917, 0
      %vm1950 = vcmp.ge.s32.totalorder %v1918, 0
      %vm1951 = vcmp.ge.s32.totalorder %v1919, 0
      %vm1952 = vcmp.ge.s32.totalorder %v1920, 0
      %vm1953 = vcmp.ge.s32.totalorder %v1921, 0
      %vm1954 = vcmp.ge.s32.totalorder %v1922, 0
      %vm1955 = vcmp.ge.s32.totalorder %v1923, 0
      %vm1956 = vcmp.ge.s32.totalorder %v1924, 0
      %vm1957 = vcmp.ge.s32.totalorder %v1925, 0
      %vm1958 = vcmp.ge.s32.totalorder %v1926, 0
      %vm1959 = vcmp.ge.s32.totalorder %v1927, 0
      %vm1960 = vcmp.ge.s32.totalorder %v1928, 0
      %vm1961 = vcmp.lt.s32.totalorder %v1897, 16
      %vm1962 = vcmp.lt.s32.totalorder %v1898, 16
      %vm1963 = vcmp.lt.s32.totalorder %v1899, 16
      %vm1964 = vcmp.lt.s32.totalorder %v1900, 16
      %vm1965 = vcmp.lt.s32.totalorder %v1901, 16
      %vm1966 = vcmp.lt.s32.totalorder %v1902, 16
      %vm1967 = vcmp.lt.s32.totalorder %v1903, 16
      %vm1968 = vcmp.lt.s32.totalorder %v1904, 16
      %vm1969 = vcmp.lt.s32.totalorder %v1905, 16
      %vm1970 = vcmp.lt.s32.totalorder %v1906, 16
      %vm1971 = vcmp.lt.s32.totalorder %v1907, 16
      %vm1972 = vcmp.lt.s32.totalorder %v1908, 16
      %vm1973 = vcmp.lt.s32.totalorder %v1909, 16
      %vm1974 = vcmp.lt.s32.totalorder %v1910, 16
      %vm1975 = vcmp.lt.s32.totalorder %v1911, 16
      %vm1976 = vcmp.lt.s32.totalorder %v1912, 16
      %vm1977 = vcmp.lt.s32.totalorder %v1913, 16
      %vm1978 = vcmp.lt.s32.totalorder %v1914, 16
      %vm1979 = vcmp.lt.s32.totalorder %v1915, 16
      %vm1980 = vcmp.lt.s32.totalorder %v1916, 16
      %vm1981 = vcmp.lt.s32.totalorder %v1917, 16
      %vm1982 = vcmp.lt.s32.totalorder %v1918, 16
      %vm1983 = vcmp.lt.s32.totalorder %v1919, 16
      %vm1984 = vcmp.lt.s32.totalorder %v1920, 16
      %vm1985 = vcmp.lt.s32.totalorder %v1921, 16
      %vm1986 = vcmp.lt.s32.totalorder %v1922, 16
      %vm1987 = vcmp.lt.s32.totalorder %v1923, 16
      %vm1988 = vcmp.lt.s32.totalorder %v1924, 16
      %vm1989 = vcmp.lt.s32.totalorder %v1925, 16
      %vm1990 = vcmp.lt.s32.totalorder %v1926, 16
      %vm1991 = vcmp.lt.s32.totalorder %v1927, 16
      %vm1992 = vcmp.lt.s32.totalorder %v1928, 16
      %vm1993 = vmand %vm1929, %vm1961
      %vm1994 = vmand %vm1930, %vm1962
      %vm1995 = vmand %vm1931, %vm1963
      %vm1996 = vmand %vm1932, %vm1964
      %vm1997 = vmand %vm1933, %vm1965
      %vm1998 = vmand %vm1934, %vm1966
      %vm1999 = vmand %vm1935, %vm1967
      %vm2000 = vmand %vm1936, %vm1968
      %vm2001 = vmand %vm1937, %vm1969
      %vm2002 = vmand %vm1938, %vm1970
      %vm2003 = vmand %vm1939, %vm1971
      %vm2004 = vmand %vm1940, %vm1972
      %vm2005 = vmand %vm1941, %vm1973
      %vm2006 = vmand %vm1942, %vm1974
      %vm2007 = vmand %vm1943, %vm1975
      %vm2008 = vmand %vm1944, %vm1976
      %vm2009 = vmand %vm1945, %vm1977
      %vm2010 = vmand %vm1946, %vm1978
      %vm2011 = vmand %vm1947, %vm1979
      %vm2012 = vmand %vm1948, %vm1980
      %vm2013 = vmand %vm1949, %vm1981
      %vm2014 = vmand %vm1950, %vm1982
      %vm2015 = vmand %vm1951, %vm1983
      %vm2016 = vmand %vm1952, %vm1984
      %vm2017 = vmand %vm1953, %vm1985
      %vm2018 = vmand %vm1954, %vm1986
      %vm2019 = vmand %vm1955, %vm1987
      %vm2020 = vmand %vm1956, %vm1988
      %vm2021 = vmand %vm1957, %vm1989
      %vm2022 = vmand %vm1958, %vm1990
      %vm2023 = vmand %vm1959, %vm1991
      %vm2024 = vmand %vm1960, %vm1992
      %v2025 = vadd.s32 %v1865, 4294967295
      %v2026 = vadd.s32 %v1866, 4294967295
      %v2027 = vadd.s32 %v1867, 4294967295
      %v2028 = vadd.s32 %v1868, 4294967295
      %v2029 = vadd.s32 %v1869, 4294967295
      %v2030 = vadd.s32 %v1870, 4294967295
      %v2031 = vadd.s32 %v1871, 4294967295
      %v2032 = vadd.s32 %v1872, 4294967295
      %v2033 = vadd.s32 %v1873, 4294967295
      %v2034 = vadd.s32 %v1874, 4294967295
      %v2035 = vadd.s32 %v1875, 4294967295
      %v2036 = vadd.s32 %v1876, 4294967295
      %v2037 = vadd.s32 %v1877, 4294967295
      %v2038 = vadd.s32 %v1878, 4294967295
      %v2039 = vadd.s32 %v1879, 4294967295
      %v2040 = vadd.s32 %v1880, 4294967295
      %v2041 = vadd.s32 %v1881, 4294967295
      %v2042 = vadd.s32 %v1882, 4294967295
      %v2043 = vadd.s32 %v1883, 4294967295
      %v2044 = vadd.s32 %v1884, 4294967295
      %v2045 = vadd.s32 %v1885, 4294967295
      %v2046 = vadd.s32 %v1886, 4294967295
      %v2047 = vadd.s32 %v1887, 4294967295
      %v2048 = vadd.s32 %v1888, 4294967295
      %v2049 = vadd.s32 %v1889, 4294967295
      %v2050 = vadd.s32 %v1890, 4294967295
      %v2051 = vadd.s32 %v1891, 4294967295
      %v2052 = vadd.s32 %v1892, 4294967295
      %v2053 = vadd.s32 %v1893, 4294967295
      %v2054 = vadd.s32 %v1894, 4294967295
      %v2055 = vadd.s32 %v1895, 4294967295
      %v2056 = vadd.s32 %v1896, 4294967295
      %vm2057 = vcmp.ge.s32.totalorder %v2025, 0
      %vm2058 = vcmp.ge.s32.totalorder %v2026, 0
      %vm2059 = vcmp.ge.s32.totalorder %v2027, 0
      %vm2060 = vcmp.ge.s32.totalorder %v2028, 0
      %vm2061 = vcmp.ge.s32.totalorder %v2029, 0
      %vm2062 = vcmp.ge.s32.totalorder %v2030, 0
      %vm2063 = vcmp.ge.s32.totalorder %v2031, 0
      %vm2064 = vcmp.ge.s32.totalorder %v2032, 0
      %vm2065 = vcmp.ge.s32.totalorder %v2033, 0
      %vm2066 = vcmp.ge.s32.totalorder %v2034, 0
      %vm2067 = vcmp.ge.s32.totalorder %v2035, 0
      %vm2068 = vcmp.ge.s32.totalorder %v2036, 0
      %vm2069 = vcmp.ge.s32.totalorder %v2037, 0
      %vm2070 = vcmp.ge.s32.totalorder %v2038, 0
      %vm2071 = vcmp.ge.s32.totalorder %v2039, 0
      %vm2072 = vcmp.ge.s32.totalorder %v2040, 0
      %vm2073 = vcmp.ge.s32.totalorder %v2041, 0
      %vm2074 = vcmp.ge.s32.totalorder %v2042, 0
      %vm2075 = vcmp.ge.s32.totalorder %v2043, 0
      %vm2076 = vcmp.ge.s32.totalorder %v2044, 0
      %vm2077 = vcmp.ge.s32.totalorder %v2045, 0
      %vm2078 = vcmp.ge.s32.totalorder %v2046, 0
      %vm2079 = vcmp.ge.s32.totalorder %v2047, 0
      %vm2080 = vcmp.ge.s32.totalorder %v2048, 0
      %vm2081 = vcmp.ge.s32.totalorder %v2049, 0
      %vm2082 = vcmp.ge.s32.totalorder %v2050, 0
      %vm2083 = vcmp.ge.s32.totalorder %v2051, 0
      %vm2084 = vcmp.ge.s32.totalorder %v2052, 0
      %vm2085 = vcmp.ge.s32.totalorder %v2053, 0
      %vm2086 = vcmp.ge.s32.totalorder %v2054, 0
      %vm2087 = vcmp.ge.s32.totalorder %v2055, 0
      %vm2088 = vcmp.ge.s32.totalorder %v2056, 0
      %vm2089 = vcmp.lt.s32.totalorder %v2025, 16
      %vm2090 = vcmp.lt.s32.totalorder %v2026, 16
      %vm2091 = vcmp.lt.s32.totalorder %v2027, 16
      %vm2092 = vcmp.lt.s32.totalorder %v2028, 16
      %vm2093 = vcmp.lt.s32.totalorder %v2029, 16
      %vm2094 = vcmp.lt.s32.totalorder %v2030, 16
      %vm2095 = vcmp.lt.s32.totalorder %v2031, 16
      %vm2096 = vcmp.lt.s32.totalorder %v2032, 16
      %vm2097 = vcmp.lt.s32.totalorder %v2033, 16
      %vm2098 = vcmp.lt.s32.totalorder %v2034, 16
      %vm2099 = vcmp.lt.s32.totalorder %v2035, 16
      %vm2100 = vcmp.lt.s32.totalorder %v2036, 16
      %vm2101 = vcmp.lt.s32.totalorder %v2037, 16
      %vm2102 = vcmp.lt.s32.totalorder %v2038, 16
      %vm2103 = vcmp.lt.s32.totalorder %v2039, 16
      %vm2104 = vcmp.lt.s32.totalorder %v2040, 16
      %vm2105 = vcmp.lt.s32.totalorder %v2041, 16
      %vm2106 = vcmp.lt.s32.totalorder %v2042, 16
      %vm2107 = vcmp.lt.s32.totalorder %v2043, 16
      %vm2108 = vcmp.lt.s32.totalorder %v2044, 16
      %vm2109 = vcmp.lt.s32.totalorder %v2045, 16
      %vm2110 = vcmp.lt.s32.totalorder %v2046, 16
      %vm2111 = vcmp.lt.s32.totalorder %v2047, 16
      %vm2112 = vcmp.lt.s32.totalorder %v2048, 16
      %vm2113 = vcmp.lt.s32.totalorder %v2049, 16
      %vm2114 = vcmp.lt.s32.totalorder %v2050, 16
      %vm2115 = vcmp.lt.s32.totalorder %v2051, 16
      %vm2116 = vcmp.lt.s32.totalorder %v2052, 16
      %vm2117 = vcmp.lt.s32.totalorder %v2053, 16
      %vm2118 = vcmp.lt.s32.totalorder %v2054, 16
      %vm2119 = vcmp.lt.s32.totalorder %v2055, 16
      %vm2120 = vcmp.lt.s32.totalorder %v2056, 16
      %vm2121 = vmand %vm2057, %vm2089
      %vm2122 = vmand %vm2058, %vm2090
      %vm2123 = vmand %vm2059, %vm2091
      %vm2124 = vmand %vm2060, %vm2092
      %vm2125 = vmand %vm2061, %vm2093
      %vm2126 = vmand %vm2062, %vm2094
      %vm2127 = vmand %vm2063, %vm2095
      %vm2128 = vmand %vm2064, %vm2096
      %vm2129 = vmand %vm2065, %vm2097
      %vm2130 = vmand %vm2066, %vm2098
      %vm2131 = vmand %vm2067, %vm2099
      %vm2132 = vmand %vm2068, %vm2100
      %vm2133 = vmand %vm2069, %vm2101
      %vm2134 = vmand %vm2070, %vm2102
      %vm2135 = vmand %vm2071, %vm2103
      %vm2136 = vmand %vm2072, %vm2104
      %vm2137 = vmand %vm2073, %vm2105
      %vm2138 = vmand %vm2074, %vm2106
      %vm2139 = vmand %vm2075, %vm2107
      %vm2140 = vmand %vm2076, %vm2108
      %vm2141 = vmand %vm2077, %vm2109
      %vm2142 = vmand %vm2078, %vm2110
      %vm2143 = vmand %vm2079, %vm2111
      %vm2144 = vmand %vm2080, %vm2112
      %vm2145 = vmand %vm2081, %vm2113
      %vm2146 = vmand %vm2082, %vm2114
      %vm2147 = vmand %vm2083, %vm2115
      %vm2148 = vmand %vm2084, %vm2116
      %vm2149 = vmand %vm2085, %vm2117
      %vm2150 = vmand %vm2086, %vm2118
      %vm2151 = vmand %vm2087, %vm2119
      %vm2152 = vmand %vm2088, %vm2120
      %v2153 = vadd.s32 %v1865, 1
      %v2154 = vadd.s32 %v1866, 1
      %v2155 = vadd.s32 %v1867, 1
      %v2156 = vadd.s32 %v1868, 1
      %v2157 = vadd.s32 %v1869, 1
      %v2158 = vadd.s32 %v1870, 1
      %v2159 = vadd.s32 %v1871, 1
      %v2160 = vadd.s32 %v1872, 1
      %v2161 = vadd.s32 %v1873, 1
      %v2162 = vadd.s32 %v1874, 1
      %v2163 = vadd.s32 %v1875, 1
      %v2164 = vadd.s32 %v1876, 1
      %v2165 = vadd.s32 %v1877, 1
      %v2166 = vadd.s32 %v1878, 1
      %v2167 = vadd.s32 %v1879, 1
      %v2168 = vadd.s32 %v1880, 1
      %v2169 = vadd.s32 %v1881, 1
      %v2170 = vadd.s32 %v1882, 1
      %v2171 = vadd.s32 %v1883, 1
      %v2172 = vadd.s32 %v1884, 1
      %v2173 = vadd.s32 %v1885, 1
      %v2174 = vadd.s32 %v1886, 1
      %v2175 = vadd.s32 %v1887, 1
      %v2176 = vadd.s32 %v1888, 1
      %v2177 = vadd.s32 %v1889, 1
      %v2178 = vadd.s32 %v1890, 1
      %v2179 = vadd.s32 %v1891, 1
      %v2180 = vadd.s32 %v1892, 1
      %v2181 = vadd.s32 %v1893, 1
      %v2182 = vadd.s32 %v1894, 1
      %v2183 = vadd.s32 %v1895, 1
      %v2184 = vadd.s32 %v1896, 1
      %vm2185 = vcmp.ge.s32.totalorder %v2153, 0
      %vm2186 = vcmp.ge.s32.totalorder %v2154, 0
      %vm2187 = vcmp.ge.s32.totalorder %v2155, 0
      %vm2188 = vcmp.ge.s32.totalorder %v2156, 0
      %vm2189 = vcmp.ge.s32.totalorder %v2157, 0
      %vm2190 = vcmp.ge.s32.totalorder %v2158, 0
      %vm2191 = vcmp.ge.s32.totalorder %v2159, 0
      %vm2192 = vcmp.ge.s32.totalorder %v2160, 0
      %vm2193 = vcmp.ge.s32.totalorder %v2161, 0
      %vm2194 = vcmp.ge.s32.totalorder %v2162, 0
      %vm2195 = vcmp.ge.s32.totalorder %v2163, 0
      %vm2196 = vcmp.ge.s32.totalorder %v2164, 0
      %vm2197 = vcmp.ge.s32.totalorder %v2165, 0
      %vm2198 = vcmp.ge.s32.totalorder %v2166, 0
      %vm2199 = vcmp.ge.s32.totalorder %v2167, 0
      %vm2200 = vcmp.ge.s32.totalorder %v2168, 0
      %vm2201 = vcmp.ge.s32.totalorder %v2169, 0
      %vm2202 = vcmp.ge.s32.totalorder %v2170, 0
      %vm2203 = vcmp.ge.s32.totalorder %v2171, 0
      %vm2204 = vcmp.ge.s32.totalorder %v2172, 0
      %vm2205 = vcmp.ge.s32.totalorder %v2173, 0
      %vm2206 = vcmp.ge.s32.totalorder %v2174, 0
      %vm2207 = vcmp.ge.s32.totalorder %v2175, 0
      %vm2208 = vcmp.ge.s32.totalorder %v2176, 0
      %vm2209 = vcmp.ge.s32.totalorder %v2177, 0
      %vm2210 = vcmp.ge.s32.totalorder %v2178, 0
      %vm2211 = vcmp.ge.s32.totalorder %v2179, 0
      %vm2212 = vcmp.ge.s32.totalorder %v2180, 0
      %vm2213 = vcmp.ge.s32.totalorder %v2181, 0
      %vm2214 = vcmp.ge.s32.totalorder %v2182, 0
      %vm2215 = vcmp.ge.s32.totalorder %v2183, 0
      %vm2216 = vcmp.ge.s32.totalorder %v2184, 0
      %vm2217 = vcmp.lt.s32.totalorder %v2153, 16
      %vm2218 = vcmp.lt.s32.totalorder %v2154, 16
      %vm2219 = vcmp.lt.s32.totalorder %v2155, 16
      %vm2220 = vcmp.lt.s32.totalorder %v2156, 16
      %vm2221 = vcmp.lt.s32.totalorder %v2157, 16
      %vm2222 = vcmp.lt.s32.totalorder %v2158, 16
      %vm2223 = vcmp.lt.s32.totalorder %v2159, 16
      %vm2224 = vcmp.lt.s32.totalorder %v2160, 16
      %vm2225 = vcmp.lt.s32.totalorder %v2161, 16
      %vm2226 = vcmp.lt.s32.totalorder %v2162, 16
      %vm2227 = vcmp.lt.s32.totalorder %v2163, 16
      %vm2228 = vcmp.lt.s32.totalorder %v2164, 16
      %vm2229 = vcmp.lt.s32.totalorder %v2165, 16
      %vm2230 = vcmp.lt.s32.totalorder %v2166, 16
      %vm2231 = vcmp.lt.s32.totalorder %v2167, 16
      %vm2232 = vcmp.lt.s32.totalorder %v2168, 16
      %vm2233 = vcmp.lt.s32.totalorder %v2169, 16
      %vm2234 = vcmp.lt.s32.totalorder %v2170, 16
      %vm2235 = vcmp.lt.s32.totalorder %v2171, 16
      %vm2236 = vcmp.lt.s32.totalorder %v2172, 16
      %vm2237 = vcmp.lt.s32.totalorder %v2173, 16
      %vm2238 = vcmp.lt.s32.totalorder %v2174, 16
      %vm2239 = vcmp.lt.s32.totalorder %v2175, 16
      %vm2240 = vcmp.lt.s32.totalorder %v2176, 16
      %vm2241 = vcmp.lt.s32.totalorder %v2177, 16
      %vm2242 = vcmp.lt.s32.totalorder %v2178, 16
      %vm2243 = vcmp.lt.s32.totalorder %v2179, 16
      %vm2244 = vcmp.lt.s32.totalorder %v2180, 16
      %vm2245 = vcmp.lt.s32.totalorder %v2181, 16
      %vm2246 = vcmp.lt.s32.totalorder %v2182, 16
      %vm2247 = vcmp.lt.s32.totalorder %v2183, 16
      %vm2248 = vcmp.lt.s32.totalorder %v2184, 16
      %vm2249 = vmand %vm2185, %vm2217
      %vm2250 = vmand %vm2186, %vm2218
      %vm2251 = vmand %vm2187, %vm2219
      %vm2252 = vmand %vm2188, %vm2220
      %vm2253 = vmand %vm2189, %vm2221
      %vm2254 = vmand %vm2190, %vm2222
      %vm2255 = vmand %vm2191, %vm2223
      %vm2256 = vmand %vm2192, %vm2224
      %vm2257 = vmand %vm2193, %vm2225
      %vm2258 = vmand %vm2194, %vm2226
      %vm2259 = vmand %vm2195, %vm2227
      %vm2260 = vmand %vm2196, %vm2228
      %vm2261 = vmand %vm2197, %vm2229
      %vm2262 = vmand %vm2198, %vm2230
      %vm2263 = vmand %vm2199, %vm2231
      %vm2264 = vmand %vm2200, %vm2232
      %vm2265 = vmand %vm2201, %vm2233
      %vm2266 = vmand %vm2202, %vm2234
      %vm2267 = vmand %vm2203, %vm2235
      %vm2268 = vmand %vm2204, %vm2236
      %vm2269 = vmand %vm2205, %vm2237
      %vm2270 = vmand %vm2206, %vm2238
      %vm2271 = vmand %vm2207, %vm2239
      %vm2272 = vmand %vm2208, %vm2240
      %vm2273 = vmand %vm2209, %vm2241
      %vm2274 = vmand %vm2210, %vm2242
      %vm2275 = vmand %vm2211, %vm2243
      %vm2276 = vmand %vm2212, %vm2244
      %vm2277 = vmand %vm2213, %vm2245
      %vm2278 = vmand %vm2214, %vm2246
      %vm2279 = vmand %vm2215, %vm2247
      %vm2280 = vmand %vm2216, %vm2248
      %v2281 = vadd.s32 %v1865, 2
      %v2282 = vadd.s32 %v1866, 2
      %v2283 = vadd.s32 %v1867, 2
      %v2284 = vadd.s32 %v1868, 2
      %v2285 = vadd.s32 %v1869, 2
      %v2286 = vadd.s32 %v1870, 2
      %v2287 = vadd.s32 %v1871, 2
      %v2288 = vadd.s32 %v1872, 2
      %v2289 = vadd.s32 %v1873, 2
      %v2290 = vadd.s32 %v1874, 2
      %v2291 = vadd.s32 %v1875, 2
      %v2292 = vadd.s32 %v1876, 2
      %v2293 = vadd.s32 %v1877, 2
      %v2294 = vadd.s32 %v1878, 2
      %v2295 = vadd.s32 %v1879, 2
      %v2296 = vadd.s32 %v1880, 2
      %v2297 = vadd.s32 %v1881, 2
      %v2298 = vadd.s32 %v1882, 2
      %v2299 = vadd.s32 %v1883, 2
      %v2300 = vadd.s32 %v1884, 2
      %v2301 = vadd.s32 %v1885, 2
      %v2302 = vadd.s32 %v1886, 2
      %v2303 = vadd.s32 %v1887, 2
      %v2304 = vadd.s32 %v1888, 2
      %v2305 = vadd.s32 %v1889, 2
      %v2306 = vadd.s32 %v1890, 2
      %v2307 = vadd.s32 %v1891, 2
      %v2308 = vadd.s32 %v1892, 2
      %v2309 = vadd.s32 %v1893, 2
      %v2310 = vadd.s32 %v1894, 2
      %v2311 = vadd.s32 %v1895, 2
      %v2312 = vadd.s32 %v1896, 2
      %vm2313 = vcmp.ge.s32.totalorder %v2281, 0
      %vm2314 = vcmp.ge.s32.totalorder %v2282, 0
      %vm2315 = vcmp.ge.s32.totalorder %v2283, 0
      %vm2316 = vcmp.ge.s32.totalorder %v2284, 0
      %vm2317 = vcmp.ge.s32.totalorder %v2285, 0
      %vm2318 = vcmp.ge.s32.totalorder %v2286, 0
      %vm2319 = vcmp.ge.s32.totalorder %v2287, 0
      %vm2320 = vcmp.ge.s32.totalorder %v2288, 0
      %vm2321 = vcmp.ge.s32.totalorder %v2289, 0
      %vm2322 = vcmp.ge.s32.totalorder %v2290, 0
      %vm2323 = vcmp.ge.s32.totalorder %v2291, 0
      %vm2324 = vcmp.ge.s32.totalorder %v2292, 0
      %vm2325 = vcmp.ge.s32.totalorder %v2293, 0
      %vm2326 = vcmp.ge.s32.totalorder %v2294, 0
      %vm2327 = vcmp.ge.s32.totalorder %v2295, 0
      %vm2328 = vcmp.ge.s32.totalorder %v2296, 0
      %vm2329 = vcmp.ge.s32.totalorder %v2297, 0
      %vm2330 = vcmp.ge.s32.totalorder %v2298, 0
      %vm2331 = vcmp.ge.s32.totalorder %v2299, 0
      %vm2332 = vcmp.ge.s32.totalorder %v2300, 0
      %vm2333 = vcmp.ge.s32.totalorder %v2301, 0
      %vm2334 = vcmp.ge.s32.totalorder %v2302, 0
      %vm2335 = vcmp.ge.s32.totalorder %v2303, 0
      %vm2336 = vcmp.ge.s32.totalorder %v2304, 0
      %vm2337 = vcmp.ge.s32.totalorder %v2305, 0
      %vm2338 = vcmp.ge.s32.totalorder %v2306, 0
      %vm2339 = vcmp.ge.s32.totalorder %v2307, 0
      %vm2340 = vcmp.ge.s32.totalorder %v2308, 0
      %vm2341 = vcmp.ge.s32.totalorder %v2309, 0
      %vm2342 = vcmp.ge.s32.totalorder %v2310, 0
      %vm2343 = vcmp.ge.s32.totalorder %v2311, 0
      %vm2344 = vcmp.ge.s32.totalorder %v2312, 0
      %vm2345 = vcmp.lt.s32.totalorder %v2281, 16
      %vm2346 = vcmp.lt.s32.totalorder %v2282, 16
      %vm2347 = vcmp.lt.s32.totalorder %v2283, 16
      %vm2348 = vcmp.lt.s32.totalorder %v2284, 16
      %vm2349 = vcmp.lt.s32.totalorder %v2285, 16
      %vm2350 = vcmp.lt.s32.totalorder %v2286, 16
      %vm2351 = vcmp.lt.s32.totalorder %v2287, 16
      %vm2352 = vcmp.lt.s32.totalorder %v2288, 16
      %vm2353 = vcmp.lt.s32.totalorder %v2289, 16
      %vm2354 = vcmp.lt.s32.totalorder %v2290, 16
      %vm2355 = vcmp.lt.s32.totalorder %v2291, 16
      %vm2356 = vcmp.lt.s32.totalorder %v2292, 16
      %vm2357 = vcmp.lt.s32.totalorder %v2293, 16
      %vm2358 = vcmp.lt.s32.totalorder %v2294, 16
      %vm2359 = vcmp.lt.s32.totalorder %v2295, 16
      %vm2360 = vcmp.lt.s32.totalorder %v2296, 16
      %vm2361 = vcmp.lt.s32.totalorder %v2297, 16
      %vm2362 = vcmp.lt.s32.totalorder %v2298, 16
      %vm2363 = vcmp.lt.s32.totalorder %v2299, 16
      %vm2364 = vcmp.lt.s32.totalorder %v2300, 16
      %vm2365 = vcmp.lt.s32.totalorder %v2301, 16
      %vm2366 = vcmp.lt.s32.totalorder %v2302, 16
      %vm2367 = vcmp.lt.s32.totalorder %v2303, 16
      %vm2368 = vcmp.lt.s32.totalorder %v2304, 16
      %vm2369 = vcmp.lt.s32.totalorder %v2305, 16
      %vm2370 = vcmp.lt.s32.totalorder %v2306, 16
      %vm2371 = vcmp.lt.s32.totalorder %v2307, 16
      %vm2372 = vcmp.lt.s32.totalorder %v2308, 16
      %vm2373 = vcmp.lt.s32.totalorder %v2309, 16
      %vm2374 = vcmp.lt.s32.totalorder %v2310, 16
      %vm2375 = vcmp.lt.s32.totalorder %v2311, 16
      %vm2376 = vcmp.lt.s32.totalorder %v2312, 16
      %vm2377 = vmand %vm2313, %vm2345
      %vm2378 = vmand %vm2314, %vm2346
      %vm2379 = vmand %vm2315, %vm2347
      %vm2380 = vmand %vm2316, %vm2348
      %vm2381 = vmand %vm2317, %vm2349
      %vm2382 = vmand %vm2318, %vm2350
      %vm2383 = vmand %vm2319, %vm2351
      %vm2384 = vmand %vm2320, %vm2352
      %vm2385 = vmand %vm2321, %vm2353
      %vm2386 = vmand %vm2322, %vm2354
      %vm2387 = vmand %vm2323, %vm2355
      %vm2388 = vmand %vm2324, %vm2356
      %vm2389 = vmand %vm2325, %vm2357
      %vm2390 = vmand %vm2326, %vm2358
      %vm2391 = vmand %vm2327, %vm2359
      %vm2392 = vmand %vm2328, %vm2360
      %vm2393 = vmand %vm2329, %vm2361
      %vm2394 = vmand %vm2330, %vm2362
      %vm2395 = vmand %vm2331, %vm2363
      %vm2396 = vmand %vm2332, %vm2364
      %vm2397 = vmand %vm2333, %vm2365
      %vm2398 = vmand %vm2334, %vm2366
      %vm2399 = vmand %vm2335, %vm2367
      %vm2400 = vmand %vm2336, %vm2368
      %vm2401 = vmand %vm2337, %vm2369
      %vm2402 = vmand %vm2338, %vm2370
      %vm2403 = vmand %vm2339, %vm2371
      %vm2404 = vmand %vm2340, %vm2372
      %vm2405 = vmand %vm2341, %vm2373
      %vm2406 = vmand %vm2342, %vm2374
      %vm2407 = vmand %vm2343, %vm2375
      %vm2408 = vmand %vm2344, %vm2376
      %v2409 = vld [vmem:[#allocation2 + $0x6] sm:$0xff]
      %v2410 = vld [vmem:[#allocation2 + $0xe] sm:$0xff]
      %v2411 = vld [vmem:[#allocation2 + $0x16] sm:$0xff]
      %v2412 = vld [vmem:[#allocation2 + $0x1e] sm:$0xff]
      %v2413 = vld [vmem:[#allocation2 + $0x26] sm:$0xff]
      %v2414 = vld [vmem:[#allocation2 + $0x2e] sm:$0xff]
      %v2415 = vld [vmem:[#allocation2 + $0x36] sm:$0xff]
      %v2416 = vld [vmem:[#allocation2 + $0x3e] sm:$0xff]
      %v2417 = vld [vmem:[#allocation2 + $0x46] sm:$0xff]
      %v2418 = vld [vmem:[#allocation2 + $0x4e] sm:$0xff]
      %v2419 = vld [vmem:[#allocation2 + $0x56] sm:$0xff]
      %v2420 = vld [vmem:[#allocation2 + $0x5e] sm:$0xff]
      %v2421 = vld [vmem:[#allocation2 + $0x66] sm:$0xff]
      %v2422 = vld [vmem:[#allocation2 + $0x6e] sm:$0xff]
      %v2423 = vld [vmem:[#allocation2 + $0x76] sm:$0xff]
      %v2424 = vld [vmem:[#allocation2 + $0x7e] sm:$0xff]
      %v2425 = vld [vmem:[#allocation2 + $0x86] sm:$0xff]
      %v2426 = vld [vmem:[#allocation2 + $0x8e] sm:$0xff]
      %v2427 = vld [vmem:[#allocation2 + $0x96] sm:$0xff]
      %v2428 = vld [vmem:[#allocation2 + $0x9e] sm:$0xff]
      %v2429 = vld [vmem:[#allocation2 + $0xa6] sm:$0xff]
      %v2430 = vld [vmem:[#allocation2 + $0xae] sm:$0xff]
      %v2431 = vld [vmem:[#allocation2 + $0xb6] sm:$0xff]
      %v2432 = vld [vmem:[#allocation2 + $0xbe] sm:$0xff]
      %v2433 = vld [vmem:[#allocation2 + $0xc6] sm:$0xff]
      %v2434 = vld [vmem:[#allocation2 + $0xce] sm:$0xff]
      %v2435 = vld [vmem:[#allocation2 + $0xd6] sm:$0xff]
      %v2436 = vld [vmem:[#allocation2 + $0xde] sm:$0xff]
      %v2437 = vld [vmem:[#allocation2 + $0xe6] sm:$0xff]
      %v2438 = vld [vmem:[#allocation2 + $0xee] sm:$0xff]
      %v2439 = vld [vmem:[#allocation2 + $0xf6] sm:$0xff]
      %v2440 = vld [vmem:[#allocation2 + $0xfe] sm:$0xff]
      %v2441 = vsel %vm1993, 1, 0
      %v2442 = vsel %vm1994, 1, 0
      %v2443 = vsel %vm1995, 1, 0
      %v2444 = vsel %vm1996, 1, 0
      %v2445 = vsel %vm1997, 1, 0
      %v2446 = vsel %vm1998, 1, 0
      %v2447 = vsel %vm1999, 1, 0
      %v2448 = vsel %vm2000, 1, 0
      %v2449 = vsel %vm2001, 1, 0
      %v2450 = vsel %vm2002, 1, 0
      %v2451 = vsel %vm2003, 1, 0
      %v2452 = vsel %vm2004, 1, 0
      %v2453 = vsel %vm2005, 1, 0
      %v2454 = vsel %vm2006, 1, 0
      %v2455 = vsel %vm2007, 1, 0
      %v2456 = vsel %vm2008, 1, 0
      %v2457 = vsel %vm2009, 1, 0
      %v2458 = vsel %vm2010, 1, 0
      %v2459 = vsel %vm2011, 1, 0
      %v2460 = vsel %vm2012, 1, 0
      %v2461 = vsel %vm2013, 1, 0
      %v2462 = vsel %vm2014, 1, 0
      %v2463 = vsel %vm2015, 1, 0
      %v2464 = vsel %vm2016, 1, 0
      %v2465 = vsel %vm2017, 1, 0
      %v2466 = vsel %vm2018, 1, 0
      %v2467 = vsel %vm2019, 1, 0
      %v2468 = vsel %vm2020, 1, 0
      %v2469 = vsel %vm2021, 1, 0
      %v2470 = vsel %vm2022, 1, 0
      %v2471 = vsel %vm2023, 1, 0
      %v2472 = vsel %vm2024, 1, 0
      %vm2473 = vcmp.eq.s32.totalorder %v2441, 1
      %vm2474 = vcmp.eq.s32.totalorder %v2442, 1
      %vm2475 = vcmp.eq.s32.totalorder %v2443, 1
      %vm2476 = vcmp.eq.s32.totalorder %v2444, 1
      %vm2477 = vcmp.eq.s32.totalorder %v2445, 1
      %vm2478 = vcmp.eq.s32.totalorder %v2446, 1
      %vm2479 = vcmp.eq.s32.totalorder %v2447, 1
      %vm2480 = vcmp.eq.s32.totalorder %v2448, 1
      %vm2481 = vcmp.eq.s32.totalorder %v2449, 1
      %vm2482 = vcmp.eq.s32.totalorder %v2450, 1
      %vm2483 = vcmp.eq.s32.totalorder %v2451, 1
      %vm2484 = vcmp.eq.s32.totalorder %v2452, 1
      %vm2485 = vcmp.eq.s32.totalorder %v2453, 1
      %vm2486 = vcmp.eq.s32.totalorder %v2454, 1
      %vm2487 = vcmp.eq.s32.totalorder %v2455, 1
      %vm2488 = vcmp.eq.s32.totalorder %v2456, 1
      %vm2489 = vcmp.eq.s32.totalorder %v2457, 1
      %vm2490 = vcmp.eq.s32.totalorder %v2458, 1
      %vm2491 = vcmp.eq.s32.totalorder %v2459, 1
      %vm2492 = vcmp.eq.s32.totalorder %v2460, 1
      %vm2493 = vcmp.eq.s32.totalorder %v2461, 1
      %vm2494 = vcmp.eq.s32.totalorder %v2462, 1
      %vm2495 = vcmp.eq.s32.totalorder %v2463, 1
      %vm2496 = vcmp.eq.s32.totalorder %v2464, 1
      %vm2497 = vcmp.eq.s32.totalorder %v2465, 1
      %vm2498 = vcmp.eq.s32.totalorder %v2466, 1
      %vm2499 = vcmp.eq.s32.totalorder %v2467, 1
      %vm2500 = vcmp.eq.s32.totalorder %v2468, 1
      %vm2501 = vcmp.eq.s32.totalorder %v2469, 1
      %vm2502 = vcmp.eq.s32.totalorder %v2470, 1
      %vm2503 = vcmp.eq.s32.totalorder %v2471, 1
      %vm2504 = vcmp.eq.s32.totalorder %v2472, 1
      %v2505 = vsel %vm2473, %v2409, 0.0
      %v2506 = vsel %vm2474, %v2410, 0.0
      %v2507 = vsel %vm2475, %v2411, 0.0
      %v2508 = vsel %vm2476, %v2412, 0.0
      %v2509 = vsel %vm2477, %v2413, 0.0
      %v2510 = vsel %vm2478, %v2414, 0.0
      %v2511 = vsel %vm2479, %v2415, 0.0
      %v2512 = vsel %vm2480, %v2416, 0.0
      %v2513 = vsel %vm2481, %v2417, 0.0
      %v2514 = vsel %vm2482, %v2418, 0.0
      %v2515 = vsel %vm2483, %v2419, 0.0
      %v2516 = vsel %vm2484, %v2420, 0.0
      %v2517 = vsel %vm2485, %v2421, 0.0
      %v2518 = vsel %vm2486, %v2422, 0.0
      %v2519 = vsel %vm2487, %v2423, 0.0
      %v2520 = vsel %vm2488, %v2424, 0.0
      %v2521 = vsel %vm2489, %v2425, 0.0
      %v2522 = vsel %vm2490, %v2426, 0.0
      %v2523 = vsel %vm2491, %v2427, 0.0
      %v2524 = vsel %vm2492, %v2428, 0.0
      %v2525 = vsel %vm2493, %v2429, 0.0
      %v2526 = vsel %vm2494, %v2430, 0.0
      %v2527 = vsel %vm2495, %v2431, 0.0
      %v2528 = vsel %vm2496, %v2432, 0.0
      %v2529 = vsel %vm2497, %v2433, 0.0
      %v2530 = vsel %vm2498, %v2434, 0.0
      %v2531 = vsel %vm2499, %v2435, 0.0
      %v2532 = vsel %vm2500, %v2436, 0.0
      %v2533 = vsel %vm2501, %v2437, 0.0
      %v2534 = vsel %vm2502, %v2438, 0.0
      %v2535 = vsel %vm2503, %v2439, 0.0
      %v2536 = vsel %vm2504, %v2440, 0.0
      %v2537 = vpack.c.bf16 %v2506, %v2505
      %v2538 = vpack.c.bf16 %v2508, %v2507
      %v2539 = vpack.c.bf16 %v2510, %v2509
      %v2540 = vpack.c.bf16 %v2512, %v2511
      %v2541 = vpack.c.bf16 %v2514, %v2513
      %v2542 = vpack.c.bf16 %v2516, %v2515
      %v2543 = vpack.c.bf16 %v2518, %v2517
      %v2544 = vpack.c.bf16 %v2520, %v2519
      %v2545 = vpack.c.bf16 %v2522, %v2521
      %v2546 = vpack.c.bf16 %v2524, %v2523
      %v2547 = vpack.c.bf16 %v2526, %v2525
      %v2548 = vpack.c.bf16 %v2528, %v2527
      %v2549 = vpack.c.bf16 %v2530, %v2529
      %v2550 = vpack.c.bf16 %v2532, %v2531
      %v2551 = vpack.c.bf16 %v2534, %v2533
      %v2552 = vpack.c.bf16 %v2536, %v2535
      %v2553 = vld [vmem:[%s5] sm:$0xf]
      %v2554 = vld [vmem:[%s5 + $0x4] sm:$0xf]
      %v2555 = vld [vmem:[%s5 + $0x8] sm:$0xf]
      %v2556 = vld [vmem:[%s5 + $0xc] sm:$0xf]
      %v2557 = vld [vmem:[%s5 + $0x10] sm:$0x3]
      %v2558 = vld [vmem:[#allocation2 + $0x7] sm:$0xff]
      %v2559 = vld [vmem:[#allocation2 + $0xf] sm:$0xff]
      %v2560 = vld [vmem:[#allocation2 + $0x17] sm:$0xff]
      %v2561 = vld [vmem:[#allocation2 + $0x1f] sm:$0xff]
      %v2562 = vld [vmem:[#allocation2 + $0x27] sm:$0xff]
      %v2563 = vld [vmem:[#allocation2 + $0x2f] sm:$0xff]
      %v2564 = vld [vmem:[#allocation2 + $0x37] sm:$0xff]
      %v2565 = vld [vmem:[#allocation2 + $0x3f] sm:$0xff]
      %v2566 = vld [vmem:[#allocation2 + $0x47] sm:$0xff]
      %v2567 = vld [vmem:[#allocation2 + $0x4f] sm:$0xff]
      %v2568 = vld [vmem:[#allocation2 + $0x57] sm:$0xff]
      %v2569 = vld [vmem:[#allocation2 + $0x5f] sm:$0xff]
      %v2570 = vld [vmem:[#allocation2 + $0x67] sm:$0xff]
      %v2571 = vld [vmem:[#allocation2 + $0x6f] sm:$0xff]
      %v2572 = vld [vmem:[#allocation2 + $0x77] sm:$0xff]
      %v2573 = vld [vmem:[#allocation2 + $0x7f] sm:$0xff]
      %v2574 = vld [vmem:[#allocation2 + $0x87] sm:$0xff]
      %v2575 = vld [vmem:[#allocation2 + $0x8f] sm:$0xff]
      %v2576 = vld [vmem:[#allocation2 + $0x97] sm:$0xff]
      %v2577 = vld [vmem:[#allocation2 + $0x9f] sm:$0xff]
      %v2578 = vld [vmem:[#allocation2 + $0xa7] sm:$0xff]
      %v2579 = vld [vmem:[#allocation2 + $0xaf] sm:$0xff]
      %v2580 = vld [vmem:[#allocation2 + $0xb7] sm:$0xff]
      %v2581 = vld [vmem:[#allocation2 + $0xbf] sm:$0xff]
      %v2582 = vld [vmem:[#allocation2 + $0xc7] sm:$0xff]
      %v2583 = vld [vmem:[#allocation2 + $0xcf] sm:$0xff]
      %v2584 = vld [vmem:[#allocation2 + $0xd7] sm:$0xff]
      %v2585 = vld [vmem:[#allocation2 + $0xdf] sm:$0xff]
      %v2586 = vld [vmem:[#allocation2 + $0xe7] sm:$0xff]
      %v2587 = vld [vmem:[#allocation2 + $0xef] sm:$0xff]
      %v2588 = vld [vmem:[#allocation2 + $0xf7] sm:$0xff]
      %v2589 = vld [vmem:[#allocation2 + $0xff] sm:$0xff]
      %v2590 = vsel %vm2121, 1, 0
      %v2591 = vsel %vm2122, 1, 0
      %v2592 = vsel %vm2123, 1, 0
      %v2593 = vsel %vm2124, 1, 0
      %v2594 = vsel %vm2125, 1, 0
      %v2595 = vsel %vm2126, 1, 0
      %v2596 = vsel %vm2127, 1, 0
      %v2597 = vsel %vm2128, 1, 0
      %v2598 = vsel %vm2129, 1, 0
      %v2599 = vsel %vm2130, 1, 0
      %v2600 = vsel %vm2131, 1, 0
      %v2601 = vsel %vm2132, 1, 0
      %v2602 = vsel %vm2133, 1, 0
      %v2603 = vsel %vm2134, 1, 0
      %v2604 = vsel %vm2135, 1, 0
      %v2605 = vsel %vm2136, 1, 0
      %v2606 = vsel %vm2137, 1, 0
      %v2607 = vsel %vm2138, 1, 0
      %v2608 = vsel %vm2139, 1, 0
      %v2609 = vsel %vm2140, 1, 0
      %v2610 = vsel %vm2141, 1, 0
      %v2611 = vsel %vm2142, 1, 0
      %v2612 = vsel %vm2143, 1, 0
      %v2613 = vsel %vm2144, 1, 0
      %v2614 = vsel %vm2145, 1, 0
      %v2615 = vsel %vm2146, 1, 0
      %v2616 = vsel %vm2147, 1, 0
      %v2617 = vsel %vm2148, 1, 0
      %v2618 = vsel %vm2149, 1, 0
      %v2619 = vsel %vm2150, 1, 0
      %v2620 = vsel %vm2151, 1, 0
      %v2621 = vsel %vm2152, 1, 0
      %vm2622 = vcmp.eq.s32.totalorder %v2590, 1
      %vm2623 = vcmp.eq.s32.totalorder %v2591, 1
      %vm2624 = vcmp.eq.s32.totalorder %v2592, 1
      %vm2625 = vcmp.eq.s32.totalorder %v2593, 1
      %vm2626 = vcmp.eq.s32.totalorder %v2594, 1
      %vm2627 = vcmp.eq.s32.totalorder %v2595, 1
      %vm2628 = vcmp.eq.s32.totalorder %v2596, 1
      %vm2629 = vcmp.eq.s32.totalorder %v2597, 1
      %vm2630 = vcmp.eq.s32.totalorder %v2598, 1
      %vm2631 = vcmp.eq.s32.totalorder %v2599, 1
      %vm2632 = vcmp.eq.s32.totalorder %v2600, 1
      %vm2633 = vcmp.eq.s32.totalorder %v2601, 1
      %vm2634 = vcmp.eq.s32.totalorder %v2602, 1
      %vm2635 = vcmp.eq.s32.totalorder %v2603, 1
      %vm2636 = vcmp.eq.s32.totalorder %v2604, 1
      %vm2637 = vcmp.eq.s32.totalorder %v2605, 1
      %vm2638 = vcmp.eq.s32.totalorder %v2606, 1
      %vm2639 = vcmp.eq.s32.totalorder %v2607, 1
      %vm2640 = vcmp.eq.s32.totalorder %v2608, 1
      %vm2641 = vcmp.eq.s32.totalorder %v2609, 1
      %vm2642 = vcmp.eq.s32.totalorder %v2610, 1
      %vm2643 = vcmp.eq.s32.totalorder %v2611, 1
      %vm2644 = vcmp.eq.s32.totalorder %v2612, 1
      %vm2645 = vcmp.eq.s32.totalorder %v2613, 1
      %vm2646 = vcmp.eq.s32.totalorder %v2614, 1
      %vm2647 = vcmp.eq.s32.totalorder %v2615, 1
      %vm2648 = vcmp.eq.s32.totalorder %v2616, 1
      %vm2649 = vcmp.eq.s32.totalorder %v2617, 1
      %vm2650 = vcmp.eq.s32.totalorder %v2618, 1
      %vm2651 = vcmp.eq.s32.totalorder %v2619, 1
      %vm2652 = vcmp.eq.s32.totalorder %v2620, 1
      %vm2653 = vcmp.eq.s32.totalorder %v2621, 1
      %v2654 = vsel %vm2622, %v2558, 0.0
      %v2655 = vsel %vm2623, %v2559, 0.0
      %v2656 = vsel %vm2624, %v2560, 0.0
      %v2657 = vsel %vm2625, %v2561, 0.0
      %v2658 = vsel %vm2626, %v2562, 0.0
      %v2659 = vsel %vm2627, %v2563, 0.0
      %v2660 = vsel %vm2628, %v2564, 0.0
      %v2661 = vsel %vm2629, %v2565, 0.0
      %v2662 = vsel %vm2630, %v2566, 0.0
      %v2663 = vsel %vm2631, %v2567, 0.0
      %v2664 = vsel %vm2632, %v2568, 0.0
      %v2665 = vsel %vm2633, %v2569, 0.0
      %v2666 = vsel %vm2634, %v2570, 0.0
      %v2667 = vsel %vm2635, %v2571, 0.0
      %v2668 = vsel %vm2636, %v2572, 0.0
      %v2669 = vsel %vm2637, %v2573, 0.0
      %v2670 = vsel %vm2638, %v2574, 0.0
      %v2671 = vsel %vm2639, %v2575, 0.0
      %v2672 = vsel %vm2640, %v2576, 0.0
      %v2673 = vsel %vm2641, %v2577, 0.0
      %v2674 = vsel %vm2642, %v2578, 0.0
      %v2675 = vsel %vm2643, %v2579, 0.0
      %v2676 = vsel %vm2644, %v2580, 0.0
      %v2677 = vsel %vm2645, %v2581, 0.0
      %v2678 = vsel %vm2646, %v2582, 0.0
      %v2679 = vsel %vm2647, %v2583, 0.0
      %v2680 = vsel %vm2648, %v2584, 0.0
      %v2681 = vsel %vm2649, %v2585, 0.0
      %v2682 = vsel %vm2650, %v2586, 0.0
      %v2683 = vsel %vm2651, %v2587, 0.0
      %v2684 = vsel %vm2652, %v2588, 0.0
      %v2685 = vsel %vm2653, %v2589, 0.0
      %v2686 = vpack.c.bf16 %v2655, %v2654
      %v2687 = vpack.c.bf16 %v2657, %v2656
      %v2688 = vpack.c.bf16 %v2659, %v2658
      %v2689 = vpack.c.bf16 %v2661, %v2660
      %v2690 = vpack.c.bf16 %v2663, %v2662
      %v2691 = vpack.c.bf16 %v2665, %v2664
      %v2692 = vpack.c.bf16 %v2667, %v2666
      %v2693 = vpack.c.bf16 %v2669, %v2668
      %v2694 = vpack.c.bf16 %v2671, %v2670
      %v2695 = vpack.c.bf16 %v2673, %v2672
      %v2696 = vpack.c.bf16 %v2675, %v2674
      %v2697 = vpack.c.bf16 %v2677, %v2676
      %v2698 = vpack.c.bf16 %v2679, %v2678
      %v2699 = vpack.c.bf16 %v2681, %v2680
      %v2700 = vpack.c.bf16 %v2683, %v2682
      %v2701 = vpack.c.bf16 %v2685, %v2684
      %s2702 = scalar_lea.vmem %s5, 20
      %v2703 = vld [vmem:[%s2702] sm:$0xf]
      %v2704 = vld [vmem:[%s2702 + $0x4] sm:$0xf]
      %v2705 = vld [vmem:[%s2702 + $0x8] sm:$0xf]
      %v2706 = vld [vmem:[%s2702 + $0xc] sm:$0xf]
      %v2707 = vld [vmem:[%s2702 + $0x10] sm:$0x3]
      %v2713 = vunpack.c.l.b16 %v2703
      %v2714 = vunpack.c.l.b16 %v2704
      %v2715 = vunpack.c.l.b16 %v2705
      %v2716 = vunpack.c.l.b16 %v2706
      %v2717 = vunpack.c.l.b16 %v2707
      %v2718 = vpack.c.b16 %v2714, %v2713
      %v2719 = vpack.c.b16 %v2716, %v2715
      %v2720 = vpack.c.b16 %v2717, %v2717
      %v2724 = vsel %vm1405, %v2686, 0
      %v2727 = vsel %vm1405, %v2687, 0
      %v2730 = vsel %vm1405, %v2688, 0
      %v2733 = vsel %vm1405, %v2689, 0
      %v2736 = vsel %vm1405, %v2690, 0
      %v2739 = vsel %vm1405, %v2691, 0
      %v2742 = vsel %vm1405, %v2692, 0
      %v2745 = vsel %vm1405, %v2693, 0
      %v2748 = vsel %vm1405, %v2694, 0
      %v2751 = vsel %vm1405, %v2695, 0
      %v2754 = vsel %vm1405, %v2696, 0
      %v2757 = vsel %vm1405, %v2697, 0
      %v2760 = vsel %vm1405, %v2698, 0
      %v2763 = vsel %vm1405, %v2699, 0
      %v2766 = vsel %vm1405, %v2700, 0
      %v2769 = vsel %vm1405, %v2701, 0
      %vm2771 = vcmask 1041408
      %v2773 = vsel %vm2771, %v2720, 0
      %2775 = vmatpush.bf16.msra.mxu0 0
      %2776 = vmatpush.bf16.msra.mxu0 0
      %2777 = vmatpush.bf16.msra.mxu0 0
      %2778 = vmatpush.bf16.msra.mxu0 0
      %2779 = vmatpush.bf16.msra.mxu0 0
      %2780 = vmatpush.bf16.msra.mxu0 %v2773
      %2781 = vmatpush.bf16.msra.mxu0 %v2719
      %2782 = vmatpush.bf16.msra.mxu0 %v2718
      %2783 = vmatmul.bf16.gmra.mxu0 %v2724
      %v2784 = vpop.f32.mrf.mxu0
      %v2785 = vadd.f32 0.0, %v2784
      %v2786 = vpop.f32.mrf.mxu0
      %v2787 = vadd.f32 0.0, %v2786
      %2788 = vmatmul.bf16.gmra.mxu0 %v2727
      %v2789 = vpop.f32.mrf.mxu0
      %v2790 = vadd.f32 0.0, %v2789
      %v2791 = vpop.f32.mrf.mxu0
      %v2792 = vadd.f32 0.0, %v2791
      %2793 = vmatmul.bf16.gmra.mxu0 %v2730
      %v2794 = vpop.f32.mrf.mxu0
      %v2795 = vadd.f32 0.0, %v2794
      %v2796 = vpop.f32.mrf.mxu0
      %v2797 = vadd.f32 0.0, %v2796
      %2798 = vmatmul.bf16.gmra.mxu0 %v2733
      %v2799 = vpop.f32.mrf.mxu0
      %v2800 = vadd.f32 0.0, %v2799
      %v2801 = vpop.f32.mrf.mxu0
      %v2802 = vadd.f32 0.0, %v2801
      %2803 = vmatmul.bf16.gmra.mxu0 %v2736
      %v2804 = vpop.f32.mrf.mxu0
      %v2805 = vadd.f32 0.0, %v2804
      %v2806 = vpop.f32.mrf.mxu0
      %v2807 = vadd.f32 0.0, %v2806
      %2808 = vmatmul.bf16.gmra.mxu0 %v2739
      %v2809 = vpop.f32.mrf.mxu0
      %v2810 = vadd.f32 0.0, %v2809
      %v2811 = vpop.f32.mrf.mxu0
      %v2812 = vadd.f32 0.0, %v2811
      %2813 = vmatmul.bf16.gmra.mxu0 %v2742
      %v2814 = vpop.f32.mrf.mxu0
      %v2815 = vadd.f32 0.0, %v2814
      %v2816 = vpop.f32.mrf.mxu0
      %v2817 = vadd.f32 0.0, %v2816
      %2818 = vmatmul.bf16.gmra.mxu0 %v2745
      %v2819 = vpop.f32.mrf.mxu0
      %v2820 = vadd.f32 0.0, %v2819
      %v2821 = vpop.f32.mrf.mxu0
      %v2822 = vadd.f32 0.0, %v2821
      %2823 = vmatmul.bf16.gmra.mxu0 %v2748
      %v2824 = vpop.f32.mrf.mxu0
      %v2825 = vadd.f32 0.0, %v2824
      %v2826 = vpop.f32.mrf.mxu0
      %v2827 = vadd.f32 0.0, %v2826
      %2828 = vmatmul.bf16.gmra.mxu0 %v2751
      %v2829 = vpop.f32.mrf.mxu0
      %v2830 = vadd.f32 0.0, %v2829
      %v2831 = vpop.f32.mrf.mxu0
      %v2832 = vadd.f32 0.0, %v2831
      %2833 = vmatmul.bf16.gmra.mxu0 %v2754
      %v2834 = vpop.f32.mrf.mxu0
      %v2835 = vadd.f32 0.0, %v2834
      %v2836 = vpop.f32.mrf.mxu0
      %v2837 = vadd.f32 0.0, %v2836
      %2838 = vmatmul.bf16.gmra.mxu0 %v2757
      %v2839 = vpop.f32.mrf.mxu0
      %v2840 = vadd.f32 0.0, %v2839
      %v2841 = vpop.f32.mrf.mxu0
      %v2842 = vadd.f32 0.0, %v2841
      %2843 = vmatmul.bf16.gmra.mxu0 %v2760
      %v2844 = vpop.f32.mrf.mxu0
      %v2845 = vadd.f32 0.0, %v2844
      %v2846 = vpop.f32.mrf.mxu0
      %v2847 = vadd.f32 0.0, %v2846
      %2848 = vmatmul.bf16.gmra.mxu0 %v2763
      %v2849 = vpop.f32.mrf.mxu0
      %v2850 = vadd.f32 0.0, %v2849
      %v2851 = vpop.f32.mrf.mxu0
      %v2852 = vadd.f32 0.0, %v2851
      %2853 = vmatmul.bf16.gmra.mxu0 %v2766
      %v2854 = vpop.f32.mrf.mxu0
      %v2855 = vadd.f32 0.0, %v2854
      %v2856 = vpop.f32.mrf.mxu0
      %v2857 = vadd.f32 0.0, %v2856
      %2858 = vmatmul.bf16.gmra.mxu0 %v2769
      %v2859 = vpop.f32.mrf.mxu0
      %v2860 = vadd.f32 0.0, %v2859
      %v2861 = vpop.f32.mrf.mxu0
      %v2862 = vadd.f32 0.0, %v2861
      %2863 = vdwg.mxu0
      %v2869 = vunpack.c.l.b16 %v2553
      %v2870 = vunpack.c.l.b16 %v2554
      %v2871 = vunpack.c.l.b16 %v2555
      %v2872 = vunpack.c.l.b16 %v2556
      %v2873 = vunpack.c.l.b16 %v2557
      %v2874 = vpack.c.b16 %v2870, %v2869
      %v2875 = vpack.c.b16 %v2872, %v2871
      %v2876 = vpack.c.b16 %v2873, %v2873
      %v2880 = vsel %vm1405, %v2537, 0
      %v2883 = vsel %vm1405, %v2538, 0
      %v2886 = vsel %vm1405, %v2539, 0
      %v2889 = vsel %vm1405, %v2540, 0
      %v2892 = vsel %vm1405, %v2541, 0
      %v2895 = vsel %vm1405, %v2542, 0
      %v2898 = vsel %vm1405, %v2543, 0
      %v2901 = vsel %vm1405, %v2544, 0
      %v2904 = vsel %vm1405, %v2545, 0
      %v2907 = vsel %vm1405, %v2546, 0
      %v2910 = vsel %vm1405, %v2547, 0
      %v2913 = vsel %vm1405, %v2548, 0
      %v2916 = vsel %vm1405, %v2549, 0
      %v2919 = vsel %vm1405, %v2550, 0
      %v2922 = vsel %vm1405, %v2551, 0
      %v2925 = vsel %vm1405, %v2552, 0
      %v2928 = vsel %vm2771, %v2876, 0
      %2930 = vmatpush.bf16.msra.mxu0 0
      %2931 = vmatpush.bf16.msra.mxu0 0
      %2932 = vmatpush.bf16.msra.mxu0 0
      %2933 = vmatpush.bf16.msra.mxu0 0
      %2934 = vmatpush.bf16.msra.mxu0 0
      %2935 = vmatpush.bf16.msra.mxu0 %v2928
      %2936 = vmatpush.bf16.msra.mxu0 %v2875
      %2937 = vmatpush.bf16.msra.mxu0 %v2874
      %2938 = vmatmul.bf16.gmra.mxu0 %v2880
      %v2939 = vpop.f32.mrf.mxu0
      %v2940 = vadd.f32 %v2785, %v2939
      %v2941 = vpop.f32.mrf.mxu0
      %v2942 = vadd.f32 %v2787, %v2941
      %2943 = vmatmul.bf16.gmra.mxu0 %v2883
      %v2944 = vpop.f32.mrf.mxu0
      %v2945 = vadd.f32 %v2790, %v2944
      %v2946 = vpop.f32.mrf.mxu0
      %v2947 = vadd.f32 %v2792, %v2946
      %2948 = vmatmul.bf16.gmra.mxu0 %v2886
      %v2949 = vpop.f32.mrf.mxu0
      %v2950 = vadd.f32 %v2795, %v2949
      %v2951 = vpop.f32.mrf.mxu0
      %v2952 = vadd.f32 %v2797, %v2951
      %2953 = vmatmul.bf16.gmra.mxu0 %v2889
      %v2954 = vpop.f32.mrf.mxu0
      %v2955 = vadd.f32 %v2800, %v2954
      %v2956 = vpop.f32.mrf.mxu0
      %v2957 = vadd.f32 %v2802, %v2956
      %2958 = vmatmul.bf16.gmra.mxu0 %v2892
      %v2959 = vpop.f32.mrf.mxu0
      %v2960 = vadd.f32 %v2805, %v2959
      %v2961 = vpop.f32.mrf.mxu0
      %v2962 = vadd.f32 %v2807, %v2961
      %2963 = vmatmul.bf16.gmra.mxu0 %v2895
      %v2964 = vpop.f32.mrf.mxu0
      %v2965 = vadd.f32 %v2810, %v2964
      %v2966 = vpop.f32.mrf.mxu0
      %v2967 = vadd.f32 %v2812, %v2966
      %2968 = vmatmul.bf16.gmra.mxu0 %v2898
      %v2969 = vpop.f32.mrf.mxu0
      %v2970 = vadd.f32 %v2815, %v2969
      %v2971 = vpop.f32.mrf.mxu0
      %v2972 = vadd.f32 %v2817, %v2971
      %2973 = vmatmul.bf16.gmra.mxu0 %v2901
      %v2974 = vpop.f32.mrf.mxu0
      %v2975 = vadd.f32 %v2820, %v2974
      %v2976 = vpop.f32.mrf.mxu0
      %v2977 = vadd.f32 %v2822, %v2976
      %2978 = vmatmul.bf16.gmra.mxu0 %v2904
      %v2979 = vpop.f32.mrf.mxu0
      %v2980 = vadd.f32 %v2825, %v2979
      %v2981 = vpop.f32.mrf.mxu0
      %v2982 = vadd.f32 %v2827, %v2981
      %2983 = vmatmul.bf16.gmra.mxu0 %v2907
      %v2984 = vpop.f32.mrf.mxu0
      %v2985 = vadd.f32 %v2830, %v2984
      %v2986 = vpop.f32.mrf.mxu0
      %v2987 = vadd.f32 %v2832, %v2986
      %2988 = vmatmul.bf16.gmra.mxu0 %v2910
      %v2989 = vpop.f32.mrf.mxu0
      %v2990 = vadd.f32 %v2835, %v2989
      %v2991 = vpop.f32.mrf.mxu0
      %v2992 = vadd.f32 %v2837, %v2991
      %2993 = vmatmul.bf16.gmra.mxu0 %v2913
      %v2994 = vpop.f32.mrf.mxu0
      %v2995 = vadd.f32 %v2840, %v2994
      %v2996 = vpop.f32.mrf.mxu0
      %v2997 = vadd.f32 %v2842, %v2996
      %2998 = vmatmul.bf16.gmra.mxu0 %v2916
      %v2999 = vpop.f32.mrf.mxu0
      %v3000 = vadd.f32 %v2845, %v2999
      %v3001 = vpop.f32.mrf.mxu0
      %v3002 = vadd.f32 %v2847, %v3001
      %3003 = vmatmul.bf16.gmra.mxu0 %v2919
      %v3004 = vpop.f32.mrf.mxu0
      %v3005 = vadd.f32 %v2850, %v3004
      %v3006 = vpop.f32.mrf.mxu0
      %v3007 = vadd.f32 %v2852, %v3006
      %3008 = vmatmul.bf16.gmra.mxu0 %v2922
      %v3009 = vpop.f32.mrf.mxu0
      %v3010 = vadd.f32 %v2855, %v3009
      %v3011 = vpop.f32.mrf.mxu0
      %v3012 = vadd.f32 %v2857, %v3011
      %3013 = vmatmul.bf16.gmra.mxu0 %v2925
      %v3014 = vpop.f32.mrf.mxu0
      %v3015 = vadd.f32 %v2860, %v3014
      %v3016 = vpop.f32.mrf.mxu0
      %v3017 = vadd.f32 %v2862, %v3016
      %3018 = vdwg.mxu0
      %v3019 = vld [vmem:[#allocation2 + $0x8] sm:$0xff]
      %v3020 = vld [vmem:[#allocation2 + $0x10] sm:$0xff]
      %v3021 = vld [vmem:[#allocation2 + $0x18] sm:$0xff]
      %v3022 = vld [vmem:[#allocation2 + $0x20] sm:$0xff]
      %v3023 = vld [vmem:[#allocation2 + $0x28] sm:$0xff]
      %v3024 = vld [vmem:[#allocation2 + $0x30] sm:$0xff]
      %v3025 = vld [vmem:[#allocation2 + $0x38] sm:$0xff]
      %v3026 = vld [vmem:[#allocation2 + $0x40] sm:$0xff]
      %v3027 = vld [vmem:[#allocation2 + $0x48] sm:$0xff]
      %v3028 = vld [vmem:[#allocation2 + $0x50] sm:$0xff]
      %v3029 = vld [vmem:[#allocation2 + $0x58] sm:$0xff]
      %v3030 = vld [vmem:[#allocation2 + $0x60] sm:$0xff]
      %v3031 = vld [vmem:[#allocation2 + $0x68] sm:$0xff]
      %v3032 = vld [vmem:[#allocation2 + $0x70] sm:$0xff]
      %v3033 = vld [vmem:[#allocation2 + $0x78] sm:$0xff]
      %v3034 = vld [vmem:[#allocation2 + $0x80] sm:$0xff]
      %v3035 = vld [vmem:[#allocation2 + $0x88] sm:$0xff]
      %v3036 = vld [vmem:[#allocation2 + $0x90] sm:$0xff]
      %v3037 = vld [vmem:[#allocation2 + $0x98] sm:$0xff]
      %v3038 = vld [vmem:[#allocation2 + $0xa0] sm:$0xff]
      %v3039 = vld [vmem:[#allocation2 + $0xa8] sm:$0xff]
      %v3040 = vld [vmem:[#allocation2 + $0xb0] sm:$0xff]
      %v3041 = vld [vmem:[#allocation2 + $0xb8] sm:$0xff]
      %v3042 = vld [vmem:[#allocation2 + $0xc0] sm:$0xff]
      %v3043 = vld [vmem:[#allocation2 + $0xc8] sm:$0xff]
      %v3044 = vld [vmem:[#allocation2 + $0xd0] sm:$0xff]
      %v3045 = vld [vmem:[#allocation2 + $0xd8] sm:$0xff]
      %v3046 = vld [vmem:[#allocation2 + $0xe0] sm:$0xff]
      %v3047 = vld [vmem:[#allocation2 + $0xe8] sm:$0xff]
      %v3048 = vld [vmem:[#allocation2 + $0xf0] sm:$0xff]
      %v3049 = vld [vmem:[#allocation2 + $0xf8] sm:$0xff]
      %v3050 = vld [vmem:[#allocation2 + $0x100] sm:$0xff]
      %v3051 = vpack.c.bf16 %v3020, %v3019
      %v3052 = vpack.c.bf16 %v3022, %v3021
      %v3053 = vpack.c.bf16 %v3024, %v3023
      %v3054 = vpack.c.bf16 %v3026, %v3025
      %v3055 = vpack.c.bf16 %v3028, %v3027
      %v3056 = vpack.c.bf16 %v3030, %v3029
      %v3057 = vpack.c.bf16 %v3032, %v3031
      %v3058 = vpack.c.bf16 %v3034, %v3033
      %v3059 = vpack.c.bf16 %v3036, %v3035
      %v3060 = vpack.c.bf16 %v3038, %v3037
      %v3061 = vpack.c.bf16 %v3040, %v3039
      %v3062 = vpack.c.bf16 %v3042, %v3041
      %v3063 = vpack.c.bf16 %v3044, %v3043
      %v3064 = vpack.c.bf16 %v3046, %v3045
      %v3065 = vpack.c.bf16 %v3048, %v3047
      %v3066 = vpack.c.bf16 %v3050, %v3049
      %s3067 = scalar_lea.vmem %s5, 40
      %v3068 = vld [vmem:[%s3067] sm:$0xf]
      %v3069 = vld [vmem:[%s3067 + $0x4] sm:$0xf]
      %v3070 = vld [vmem:[%s3067 + $0x8] sm:$0xf]
      %v3071 = vld [vmem:[%s3067 + $0xc] sm:$0xf]
      %v3072 = vld [vmem:[%s3067 + $0x10] sm:$0x3]
      %v3078 = vunpack.c.l.b16 %v3068
      %v3079 = vunpack.c.l.b16 %v3069
      %v3080 = vunpack.c.l.b16 %v3070
      %v3081 = vunpack.c.l.b16 %v3071
      %v3082 = vunpack.c.l.b16 %v3072
      %v3083 = vpack.c.b16 %v3079, %v3078
      %v3084 = vpack.c.b16 %v3081, %v3080
      %v3085 = vpack.c.b16 %v3082, %v3082
      %v3089 = vsel %vm1405, %v3051, 0
      %v3092 = vsel %vm1405, %v3052, 0
      %v3095 = vsel %vm1405, %v3053, 0
      %v3098 = vsel %vm1405, %v3054, 0
      %v3101 = vsel %vm1405, %v3055, 0
      %v3104 = vsel %vm1405, %v3056, 0
      %v3107 = vsel %vm1405, %v3057, 0
      %v3110 = vsel %vm1405, %v3058, 0
      %v3113 = vsel %vm1405, %v3059, 0
      %v3116 = vsel %vm1405, %v3060, 0
      %v3119 = vsel %vm1405, %v3061, 0
      %v3122 = vsel %vm1405, %v3062, 0
      %v3125 = vsel %vm1405, %v3063, 0
      %v3128 = vsel %vm1405, %v3064, 0
      %v3131 = vsel %vm1405, %v3065, 0
      %v3134 = vsel %vm1405, %v3066, 0
      %v3137 = vsel %vm2771, %v3085, 0
      %3139 = vmatpush.bf16.msra.mxu0 0
      %3140 = vmatpush.bf16.msra.mxu0 0
      %3141 = vmatpush.bf16.msra.mxu0 0
      %3142 = vmatpush.bf16.msra.mxu0 0
      %3143 = vmatpush.bf16.msra.mxu0 0
      %3144 = vmatpush.bf16.msra.mxu0 %v3137
      %3145 = vmatpush.bf16.msra.mxu0 %v3084
      %3146 = vmatpush.bf16.msra.mxu0 %v3083
      %3147 = vmatmul.bf16.gmra.mxu0 %v3089
      %v3148 = vpop.f32.mrf.mxu0
      %v3149 = vadd.f32 0.0, %v3148
      %v3150 = vpop.f32.mrf.mxu0
      %v3151 = vadd.f32 0.0, %v3150
      %3152 = vmatmul.bf16.gmra.mxu0 %v3092
      %v3153 = vpop.f32.mrf.mxu0
      %v3154 = vadd.f32 0.0, %v3153
      %v3155 = vpop.f32.mrf.mxu0
      %v3156 = vadd.f32 0.0, %v3155
      %3157 = vmatmul.bf16.gmra.mxu0 %v3095
      %v3158 = vpop.f32.mrf.mxu0
      %v3159 = vadd.f32 0.0, %v3158
      %v3160 = vpop.f32.mrf.mxu0
      %v3161 = vadd.f32 0.0, %v3160
      %3162 = vmatmul.bf16.gmra.mxu0 %v3098
      %v3163 = vpop.f32.mrf.mxu0
      %v3164 = vadd.f32 0.0, %v3163
      %v3165 = vpop.f32.mrf.mxu0
      %v3166 = vadd.f32 0.0, %v3165
      %3167 = vmatmul.bf16.gmra.mxu0 %v3101
      %v3168 = vpop.f32.mrf.mxu0
      %v3169 = vadd.f32 0.0, %v3168
      %v3170 = vpop.f32.mrf.mxu0
      %v3171 = vadd.f32 0.0, %v3170
      %3172 = vmatmul.bf16.gmra.mxu0 %v3104
      %v3173 = vpop.f32.mrf.mxu0
      %v3174 = vadd.f32 0.0, %v3173
      %v3175 = vpop.f32.mrf.mxu0
      %v3176 = vadd.f32 0.0, %v3175
      %3177 = vmatmul.bf16.gmra.mxu0 %v3107
      %v3178 = vpop.f32.mrf.mxu0
      %v3179 = vadd.f32 0.0, %v3178
      %v3180 = vpop.f32.mrf.mxu0
      %v3181 = vadd.f32 0.0, %v3180
      %3182 = vmatmul.bf16.gmra.mxu0 %v3110
      %v3183 = vpop.f32.mrf.mxu0
      %v3184 = vadd.f32 0.0, %v3183
      %v3185 = vpop.f32.mrf.mxu0
      %v3186 = vadd.f32 0.0, %v3185
      %3187 = vmatmul.bf16.gmra.mxu0 %v3113
      %v3188 = vpop.f32.mrf.mxu0
      %v3189 = vadd.f32 0.0, %v3188
      %v3190 = vpop.f32.mrf.mxu0
      %v3191 = vadd.f32 0.0, %v3190
      %3192 = vmatmul.bf16.gmra.mxu0 %v3116
      %v3193 = vpop.f32.mrf.mxu0
      %v3194 = vadd.f32 0.0, %v3193
      %v3195 = vpop.f32.mrf.mxu0
      %v3196 = vadd.f32 0.0, %v3195
      %3197 = vmatmul.bf16.gmra.mxu0 %v3119
      %v3198 = vpop.f32.mrf.mxu0
      %v3199 = vadd.f32 0.0, %v3198
      %v3200 = vpop.f32.mrf.mxu0
      %v3201 = vadd.f32 0.0, %v3200
      %3202 = vmatmul.bf16.gmra.mxu0 %v3122
      %v3203 = vpop.f32.mrf.mxu0
      %v3204 = vadd.f32 0.0, %v3203
      %v3205 = vpop.f32.mrf.mxu0
      %v3206 = vadd.f32 0.0, %v3205
      %3207 = vmatmul.bf16.gmra.mxu0 %v3125
      %v3208 = vpop.f32.mrf.mxu0
      %v3209 = vadd.f32 0.0, %v3208
      %v3210 = vpop.f32.mrf.mxu0
      %v3211 = vadd.f32 0.0, %v3210
      %3212 = vmatmul.bf16.gmra.mxu0 %v3128
      %v3213 = vpop.f32.mrf.mxu0
      %v3214 = vadd.f32 0.0, %v3213
      %v3215 = vpop.f32.mrf.mxu0
      %v3216 = vadd.f32 0.0, %v3215
      %3217 = vmatmul.bf16.gmra.mxu0 %v3131
      %v3218 = vpop.f32.mrf.mxu0
      %v3219 = vadd.f32 0.0, %v3218
      %v3220 = vpop.f32.mrf.mxu0
      %v3221 = vadd.f32 0.0, %v3220
      %3222 = vmatmul.bf16.gmra.mxu0 %v3134
      %v3223 = vpop.f32.mrf.mxu0
      %v3224 = vadd.f32 0.0, %v3223
      %v3225 = vpop.f32.mrf.mxu0
      %v3226 = vadd.f32 0.0, %v3225
      %3227 = vdwg.mxu0
      %v3228 = vadd.f32 %v2940, %v3149
      %v3229 = vadd.f32 %v2942, %v3151
      %v3230 = vadd.f32 %v2945, %v3154
      %v3231 = vadd.f32 %v2947, %v3156
      %v3232 = vadd.f32 %v2950, %v3159
      %v3233 = vadd.f32 %v2952, %v3161
      %v3234 = vadd.f32 %v2955, %v3164
      %v3235 = vadd.f32 %v2957, %v3166
      %v3236 = vadd.f32 %v2960, %v3169
      %v3237 = vadd.f32 %v2962, %v3171
      %v3238 = vadd.f32 %v2965, %v3174
      %v3239 = vadd.f32 %v2967, %v3176
      %v3240 = vadd.f32 %v2970, %v3179
      %v3241 = vadd.f32 %v2972, %v3181
      %v3242 = vadd.f32 %v2975, %v3184
      %v3243 = vadd.f32 %v2977, %v3186
      %v3244 = vadd.f32 %v2980, %v3189
      %v3245 = vadd.f32 %v2982, %v3191
      %v3246 = vadd.f32 %v2985, %v3194
      %v3247 = vadd.f32 %v2987, %v3196
      %v3248 = vadd.f32 %v2990, %v3199
      %v3249 = vadd.f32 %v2992, %v3201
      %v3250 = vadd.f32 %v2995, %v3204
      %v3251 = vadd.f32 %v2997, %v3206
      %v3252 = vadd.f32 %v3000, %v3209
      %v3253 = vadd.f32 %v3002, %v3211
      %v3254 = vadd.f32 %v3005, %v3214
      %v3255 = vadd.f32 %v3007, %v3216
      %v3256 = vadd.f32 %v3010, %v3219
      %v3257 = vadd.f32 %v3012, %v3221
      %v3258 = vadd.f32 %v3015, %v3224
      %v3259 = vadd.f32 %v3017, %v3226
      %v3260 = vld [vmem:[#allocation2 + $0x9] sm:$0xff]
      %v3261 = vld [vmem:[#allocation2 + $0x11] sm:$0xff]
      %v3262 = vld [vmem:[#allocation2 + $0x19] sm:$0xff]
      %v3263 = vld [vmem:[#allocation2 + $0x21] sm:$0xff]
      %v3264 = vld [vmem:[#allocation2 + $0x29] sm:$0xff]
      %v3265 = vld [vmem:[#allocation2 + $0x31] sm:$0xff]
      %v3266 = vld [vmem:[#allocation2 + $0x39] sm:$0xff]
      %v3267 = vld [vmem:[#allocation2 + $0x41] sm:$0xff]
      %v3268 = vld [vmem:[#allocation2 + $0x49] sm:$0xff]
      %v3269 = vld [vmem:[#allocation2 + $0x51] sm:$0xff]
      %v3270 = vld [vmem:[#allocation2 + $0x59] sm:$0xff]
      %v3271 = vld [vmem:[#allocation2 + $0x61] sm:$0xff]
      %v3272 = vld [vmem:[#allocation2 + $0x69] sm:$0xff]
      %v3273 = vld [vmem:[#allocation2 + $0x71] sm:$0xff]
      %v3274 = vld [vmem:[#allocation2 + $0x79] sm:$0xff]
      %v3275 = vld [vmem:[#allocation2 + $0x81] sm:$0xff]
      %v3276 = vld [vmem:[#allocation2 + $0x89] sm:$0xff]
      %v3277 = vld [vmem:[#allocation2 + $0x91] sm:$0xff]
      %v3278 = vld [vmem:[#allocation2 + $0x99] sm:$0xff]
      %v3279 = vld [vmem:[#allocation2 + $0xa1] sm:$0xff]
      %v3280 = vld [vmem:[#allocation2 + $0xa9] sm:$0xff]
      %v3281 = vld [vmem:[#allocation2 + $0xb1] sm:$0xff]
      %v3282 = vld [vmem:[#allocation2 + $0xb9] sm:$0xff]
      %v3283 = vld [vmem:[#allocation2 + $0xc1] sm:$0xff]
      %v3284 = vld [vmem:[#allocation2 + $0xc9] sm:$0xff]
      %v3285 = vld [vmem:[#allocation2 + $0xd1] sm:$0xff]
      %v3286 = vld [vmem:[#allocation2 + $0xd9] sm:$0xff]
      %v3287 = vld [vmem:[#allocation2 + $0xe1] sm:$0xff]
      %v3288 = vld [vmem:[#allocation2 + $0xe9] sm:$0xff]
      %v3289 = vld [vmem:[#allocation2 + $0xf1] sm:$0xff]
      %v3290 = vld [vmem:[#allocation2 + $0xf9] sm:$0xff]
      %v3291 = vld [vmem:[#allocation2 + $0x101] sm:$0xff]
      %v3292 = vsel %vm2249, 1, 0
      %v3293 = vsel %vm2250, 1, 0
      %v3294 = vsel %vm2251, 1, 0
      %v3295 = vsel %vm2252, 1, 0
      %v3296 = vsel %vm2253, 1, 0
      %v3297 = vsel %vm2254, 1, 0
      %v3298 = vsel %vm2255, 1, 0
      %v3299 = vsel %vm2256, 1, 0
      %v3300 = vsel %vm2257, 1, 0
      %v3301 = vsel %vm2258, 1, 0
      %v3302 = vsel %vm2259, 1, 0
      %v3303 = vsel %vm2260, 1, 0
      %v3304 = vsel %vm2261, 1, 0
      %v3305 = vsel %vm2262, 1, 0
      %v3306 = vsel %vm2263, 1, 0
      %v3307 = vsel %vm2264, 1, 0
      %v3308 = vsel %vm2265, 1, 0
      %v3309 = vsel %vm2266, 1, 0
      %v3310 = vsel %vm2267, 1, 0
      %v3311 = vsel %vm2268, 1, 0
      %v3312 = vsel %vm2269, 1, 0
      %v3313 = vsel %vm2270, 1, 0
      %v3314 = vsel %vm2271, 1, 0
      %v3315 = vsel %vm2272, 1, 0
      %v3316 = vsel %vm2273, 1, 0
      %v3317 = vsel %vm2274, 1, 0
      %v3318 = vsel %vm2275, 1, 0
      %v3319 = vsel %vm2276, 1, 0
      %v3320 = vsel %vm2277, 1, 0
      %v3321 = vsel %vm2278, 1, 0
      %v3322 = vsel %vm2279, 1, 0
      %v3323 = vsel %vm2280, 1, 0
      %vm3324 = vcmp.eq.s32.totalorder %v3292, 1
      %vm3325 = vcmp.eq.s32.totalorder %v3293, 1
      %vm3326 = vcmp.eq.s32.totalorder %v3294, 1
      %vm3327 = vcmp.eq.s32.totalorder %v3295, 1
      %vm3328 = vcmp.eq.s32.totalorder %v3296, 1
      %vm3329 = vcmp.eq.s32.totalorder %v3297, 1
      %vm3330 = vcmp.eq.s32.totalorder %v3298, 1
      %vm3331 = vcmp.eq.s32.totalorder %v3299, 1
      %vm3332 = vcmp.eq.s32.totalorder %v3300, 1
      %vm3333 = vcmp.eq.s32.totalorder %v3301, 1
      %vm3334 = vcmp.eq.s32.totalorder %v3302, 1
      %vm3335 = vcmp.eq.s32.totalorder %v3303, 1
      %vm3336 = vcmp.eq.s32.totalorder %v3304, 1
      %vm3337 = vcmp.eq.s32.totalorder %v3305, 1
      %vm3338 = vcmp.eq.s32.totalorder %v3306, 1
      %vm3339 = vcmp.eq.s32.totalorder %v3307, 1
      %vm3340 = vcmp.eq.s32.totalorder %v3308, 1
      %vm3341 = vcmp.eq.s32.totalorder %v3309, 1
      %vm3342 = vcmp.eq.s32.totalorder %v3310, 1
      %vm3343 = vcmp.eq.s32.totalorder %v3311, 1
      %vm3344 = vcmp.eq.s32.totalorder %v3312, 1
      %vm3345 = vcmp.eq.s32.totalorder %v3313, 1
      %vm3346 = vcmp.eq.s32.totalorder %v3314, 1
      %vm3347 = vcmp.eq.s32.totalorder %v3315, 1
      %vm3348 = vcmp.eq.s32.totalorder %v3316, 1
      %vm3349 = vcmp.eq.s32.totalorder %v3317, 1
      %vm3350 = vcmp.eq.s32.totalorder %v3318, 1
      %vm3351 = vcmp.eq.s32.totalorder %v3319, 1
      %vm3352 = vcmp.eq.s32.totalorder %v3320, 1
      %vm3353 = vcmp.eq.s32.totalorder %v3321, 1
      %vm3354 = vcmp.eq.s32.totalorder %v3322, 1
      %vm3355 = vcmp.eq.s32.totalorder %v3323, 1
      %v3356 = vsel %vm3324, %v3260, 0.0
      %v3357 = vsel %vm3325, %v3261, 0.0
      %v3358 = vsel %vm3326, %v3262, 0.0
      %v3359 = vsel %vm3327, %v3263, 0.0
      %v3360 = vsel %vm3328, %v3264, 0.0
      %v3361 = vsel %vm3329, %v3265, 0.0
      %v3362 = vsel %vm3330, %v3266, 0.0
      %v3363 = vsel %vm3331, %v3267, 0.0
      %v3364 = vsel %vm3332, %v3268, 0.0
      %v3365 = vsel %vm3333, %v3269, 0.0
      %v3366 = vsel %vm3334, %v3270, 0.0
      %v3367 = vsel %vm3335, %v3271, 0.0
      %v3368 = vsel %vm3336, %v3272, 0.0
      %v3369 = vsel %vm3337, %v3273, 0.0
      %v3370 = vsel %vm3338, %v3274, 0.0
      %v3371 = vsel %vm3339, %v3275, 0.0
      %v3372 = vsel %vm3340, %v3276, 0.0
      %v3373 = vsel %vm3341, %v3277, 0.0
      %v3374 = vsel %vm3342, %v3278, 0.0
      %v3375 = vsel %vm3343, %v3279, 0.0
      %v3376 = vsel %vm3344, %v3280, 0.0
      %v3377 = vsel %vm3345, %v3281, 0.0
      %v3378 = vsel %vm3346, %v3282, 0.0
      %v3379 = vsel %vm3347, %v3283, 0.0
      %v3380 = vsel %vm3348, %v3284, 0.0
      %v3381 = vsel %vm3349, %v3285, 0.0
      %v3382 = vsel %vm3350, %v3286, 0.0
      %v3383 = vsel %vm3351, %v3287, 0.0
      %v3384 = vsel %vm3352, %v3288, 0.0
      %v3385 = vsel %vm3353, %v3289, 0.0
      %v3386 = vsel %vm3354, %v3290, 0.0
      %v3387 = vsel %vm3355, %v3291, 0.0
      %v3388 = vpack.c.bf16 %v3357, %v3356
      %v3389 = vpack.c.bf16 %v3359, %v3358
      %v3390 = vpack.c.bf16 %v3361, %v3360
      %v3391 = vpack.c.bf16 %v3363, %v3362
      %v3392 = vpack.c.bf16 %v3365, %v3364
      %v3393 = vpack.c.bf16 %v3367, %v3366
      %v3394 = vpack.c.bf16 %v3369, %v3368
      %v3395 = vpack.c.bf16 %v3371, %v3370
      %v3396 = vpack.c.bf16 %v3373, %v3372
      %v3397 = vpack.c.bf16 %v3375, %v3374
      %v3398 = vpack.c.bf16 %v3377, %v3376
      %v3399 = vpack.c.bf16 %v3379, %v3378
      %v3400 = vpack.c.bf16 %v3381, %v3380
      %v3401 = vpack.c.bf16 %v3383, %v3382
      %v3402 = vpack.c.bf16 %v3385, %v3384
      %v3403 = vpack.c.bf16 %v3387, %v3386
      %s3404 = scalar_lea.vmem %s5, 60
      %v3405 = vld [vmem:[%s3404] sm:$0xf]
      %v3406 = vld [vmem:[%s3404 + $0x4] sm:$0xf]
      %v3407 = vld [vmem:[%s3404 + $0x8] sm:$0xf]
      %v3408 = vld [vmem:[%s3404 + $0xc] sm:$0xf]
      %v3409 = vld [vmem:[%s3404 + $0x10] sm:$0x3]
      %v3415 = vunpack.c.l.b16 %v3405
      %v3416 = vunpack.c.l.b16 %v3406
      %v3417 = vunpack.c.l.b16 %v3407
      %v3418 = vunpack.c.l.b16 %v3408
      %v3419 = vunpack.c.l.b16 %v3409
      %v3420 = vpack.c.b16 %v3416, %v3415
      %v3421 = vpack.c.b16 %v3418, %v3417
      %v3422 = vpack.c.b16 %v3419, %v3419
      %v3426 = vsel %vm1405, %v3388, 0
      %v3429 = vsel %vm1405, %v3389, 0
      %v3432 = vsel %vm1405, %v3390, 0
      %v3435 = vsel %vm1405, %v3391, 0
      %v3438 = vsel %vm1405, %v3392, 0
      %v3441 = vsel %vm1405, %v3393, 0
      %v3444 = vsel %vm1405, %v3394, 0
      %v3447 = vsel %vm1405, %v3395, 0
      %v3450 = vsel %vm1405, %v3396, 0
      %v3453 = vsel %vm1405, %v3397, 0
      %v3456 = vsel %vm1405, %v3398, 0
      %v3459 = vsel %vm1405, %v3399, 0
      %v3462 = vsel %vm1405, %v3400, 0
      %v3465 = vsel %vm1405, %v3401, 0
      %v3468 = vsel %vm1405, %v3402, 0
      %v3471 = vsel %vm1405, %v3403, 0
      %v3474 = vsel %vm2771, %v3422, 0
      %3476 = vmatpush.bf16.msra.mxu0 0
      %3477 = vmatpush.bf16.msra.mxu0 0
      %3478 = vmatpush.bf16.msra.mxu0 0
      %3479 = vmatpush.bf16.msra.mxu0 0
      %3480 = vmatpush.bf16.msra.mxu0 0
      %3481 = vmatpush.bf16.msra.mxu0 %v3474
      %3482 = vmatpush.bf16.msra.mxu0 %v3421
      %3483 = vmatpush.bf16.msra.mxu0 %v3420
      %3484 = vmatmul.bf16.gmra.mxu0 %v3426
      %v3485 = vpop.f32.mrf.mxu0
      %v3486 = vadd.f32 0.0, %v3485
      %v3487 = vpop.f32.mrf.mxu0
      %v3488 = vadd.f32 0.0, %v3487
      %3489 = vmatmul.bf16.gmra.mxu0 %v3429
      %v3490 = vpop.f32.mrf.mxu0
      %v3491 = vadd.f32 0.0, %v3490
      %v3492 = vpop.f32.mrf.mxu0
      %v3493 = vadd.f32 0.0, %v3492
      %3494 = vmatmul.bf16.gmra.mxu0 %v3432
      %v3495 = vpop.f32.mrf.mxu0
      %v3496 = vadd.f32 0.0, %v3495
      %v3497 = vpop.f32.mrf.mxu0
      %v3498 = vadd.f32 0.0, %v3497
      %3499 = vmatmul.bf16.gmra.mxu0 %v3435
      %v3500 = vpop.f32.mrf.mxu0
      %v3501 = vadd.f32 0.0, %v3500
      %v3502 = vpop.f32.mrf.mxu0
      %v3503 = vadd.f32 0.0, %v3502
      %3504 = vmatmul.bf16.gmra.mxu0 %v3438
      %v3505 = vpop.f32.mrf.mxu0
      %v3506 = vadd.f32 0.0, %v3505
      %v3507 = vpop.f32.mrf.mxu0
      %v3508 = vadd.f32 0.0, %v3507
      %3509 = vmatmul.bf16.gmra.mxu0 %v3441
      %v3510 = vpop.f32.mrf.mxu0
      %v3511 = vadd.f32 0.0, %v3510
      %v3512 = vpop.f32.mrf.mxu0
      %v3513 = vadd.f32 0.0, %v3512
      %3514 = vmatmul.bf16.gmra.mxu0 %v3444
      %v3515 = vpop.f32.mrf.mxu0
      %v3516 = vadd.f32 0.0, %v3515
      %v3517 = vpop.f32.mrf.mxu0
      %v3518 = vadd.f32 0.0, %v3517
      %3519 = vmatmul.bf16.gmra.mxu0 %v3447
      %v3520 = vpop.f32.mrf.mxu0
      %v3521 = vadd.f32 0.0, %v3520
      %v3522 = vpop.f32.mrf.mxu0
      %v3523 = vadd.f32 0.0, %v3522
      %3524 = vmatmul.bf16.gmra.mxu0 %v3450
      %v3525 = vpop.f32.mrf.mxu0
      %v3526 = vadd.f32 0.0, %v3525
      %v3527 = vpop.f32.mrf.mxu0
      %v3528 = vadd.f32 0.0, %v3527
      %3529 = vmatmul.bf16.gmra.mxu0 %v3453
      %v3530 = vpop.f32.mrf.mxu0
      %v3531 = vadd.f32 0.0, %v3530
      %v3532 = vpop.f32.mrf.mxu0
      %v3533 = vadd.f32 0.0, %v3532
      %3534 = vmatmul.bf16.gmra.mxu0 %v3456
      %v3535 = vpop.f32.mrf.mxu0
      %v3536 = vadd.f32 0.0, %v3535
      %v3537 = vpop.f32.mrf.mxu0
      %v3538 = vadd.f32 0.0, %v3537
      %3539 = vmatmul.bf16.gmra.mxu0 %v3459
      %v3540 = vpop.f32.mrf.mxu0
      %v3541 = vadd.f32 0.0, %v3540
      %v3542 = vpop.f32.mrf.mxu0
      %v3543 = vadd.f32 0.0, %v3542
      %3544 = vmatmul.bf16.gmra.mxu0 %v3462
      %v3545 = vpop.f32.mrf.mxu0
      %v3546 = vadd.f32 0.0, %v3545
      %v3547 = vpop.f32.mrf.mxu0
      %v3548 = vadd.f32 0.0, %v3547
      %3549 = vmatmul.bf16.gmra.mxu0 %v3465
      %v3550 = vpop.f32.mrf.mxu0
      %v3551 = vadd.f32 0.0, %v3550
      %v3552 = vpop.f32.mrf.mxu0
      %v3553 = vadd.f32 0.0, %v3552
      %3554 = vmatmul.bf16.gmra.mxu0 %v3468
      %v3555 = vpop.f32.mrf.mxu0
      %v3556 = vadd.f32 0.0, %v3555
      %v3557 = vpop.f32.mrf.mxu0
      %v3558 = vadd.f32 0.0, %v3557
      %3559 = vmatmul.bf16.gmra.mxu0 %v3471
      %v3560 = vpop.f32.mrf.mxu0
      %v3561 = vadd.f32 0.0, %v3560
      %v3562 = vpop.f32.mrf.mxu0
      %v3563 = vadd.f32 0.0, %v3562
      %3564 = vdwg.mxu0
      %v3565 = vadd.f32 %v3228, %v3486
      %v3566 = vadd.f32 %v3229, %v3488
      %v3567 = vadd.f32 %v3230, %v3491
      %v3568 = vadd.f32 %v3231, %v3493
      %v3569 = vadd.f32 %v3232, %v3496
      %v3570 = vadd.f32 %v3233, %v3498
      %v3571 = vadd.f32 %v3234, %v3501
      %v3572 = vadd.f32 %v3235, %v3503
      %v3573 = vadd.f32 %v3236, %v3506
      %v3574 = vadd.f32 %v3237, %v3508
      %v3575 = vadd.f32 %v3238, %v3511
      %v3576 = vadd.f32 %v3239, %v3513
      %v3577 = vadd.f32 %v3240, %v3516
      %v3578 = vadd.f32 %v3241, %v3518
      %v3579 = vadd.f32 %v3242, %v3521
      %v3580 = vadd.f32 %v3243, %v3523
      %v3581 = vadd.f32 %v3244, %v3526
      %v3582 = vadd.f32 %v3245, %v3528
      %v3583 = vadd.f32 %v3246, %v3531
      %v3584 = vadd.f32 %v3247, %v3533
      %v3585 = vadd.f32 %v3248, %v3536
      %v3586 = vadd.f32 %v3249, %v3538
      %v3587 = vadd.f32 %v3250, %v3541
      %v3588 = vadd.f32 %v3251, %v3543
      %v3589 = vadd.f32 %v3252, %v3546
      %v3590 = vadd.f32 %v3253, %v3548
      %v3591 = vadd.f32 %v3254, %v3551
      %v3592 = vadd.f32 %v3255, %v3553
      %v3593 = vadd.f32 %v3256, %v3556
      %v3594 = vadd.f32 %v3257, %v3558
      %v3595 = vadd.f32 %v3258, %v3561
      %v3596 = vadd.f32 %v3259, %v3563
      %v3597 = vld [vmem:[#allocation2 + $0xa] sm:$0xff]
      %v3598 = vld [vmem:[#allocation2 + $0x12] sm:$0xff]
      %v3599 = vld [vmem:[#allocation2 + $0x1a] sm:$0xff]
      %v3600 = vld [vmem:[#allocation2 + $0x22] sm:$0xff]
      %v3601 = vld [vmem:[#allocation2 + $0x2a] sm:$0xff]
      %v3602 = vld [vmem:[#allocation2 + $0x32] sm:$0xff]
      %v3603 = vld [vmem:[#allocation2 + $0x3a] sm:$0xff]
      %v3604 = vld [vmem:[#allocation2 + $0x42] sm:$0xff]
      %v3605 = vld [vmem:[#allocation2 + $0x4a] sm:$0xff]
      %v3606 = vld [vmem:[#allocation2 + $0x52] sm:$0xff]
      %v3607 = vld [vmem:[#allocation2 + $0x5a] sm:$0xff]
      %v3608 = vld [vmem:[#allocation2 + $0x62] sm:$0xff]
      %v3609 = vld [vmem:[#allocation2 + $0x6a] sm:$0xff]
      %v3610 = vld [vmem:[#allocation2 + $0x72] sm:$0xff]
      %v3611 = vld [vmem:[#allocation2 + $0x7a] sm:$0xff]
      %v3612 = vld [vmem:[#allocation2 + $0x82] sm:$0xff]
      %v3613 = vld [vmem:[#allocation2 + $0x8a] sm:$0xff]
      %v3614 = vld [vmem:[#allocation2 + $0x92] sm:$0xff]
      %v3615 = vld [vmem:[#allocation2 + $0x9a] sm:$0xff]
      %v3616 = vld [vmem:[#allocation2 + $0xa2] sm:$0xff]
      %v3617 = vld [vmem:[#allocation2 + $0xaa] sm:$0xff]
      %v3618 = vld [vmem:[#allocation2 + $0xb2] sm:$0xff]
      %v3619 = vld [vmem:[#allocation2 + $0xba] sm:$0xff]
      %v3620 = vld [vmem:[#allocation2 + $0xc2] sm:$0xff]
      %v3621 = vld [vmem:[#allocation2 + $0xca] sm:$0xff]
      %v3622 = vld [vmem:[#allocation2 + $0xd2] sm:$0xff]
      %v3623 = vld [vmem:[#allocation2 + $0xda] sm:$0xff]
      %v3624 = vld [vmem:[#allocation2 + $0xe2] sm:$0xff]
      %v3625 = vld [vmem:[#allocation2 + $0xea] sm:$0xff]
      %v3626 = vld [vmem:[#allocation2 + $0xf2] sm:$0xff]
      %v3627 = vld [vmem:[#allocation2 + $0xfa] sm:$0xff]
      %v3628 = vld [vmem:[#allocation2 + $0x102] sm:$0xff]
      %v3629 = vsel %vm2377, 1, 0
      %v3630 = vsel %vm2378, 1, 0
      %v3631 = vsel %vm2379, 1, 0
      %v3632 = vsel %vm2380, 1, 0
      %v3633 = vsel %vm2381, 1, 0
      %v3634 = vsel %vm2382, 1, 0
      %v3635 = vsel %vm2383, 1, 0
      %v3636 = vsel %vm2384, 1, 0
      %v3637 = vsel %vm2385, 1, 0
      %v3638 = vsel %vm2386, 1, 0
      %v3639 = vsel %vm2387, 1, 0
      %v3640 = vsel %vm2388, 1, 0
      %v3641 = vsel %vm2389, 1, 0
      %v3642 = vsel %vm2390, 1, 0
      %v3643 = vsel %vm2391, 1, 0
      %v3644 = vsel %vm2392, 1, 0
      %v3645 = vsel %vm2393, 1, 0
      %v3646 = vsel %vm2394, 1, 0
      %v3647 = vsel %vm2395, 1, 0
      %v3648 = vsel %vm2396, 1, 0
      %v3649 = vsel %vm2397, 1, 0
      %v3650 = vsel %vm2398, 1, 0
      %v3651 = vsel %vm2399, 1, 0
      %v3652 = vsel %vm2400, 1, 0
      %v3653 = vsel %vm2401, 1, 0
      %v3654 = vsel %vm2402, 1, 0
      %v3655 = vsel %vm2403, 1, 0
      %v3656 = vsel %vm2404, 1, 0
      %v3657 = vsel %vm2405, 1, 0
      %v3658 = vsel %vm2406, 1, 0
      %v3659 = vsel %vm2407, 1, 0
      %v3660 = vsel %vm2408, 1, 0
      %vm3661 = vcmp.eq.s32.totalorder %v3629, 1
      %vm3662 = vcmp.eq.s32.totalorder %v3630, 1
      %vm3663 = vcmp.eq.s32.totalorder %v3631, 1
      %vm3664 = vcmp.eq.s32.totalorder %v3632, 1
      %vm3665 = vcmp.eq.s32.totalorder %v3633, 1
      %vm3666 = vcmp.eq.s32.totalorder %v3634, 1
      %vm3667 = vcmp.eq.s32.totalorder %v3635, 1
      %vm3668 = vcmp.eq.s32.totalorder %v3636, 1
      %vm3669 = vcmp.eq.s32.totalorder %v3637, 1
      %vm3670 = vcmp.eq.s32.totalorder %v3638, 1
      %vm3671 = vcmp.eq.s32.totalorder %v3639, 1
      %vm3672 = vcmp.eq.s32.totalorder %v3640, 1
      %vm3673 = vcmp.eq.s32.totalorder %v3641, 1
      %vm3674 = vcmp.eq.s32.totalorder %v3642, 1
      %vm3675 = vcmp.eq.s32.totalorder %v3643, 1
      %vm3676 = vcmp.eq.s32.totalorder %v3644, 1
      %vm3677 = vcmp.eq.s32.totalorder %v3645, 1
      %vm3678 = vcmp.eq.s32.totalorder %v3646, 1
      %vm3679 = vcmp.eq.s32.totalorder %v3647, 1
      %vm3680 = vcmp.eq.s32.totalorder %v3648, 1
      %vm3681 = vcmp.eq.s32.totalorder %v3649, 1
      %vm3682 = vcmp.eq.s32.totalorder %v3650, 1
      %vm3683 = vcmp.eq.s32.totalorder %v3651, 1
      %vm3684 = vcmp.eq.s32.totalorder %v3652, 1
      %vm3685 = vcmp.eq.s32.totalorder %v3653, 1
      %vm3686 = vcmp.eq.s32.totalorder %v3654, 1
      %vm3687 = vcmp.eq.s32.totalorder %v3655, 1
      %vm3688 = vcmp.eq.s32.totalorder %v3656, 1
      %vm3689 = vcmp.eq.s32.totalorder %v3657, 1
      %vm3690 = vcmp.eq.s32.totalorder %v3658, 1
      %vm3691 = vcmp.eq.s32.totalorder %v3659, 1
      %vm3692 = vcmp.eq.s32.totalorder %v3660, 1
      %v3693 = vsel %vm3661, %v3597, 0.0
      %v3694 = vsel %vm3662, %v3598, 0.0
      %v3695 = vsel %vm3663, %v3599, 0.0
      %v3696 = vsel %vm3664, %v3600, 0.0
      %v3697 = vsel %vm3665, %v3601, 0.0
      %v3698 = vsel %vm3666, %v3602, 0.0
      %v3699 = vsel %vm3667, %v3603, 0.0
      %v3700 = vsel %vm3668, %v3604, 0.0
      %v3701 = vsel %vm3669, %v3605, 0.0
      %v3702 = vsel %vm3670, %v3606, 0.0
      %v3703 = vsel %vm3671, %v3607, 0.0
      %v3704 = vsel %vm3672, %v3608, 0.0
      %v3705 = vsel %vm3673, %v3609, 0.0
      %v3706 = vsel %vm3674, %v3610, 0.0
      %v3707 = vsel %vm3675, %v3611, 0.0
      %v3708 = vsel %vm3676, %v3612, 0.0
      %v3709 = vsel %vm3677, %v3613, 0.0
      %v3710 = vsel %vm3678, %v3614, 0.0
      %v3711 = vsel %vm3679, %v3615, 0.0
      %v3712 = vsel %vm3680, %v3616, 0.0
      %v3713 = vsel %vm3681, %v3617, 0.0
      %v3714 = vsel %vm3682, %v3618, 0.0
      %v3715 = vsel %vm3683, %v3619, 0.0
      %v3716 = vsel %vm3684, %v3620, 0.0
      %v3717 = vsel %vm3685, %v3621, 0.0
      %v3718 = vsel %vm3686, %v3622, 0.0
      %v3719 = vsel %vm3687, %v3623, 0.0
      %v3720 = vsel %vm3688, %v3624, 0.0
      %v3721 = vsel %vm3689, %v3625, 0.0
      %v3722 = vsel %vm3690, %v3626, 0.0
      %v3723 = vsel %vm3691, %v3627, 0.0
      %v3724 = vsel %vm3692, %v3628, 0.0
      %v3725 = vpack.c.bf16 %v3694, %v3693
      %v3726 = vpack.c.bf16 %v3696, %v3695
      %v3727 = vpack.c.bf16 %v3698, %v3697
      %v3728 = vpack.c.bf16 %v3700, %v3699
      %v3729 = vpack.c.bf16 %v3702, %v3701
      %v3730 = vpack.c.bf16 %v3704, %v3703
      %v3731 = vpack.c.bf16 %v3706, %v3705
      %v3732 = vpack.c.bf16 %v3708, %v3707
      %v3733 = vpack.c.bf16 %v3710, %v3709
      %v3734 = vpack.c.bf16 %v3712, %v3711
      %v3735 = vpack.c.bf16 %v3714, %v3713
      %v3736 = vpack.c.bf16 %v3716, %v3715
      %v3737 = vpack.c.bf16 %v3718, %v3717
      %v3738 = vpack.c.bf16 %v3720, %v3719
      %v3739 = vpack.c.bf16 %v3722, %v3721
      %v3740 = vpack.c.bf16 %v3724, %v3723
      %s3741 = scalar_lea.vmem %s5, 80
      %v3742 = vld [vmem:[%s3741] sm:$0xf]
      %v3743 = vld [vmem:[%s3741 + $0x4] sm:$0xf]
      %v3744 = vld [vmem:[%s3741 + $0x8] sm:$0xf]
      %v3745 = vld [vmem:[%s3741 + $0xc] sm:$0xf]
      %v3746 = vld [vmem:[%s3741 + $0x10] sm:$0x3]
      %v3752 = vunpack.c.l.b16 %v3742
      %v3753 = vunpack.c.l.b16 %v3743
      %v3754 = vunpack.c.l.b16 %v3744
      %v3755 = vunpack.c.l.b16 %v3745
      %v3756 = vunpack.c.l.b16 %v3746
      %v3757 = vpack.c.b16 %v3753, %v3752
      %v3758 = vpack.c.b16 %v3755, %v3754
      %v3759 = vpack.c.b16 %v3756, %v3756
      %v3763 = vsel %vm1405, %v3725, 0
      %v3766 = vsel %vm1405, %v3726, 0
      %v3769 = vsel %vm1405, %v3727, 0
      %v3772 = vsel %vm1405, %v3728, 0
      %v3775 = vsel %vm1405, %v3729, 0
      %v3778 = vsel %vm1405, %v3730, 0
      %v3781 = vsel %vm1405, %v3731, 0
      %v3784 = vsel %vm1405, %v3732, 0
      %v3787 = vsel %vm1405, %v3733, 0
      %v3790 = vsel %vm1405, %v3734, 0
      %v3793 = vsel %vm1405, %v3735, 0
      %v3796 = vsel %vm1405, %v3736, 0
      %v3799 = vsel %vm1405, %v3737, 0
      %v3802 = vsel %vm1405, %v3738, 0
      %v3805 = vsel %vm1405, %v3739, 0
      %v3808 = vsel %vm1405, %v3740, 0
      %v3811 = vsel %vm2771, %v3759, 0
      %3813 = vmatpush.bf16.msra.mxu0 0
      %3814 = vmatpush.bf16.msra.mxu0 0
      %3815 = vmatpush.bf16.msra.mxu0 0
      %3816 = vmatpush.bf16.msra.mxu0 0
      %3817 = vmatpush.bf16.msra.mxu0 0
      %3818 = vmatpush.bf16.msra.mxu0 %v3811
      %3819 = vmatpush.bf16.msra.mxu0 %v3758
      %3820 = vmatpush.bf16.msra.mxu0 %v3757
      %3821 = vmatmul.bf16.gmra.mxu0 %v3763
      %v3822 = vpop.f32.mrf.mxu0
      %v3823 = vadd.f32 0.0, %v3822
      %v3824 = vpop.f32.mrf.mxu0
      %v3825 = vadd.f32 0.0, %v3824
      %3826 = vmatmul.bf16.gmra.mxu0 %v3766
      %v3827 = vpop.f32.mrf.mxu0
      %v3828 = vadd.f32 0.0, %v3827
      %v3829 = vpop.f32.mrf.mxu0
      %v3830 = vadd.f32 0.0, %v3829
      %3831 = vmatmul.bf16.gmra.mxu0 %v3769
      %v3832 = vpop.f32.mrf.mxu0
      %v3833 = vadd.f32 0.0, %v3832
      %v3834 = vpop.f32.mrf.mxu0
      %v3835 = vadd.f32 0.0, %v3834
      %3836 = vmatmul.bf16.gmra.mxu0 %v3772
      %v3837 = vpop.f32.mrf.mxu0
      %v3838 = vadd.f32 0.0, %v3837
      %v3839 = vpop.f32.mrf.mxu0
      %v3840 = vadd.f32 0.0, %v3839
      %3841 = vmatmul.bf16.gmra.mxu0 %v3775
      %v3842 = vpop.f32.mrf.mxu0
      %v3843 = vadd.f32 0.0, %v3842
      %v3844 = vpop.f32.mrf.mxu0
      %v3845 = vadd.f32 0.0, %v3844
      %3846 = vmatmul.bf16.gmra.mxu0 %v3778
      %v3847 = vpop.f32.mrf.mxu0
      %v3848 = vadd.f32 0.0, %v3847
      %v3849 = vpop.f32.mrf.mxu0
      %v3850 = vadd.f32 0.0, %v3849
      %3851 = vmatmul.bf16.gmra.mxu0 %v3781
      %v3852 = vpop.f32.mrf.mxu0
      %v3853 = vadd.f32 0.0, %v3852
      %v3854 = vpop.f32.mrf.mxu0
      %v3855 = vadd.f32 0.0, %v3854
      %3856 = vmatmul.bf16.gmra.mxu0 %v3784
      %v3857 = vpop.f32.mrf.mxu0
      %v3858 = vadd.f32 0.0, %v3857
      %v3859 = vpop.f32.mrf.mxu0
      %v3860 = vadd.f32 0.0, %v3859
      %3861 = vmatmul.bf16.gmra.mxu0 %v3787
      %v3862 = vpop.f32.mrf.mxu0
      %v3863 = vadd.f32 0.0, %v3862
      %v3864 = vpop.f32.mrf.mxu0
      %v3865 = vadd.f32 0.0, %v3864
      %3866 = vmatmul.bf16.gmra.mxu0 %v3790
      %v3867 = vpop.f32.mrf.mxu0
      %v3868 = vadd.f32 0.0, %v3867
      %v3869 = vpop.f32.mrf.mxu0
      %v3870 = vadd.f32 0.0, %v3869
      %3871 = vmatmul.bf16.gmra.mxu0 %v3793
      %v3872 = vpop.f32.mrf.mxu0
      %v3873 = vadd.f32 0.0, %v3872
      %v3874 = vpop.f32.mrf.mxu0
      %v3875 = vadd.f32 0.0, %v3874
      %3876 = vmatmul.bf16.gmra.mxu0 %v3796
      %v3877 = vpop.f32.mrf.mxu0
      %v3878 = vadd.f32 0.0, %v3877
      %v3879 = vpop.f32.mrf.mxu0
      %v3880 = vadd.f32 0.0, %v3879
      %3881 = vmatmul.bf16.gmra.mxu0 %v3799
      %v3882 = vpop.f32.mrf.mxu0
      %v3883 = vadd.f32 0.0, %v3882
      %v3884 = vpop.f32.mrf.mxu0
      %v3885 = vadd.f32 0.0, %v3884
      %3886 = vmatmul.bf16.gmra.mxu0 %v3802
      %v3887 = vpop.f32.mrf.mxu0
      %v3888 = vadd.f32 0.0, %v3887
      %v3889 = vpop.f32.mrf.mxu0
      %v3890 = vadd.f32 0.0, %v3889
      %3891 = vmatmul.bf16.gmra.mxu0 %v3805
      %v3892 = vpop.f32.mrf.mxu0
      %v3893 = vadd.f32 0.0, %v3892
      %v3894 = vpop.f32.mrf.mxu0
      %v3895 = vadd.f32 0.0, %v3894
      %3896 = vmatmul.bf16.gmra.mxu0 %v3808
      %v3897 = vpop.f32.mrf.mxu0
      %v3898 = vadd.f32 0.0, %v3897
      %v3899 = vpop.f32.mrf.mxu0
      %v3900 = vadd.f32 0.0, %v3899
      %3901 = vdwg.mxu0
      %v3902 = vadd.f32 %v3565, %v3823
      %v3903 = vadd.f32 %v3566, %v3825
      %v3904 = vadd.f32 %v3567, %v3828
      %v3905 = vadd.f32 %v3568, %v3830
      %v3906 = vadd.f32 %v3569, %v3833
      %v3907 = vadd.f32 %v3570, %v3835
      %v3908 = vadd.f32 %v3571, %v3838
      %v3909 = vadd.f32 %v3572, %v3840
      %v3910 = vadd.f32 %v3573, %v3843
      %v3911 = vadd.f32 %v3574, %v3845
      %v3912 = vadd.f32 %v3575, %v3848
      %v3913 = vadd.f32 %v3576, %v3850
      %v3914 = vadd.f32 %v3577, %v3853
      %v3915 = vadd.f32 %v3578, %v3855
      %v3916 = vadd.f32 %v3579, %v3858
      %v3917 = vadd.f32 %v3580, %v3860
      %v3918 = vadd.f32 %v3581, %v3863
      %v3919 = vadd.f32 %v3582, %v3865
      %v3920 = vadd.f32 %v3583, %v3868
      %v3921 = vadd.f32 %v3584, %v3870
      %v3922 = vadd.f32 %v3585, %v3873
      %v3923 = vadd.f32 %v3586, %v3875
      %v3924 = vadd.f32 %v3587, %v3878
      %v3925 = vadd.f32 %v3588, %v3880
      %v3926 = vadd.f32 %v3589, %v3883
      %v3927 = vadd.f32 %v3590, %v3885
      %v3928 = vadd.f32 %v3591, %v3888
      %v3929 = vadd.f32 %v3592, %v3890
      %v3930 = vadd.f32 %v3593, %v3893
      %v3931 = vadd.f32 %v3594, %v3895
      %v3932 = vadd.f32 %v3595, %v3898
      %v3933 = vadd.f32 %v3596, %v3900
      %v3934 = vld [vmem:[#allocation2 + $0x16] sm:$0xff]
      %v3935 = vld [vmem:[#allocation2 + $0x1e] sm:$0xff]
      %v3936 = vld [vmem:[#allocation2 + $0x26] sm:$0xff]
      %v3937 = vld [vmem:[#allocation2 + $0x2e] sm:$0xff]
      %v3938 = vld [vmem:[#allocation2 + $0x36] sm:$0xff]
      %v3939 = vld [vmem:[#allocation2 + $0x3e] sm:$0xff]
      %v3940 = vld [vmem:[#allocation2 + $0x46] sm:$0xff]
      %v3941 = vld [vmem:[#allocation2 + $0x4e] sm:$0xff]
      %v3942 = vld [vmem:[#allocation2 + $0x56] sm:$0xff]
      %v3943 = vld [vmem:[#allocation2 + $0x5e] sm:$0xff]
      %v3944 = vld [vmem:[#allocation2 + $0x66] sm:$0xff]
      %v3945 = vld [vmem:[#allocation2 + $0x6e] sm:$0xff]
      %v3946 = vld [vmem:[#allocation2 + $0x76] sm:$0xff]
      %v3947 = vld [vmem:[#allocation2 + $0x7e] sm:$0xff]
      %v3948 = vld [vmem:[#allocation2 + $0x86] sm:$0xff]
      %v3949 = vld [vmem:[#allocation2 + $0x8e] sm:$0xff]
      %v3950 = vld [vmem:[#allocation2 + $0x96] sm:$0xff]
      %v3951 = vld [vmem:[#allocation2 + $0x9e] sm:$0xff]
      %v3952 = vld [vmem:[#allocation2 + $0xa6] sm:$0xff]
      %v3953 = vld [vmem:[#allocation2 + $0xae] sm:$0xff]
      %v3954 = vld [vmem:[#allocation2 + $0xb6] sm:$0xff]
      %v3955 = vld [vmem:[#allocation2 + $0xbe] sm:$0xff]
      %v3956 = vld [vmem:[#allocation2 + $0xc6] sm:$0xff]
      %v3957 = vld [vmem:[#allocation2 + $0xce] sm:$0xff]
      %v3958 = vld [vmem:[#allocation2 + $0xd6] sm:$0xff]
      %v3959 = vld [vmem:[#allocation2 + $0xde] sm:$0xff]
      %v3960 = vld [vmem:[#allocation2 + $0xe6] sm:$0xff]
      %v3961 = vld [vmem:[#allocation2 + $0xee] sm:$0xff]
      %v3962 = vld [vmem:[#allocation2 + $0xf6] sm:$0xff]
      %v3963 = vld [vmem:[#allocation2 + $0xfe] sm:$0xff]
      %v3964 = vld [vmem:[#allocation2 + $0x106] sm:$0xff]
      %v3965 = vld [vmem:[#allocation2 + $0x10e] sm:$0xff]
      %v3966 = vsel %vm2473, %v3934, 0.0
      %v3967 = vsel %vm2474, %v3935, 0.0
      %v3968 = vsel %vm2475, %v3936, 0.0
      %v3969 = vsel %vm2476, %v3937, 0.0
      %v3970 = vsel %vm2477, %v3938, 0.0
      %v3971 = vsel %vm2478, %v3939, 0.0
      %v3972 = vsel %vm2479, %v3940, 0.0
      %v3973 = vsel %vm2480, %v3941, 0.0
      %v3974 = vsel %vm2481, %v3942, 0.0
      %v3975 = vsel %vm2482, %v3943, 0.0
      %v3976 = vsel %vm2483, %v3944, 0.0
      %v3977 = vsel %vm2484, %v3945, 0.0
      %v3978 = vsel %vm2485, %v3946, 0.0
      %v3979 = vsel %vm2486, %v3947, 0.0
      %v3980 = vsel %vm2487, %v3948, 0.0
      %v3981 = vsel %vm2488, %v3949, 0.0
      %v3982 = vsel %vm2489, %v3950, 0.0
      %v3983 = vsel %vm2490, %v3951, 0.0
      %v3984 = vsel %vm2491, %v3952, 0.0
      %v3985 = vsel %vm2492, %v3953, 0.0
      %v3986 = vsel %vm2493, %v3954, 0.0
      %v3987 = vsel %vm2494, %v3955, 0.0
      %v3988 = vsel %vm2495, %v3956, 0.0
      %v3989 = vsel %vm2496, %v3957, 0.0
      %v3990 = vsel %vm2497, %v3958, 0.0
      %v3991 = vsel %vm2498, %v3959, 0.0
      %v3992 = vsel %vm2499, %v3960, 0.0
      %v3993 = vsel %vm2500, %v3961, 0.0
      %v3994 = vsel %vm2501, %v3962, 0.0
      %v3995 = vsel %vm2502, %v3963, 0.0
      %v3996 = vsel %vm2503, %v3964, 0.0
      %v3997 = vsel %vm2504, %v3965, 0.0
      %v3998 = vpack.c.bf16 %v3967, %v3966
      %v3999 = vpack.c.bf16 %v3969, %v3968
      %v4000 = vpack.c.bf16 %v3971, %v3970
      %v4001 = vpack.c.bf16 %v3973, %v3972
      %v4002 = vpack.c.bf16 %v3975, %v3974
      %v4003 = vpack.c.bf16 %v3977, %v3976
      %v4004 = vpack.c.bf16 %v3979, %v3978
      %v4005 = vpack.c.bf16 %v3981, %v3980
      %v4006 = vpack.c.bf16 %v3983, %v3982
      %v4007 = vpack.c.bf16 %v3985, %v3984
      %v4008 = vpack.c.bf16 %v3987, %v3986
      %v4009 = vpack.c.bf16 %v3989, %v3988
      %v4010 = vpack.c.bf16 %v3991, %v3990
      %v4011 = vpack.c.bf16 %v3993, %v3992
      %v4012 = vpack.c.bf16 %v3995, %v3994
      %v4013 = vpack.c.bf16 %v3997, %v3996
      %s4014 = scalar_lea.vmem %s5, 100
      %v4015 = vld [vmem:[%s4014] sm:$0xf]
      %v4016 = vld [vmem:[%s4014 + $0x4] sm:$0xf]
      %v4017 = vld [vmem:[%s4014 + $0x8] sm:$0xf]
      %v4018 = vld [vmem:[%s4014 + $0xc] sm:$0xf]
      %v4019 = vld [vmem:[%s4014 + $0x10] sm:$0x3]
      %v4025 = vunpack.c.l.b16 %v4015
      %v4026 = vunpack.c.l.b16 %v4016
      %v4027 = vunpack.c.l.b16 %v4017
      %v4028 = vunpack.c.l.b16 %v4018
      %v4029 = vunpack.c.l.b16 %v4019
      %v4030 = vpack.c.b16 %v4026, %v4025
      %v4031 = vpack.c.b16 %v4028, %v4027
      %v4032 = vpack.c.b16 %v4029, %v4029
      %v4036 = vsel %vm1405, %v3998, 0
      %v4039 = vsel %vm1405, %v3999, 0
      %v4042 = vsel %vm1405, %v4000, 0
      %v4045 = vsel %vm1405, %v4001, 0
      %v4048 = vsel %vm1405, %v4002, 0
      %v4051 = vsel %vm1405, %v4003, 0
      %v4054 = vsel %vm1405, %v4004, 0
      %v4057 = vsel %vm1405, %v4005, 0
      %v4060 = vsel %vm1405, %v4006, 0
      %v4063 = vsel %vm1405, %v4007, 0
      %v4066 = vsel %vm1405, %v4008, 0
      %v4069 = vsel %vm1405, %v4009, 0
      %v4072 = vsel %vm1405, %v4010, 0
      %v4075 = vsel %vm1405, %v4011, 0
      %v4078 = vsel %vm1405, %v4012, 0
      %v4081 = vsel %vm1405, %v4013, 0
      %v4084 = vsel %vm2771, %v4032, 0
      %4086 = vmatpush.bf16.msra.mxu0 0
      %4087 = vmatpush.bf16.msra.mxu0 0
      %4088 = vmatpush.bf16.msra.mxu0 0
      %4089 = vmatpush.bf16.msra.mxu0 0
      %4090 = vmatpush.bf16.msra.mxu0 0
      %4091 = vmatpush.bf16.msra.mxu0 %v4084
      %4092 = vmatpush.bf16.msra.mxu0 %v4031
      %4093 = vmatpush.bf16.msra.mxu0 %v4030
      %4094 = vmatmul.bf16.gmra.mxu0 %v4036
      %v4095 = vpop.f32.mrf.mxu0
      %v4096 = vadd.f32 0.0, %v4095
      %v4097 = vpop.f32.mrf.mxu0
      %v4098 = vadd.f32 0.0, %v4097
      %4099 = vmatmul.bf16.gmra.mxu0 %v4039
      %v4100 = vpop.f32.mrf.mxu0
      %v4101 = vadd.f32 0.0, %v4100
      %v4102 = vpop.f32.mrf.mxu0
      %v4103 = vadd.f32 0.0, %v4102
      %4104 = vmatmul.bf16.gmra.mxu0 %v4042
      %v4105 = vpop.f32.mrf.mxu0
      %v4106 = vadd.f32 0.0, %v4105
      %v4107 = vpop.f32.mrf.mxu0
      %v4108 = vadd.f32 0.0, %v4107
      %4109 = vmatmul.bf16.gmra.mxu0 %v4045
      %v4110 = vpop.f32.mrf.mxu0
      %v4111 = vadd.f32 0.0, %v4110
      %v4112 = vpop.f32.mrf.mxu0
      %v4113 = vadd.f32 0.0, %v4112
      %4114 = vmatmul.bf16.gmra.mxu0 %v4048
      %v4115 = vpop.f32.mrf.mxu0
      %v4116 = vadd.f32 0.0, %v4115
      %v4117 = vpop.f32.mrf.mxu0
      %v4118 = vadd.f32 0.0, %v4117
      %4119 = vmatmul.bf16.gmra.mxu0 %v4051
      %v4120 = vpop.f32.mrf.mxu0
      %v4121 = vadd.f32 0.0, %v4120
      %v4122 = vpop.f32.mrf.mxu0
      %v4123 = vadd.f32 0.0, %v4122
      %4124 = vmatmul.bf16.gmra.mxu0 %v4054
      %v4125 = vpop.f32.mrf.mxu0
      %v4126 = vadd.f32 0.0, %v4125
      %v4127 = vpop.f32.mrf.mxu0
      %v4128 = vadd.f32 0.0, %v4127
      %4129 = vmatmul.bf16.gmra.mxu0 %v4057
      %v4130 = vpop.f32.mrf.mxu0
      %v4131 = vadd.f32 0.0, %v4130
      %v4132 = vpop.f32.mrf.mxu0
      %v4133 = vadd.f32 0.0, %v4132
      %4134 = vmatmul.bf16.gmra.mxu0 %v4060
      %v4135 = vpop.f32.mrf.mxu0
      %v4136 = vadd.f32 0.0, %v4135
      %v4137 = vpop.f32.mrf.mxu0
      %v4138 = vadd.f32 0.0, %v4137
      %4139 = vmatmul.bf16.gmra.mxu0 %v4063
      %v4140 = vpop.f32.mrf.mxu0
      %v4141 = vadd.f32 0.0, %v4140
      %v4142 = vpop.f32.mrf.mxu0
      %v4143 = vadd.f32 0.0, %v4142
      %4144 = vmatmul.bf16.gmra.mxu0 %v4066
      %v4145 = vpop.f32.mrf.mxu0
      %v4146 = vadd.f32 0.0, %v4145
      %v4147 = vpop.f32.mrf.mxu0
      %v4148 = vadd.f32 0.0, %v4147
      %4149 = vmatmul.bf16.gmra.mxu0 %v4069
      %v4150 = vpop.f32.mrf.mxu0
      %v4151 = vadd.f32 0.0, %v4150
      %v4152 = vpop.f32.mrf.mxu0
      %v4153 = vadd.f32 0.0, %v4152
      %4154 = vmatmul.bf16.gmra.mxu0 %v4072
      %v4155 = vpop.f32.mrf.mxu0
      %v4156 = vadd.f32 0.0, %v4155
      %v4157 = vpop.f32.mrf.mxu0
      %v4158 = vadd.f32 0.0, %v4157
      %4159 = vmatmul.bf16.gmra.mxu0 %v4075
      %v4160 = vpop.f32.mrf.mxu0
      %v4161 = vadd.f32 0.0, %v4160
      %v4162 = vpop.f32.mrf.mxu0
      %v4163 = vadd.f32 0.0, %v4162
      %4164 = vmatmul.bf16.gmra.mxu0 %v4078
      %v4165 = vpop.f32.mrf.mxu0
      %v4166 = vadd.f32 0.0, %v4165
      %v4167 = vpop.f32.mrf.mxu0
      %v4168 = vadd.f32 0.0, %v4167
      %4169 = vmatmul.bf16.gmra.mxu0 %v4081
      %v4170 = vpop.f32.mrf.mxu0
      %v4171 = vadd.f32 0.0, %v4170
      %v4172 = vpop.f32.mrf.mxu0
      %v4173 = vadd.f32 0.0, %v4172
      %4174 = vdwg.mxu0
      %v4175 = vadd.f32 %v3902, %v4096
      %v4176 = vadd.f32 %v3903, %v4098
      %v4177 = vadd.f32 %v3904, %v4101
      %v4178 = vadd.f32 %v3905, %v4103
      %v4179 = vadd.f32 %v3906, %v4106
      %v4180 = vadd.f32 %v3907, %v4108
      %v4181 = vadd.f32 %v3908, %v4111
      %v4182 = vadd.f32 %v3909, %v4113
      %v4183 = vadd.f32 %v3910, %v4116
      %v4184 = vadd.f32 %v3911, %v4118
      %v4185 = vadd.f32 %v3912, %v4121
      %v4186 = vadd.f32 %v3913, %v4123
      %v4187 = vadd.f32 %v3914, %v4126
      %v4188 = vadd.f32 %v3915, %v4128
      %v4189 = vadd.f32 %v3916, %v4131
      %v4190 = vadd.f32 %v3917, %v4133
      %v4191 = vadd.f32 %v3918, %v4136
      %v4192 = vadd.f32 %v3919, %v4138
      %v4193 = vadd.f32 %v3920, %v4141
      %v4194 = vadd.f32 %v3921, %v4143
      %v4195 = vadd.f32 %v3922, %v4146
      %v4196 = vadd.f32 %v3923, %v4148
      %v4197 = vadd.f32 %v3924, %v4151
      %v4198 = vadd.f32 %v3925, %v4153
      %v4199 = vadd.f32 %v3926, %v4156
      %v4200 = vadd.f32 %v3927, %v4158
      %v4201 = vadd.f32 %v3928, %v4161
      %v4202 = vadd.f32 %v3929, %v4163
      %v4203 = vadd.f32 %v3930, %v4166
      %v4204 = vadd.f32 %v3931, %v4168
      %v4205 = vadd.f32 %v3932, %v4171
      %v4206 = vadd.f32 %v3933, %v4173
      %v4207 = vld [vmem:[#allocation2 + $0x17] sm:$0xff]
      %v4208 = vld [vmem:[#allocation2 + $0x1f] sm:$0xff]
      %v4209 = vld [vmem:[#allocation2 + $0x27] sm:$0xff]
      %v4210 = vld [vmem:[#allocation2 + $0x2f] sm:$0xff]
      %v4211 = vld [vmem:[#allocation2 + $0x37] sm:$0xff]
      %v4212 = vld [vmem:[#allocation2 + $0x3f] sm:$0xff]
      %v4213 = vld [vmem:[#allocation2 + $0x47] sm:$0xff]
      %v4214 = vld [vmem:[#allocation2 + $0x4f] sm:$0xff]
      %v4215 = vld [vmem:[#allocation2 + $0x57] sm:$0xff]
      %v4216 = vld [vmem:[#allocation2 + $0x5f] sm:$0xff]
      %v4217 = vld [vmem:[#allocation2 + $0x67] sm:$0xff]
      %v4218 = vld [vmem:[#allocation2 + $0x6f] sm:$0xff]
      %v4219 = vld [vmem:[#allocation2 + $0x77] sm:$0xff]
      %v4220 = vld [vmem:[#allocation2 + $0x7f] sm:$0xff]
      %v4221 = vld [vmem:[#allocation2 + $0x87] sm:$0xff]
      %v4222 = vld [vmem:[#allocation2 + $0x8f] sm:$0xff]
      %v4223 = vld [vmem:[#allocation2 + $0x97] sm:$0xff]
      %v4224 = vld [vmem:[#allocation2 + $0x9f] sm:$0xff]
      %v4225 = vld [vmem:[#allocation2 + $0xa7] sm:$0xff]
      %v4226 = vld [vmem:[#allocation2 + $0xaf] sm:$0xff]
      %v4227 = vld [vmem:[#allocation2 + $0xb7] sm:$0xff]
      %v4228 = vld [vmem:[#allocation2 + $0xbf] sm:$0xff]
      %v4229 = vld [vmem:[#allocation2 + $0xc7] sm:$0xff]
      %v4230 = vld [vmem:[#allocation2 + $0xcf] sm:$0xff]
      %v4231 = vld [vmem:[#allocation2 + $0xd7] sm:$0xff]
      %v4232 = vld [vmem:[#allocation2 + $0xdf] sm:$0xff]
      %v4233 = vld [vmem:[#allocation2 + $0xe7] sm:$0xff]
      %v4234 = vld [vmem:[#allocation2 + $0xef] sm:$0xff]
      %v4235 = vld [vmem:[#allocation2 + $0xf7] sm:$0xff]
      %v4236 = vld [vmem:[#allocation2 + $0xff] sm:$0xff]
      %v4237 = vld [vmem:[#allocation2 + $0x107] sm:$0xff]
      %v4238 = vld [vmem:[#allocation2 + $0x10f] sm:$0xff]
      %v4239 = vsel %vm2622, %v4207, 0.0
      %v4240 = vsel %vm2623, %v4208, 0.0
      %v4241 = vsel %vm2624, %v4209, 0.0
      %v4242 = vsel %vm2625, %v4210, 0.0
      %v4243 = vsel %vm2626, %v4211, 0.0
      %v4244 = vsel %vm2627, %v4212, 0.0
      %v4245 = vsel %vm2628, %v4213, 0.0
      %v4246 = vsel %vm2629, %v4214, 0.0
      %v4247 = vsel %vm2630, %v4215, 0.0
      %v4248 = vsel %vm2631, %v4216, 0.0
      %v4249 = vsel %vm2632, %v4217, 0.0
      %v4250 = vsel %vm2633, %v4218, 0.0
      %v4251 = vsel %vm2634, %v4219, 0.0
      %v4252 = vsel %vm2635, %v4220, 0.0
      %v4253 = vsel %vm2636, %v4221, 0.0
      %v4254 = vsel %vm2637, %v4222, 0.0
      %v4255 = vsel %vm2638, %v4223, 0.0
      %v4256 = vsel %vm2639, %v4224, 0.0
      %v4257 = vsel %vm2640, %v4225, 0.0
      %v4258 = vsel %vm2641, %v4226, 0.0
      %v4259 = vsel %vm2642, %v4227, 0.0
      %v4260 = vsel %vm2643, %v4228, 0.0
      %v4261 = vsel %vm2644, %v4229, 0.0
      %v4262 = vsel %vm2645, %v4230, 0.0
      %v4263 = vsel %vm2646, %v4231, 0.0
      %v4264 = vsel %vm2647, %v4232, 0.0
      %v4265 = vsel %vm2648, %v4233, 0.0
      %v4266 = vsel %vm2649, %v4234, 0.0
      %v4267 = vsel %vm2650, %v4235, 0.0
      %v4268 = vsel %vm2651, %v4236, 0.0
      %v4269 = vsel %vm2652, %v4237, 0.0
      %v4270 = vsel %vm2653, %v4238, 0.0
      %v4271 = vpack.c.bf16 %v4240, %v4239
      %v4272 = vpack.c.bf16 %v4242, %v4241
      %v4273 = vpack.c.bf16 %v4244, %v4243
      %v4274 = vpack.c.bf16 %v4246, %v4245
      %v4275 = vpack.c.bf16 %v4248, %v4247
      %v4276 = vpack.c.bf16 %v4250, %v4249
      %v4277 = vpack.c.bf16 %v4252, %v4251
      %v4278 = vpack.c.bf16 %v4254, %v4253
      %v4279 = vpack.c.bf16 %v4256, %v4255
      %v4280 = vpack.c.bf16 %v4258, %v4257
      %v4281 = vpack.c.bf16 %v4260, %v4259
      %v4282 = vpack.c.bf16 %v4262, %v4261
      %v4283 = vpack.c.bf16 %v4264, %v4263
      %v4284 = vpack.c.bf16 %v4266, %v4265
      %v4285 = vpack.c.bf16 %v4268, %v4267
      %v4286 = vpack.c.bf16 %v4270, %v4269
      %s4287 = scalar_lea.vmem %s5, 120
      %v4288 = vld [vmem:[%s4287] sm:$0xf]
      %v4289 = vld [vmem:[%s4287 + $0x4] sm:$0xf]
      %v4290 = vld [vmem:[%s4287 + $0x8] sm:$0xf]
      %v4291 = vld [vmem:[%s4287 + $0xc] sm:$0xf]
      %v4292 = vld [vmem:[%s4287 + $0x10] sm:$0x3]
      %v4298 = vunpack.c.l.b16 %v4288
      %v4299 = vunpack.c.l.b16 %v4289
      %v4300 = vunpack.c.l.b16 %v4290
      %v4301 = vunpack.c.l.b16 %v4291
      %v4302 = vunpack.c.l.b16 %v4292
      %v4303 = vpack.c.b16 %v4299, %v4298
      %v4304 = vpack.c.b16 %v4301, %v4300
      %v4305 = vpack.c.b16 %v4302, %v4302
      %v4309 = vsel %vm1405, %v4271, 0
      %v4312 = vsel %vm1405, %v4272, 0
      %v4315 = vsel %vm1405, %v4273, 0
      %v4318 = vsel %vm1405, %v4274, 0
      %v4321 = vsel %vm1405, %v4275, 0
      %v4324 = vsel %vm1405, %v4276, 0
      %v4327 = vsel %vm1405, %v4277, 0
      %v4330 = vsel %vm1405, %v4278, 0
      %v4333 = vsel %vm1405, %v4279, 0
      %v4336 = vsel %vm1405, %v4280, 0
      %v4339 = vsel %vm1405, %v4281, 0
      %v4342 = vsel %vm1405, %v4282, 0
      %v4345 = vsel %vm1405, %v4283, 0
      %v4348 = vsel %vm1405, %v4284, 0
      %v4351 = vsel %vm1405, %v4285, 0
      %v4354 = vsel %vm1405, %v4286, 0
      %v4357 = vsel %vm2771, %v4305, 0
      %4359 = vmatpush.bf16.msra.mxu0 0
      %4360 = vmatpush.bf16.msra.mxu0 0
      %4361 = vmatpush.bf16.msra.mxu0 0
      %4362 = vmatpush.bf16.msra.mxu0 0
      %4363 = vmatpush.bf16.msra.mxu0 0
      %4364 = vmatpush.bf16.msra.mxu0 %v4357
      %4365 = vmatpush.bf16.msra.mxu0 %v4304
      %4366 = vmatpush.bf16.msra.mxu0 %v4303
      %4367 = vmatmul.bf16.gmra.mxu0 %v4309
      %v4368 = vpop.f32.mrf.mxu0
      %v4369 = vadd.f32 0.0, %v4368
      %v4370 = vpop.f32.mrf.mxu0
      %v4371 = vadd.f32 0.0, %v4370
      %4372 = vmatmul.bf16.gmra.mxu0 %v4312
      %v4373 = vpop.f32.mrf.mxu0
      %v4374 = vadd.f32 0.0, %v4373
      %v4375 = vpop.f32.mrf.mxu0
      %v4376 = vadd.f32 0.0, %v4375
      %4377 = vmatmul.bf16.gmra.mxu0 %v4315
      %v4378 = vpop.f32.mrf.mxu0
      %v4379 = vadd.f32 0.0, %v4378
      %v4380 = vpop.f32.mrf.mxu0
      %v4381 = vadd.f32 0.0, %v4380
      %4382 = vmatmul.bf16.gmra.mxu0 %v4318
      %v4383 = vpop.f32.mrf.mxu0
      %v4384 = vadd.f32 0.0, %v4383
      %v4385 = vpop.f32.mrf.mxu0
      %v4386 = vadd.f32 0.0, %v4385
      %4387 = vmatmul.bf16.gmra.mxu0 %v4321
      %v4388 = vpop.f32.mrf.mxu0
      %v4389 = vadd.f32 0.0, %v4388
      %v4390 = vpop.f32.mrf.mxu0
      %v4391 = vadd.f32 0.0, %v4390
      %4392 = vmatmul.bf16.gmra.mxu0 %v4324
      %v4393 = vpop.f32.mrf.mxu0
      %v4394 = vadd.f32 0.0, %v4393
      %v4395 = vpop.f32.mrf.mxu0
      %v4396 = vadd.f32 0.0, %v4395
      %4397 = vmatmul.bf16.gmra.mxu0 %v4327
      %v4398 = vpop.f32.mrf.mxu0
      %v4399 = vadd.f32 0.0, %v4398
      %v4400 = vpop.f32.mrf.mxu0
      %v4401 = vadd.f32 0.0, %v4400
      %4402 = vmatmul.bf16.gmra.mxu0 %v4330
      %v4403 = vpop.f32.mrf.mxu0
      %v4404 = vadd.f32 0.0, %v4403
      %v4405 = vpop.f32.mrf.mxu0
      %v4406 = vadd.f32 0.0, %v4405
      %4407 = vmatmul.bf16.gmra.mxu0 %v4333
      %v4408 = vpop.f32.mrf.mxu0
      %v4409 = vadd.f32 0.0, %v4408
      %v4410 = vpop.f32.mrf.mxu0
      %v4411 = vadd.f32 0.0, %v4410
      %4412 = vmatmul.bf16.gmra.mxu0 %v4336
      %v4413 = vpop.f32.mrf.mxu0
      %v4414 = vadd.f32 0.0, %v4413
      %v4415 = vpop.f32.mrf.mxu0
      %v4416 = vadd.f32 0.0, %v4415
      %4417 = vmatmul.bf16.gmra.mxu0 %v4339
      %v4418 = vpop.f32.mrf.mxu0
      %v4419 = vadd.f32 0.0, %v4418
      %v4420 = vpop.f32.mrf.mxu0
      %v4421 = vadd.f32 0.0, %v4420
      %4422 = vmatmul.bf16.gmra.mxu0 %v4342
      %v4423 = vpop.f32.mrf.mxu0
      %v4424 = vadd.f32 0.0, %v4423
      %v4425 = vpop.f32.mrf.mxu0
      %v4426 = vadd.f32 0.0, %v4425
      %4427 = vmatmul.bf16.gmra.mxu0 %v4345
      %v4428 = vpop.f32.mrf.mxu0
      %v4429 = vadd.f32 0.0, %v4428
      %v4430 = vpop.f32.mrf.mxu0
      %v4431 = vadd.f32 0.0, %v4430
      %4432 = vmatmul.bf16.gmra.mxu0 %v4348
      %v4433 = vpop.f32.mrf.mxu0
      %v4434 = vadd.f32 0.0, %v4433
      %v4435 = vpop.f32.mrf.mxu0
      %v4436 = vadd.f32 0.0, %v4435
      %4437 = vmatmul.bf16.gmra.mxu0 %v4351
      %v4438 = vpop.f32.mrf.mxu0
      %v4439 = vadd.f32 0.0, %v4438
      %v4440 = vpop.f32.mrf.mxu0
      %v4441 = vadd.f32 0.0, %v4440
      %4442 = vmatmul.bf16.gmra.mxu0 %v4354
      %v4443 = vpop.f32.mrf.mxu0
      %v4444 = vadd.f32 0.0, %v4443
      %v4445 = vpop.f32.mrf.mxu0
      %v4446 = vadd.f32 0.0, %v4445
      %4447 = vdwg.mxu0
      %v4448 = vadd.f32 %v4175, %v4369
      %v4449 = vadd.f32 %v4176, %v4371
      %v4450 = vadd.f32 %v4177, %v4374
      %v4451 = vadd.f32 %v4178, %v4376
      %v4452 = vadd.f32 %v4179, %v4379
      %v4453 = vadd.f32 %v4180, %v4381
      %v4454 = vadd.f32 %v4181, %v4384
      %v4455 = vadd.f32 %v4182, %v4386
      %v4456 = vadd.f32 %v4183, %v4389
      %v4457 = vadd.f32 %v4184, %v4391
      %v4458 = vadd.f32 %v4185, %v4394
      %v4459 = vadd.f32 %v4186, %v4396
      %v4460 = vadd.f32 %v4187, %v4399
      %v4461 = vadd.f32 %v4188, %v4401
      %v4462 = vadd.f32 %v4189, %v4404
      %v4463 = vadd.f32 %v4190, %v4406
      %v4464 = vadd.f32 %v4191, %v4409
      %v4465 = vadd.f32 %v4192, %v4411
      %v4466 = vadd.f32 %v4193, %v4414
      %v4467 = vadd.f32 %v4194, %v4416
      %v4468 = vadd.f32 %v4195, %v4419
      %v4469 = vadd.f32 %v4196, %v4421
      %v4470 = vadd.f32 %v4197, %v4424
      %v4471 = vadd.f32 %v4198, %v4426
      %v4472 = vadd.f32 %v4199, %v4429
      %v4473 = vadd.f32 %v4200, %v4431
      %v4474 = vadd.f32 %v4201, %v4434
      %v4475 = vadd.f32 %v4202, %v4436
      %v4476 = vadd.f32 %v4203, %v4439
      %v4477 = vadd.f32 %v4204, %v4441
      %v4478 = vadd.f32 %v4205, %v4444
      %v4479 = vadd.f32 %v4206, %v4446
      %v4480 = vld [vmem:[#allocation2 + $0x18] sm:$0xff]
      %v4481 = vld [vmem:[#allocation2 + $0x20] sm:$0xff]
      %v4482 = vld [vmem:[#allocation2 + $0x28] sm:$0xff]
      %v4483 = vld [vmem:[#allocation2 + $0x30] sm:$0xff]
      %v4484 = vld [vmem:[#allocation2 + $0x38] sm:$0xff]
      %v4485 = vld [vmem:[#allocation2 + $0x40] sm:$0xff]
      %v4486 = vld [vmem:[#allocation2 + $0x48] sm:$0xff]
      %v4487 = vld [vmem:[#allocation2 + $0x50] sm:$0xff]
      %v4488 = vld [vmem:[#allocation2 + $0x58] sm:$0xff]
      %v4489 = vld [vmem:[#allocation2 + $0x60] sm:$0xff]
      %v4490 = vld [vmem:[#allocation2 + $0x68] sm:$0xff]
      %v4491 = vld [vmem:[#allocation2 + $0x70] sm:$0xff]
      %v4492 = vld [vmem:[#allocation2 + $0x78] sm:$0xff]
      %v4493 = vld [vmem:[#allocation2 + $0x80] sm:$0xff]
      %v4494 = vld [vmem:[#allocation2 + $0x88] sm:$0xff]
      %v4495 = vld [vmem:[#allocation2 + $0x90] sm:$0xff]
      %v4496 = vld [vmem:[#allocation2 + $0x98] sm:$0xff]
      %v4497 = vld [vmem:[#allocation2 + $0xa0] sm:$0xff]
      %v4498 = vld [vmem:[#allocation2 + $0xa8] sm:$0xff]
      %v4499 = vld [vmem:[#allocation2 + $0xb0] sm:$0xff]
      %v4500 = vld [vmem:[#allocation2 + $0xb8] sm:$0xff]
      %v4501 = vld [vmem:[#allocation2 + $0xc0] sm:$0xff]
      %v4502 = vld [vmem:[#allocation2 + $0xc8] sm:$0xff]
      %v4503 = vld [vmem:[#allocation2 + $0xd0] sm:$0xff]
      %v4504 = vld [vmem:[#allocation2 + $0xd8] sm:$0xff]
      %v4505 = vld [vmem:[#allocation2 + $0xe0] sm:$0xff]
      %v4506 = vld [vmem:[#allocation2 + $0xe8] sm:$0xff]
      %v4507 = vld [vmem:[#allocation2 + $0xf0] sm:$0xff]
      %v4508 = vld [vmem:[#allocation2 + $0xf8] sm:$0xff]
      %v4509 = vld [vmem:[#allocation2 + $0x100] sm:$0xff]
      %v4510 = vld [vmem:[#allocation2 + $0x108] sm:$0xff]
      %v4511 = vld [vmem:[#allocation2 + $0x110] sm:$0xff]
      %v4512 = vpack.c.bf16 %v4481, %v4480
      %v4513 = vpack.c.bf16 %v4483, %v4482
      %v4514 = vpack.c.bf16 %v4485, %v4484
      %v4515 = vpack.c.bf16 %v4487, %v4486
      %v4516 = vpack.c.bf16 %v4489, %v4488
      %v4517 = vpack.c.bf16 %v4491, %v4490
      %v4518 = vpack.c.bf16 %v4493, %v4492
      %v4519 = vpack.c.bf16 %v4495, %v4494
      %v4520 = vpack.c.bf16 %v4497, %v4496
      %v4521 = vpack.c.bf16 %v4499, %v4498
      %v4522 = vpack.c.bf16 %v4501, %v4500
      %v4523 = vpack.c.bf16 %v4503, %v4502
      %v4524 = vpack.c.bf16 %v4505, %v4504
      %v4525 = vpack.c.bf16 %v4507, %v4506
      %v4526 = vpack.c.bf16 %v4509, %v4508
      %v4527 = vpack.c.bf16 %v4511, %v4510
      %s4528 = scalar_lea.vmem %s5, 140
      %v4529 = vld [vmem:[%s4528] sm:$0xf]
      %v4530 = vld [vmem:[%s4528 + $0x4] sm:$0xf]
      %v4531 = vld [vmem:[%s4528 + $0x8] sm:$0xf]
      %v4532 = vld [vmem:[%s4528 + $0xc] sm:$0xf]
      %v4533 = vld [vmem:[%s4528 + $0x10] sm:$0x3]
      %v4539 = vunpack.c.l.b16 %v4529
      %v4540 = vunpack.c.l.b16 %v4530
      %v4541 = vunpack.c.l.b16 %v4531
      %v4542 = vunpack.c.l.b16 %v4532
      %v4543 = vunpack.c.l.b16 %v4533
      %v4544 = vpack.c.b16 %v4540, %v4539
      %v4545 = vpack.c.b16 %v4542, %v4541
      %v4546 = vpack.c.b16 %v4543, %v4543
      %v4550 = vsel %vm1405, %v4512, 0
      %v4553 = vsel %vm1405, %v4513, 0
      %v4556 = vsel %vm1405, %v4514, 0
      %v4559 = vsel %vm1405, %v4515, 0
      %v4562 = vsel %vm1405, %v4516, 0
      %v4565 = vsel %vm1405, %v4517, 0
      %v4568 = vsel %vm1405, %v4518, 0
      %v4571 = vsel %vm1405, %v4519, 0
      %v4574 = vsel %vm1405, %v4520, 0
      %v4577 = vsel %vm1405, %v4521, 0
      %v4580 = vsel %vm1405, %v4522, 0
      %v4583 = vsel %vm1405, %v4523, 0
      %v4586 = vsel %vm1405, %v4524, 0
      %v4589 = vsel %vm1405, %v4525, 0
      %v4592 = vsel %vm1405, %v4526, 0
      %v4595 = vsel %vm1405, %v4527, 0
      %v4598 = vsel %vm2771, %v4546, 0
      %4600 = vmatpush.bf16.msra.mxu0 0
      %4601 = vmatpush.bf16.msra.mxu0 0
      %4602 = vmatpush.bf16.msra.mxu0 0
      %4603 = vmatpush.bf16.msra.mxu0 0
      %4604 = vmatpush.bf16.msra.mxu0 0
      %4605 = vmatpush.bf16.msra.mxu0 %v4598
      %4606 = vmatpush.bf16.msra.mxu0 %v4545
      %4607 = vmatpush.bf16.msra.mxu0 %v4544
      %4608 = vmatmul.bf16.gmra.mxu0 %v4550
      %v4609 = vpop.f32.mrf.mxu0
      %v4610 = vadd.f32 0.0, %v4609
      %v4611 = vpop.f32.mrf.mxu0
      %v4612 = vadd.f32 0.0, %v4611
      %4613 = vmatmul.bf16.gmra.mxu0 %v4553
      %v4614 = vpop.f32.mrf.mxu0
      %v4615 = vadd.f32 0.0, %v4614
      %v4616 = vpop.f32.mrf.mxu0
      %v4617 = vadd.f32 0.0, %v4616
      %4618 = vmatmul.bf16.gmra.mxu0 %v4556
      %v4619 = vpop.f32.mrf.mxu0
      %v4620 = vadd.f32 0.0, %v4619
      %v4621 = vpop.f32.mrf.mxu0
      %v4622 = vadd.f32 0.0, %v4621
      %4623 = vmatmul.bf16.gmra.mxu0 %v4559
      %v4624 = vpop.f32.mrf.mxu0
      %v4625 = vadd.f32 0.0, %v4624
      %v4626 = vpop.f32.mrf.mxu0
      %v4627 = vadd.f32 0.0, %v4626
      %4628 = vmatmul.bf16.gmra.mxu0 %v4562
      %v4629 = vpop.f32.mrf.mxu0
      %v4630 = vadd.f32 0.0, %v4629
      %v4631 = vpop.f32.mrf.mxu0
      %v4632 = vadd.f32 0.0, %v4631
      %4633 = vmatmul.bf16.gmra.mxu0 %v4565
      %v4634 = vpop.f32.mrf.mxu0
      %v4635 = vadd.f32 0.0, %v4634
      %v4636 = vpop.f32.mrf.mxu0
      %v4637 = vadd.f32 0.0, %v4636
      %4638 = vmatmul.bf16.gmra.mxu0 %v4568
      %v4639 = vpop.f32.mrf.mxu0
      %v4640 = vadd.f32 0.0, %v4639
      %v4641 = vpop.f32.mrf.mxu0
      %v4642 = vadd.f32 0.0, %v4641
      %4643 = vmatmul.bf16.gmra.mxu0 %v4571
      %v4644 = vpop.f32.mrf.mxu0
      %v4645 = vadd.f32 0.0, %v4644
      %v4646 = vpop.f32.mrf.mxu0
      %v4647 = vadd.f32 0.0, %v4646
      %4648 = vmatmul.bf16.gmra.mxu0 %v4574
      %v4649 = vpop.f32.mrf.mxu0
      %v4650 = vadd.f32 0.0, %v4649
      %v4651 = vpop.f32.mrf.mxu0
      %v4652 = vadd.f32 0.0, %v4651
      %4653 = vmatmul.bf16.gmra.mxu0 %v4577
      %v4654 = vpop.f32.mrf.mxu0
      %v4655 = vadd.f32 0.0, %v4654
      %v4656 = vpop.f32.mrf.mxu0
      %v4657 = vadd.f32 0.0, %v4656
      %4658 = vmatmul.bf16.gmra.mxu0 %v4580
      %v4659 = vpop.f32.mrf.mxu0
      %v4660 = vadd.f32 0.0, %v4659
      %v4661 = vpop.f32.mrf.mxu0
      %v4662 = vadd.f32 0.0, %v4661
      %4663 = vmatmul.bf16.gmra.mxu0 %v4583
      %v4664 = vpop.f32.mrf.mxu0
      %v4665 = vadd.f32 0.0, %v4664
      %v4666 = vpop.f32.mrf.mxu0
      %v4667 = vadd.f32 0.0, %v4666
      %4668 = vmatmul.bf16.gmra.mxu0 %v4586
      %v4669 = vpop.f32.mrf.mxu0
      %v4670 = vadd.f32 0.0, %v4669
      %v4671 = vpop.f32.mrf.mxu0
      %v4672 = vadd.f32 0.0, %v4671
      %4673 = vmatmul.bf16.gmra.mxu0 %v4589
      %v4674 = vpop.f32.mrf.mxu0
      %v4675 = vadd.f32 0.0, %v4674
      %v4676 = vpop.f32.mrf.mxu0
      %v4677 = vadd.f32 0.0, %v4676
      %4678 = vmatmul.bf16.gmra.mxu0 %v4592
      %v4679 = vpop.f32.mrf.mxu0
      %v4680 = vadd.f32 0.0, %v4679
      %v4681 = vpop.f32.mrf.mxu0
      %v4682 = vadd.f32 0.0, %v4681
      %4683 = vmatmul.bf16.gmra.mxu0 %v4595
      %v4684 = vpop.f32.mrf.mxu0
      %v4685 = vadd.f32 0.0, %v4684
      %v4686 = vpop.f32.mrf.mxu0
      %v4687 = vadd.f32 0.0, %v4686
      %4688 = vdwg.mxu0
      %v4689 = vadd.f32 %v4448, %v4610
      %v4690 = vadd.f32 %v4449, %v4612
      %v4691 = vadd.f32 %v4450, %v4615
      %v4692 = vadd.f32 %v4451, %v4617
      %v4693 = vadd.f32 %v4452, %v4620
      %v4694 = vadd.f32 %v4453, %v4622
      %v4695 = vadd.f32 %v4454, %v4625
      %v4696 = vadd.f32 %v4455, %v4627
      %v4697 = vadd.f32 %v4456, %v4630
      %v4698 = vadd.f32 %v4457, %v4632
      %v4699 = vadd.f32 %v4458, %v4635
      %v4700 = vadd.f32 %v4459, %v4637
      %v4701 = vadd.f32 %v4460, %v4640
      %v4702 = vadd.f32 %v4461, %v4642
      %v4703 = vadd.f32 %v4462, %v4645
      %v4704 = vadd.f32 %v4463, %v4647
      %v4705 = vadd.f32 %v4464, %v4650
      %v4706 = vadd.f32 %v4465, %v4652
      %v4707 = vadd.f32 %v4466, %v4655
      %v4708 = vadd.f32 %v4467, %v4657
      %v4709 = vadd.f32 %v4468, %v4660
      %v4710 = vadd.f32 %v4469, %v4662
      %v4711 = vadd.f32 %v4470, %v4665
      %v4712 = vadd.f32 %v4471, %v4667
      %v4713 = vadd.f32 %v4472, %v4670
      %v4714 = vadd.f32 %v4473, %v4672
      %v4715 = vadd.f32 %v4474, %v4675
      %v4716 = vadd.f32 %v4475, %v4677
      %v4717 = vadd.f32 %v4476, %v4680
      %v4718 = vadd.f32 %v4477, %v4682
      %v4719 = vadd.f32 %v4478, %v4685
      %v4720 = vadd.f32 %v4479, %v4687
      %v4721 = vld [vmem:[#allocation2 + $0x19] sm:$0xff]
      %v4722 = vld [vmem:[#allocation2 + $0x21] sm:$0xff]
      %v4723 = vld [vmem:[#allocation2 + $0x29] sm:$0xff]
      %v4724 = vld [vmem:[#allocation2 + $0x31] sm:$0xff]
      %v4725 = vld [vmem:[#allocation2 + $0x39] sm:$0xff]
      %v4726 = vld [vmem:[#allocation2 + $0x41] sm:$0xff]
      %v4727 = vld [vmem:[#allocation2 + $0x49] sm:$0xff]
      %v4728 = vld [vmem:[#allocation2 + $0x51] sm:$0xff]
      %v4729 = vld [vmem:[#allocation2 + $0x59] sm:$0xff]
      %v4730 = vld [vmem:[#allocation2 + $0x61] sm:$0xff]
      %v4731 = vld [vmem:[#allocation2 + $0x69] sm:$0xff]
      %v4732 = vld [vmem:[#allocation2 + $0x71] sm:$0xff]
      %v4733 = vld [vmem:[#allocation2 + $0x79] sm:$0xff]
      %v4734 = vld [vmem:[#allocation2 + $0x81] sm:$0xff]
      %v4735 = vld [vmem:[#allocation2 + $0x89] sm:$0xff]
      %v4736 = vld [vmem:[#allocation2 + $0x91] sm:$0xff]
      %v4737 = vld [vmem:[#allocation2 + $0x99] sm:$0xff]
      %v4738 = vld [vmem:[#allocation2 + $0xa1] sm:$0xff]
      %v4739 = vld [vmem:[#allocation2 + $0xa9] sm:$0xff]
      %v4740 = vld [vmem:[#allocation2 + $0xb1] sm:$0xff]
      %v4741 = vld [vmem:[#allocation2 + $0xb9] sm:$0xff]
      %v4742 = vld [vmem:[#allocation2 + $0xc1] sm:$0xff]
      %v4743 = vld [vmem:[#allocation2 + $0xc9] sm:$0xff]
      %v4744 = vld [vmem:[#allocation2 + $0xd1] sm:$0xff]
      %v4745 = vld [vmem:[#allocation2 + $0xd9] sm:$0xff]
      %v4746 = vld [vmem:[#allocation2 + $0xe1] sm:$0xff]
      %v4747 = vld [vmem:[#allocation2 + $0xe9] sm:$0xff]
      %v4748 = vld [vmem:[#allocation2 + $0xf1] sm:$0xff]
      %v4749 = vld [vmem:[#allocation2 + $0xf9] sm:$0xff]
      %v4750 = vld [vmem:[#allocation2 + $0x101] sm:$0xff]
      %v4751 = vld [vmem:[#allocation2 + $0x109] sm:$0xff]
      %v4752 = vld [vmem:[#allocation2 + $0x111] sm:$0xff]
      %v4753 = vsel %vm3324, %v4721, 0.0
      %v4754 = vsel %vm3325, %v4722, 0.0
      %v4755 = vsel %vm3326, %v4723, 0.0
      %v4756 = vsel %vm3327, %v4724, 0.0
      %v4757 = vsel %vm3328, %v4725, 0.0
      %v4758 = vsel %vm3329, %v4726, 0.0
      %v4759 = vsel %vm3330, %v4727, 0.0
      %v4760 = vsel %vm3331, %v4728, 0.0
      %v4761 = vsel %vm3332, %v4729, 0.0
      %v4762 = vsel %vm3333, %v4730, 0.0
      %v4763 = vsel %vm3334, %v4731, 0.0
      %v4764 = vsel %vm3335, %v4732, 0.0
      %v4765 = vsel %vm3336, %v4733, 0.0
      %v4766 = vsel %vm3337, %v4734, 0.0
      %v4767 = vsel %vm3338, %v4735, 0.0
      %v4768 = vsel %vm3339, %v4736, 0.0
      %v4769 = vsel %vm3340, %v4737, 0.0
      %v4770 = vsel %vm3341, %v4738, 0.0
      %v4771 = vsel %vm3342, %v4739, 0.0
      %v4772 = vsel %vm3343, %v4740, 0.0
      %v4773 = vsel %vm3344, %v4741, 0.0
      %v4774 = vsel %vm3345, %v4742, 0.0
      %v4775 = vsel %vm3346, %v4743, 0.0
      %v4776 = vsel %vm3347, %v4744, 0.0
      %v4777 = vsel %vm3348, %v4745, 0.0
      %v4778 = vsel %vm3349, %v4746, 0.0
      %v4779 = vsel %vm3350, %v4747, 0.0
      %v4780 = vsel %vm3351, %v4748, 0.0
      %v4781 = vsel %vm3352, %v4749, 0.0
      %v4782 = vsel %vm3353, %v4750, 0.0
      %v4783 = vsel %vm3354, %v4751, 0.0
      %v4784 = vsel %vm3355, %v4752, 0.0
      %v4785 = vpack.c.bf16 %v4754, %v4753
      %v4786 = vpack.c.bf16 %v4756, %v4755
      %v4787 = vpack.c.bf16 %v4758, %v4757
      %v4788 = vpack.c.bf16 %v4760, %v4759
      %v4789 = vpack.c.bf16 %v4762, %v4761
      %v4790 = vpack.c.bf16 %v4764, %v4763
      %v4791 = vpack.c.bf16 %v4766, %v4765
      %v4792 = vpack.c.bf16 %v4768, %v4767
      %v4793 = vpack.c.bf16 %v4770, %v4769
      %v4794 = vpack.c.bf16 %v4772, %v4771
      %v4795 = vpack.c.bf16 %v4774, %v4773
      %v4796 = vpack.c.bf16 %v4776, %v4775
      %v4797 = vpack.c.bf16 %v4778, %v4777
      %v4798 = vpack.c.bf16 %v4780, %v4779
      %v4799 = vpack.c.bf16 %v4782, %v4781
      %v4800 = vpack.c.bf16 %v4784, %v4783
      %s4801 = scalar_lea.vmem %s5, 160
      %v4802 = vld [vmem:[%s4801] sm:$0xf]
      %v4803 = vld [vmem:[%s4801 + $0x4] sm:$0xf]
      %v4804 = vld [vmem:[%s4801 + $0x8] sm:$0xf]
      %v4805 = vld [vmem:[%s4801 + $0xc] sm:$0xf]
      %v4806 = vld [vmem:[%s4801 + $0x10] sm:$0x3]
      %v4812 = vunpack.c.l.b16 %v4802
      %v4813 = vunpack.c.l.b16 %v4803
      %v4814 = vunpack.c.l.b16 %v4804
      %v4815 = vunpack.c.l.b16 %v4805
      %v4816 = vunpack.c.l.b16 %v4806
      %v4817 = vpack.c.b16 %v4813, %v4812
      %v4818 = vpack.c.b16 %v4815, %v4814
      %v4819 = vpack.c.b16 %v4816, %v4816
      %v4823 = vsel %vm1405, %v4785, 0
      %v4826 = vsel %vm1405, %v4786, 0
      %v4829 = vsel %vm1405, %v4787, 0
      %v4832 = vsel %vm1405, %v4788, 0
      %v4835 = vsel %vm1405, %v4789, 0
      %v4838 = vsel %vm1405, %v4790, 0
      %v4841 = vsel %vm1405, %v4791, 0
      %v4844 = vsel %vm1405, %v4792, 0
      %v4847 = vsel %vm1405, %v4793, 0
      %v4850 = vsel %vm1405, %v4794, 0
      %v4853 = vsel %vm1405, %v4795, 0
      %v4856 = vsel %vm1405, %v4796, 0
      %v4859 = vsel %vm1405, %v4797, 0
      %v4862 = vsel %vm1405, %v4798, 0
      %v4865 = vsel %vm1405, %v4799, 0
      %v4868 = vsel %vm1405, %v4800, 0
      %v4871 = vsel %vm2771, %v4819, 0
      %4873 = vmatpush.bf16.msra.mxu0 0
      %4874 = vmatpush.bf16.msra.mxu0 0
      %4875 = vmatpush.bf16.msra.mxu0 0
      %4876 = vmatpush.bf16.msra.mxu0 0
      %4877 = vmatpush.bf16.msra.mxu0 0
      %4878 = vmatpush.bf16.msra.mxu0 %v4871
      %4879 = vmatpush.bf16.msra.mxu0 %v4818
      %4880 = vmatpush.bf16.msra.mxu0 %v4817
      %4881 = vmatmul.bf16.gmra.mxu0 %v4823
      %v4882 = vpop.f32.mrf.mxu0
      %v4883 = vadd.f32 0.0, %v4882
      %v4884 = vpop.f32.mrf.mxu0
      %v4885 = vadd.f32 0.0, %v4884
      %4886 = vmatmul.bf16.gmra.mxu0 %v4826
      %v4887 = vpop.f32.mrf.mxu0
      %v4888 = vadd.f32 0.0, %v4887
      %v4889 = vpop.f32.mrf.mxu0
      %v4890 = vadd.f32 0.0, %v4889
      %4891 = vmatmul.bf16.gmra.mxu0 %v4829
      %v4892 = vpop.f32.mrf.mxu0
      %v4893 = vadd.f32 0.0, %v4892
      %v4894 = vpop.f32.mrf.mxu0
      %v4895 = vadd.f32 0.0, %v4894
      %4896 = vmatmul.bf16.gmra.mxu0 %v4832
      %v4897 = vpop.f32.mrf.mxu0
      %v4898 = vadd.f32 0.0, %v4897
      %v4899 = vpop.f32.mrf.mxu0
      %v4900 = vadd.f32 0.0, %v4899
      %4901 = vmatmul.bf16.gmra.mxu0 %v4835
      %v4902 = vpop.f32.mrf.mxu0
      %v4903 = vadd.f32 0.0, %v4902
      %v4904 = vpop.f32.mrf.mxu0
      %v4905 = vadd.f32 0.0, %v4904
      %4906 = vmatmul.bf16.gmra.mxu0 %v4838
      %v4907 = vpop.f32.mrf.mxu0
      %v4908 = vadd.f32 0.0, %v4907
      %v4909 = vpop.f32.mrf.mxu0
      %v4910 = vadd.f32 0.0, %v4909
      %4911 = vmatmul.bf16.gmra.mxu0 %v4841
      %v4912 = vpop.f32.mrf.mxu0
      %v4913 = vadd.f32 0.0, %v4912
      %v4914 = vpop.f32.mrf.mxu0
      %v4915 = vadd.f32 0.0, %v4914
      %4916 = vmatmul.bf16.gmra.mxu0 %v4844
      %v4917 = vpop.f32.mrf.mxu0
      %v4918 = vadd.f32 0.0, %v4917
      %v4919 = vpop.f32.mrf.mxu0
      %v4920 = vadd.f32 0.0, %v4919
      %4921 = vmatmul.bf16.gmra.mxu0 %v4847
      %v4922 = vpop.f32.mrf.mxu0
      %v4923 = vadd.f32 0.0, %v4922
      %v4924 = vpop.f32.mrf.mxu0
      %v4925 = vadd.f32 0.0, %v4924
      %4926 = vmatmul.bf16.gmra.mxu0 %v4850
      %v4927 = vpop.f32.mrf.mxu0
      %v4928 = vadd.f32 0.0, %v4927
      %v4929 = vpop.f32.mrf.mxu0
      %v4930 = vadd.f32 0.0, %v4929
      %4931 = vmatmul.bf16.gmra.mxu0 %v4853
      %v4932 = vpop.f32.mrf.mxu0
      %v4933 = vadd.f32 0.0, %v4932
      %v4934 = vpop.f32.mrf.mxu0
      %v4935 = vadd.f32 0.0, %v4934
      %4936 = vmatmul.bf16.gmra.mxu0 %v4856
      %v4937 = vpop.f32.mrf.mxu0
      %v4938 = vadd.f32 0.0, %v4937
      %v4939 = vpop.f32.mrf.mxu0
      %v4940 = vadd.f32 0.0, %v4939
      %4941 = vmatmul.bf16.gmra.mxu0 %v4859
      %v4942 = vpop.f32.mrf.mxu0
      %v4943 = vadd.f32 0.0, %v4942
      %v4944 = vpop.f32.mrf.mxu0
      %v4945 = vadd.f32 0.0, %v4944
      %4946 = vmatmul.bf16.gmra.mxu0 %v4862
      %v4947 = vpop.f32.mrf.mxu0
      %v4948 = vadd.f32 0.0, %v4947
      %v4949 = vpop.f32.mrf.mxu0
      %v4950 = vadd.f32 0.0, %v4949
      %4951 = vmatmul.bf16.gmra.mxu0 %v4865
      %v4952 = vpop.f32.mrf.mxu0
      %v4953 = vadd.f32 0.0, %v4952
      %v4954 = vpop.f32.mrf.mxu0
      %v4955 = vadd.f32 0.0, %v4954
      %4956 = vmatmul.bf16.gmra.mxu0 %v4868
      %v4957 = vpop.f32.mrf.mxu0
      %v4958 = vadd.f32 0.0, %v4957
      %v4959 = vpop.f32.mrf.mxu0
      %v4960 = vadd.f32 0.0, %v4959
      %4961 = vdwg.mxu0
      %v4962 = vadd.f32 %v4689, %v4883
      %v4963 = vadd.f32 %v4690, %v4885
      %v4964 = vadd.f32 %v4691, %v4888
      %v4965 = vadd.f32 %v4692, %v4890
      %v4966 = vadd.f32 %v4693, %v4893
      %v4967 = vadd.f32 %v4694, %v4895
      %v4968 = vadd.f32 %v4695, %v4898
      %v4969 = vadd.f32 %v4696, %v4900
      %v4970 = vadd.f32 %v4697, %v4903
      %v4971 = vadd.f32 %v4698, %v4905
      %v4972 = vadd.f32 %v4699, %v4908
      %v4973 = vadd.f32 %v4700, %v4910
      %v4974 = vadd.f32 %v4701, %v4913
      %v4975 = vadd.f32 %v4702, %v4915
      %v4976 = vadd.f32 %v4703, %v4918
      %v4977 = vadd.f32 %v4704, %v4920
      %v4978 = vadd.f32 %v4705, %v4923
      %v4979 = vadd.f32 %v4706, %v4925
      %v4980 = vadd.f32 %v4707, %v4928
      %v4981 = vadd.f32 %v4708, %v4930
      %v4982 = vadd.f32 %v4709, %v4933
      %v4983 = vadd.f32 %v4710, %v4935
      %v4984 = vadd.f32 %v4711, %v4938
      %v4985 = vadd.f32 %v4712, %v4940
      %v4986 = vadd.f32 %v4713, %v4943
      %v4987 = vadd.f32 %v4714, %v4945
      %v4988 = vadd.f32 %v4715, %v4948
      %v4989 = vadd.f32 %v4716, %v4950
      %v4990 = vadd.f32 %v4717, %v4953
      %v4991 = vadd.f32 %v4718, %v4955
      %v4992 = vadd.f32 %v4719, %v4958
      %v4993 = vadd.f32 %v4720, %v4960
      %v4994 = vld [vmem:[#allocation2 + $0x1a] sm:$0xff]
      %v4995 = vld [vmem:[#allocation2 + $0x22] sm:$0xff]
      %v4996 = vld [vmem:[#allocation2 + $0x2a] sm:$0xff]
      %v4997 = vld [vmem:[#allocation2 + $0x32] sm:$0xff]
      %v4998 = vld [vmem:[#allocation2 + $0x3a] sm:$0xff]
      %v4999 = vld [vmem:[#allocation2 + $0x42] sm:$0xff]
      %v5000 = vld [vmem:[#allocation2 + $0x4a] sm:$0xff]
      %v5001 = vld [vmem:[#allocation2 + $0x52] sm:$0xff]
      %v5002 = vld [vmem:[#allocation2 + $0x5a] sm:$0xff]
      %v5003 = vld [vmem:[#allocation2 + $0x62] sm:$0xff]
      %v5004 = vld [vmem:[#allocation2 + $0x6a] sm:$0xff]
      %v5005 = vld [vmem:[#allocation2 + $0x72] sm:$0xff]
      %v5006 = vld [vmem:[#allocation2 + $0x7a] sm:$0xff]
      %v5007 = vld [vmem:[#allocation2 + $0x82] sm:$0xff]
      %v5008 = vld [vmem:[#allocation2 + $0x8a] sm:$0xff]
      %v5009 = vld [vmem:[#allocation2 + $0x92] sm:$0xff]
      %v5010 = vld [vmem:[#allocation2 + $0x9a] sm:$0xff]
      %v5011 = vld [vmem:[#allocation2 + $0xa2] sm:$0xff]
      %v5012 = vld [vmem:[#allocation2 + $0xaa] sm:$0xff]
      %v5013 = vld [vmem:[#allocation2 + $0xb2] sm:$0xff]
      %v5014 = vld [vmem:[#allocation2 + $0xba] sm:$0xff]
      %v5015 = vld [vmem:[#allocation2 + $0xc2] sm:$0xff]
      %v5016 = vld [vmem:[#allocation2 + $0xca] sm:$0xff]
      %v5017 = vld [vmem:[#allocation2 + $0xd2] sm:$0xff]
      %v5018 = vld [vmem:[#allocation2 + $0xda] sm:$0xff]
      %v5019 = vld [vmem:[#allocation2 + $0xe2] sm:$0xff]
      %v5020 = vld [vmem:[#allocation2 + $0xea] sm:$0xff]
      %v5021 = vld [vmem:[#allocation2 + $0xf2] sm:$0xff]
      %v5022 = vld [vmem:[#allocation2 + $0xfa] sm:$0xff]
      %v5023 = vld [vmem:[#allocation2 + $0x102] sm:$0xff]
      %v5024 = vld [vmem:[#allocation2 + $0x10a] sm:$0xff]
      %v5025 = vld [vmem:[#allocation2 + $0x112] sm:$0xff]
      %v5026 = vsel %vm3661, %v4994, 0.0
      %v5027 = vsel %vm3662, %v4995, 0.0
      %v5028 = vsel %vm3663, %v4996, 0.0
      %v5029 = vsel %vm3664, %v4997, 0.0
      %v5030 = vsel %vm3665, %v4998, 0.0
      %v5031 = vsel %vm3666, %v4999, 0.0
      %v5032 = vsel %vm3667, %v5000, 0.0
      %v5033 = vsel %vm3668, %v5001, 0.0
      %v5034 = vsel %vm3669, %v5002, 0.0
      %v5035 = vsel %vm3670, %v5003, 0.0
      %v5036 = vsel %vm3671, %v5004, 0.0
      %v5037 = vsel %vm3672, %v5005, 0.0
      %v5038 = vsel %vm3673, %v5006, 0.0
      %v5039 = vsel %vm3674, %v5007, 0.0
      %v5040 = vsel %vm3675, %v5008, 0.0
      %v5041 = vsel %vm3676, %v5009, 0.0
      %v5042 = vsel %vm3677, %v5010, 0.0
      %v5043 = vsel %vm3678, %v5011, 0.0
      %v5044 = vsel %vm3679, %v5012, 0.0
      %v5045 = vsel %vm3680, %v5013, 0.0
      %v5046 = vsel %vm3681, %v5014, 0.0
      %v5047 = vsel %vm3682, %v5015, 0.0
      %v5048 = vsel %vm3683, %v5016, 0.0
      %v5049 = vsel %vm3684, %v5017, 0.0
      %v5050 = vsel %vm3685, %v5018, 0.0
      %v5051 = vsel %vm3686, %v5019, 0.0
      %v5052 = vsel %vm3687, %v5020, 0.0
      %v5053 = vsel %vm3688, %v5021, 0.0
      %v5054 = vsel %vm3689, %v5022, 0.0
      %v5055 = vsel %vm3690, %v5023, 0.0
      %v5056 = vsel %vm3691, %v5024, 0.0
      %v5057 = vsel %vm3692, %v5025, 0.0
      %v5058 = vpack.c.bf16 %v5027, %v5026
      %v5059 = vpack.c.bf16 %v5029, %v5028
      %v5060 = vpack.c.bf16 %v5031, %v5030
      %v5061 = vpack.c.bf16 %v5033, %v5032
      %v5062 = vpack.c.bf16 %v5035, %v5034
      %v5063 = vpack.c.bf16 %v5037, %v5036
      %v5064 = vpack.c.bf16 %v5039, %v5038
      %v5065 = vpack.c.bf16 %v5041, %v5040
      %v5066 = vpack.c.bf16 %v5043, %v5042
      %v5067 = vpack.c.bf16 %v5045, %v5044
      %v5068 = vpack.c.bf16 %v5047, %v5046
      %v5069 = vpack.c.bf16 %v5049, %v5048
      %v5070 = vpack.c.bf16 %v5051, %v5050
      %v5071 = vpack.c.bf16 %v5053, %v5052
      %v5072 = vpack.c.bf16 %v5055, %v5054
      %v5073 = vpack.c.bf16 %v5057, %v5056
      %s5074 = scalar_lea.vmem %s5, 180
      %v5075 = vld [vmem:[%s5074] sm:$0xf]
      %v5076 = vld [vmem:[%s5074 + $0x4] sm:$0xf]
      %v5077 = vld [vmem:[%s5074 + $0x8] sm:$0xf]
      %v5078 = vld [vmem:[%s5074 + $0xc] sm:$0xf]
      %v5079 = vld [vmem:[%s5074 + $0x10] sm:$0x3]
      %v5085 = vunpack.c.l.b16 %v5075
      %v5086 = vunpack.c.l.b16 %v5076
      %v5087 = vunpack.c.l.b16 %v5077
      %v5088 = vunpack.c.l.b16 %v5078
      %v5089 = vunpack.c.l.b16 %v5079
      %v5090 = vpack.c.b16 %v5086, %v5085
      %v5091 = vpack.c.b16 %v5088, %v5087
      %v5092 = vpack.c.b16 %v5089, %v5089
      %v5096 = vsel %vm1405, %v5058, 0
      %v5099 = vsel %vm1405, %v5059, 0
      %v5102 = vsel %vm1405, %v5060, 0
      %v5105 = vsel %vm1405, %v5061, 0
      %v5108 = vsel %vm1405, %v5062, 0
      %v5111 = vsel %vm1405, %v5063, 0
      %v5114 = vsel %vm1405, %v5064, 0
      %v5117 = vsel %vm1405, %v5065, 0
      %v5120 = vsel %vm1405, %v5066, 0
      %v5123 = vsel %vm1405, %v5067, 0
      %v5126 = vsel %vm1405, %v5068, 0
      %v5129 = vsel %vm1405, %v5069, 0
      %v5132 = vsel %vm1405, %v5070, 0
      %v5135 = vsel %vm1405, %v5071, 0
      %v5138 = vsel %vm1405, %v5072, 0
      %v5141 = vsel %vm1405, %v5073, 0
      %v5144 = vsel %vm2771, %v5092, 0
      %5146 = vmatpush.bf16.msra.mxu0 0
      %5147 = vmatpush.bf16.msra.mxu0 0
      %5148 = vmatpush.bf16.msra.mxu0 0
      %5149 = vmatpush.bf16.msra.mxu0 0
      %5150 = vmatpush.bf16.msra.mxu0 0
      %5151 = vmatpush.bf16.msra.mxu0 %v5144
      %5152 = vmatpush.bf16.msra.mxu0 %v5091
      %5153 = vmatpush.bf16.msra.mxu0 %v5090
      %5154 = vmatmul.bf16.gmra.mxu0 %v5096
      %v5155 = vpop.f32.mrf.mxu0
      %v5156 = vadd.f32 0.0, %v5155
      %v5157 = vpop.f32.mrf.mxu0
      %v5158 = vadd.f32 0.0, %v5157
      %5159 = vmatmul.bf16.gmra.mxu0 %v5099
      %v5160 = vpop.f32.mrf.mxu0
      %v5161 = vadd.f32 0.0, %v5160
      %v5162 = vpop.f32.mrf.mxu0
      %v5163 = vadd.f32 0.0, %v5162
      %5164 = vmatmul.bf16.gmra.mxu0 %v5102
      %v5165 = vpop.f32.mrf.mxu0
      %v5166 = vadd.f32 0.0, %v5165
      %v5167 = vpop.f32.mrf.mxu0
      %v5168 = vadd.f32 0.0, %v5167
      %5169 = vmatmul.bf16.gmra.mxu0 %v5105
      %v5170 = vpop.f32.mrf.mxu0
      %v5171 = vadd.f32 0.0, %v5170
      %v5172 = vpop.f32.mrf.mxu0
      %v5173 = vadd.f32 0.0, %v5172
      %5174 = vmatmul.bf16.gmra.mxu0 %v5108
      %v5175 = vpop.f32.mrf.mxu0
      %v5176 = vadd.f32 0.0, %v5175
      %v5177 = vpop.f32.mrf.mxu0
      %v5178 = vadd.f32 0.0, %v5177
      %5179 = vmatmul.bf16.gmra.mxu0 %v5111
      %v5180 = vpop.f32.mrf.mxu0
      %v5181 = vadd.f32 0.0, %v5180
      %v5182 = vpop.f32.mrf.mxu0
      %v5183 = vadd.f32 0.0, %v5182
      %5184 = vmatmul.bf16.gmra.mxu0 %v5114
      %v5185 = vpop.f32.mrf.mxu0
      %v5186 = vadd.f32 0.0, %v5185
      %v5187 = vpop.f32.mrf.mxu0
      %v5188 = vadd.f32 0.0, %v5187
      %5189 = vmatmul.bf16.gmra.mxu0 %v5117
      %v5190 = vpop.f32.mrf.mxu0
      %v5191 = vadd.f32 0.0, %v5190
      %v5192 = vpop.f32.mrf.mxu0
      %v5193 = vadd.f32 0.0, %v5192
      %5194 = vmatmul.bf16.gmra.mxu0 %v5120
      %v5195 = vpop.f32.mrf.mxu0
      %v5196 = vadd.f32 0.0, %v5195
      %v5197 = vpop.f32.mrf.mxu0
      %v5198 = vadd.f32 0.0, %v5197
      %5199 = vmatmul.bf16.gmra.mxu0 %v5123
      %v5200 = vpop.f32.mrf.mxu0
      %v5201 = vadd.f32 0.0, %v5200
      %v5202 = vpop.f32.mrf.mxu0
      %v5203 = vadd.f32 0.0, %v5202
      %5204 = vmatmul.bf16.gmra.mxu0 %v5126
      %v5205 = vpop.f32.mrf.mxu0
      %v5206 = vadd.f32 0.0, %v5205
      %v5207 = vpop.f32.mrf.mxu0
      %v5208 = vadd.f32 0.0, %v5207
      %5209 = vmatmul.bf16.gmra.mxu0 %v5129
      %v5210 = vpop.f32.mrf.mxu0
      %v5211 = vadd.f32 0.0, %v5210
      %v5212 = vpop.f32.mrf.mxu0
      %v5213 = vadd.f32 0.0, %v5212
      %5214 = vmatmul.bf16.gmra.mxu0 %v5132
      %v5215 = vpop.f32.mrf.mxu0
      %v5216 = vadd.f32 0.0, %v5215
      %v5217 = vpop.f32.mrf.mxu0
      %v5218 = vadd.f32 0.0, %v5217
      %5219 = vmatmul.bf16.gmra.mxu0 %v5135
      %v5220 = vpop.f32.mrf.mxu0
      %v5221 = vadd.f32 0.0, %v5220
      %v5222 = vpop.f32.mrf.mxu0
      %v5223 = vadd.f32 0.0, %v5222
      %5224 = vmatmul.bf16.gmra.mxu0 %v5138
      %v5225 = vpop.f32.mrf.mxu0
      %v5226 = vadd.f32 0.0, %v5225
      %v5227 = vpop.f32.mrf.mxu0
      %v5228 = vadd.f32 0.0, %v5227
      %5229 = vmatmul.bf16.gmra.mxu0 %v5141
      %v5230 = vpop.f32.mrf.mxu0
      %v5231 = vadd.f32 0.0, %v5230
      %v5232 = vpop.f32.mrf.mxu0
      %v5233 = vadd.f32 0.0, %v5232
      %5234 = vdwg.mxu0
      %v5235 = vadd.f32 %v4962, %v5156
      %v5236 = vadd.f32 %v4963, %v5158
      %v5237 = vadd.f32 %v4964, %v5161
      %v5238 = vadd.f32 %v4965, %v5163
      %v5239 = vadd.f32 %v4966, %v5166
      %v5240 = vadd.f32 %v4967, %v5168
      %v5241 = vadd.f32 %v4968, %v5171
      %v5242 = vadd.f32 %v4969, %v5173
      %v5243 = vadd.f32 %v4970, %v5176
      %v5244 = vadd.f32 %v4971, %v5178
      %v5245 = vadd.f32 %v4972, %v5181
      %v5246 = vadd.f32 %v4973, %v5183
      %v5247 = vadd.f32 %v4974, %v5186
      %v5248 = vadd.f32 %v4975, %v5188
      %v5249 = vadd.f32 %v4976, %v5191
      %v5250 = vadd.f32 %v4977, %v5193
      %v5251 = vadd.f32 %v4978, %v5196
      %v5252 = vadd.f32 %v4979, %v5198
      %v5253 = vadd.f32 %v4980, %v5201
      %v5254 = vadd.f32 %v4981, %v5203
      %v5255 = vadd.f32 %v4982, %v5206
      %v5256 = vadd.f32 %v4983, %v5208
      %v5257 = vadd.f32 %v4984, %v5211
      %v5258 = vadd.f32 %v4985, %v5213
      %v5259 = vadd.f32 %v4986, %v5216
      %v5260 = vadd.f32 %v4987, %v5218
      %v5261 = vadd.f32 %v4988, %v5221
      %v5262 = vadd.f32 %v4989, %v5223
      %v5263 = vadd.f32 %v4990, %v5226
      %v5264 = vadd.f32 %v4991, %v5228
      %v5265 = vadd.f32 %v4992, %v5231
      %v5266 = vadd.f32 %v4993, %v5233
      %v5267 = vld [vmem:[#allocation2 + $0x26] sm:$0xff]
      %v5268 = vld [vmem:[#allocation2 + $0x2e] sm:$0xff]
      %v5269 = vld [vmem:[#allocation2 + $0x36] sm:$0xff]
      %v5270 = vld [vmem:[#allocation2 + $0x3e] sm:$0xff]
      %v5271 = vld [vmem:[#allocation2 + $0x46] sm:$0xff]
      %v5272 = vld [vmem:[#allocation2 + $0x4e] sm:$0xff]
      %v5273 = vld [vmem:[#allocation2 + $0x56] sm:$0xff]
      %v5274 = vld [vmem:[#allocation2 + $0x5e] sm:$0xff]
      %v5275 = vld [vmem:[#allocation2 + $0x66] sm:$0xff]
      %v5276 = vld [vmem:[#allocation2 + $0x6e] sm:$0xff]
      %v5277 = vld [vmem:[#allocation2 + $0x76] sm:$0xff]
      %v5278 = vld [vmem:[#allocation2 + $0x7e] sm:$0xff]
      %v5279 = vld [vmem:[#allocation2 + $0x86] sm:$0xff]
      %v5280 = vld [vmem:[#allocation2 + $0x8e] sm:$0xff]
      %v5281 = vld [vmem:[#allocation2 + $0x96] sm:$0xff]
      %v5282 = vld [vmem:[#allocation2 + $0x9e] sm:$0xff]
      %v5283 = vld [vmem:[#allocation2 + $0xa6] sm:$0xff]
      %v5284 = vld [vmem:[#allocation2 + $0xae] sm:$0xff]
      %v5285 = vld [vmem:[#allocation2 + $0xb6] sm:$0xff]
      %v5286 = vld [vmem:[#allocation2 + $0xbe] sm:$0xff]
      %v5287 = vld [vmem:[#allocation2 + $0xc6] sm:$0xff]
      %v5288 = vld [vmem:[#allocation2 + $0xce] sm:$0xff]
      %v5289 = vld [vmem:[#allocation2 + $0xd6] sm:$0xff]
      %v5290 = vld [vmem:[#allocation2 + $0xde] sm:$0xff]
      %v5291 = vld [vmem:[#allocation2 + $0xe6] sm:$0xff]
      %v5292 = vld [vmem:[#allocation2 + $0xee] sm:$0xff]
      %v5293 = vld [vmem:[#allocation2 + $0xf6] sm:$0xff]
      %v5294 = vld [vmem:[#allocation2 + $0xfe] sm:$0xff]
      %v5295 = vld [vmem:[#allocation2 + $0x106] sm:$0xff]
      %v5296 = vld [vmem:[#allocation2 + $0x10e] sm:$0xff]
      %v5297 = vld [vmem:[#allocation2 + $0x116] sm:$0xff]
      %v5298 = vld [vmem:[#allocation2 + $0x11e] sm:$0xff]
      %v5299 = vsel %vm2473, %v5267, 0.0
      %v5300 = vsel %vm2474, %v5268, 0.0
      %v5301 = vsel %vm2475, %v5269, 0.0
      %v5302 = vsel %vm2476, %v5270, 0.0
      %v5303 = vsel %vm2477, %v5271, 0.0
      %v5304 = vsel %vm2478, %v5272, 0.0
      %v5305 = vsel %vm2479, %v5273, 0.0
      %v5306 = vsel %vm2480, %v5274, 0.0
      %v5307 = vsel %vm2481, %v5275, 0.0
      %v5308 = vsel %vm2482, %v5276, 0.0
      %v5309 = vsel %vm2483, %v5277, 0.0
      %v5310 = vsel %vm2484, %v5278, 0.0
      %v5311 = vsel %vm2485, %v5279, 0.0
      %v5312 = vsel %vm2486, %v5280, 0.0
      %v5313 = vsel %vm2487, %v5281, 0.0
      %v5314 = vsel %vm2488, %v5282, 0.0
      %v5315 = vsel %vm2489, %v5283, 0.0
      %v5316 = vsel %vm2490, %v5284, 0.0
      %v5317 = vsel %vm2491, %v5285, 0.0
      %v5318 = vsel %vm2492, %v5286, 0.0
      %v5319 = vsel %vm2493, %v5287, 0.0
      %v5320 = vsel %vm2494, %v5288, 0.0
      %v5321 = vsel %vm2495, %v5289, 0.0
      %v5322 = vsel %vm2496, %v5290, 0.0
      %v5323 = vsel %vm2497, %v5291, 0.0
      %v5324 = vsel %vm2498, %v5292, 0.0
      %v5325 = vsel %vm2499, %v5293, 0.0
      %v5326 = vsel %vm2500, %v5294, 0.0
      %v5327 = vsel %vm2501, %v5295, 0.0
      %v5328 = vsel %vm2502, %v5296, 0.0
      %v5329 = vsel %vm2503, %v5297, 0.0
      %v5330 = vsel %vm2504, %v5298, 0.0
      %v5331 = vpack.c.bf16 %v5300, %v5299
      %v5332 = vpack.c.bf16 %v5302, %v5301
      %v5333 = vpack.c.bf16 %v5304, %v5303
      %v5334 = vpack.c.bf16 %v5306, %v5305
      %v5335 = vpack.c.bf16 %v5308, %v5307
      %v5336 = vpack.c.bf16 %v5310, %v5309
      %v5337 = vpack.c.bf16 %v5312, %v5311
      %v5338 = vpack.c.bf16 %v5314, %v5313
      %v5339 = vpack.c.bf16 %v5316, %v5315
      %v5340 = vpack.c.bf16 %v5318, %v5317
      %v5341 = vpack.c.bf16 %v5320, %v5319
      %v5342 = vpack.c.bf16 %v5322, %v5321
      %v5343 = vpack.c.bf16 %v5324, %v5323
      %v5344 = vpack.c.bf16 %v5326, %v5325
      %v5345 = vpack.c.bf16 %v5328, %v5327
      %v5346 = vpack.c.bf16 %v5330, %v5329
      %s5347 = scalar_lea.vmem %s5, 200
      %v5348 = vld [vmem:[%s5347] sm:$0xf]
      %v5349 = vld [vmem:[%s5347 + $0x4] sm:$0xf]
      %v5350 = vld [vmem:[%s5347 + $0x8] sm:$0xf]
      %v5351 = vld [vmem:[%s5347 + $0xc] sm:$0xf]
      %v5352 = vld [vmem:[%s5347 + $0x10] sm:$0x3]
      %v5358 = vunpack.c.l.b16 %v5348
      %v5359 = vunpack.c.l.b16 %v5349
      %v5360 = vunpack.c.l.b16 %v5350
      %v5361 = vunpack.c.l.b16 %v5351
      %v5362 = vunpack.c.l.b16 %v5352
      %v5363 = vpack.c.b16 %v5359, %v5358
      %v5364 = vpack.c.b16 %v5361, %v5360
      %v5365 = vpack.c.b16 %v5362, %v5362
      %v5369 = vsel %vm1405, %v5331, 0
      %v5372 = vsel %vm1405, %v5332, 0
      %v5375 = vsel %vm1405, %v5333, 0
      %v5378 = vsel %vm1405, %v5334, 0
      %v5381 = vsel %vm1405, %v5335, 0
      %v5384 = vsel %vm1405, %v5336, 0
      %v5387 = vsel %vm1405, %v5337, 0
      %v5390 = vsel %vm1405, %v5338, 0
      %v5393 = vsel %vm1405, %v5339, 0
      %v5396 = vsel %vm1405, %v5340, 0
      %v5399 = vsel %vm1405, %v5341, 0
      %v5402 = vsel %vm1405, %v5342, 0
      %v5405 = vsel %vm1405, %v5343, 0
      %v5408 = vsel %vm1405, %v5344, 0
      %v5411 = vsel %vm1405, %v5345, 0
      %v5414 = vsel %vm1405, %v5346, 0
      %v5417 = vsel %vm2771, %v5365, 0
      %5419 = vmatpush.bf16.msra.mxu0 0
      %5420 = vmatpush.bf16.msra.mxu0 0
      %5421 = vmatpush.bf16.msra.mxu0 0
      %5422 = vmatpush.bf16.msra.mxu0 0
      %5423 = vmatpush.bf16.msra.mxu0 0
      %5424 = vmatpush.bf16.msra.mxu0 %v5417
      %5425 = vmatpush.bf16.msra.mxu0 %v5364
      %5426 = vmatpush.bf16.msra.mxu0 %v5363
      %5427 = vmatmul.bf16.gmra.mxu0 %v5369
      %v5428 = vpop.f32.mrf.mxu0
      %v5429 = vadd.f32 0.0, %v5428
      %v5430 = vpop.f32.mrf.mxu0
      %v5431 = vadd.f32 0.0, %v5430
      %5432 = vmatmul.bf16.gmra.mxu0 %v5372
      %v5433 = vpop.f32.mrf.mxu0
      %v5434 = vadd.f32 0.0, %v5433
      %v5435 = vpop.f32.mrf.mxu0
      %v5436 = vadd.f32 0.0, %v5435
      %5437 = vmatmul.bf16.gmra.mxu0 %v5375
      %v5438 = vpop.f32.mrf.mxu0
      %v5439 = vadd.f32 0.0, %v5438
      %v5440 = vpop.f32.mrf.mxu0
      %v5441 = vadd.f32 0.0, %v5440
      %5442 = vmatmul.bf16.gmra.mxu0 %v5378
      %v5443 = vpop.f32.mrf.mxu0
      %v5444 = vadd.f32 0.0, %v5443
      %v5445 = vpop.f32.mrf.mxu0
      %v5446 = vadd.f32 0.0, %v5445
      %5447 = vmatmul.bf16.gmra.mxu0 %v5381
      %v5448 = vpop.f32.mrf.mxu0
      %v5449 = vadd.f32 0.0, %v5448
      %v5450 = vpop.f32.mrf.mxu0
      %v5451 = vadd.f32 0.0, %v5450
      %5452 = vmatmul.bf16.gmra.mxu0 %v5384
      %v5453 = vpop.f32.mrf.mxu0
      %v5454 = vadd.f32 0.0, %v5453
      %v5455 = vpop.f32.mrf.mxu0
      %v5456 = vadd.f32 0.0, %v5455
      %5457 = vmatmul.bf16.gmra.mxu0 %v5387
      %v5458 = vpop.f32.mrf.mxu0
      %v5459 = vadd.f32 0.0, %v5458
      %v5460 = vpop.f32.mrf.mxu0
      %v5461 = vadd.f32 0.0, %v5460
      %5462 = vmatmul.bf16.gmra.mxu0 %v5390
      %v5463 = vpop.f32.mrf.mxu0
      %v5464 = vadd.f32 0.0, %v5463
      %v5465 = vpop.f32.mrf.mxu0
      %v5466 = vadd.f32 0.0, %v5465
      %5467 = vmatmul.bf16.gmra.mxu0 %v5393
      %v5468 = vpop.f32.mrf.mxu0
      %v5469 = vadd.f32 0.0, %v5468
      %v5470 = vpop.f32.mrf.mxu0
      %v5471 = vadd.f32 0.0, %v5470
      %5472 = vmatmul.bf16.gmra.mxu0 %v5396
      %v5473 = vpop.f32.mrf.mxu0
      %v5474 = vadd.f32 0.0, %v5473
      %v5475 = vpop.f32.mrf.mxu0
      %v5476 = vadd.f32 0.0, %v5475
      %5477 = vmatmul.bf16.gmra.mxu0 %v5399
      %v5478 = vpop.f32.mrf.mxu0
      %v5479 = vadd.f32 0.0, %v5478
      %v5480 = vpop.f32.mrf.mxu0
      %v5481 = vadd.f32 0.0, %v5480
      %5482 = vmatmul.bf16.gmra.mxu0 %v5402
      %v5483 = vpop.f32.mrf.mxu0
      %v5484 = vadd.f32 0.0, %v5483
      %v5485 = vpop.f32.mrf.mxu0
      %v5486 = vadd.f32 0.0, %v5485
      %5487 = vmatmul.bf16.gmra.mxu0 %v5405
      %v5488 = vpop.f32.mrf.mxu0
      %v5489 = vadd.f32 0.0, %v5488
      %v5490 = vpop.f32.mrf.mxu0
      %v5491 = vadd.f32 0.0, %v5490
      %5492 = vmatmul.bf16.gmra.mxu0 %v5408
      %v5493 = vpop.f32.mrf.mxu0
      %v5494 = vadd.f32 0.0, %v5493
      %v5495 = vpop.f32.mrf.mxu0
      %v5496 = vadd.f32 0.0, %v5495
      %5497 = vmatmul.bf16.gmra.mxu0 %v5411
      %v5498 = vpop.f32.mrf.mxu0
      %v5499 = vadd.f32 0.0, %v5498
      %v5500 = vpop.f32.mrf.mxu0
      %v5501 = vadd.f32 0.0, %v5500
      %5502 = vmatmul.bf16.gmra.mxu0 %v5414
      %v5503 = vpop.f32.mrf.mxu0
      %v5504 = vadd.f32 0.0, %v5503
      %v5505 = vpop.f32.mrf.mxu0
      %v5506 = vadd.f32 0.0, %v5505
      %5507 = vdwg.mxu0
      %v5508 = vadd.f32 %v5235, %v5429
      %v5509 = vadd.f32 %v5236, %v5431
      %v5510 = vadd.f32 %v5237, %v5434
      %v5511 = vadd.f32 %v5238, %v5436
      %v5512 = vadd.f32 %v5239, %v5439
      %v5513 = vadd.f32 %v5240, %v5441
      %v5514 = vadd.f32 %v5241, %v5444
      %v5515 = vadd.f32 %v5242, %v5446
      %v5516 = vadd.f32 %v5243, %v5449
      %v5517 = vadd.f32 %v5244, %v5451
      %v5518 = vadd.f32 %v5245, %v5454
      %v5519 = vadd.f32 %v5246, %v5456
      %v5520 = vadd.f32 %v5247, %v5459
      %v5521 = vadd.f32 %v5248, %v5461
      %v5522 = vadd.f32 %v5249, %v5464
      %v5523 = vadd.f32 %v5250, %v5466
      %v5524 = vadd.f32 %v5251, %v5469
      %v5525 = vadd.f32 %v5252, %v5471
      %v5526 = vadd.f32 %v5253, %v5474
      %v5527 = vadd.f32 %v5254, %v5476
      %v5528 = vadd.f32 %v5255, %v5479
      %v5529 = vadd.f32 %v5256, %v5481
      %v5530 = vadd.f32 %v5257, %v5484
      %v5531 = vadd.f32 %v5258, %v5486
      %v5532 = vadd.f32 %v5259, %v5489
      %v5533 = vadd.f32 %v5260, %v5491
      %v5534 = vadd.f32 %v5261, %v5494
      %v5535 = vadd.f32 %v5262, %v5496
      %v5536 = vadd.f32 %v5263, %v5499
      %v5537 = vadd.f32 %v5264, %v5501
      %v5538 = vadd.f32 %v5265, %v5504
      %v5539 = vadd.f32 %v5266, %v5506
      %v5540 = vld [vmem:[#allocation2 + $0x27] sm:$0xff]
      %v5541 = vld [vmem:[#allocation2 + $0x2f] sm:$0xff]
      %v5542 = vld [vmem:[#allocation2 + $0x37] sm:$0xff]
      %v5543 = vld [vmem:[#allocation2 + $0x3f] sm:$0xff]
      %v5544 = vld [vmem:[#allocation2 + $0x47] sm:$0xff]
      %v5545 = vld [vmem:[#allocation2 + $0x4f] sm:$0xff]
      %v5546 = vld [vmem:[#allocation2 + $0x57] sm:$0xff]
      %v5547 = vld [vmem:[#allocation2 + $0x5f] sm:$0xff]
      %v5548 = vld [vmem:[#allocation2 + $0x67] sm:$0xff]
      %v5549 = vld [vmem:[#allocation2 + $0x6f] sm:$0xff]
      %v5550 = vld [vmem:[#allocation2 + $0x77] sm:$0xff]
      %v5551 = vld [vmem:[#allocation2 + $0x7f] sm:$0xff]
      %v5552 = vld [vmem:[#allocation2 + $0x87] sm:$0xff]
      %v5553 = vld [vmem:[#allocation2 + $0x8f] sm:$0xff]
      %v5554 = vld [vmem:[#allocation2 + $0x97] sm:$0xff]
      %v5555 = vld [vmem:[#allocation2 + $0x9f] sm:$0xff]
      %v5556 = vld [vmem:[#allocation2 + $0xa7] sm:$0xff]
      %v5557 = vld [vmem:[#allocation2 + $0xaf] sm:$0xff]
      %v5558 = vld [vmem:[#allocation2 + $0xb7] sm:$0xff]
      %v5559 = vld [vmem:[#allocation2 + $0xbf] sm:$0xff]
      %v5560 = vld [vmem:[#allocation2 + $0xc7] sm:$0xff]
      %v5561 = vld [vmem:[#allocation2 + $0xcf] sm:$0xff]
      %v5562 = vld [vmem:[#allocation2 + $0xd7] sm:$0xff]
      %v5563 = vld [vmem:[#allocation2 + $0xdf] sm:$0xff]
      %v5564 = vld [vmem:[#allocation2 + $0xe7] sm:$0xff]
      %v5565 = vld [vmem:[#allocation2 + $0xef] sm:$0xff]
      %v5566 = vld [vmem:[#allocation2 + $0xf7] sm:$0xff]
      %v5567 = vld [vmem:[#allocation2 + $0xff] sm:$0xff]
      %v5568 = vld [vmem:[#allocation2 + $0x107] sm:$0xff]
      %v5569 = vld [vmem:[#allocation2 + $0x10f] sm:$0xff]
      %v5570 = vld [vmem:[#allocation2 + $0x117] sm:$0xff]
      %v5571 = vld [vmem:[#allocation2 + $0x11f] sm:$0xff]
      %v5572 = vsel %vm2622, %v5540, 0.0
      %v5573 = vsel %vm2623, %v5541, 0.0
      %v5574 = vsel %vm2624, %v5542, 0.0
      %v5575 = vsel %vm2625, %v5543, 0.0
      %v5576 = vsel %vm2626, %v5544, 0.0
      %v5577 = vsel %vm2627, %v5545, 0.0
      %v5578 = vsel %vm2628, %v5546, 0.0
      %v5579 = vsel %vm2629, %v5547, 0.0
      %v5580 = vsel %vm2630, %v5548, 0.0
      %v5581 = vsel %vm2631, %v5549, 0.0
      %v5582 = vsel %vm2632, %v5550, 0.0
      %v5583 = vsel %vm2633, %v5551, 0.0
      %v5584 = vsel %vm2634, %v5552, 0.0
      %v5585 = vsel %vm2635, %v5553, 0.0
      %v5586 = vsel %vm2636, %v5554, 0.0
      %v5587 = vsel %vm2637, %v5555, 0.0
      %v5588 = vsel %vm2638, %v5556, 0.0
      %v5589 = vsel %vm2639, %v5557, 0.0
      %v5590 = vsel %vm2640, %v5558, 0.0
      %v5591 = vsel %vm2641, %v5559, 0.0
      %v5592 = vsel %vm2642, %v5560, 0.0
      %v5593 = vsel %vm2643, %v5561, 0.0
      %v5594 = vsel %vm2644, %v5562, 0.0
      %v5595 = vsel %vm2645, %v5563, 0.0
      %v5596 = vsel %vm2646, %v5564, 0.0
      %v5597 = vsel %vm2647, %v5565, 0.0
      %v5598 = vsel %vm2648, %v5566, 0.0
      %v5599 = vsel %vm2649, %v5567, 0.0
      %v5600 = vsel %vm2650, %v5568, 0.0
      %v5601 = vsel %vm2651, %v5569, 0.0
      %v5602 = vsel %vm2652, %v5570, 0.0
      %v5603 = vsel %vm2653, %v5571, 0.0
      %v5604 = vpack.c.bf16 %v5573, %v5572
      %v5605 = vpack.c.bf16 %v5575, %v5574
      %v5606 = vpack.c.bf16 %v5577, %v5576
      %v5607 = vpack.c.bf16 %v5579, %v5578
      %v5608 = vpack.c.bf16 %v5581, %v5580
      %v5609 = vpack.c.bf16 %v5583, %v5582
      %v5610 = vpack.c.bf16 %v5585, %v5584
      %v5611 = vpack.c.bf16 %v5587, %v5586
      %v5612 = vpack.c.bf16 %v5589, %v5588
      %v5613 = vpack.c.bf16 %v5591, %v5590
      %v5614 = vpack.c.bf16 %v5593, %v5592
      %v5615 = vpack.c.bf16 %v5595, %v5594
      %v5616 = vpack.c.bf16 %v5597, %v5596
      %v5617 = vpack.c.bf16 %v5599, %v5598
      %v5618 = vpack.c.bf16 %v5601, %v5600
      %v5619 = vpack.c.bf16 %v5603, %v5602
      %s5620 = scalar_lea.vmem %s5, 220
      %v5621 = vld [vmem:[%s5620] sm:$0xf]
      %v5622 = vld [vmem:[%s5620 + $0x4] sm:$0xf]
      %v5623 = vld [vmem:[%s5620 + $0x8] sm:$0xf]
      %v5624 = vld [vmem:[%s5620 + $0xc] sm:$0xf]
      %v5625 = vld [vmem:[%s5620 + $0x10] sm:$0x3]
      %v5631 = vunpack.c.l.b16 %v5621
      %v5632 = vunpack.c.l.b16 %v5622
      %v5633 = vunpack.c.l.b16 %v5623
      %v5634 = vunpack.c.l.b16 %v5624
      %v5635 = vunpack.c.l.b16 %v5625
      %v5636 = vpack.c.b16 %v5632, %v5631
      %v5637 = vpack.c.b16 %v5634, %v5633
      %v5638 = vpack.c.b16 %v5635, %v5635
      %v5642 = vsel %vm1405, %v5604, 0
      %v5645 = vsel %vm1405, %v5605, 0
      %v5648 = vsel %vm1405, %v5606, 0
      %v5651 = vsel %vm1405, %v5607, 0
      %v5654 = vsel %vm1405, %v5608, 0
      %v5657 = vsel %vm1405, %v5609, 0
      %v5660 = vsel %vm1405, %v5610, 0
      %v5663 = vsel %vm1405, %v5611, 0
      %v5666 = vsel %vm1405, %v5612, 0
      %v5669 = vsel %vm1405, %v5613, 0
      %v5672 = vsel %vm1405, %v5614, 0
      %v5675 = vsel %vm1405, %v5615, 0
      %v5678 = vsel %vm1405, %v5616, 0
      %v5681 = vsel %vm1405, %v5617, 0
      %v5684 = vsel %vm1405, %v5618, 0
      %v5687 = vsel %vm1405, %v5619, 0
      %v5690 = vsel %vm2771, %v5638, 0
      %5692 = vmatpush.bf16.msra.mxu0 0
      %5693 = vmatpush.bf16.msra.mxu0 0
      %5694 = vmatpush.bf16.msra.mxu0 0
      %5695 = vmatpush.bf16.msra.mxu0 0
      %5696 = vmatpush.bf16.msra.mxu0 0
      %5697 = vmatpush.bf16.msra.mxu0 %v5690
      %5698 = vmatpush.bf16.msra.mxu0 %v5637
      %5699 = vmatpush.bf16.msra.mxu0 %v5636
      %5700 = vmatmul.bf16.gmra.mxu0 %v5642
      %v5701 = vpop.f32.mrf.mxu0
      %v5702 = vadd.f32 0.0, %v5701
      %v5703 = vpop.f32.mrf.mxu0
      %v5704 = vadd.f32 0.0, %v5703
      %5705 = vmatmul.bf16.gmra.mxu0 %v5645
      %v5706 = vpop.f32.mrf.mxu0
      %v5707 = vadd.f32 0.0, %v5706
      %v5708 = vpop.f32.mrf.mxu0
      %v5709 = vadd.f32 0.0, %v5708
      %5710 = vmatmul.bf16.gmra.mxu0 %v5648
      %v5711 = vpop.f32.mrf.mxu0
      %v5712 = vadd.f32 0.0, %v5711
      %v5713 = vpop.f32.mrf.mxu0
      %v5714 = vadd.f32 0.0, %v5713
      %5715 = vmatmul.bf16.gmra.mxu0 %v5651
      %v5716 = vpop.f32.mrf.mxu0
      %v5717 = vadd.f32 0.0, %v5716
      %v5718 = vpop.f32.mrf.mxu0
      %v5719 = vadd.f32 0.0, %v5718
      %5720 = vmatmul.bf16.gmra.mxu0 %v5654
      %v5721 = vpop.f32.mrf.mxu0
      %v5722 = vadd.f32 0.0, %v5721
      %v5723 = vpop.f32.mrf.mxu0
      %v5724 = vadd.f32 0.0, %v5723
      %5725 = vmatmul.bf16.gmra.mxu0 %v5657
      %v5726 = vpop.f32.mrf.mxu0
      %v5727 = vadd.f32 0.0, %v5726
      %v5728 = vpop.f32.mrf.mxu0
      %v5729 = vadd.f32 0.0, %v5728
      %5730 = vmatmul.bf16.gmra.mxu0 %v5660
      %v5731 = vpop.f32.mrf.mxu0
      %v5732 = vadd.f32 0.0, %v5731
      %v5733 = vpop.f32.mrf.mxu0
      %v5734 = vadd.f32 0.0, %v5733
      %5735 = vmatmul.bf16.gmra.mxu0 %v5663
      %v5736 = vpop.f32.mrf.mxu0
      %v5737 = vadd.f32 0.0, %v5736
      %v5738 = vpop.f32.mrf.mxu0
      %v5739 = vadd.f32 0.0, %v5738
      %5740 = vmatmul.bf16.gmra.mxu0 %v5666
      %v5741 = vpop.f32.mrf.mxu0
      %v5742 = vadd.f32 0.0, %v5741
      %v5743 = vpop.f32.mrf.mxu0
      %v5744 = vadd.f32 0.0, %v5743
      %5745 = vmatmul.bf16.gmra.mxu0 %v5669
      %v5746 = vpop.f32.mrf.mxu0
      %v5747 = vadd.f32 0.0, %v5746
      %v5748 = vpop.f32.mrf.mxu0
      %v5749 = vadd.f32 0.0, %v5748
      %5750 = vmatmul.bf16.gmra.mxu0 %v5672
      %v5751 = vpop.f32.mrf.mxu0
      %v5752 = vadd.f32 0.0, %v5751
      %v5753 = vpop.f32.mrf.mxu0
      %v5754 = vadd.f32 0.0, %v5753
      %5755 = vmatmul.bf16.gmra.mxu0 %v5675
      %v5756 = vpop.f32.mrf.mxu0
      %v5757 = vadd.f32 0.0, %v5756
      %v5758 = vpop.f32.mrf.mxu0
      %v5759 = vadd.f32 0.0, %v5758
      %5760 = vmatmul.bf16.gmra.mxu0 %v5678
      %v5761 = vpop.f32.mrf.mxu0
      %v5762 = vadd.f32 0.0, %v5761
      %v5763 = vpop.f32.mrf.mxu0
      %v5764 = vadd.f32 0.0, %v5763
      %5765 = vmatmul.bf16.gmra.mxu0 %v5681
      %v5766 = vpop.f32.mrf.mxu0
      %v5767 = vadd.f32 0.0, %v5766
      %v5768 = vpop.f32.mrf.mxu0
      %v5769 = vadd.f32 0.0, %v5768
      %5770 = vmatmul.bf16.gmra.mxu0 %v5684
      %v5771 = vpop.f32.mrf.mxu0
      %v5772 = vadd.f32 0.0, %v5771
      %v5773 = vpop.f32.mrf.mxu0
      %v5774 = vadd.f32 0.0, %v5773
      %5775 = vmatmul.bf16.gmra.mxu0 %v5687
      %v5776 = vpop.f32.mrf.mxu0
      %v5777 = vadd.f32 0.0, %v5776
      %v5778 = vpop.f32.mrf.mxu0
      %v5779 = vadd.f32 0.0, %v5778
      %5780 = vdwg.mxu0
      %v5781 = vadd.f32 %v5508, %v5702
      %v5782 = vadd.f32 %v5509, %v5704
      %v5783 = vadd.f32 %v5510, %v5707
      %v5784 = vadd.f32 %v5511, %v5709
      %v5785 = vadd.f32 %v5512, %v5712
      %v5786 = vadd.f32 %v5513, %v5714
      %v5787 = vadd.f32 %v5514, %v5717
      %v5788 = vadd.f32 %v5515, %v5719
      %v5789 = vadd.f32 %v5516, %v5722
      %v5790 = vadd.f32 %v5517, %v5724
      %v5791 = vadd.f32 %v5518, %v5727
      %v5792 = vadd.f32 %v5519, %v5729
      %v5793 = vadd.f32 %v5520, %v5732
      %v5794 = vadd.f32 %v5521, %v5734
      %v5795 = vadd.f32 %v5522, %v5737
      %v5796 = vadd.f32 %v5523, %v5739
      %v5797 = vadd.f32 %v5524, %v5742
      %v5798 = vadd.f32 %v5525, %v5744
      %v5799 = vadd.f32 %v5526, %v5747
      %v5800 = vadd.f32 %v5527, %v5749
      %v5801 = vadd.f32 %v5528, %v5752
      %v5802 = vadd.f32 %v5529, %v5754
      %v5803 = vadd.f32 %v5530, %v5757
      %v5804 = vadd.f32 %v5531, %v5759
      %v5805 = vadd.f32 %v5532, %v5762
      %v5806 = vadd.f32 %v5533, %v5764
      %v5807 = vadd.f32 %v5534, %v5767
      %v5808 = vadd.f32 %v5535, %v5769
      %v5809 = vadd.f32 %v5536, %v5772
      %v5810 = vadd.f32 %v5537, %v5774
      %v5811 = vadd.f32 %v5538, %v5777
      %v5812 = vadd.f32 %v5539, %v5779
      %v5813 = vld [vmem:[#allocation2 + $0x28] sm:$0xff]
      %v5814 = vld [vmem:[#allocation2 + $0x30] sm:$0xff]
      %v5815 = vld [vmem:[#allocation2 + $0x38] sm:$0xff]
      %v5816 = vld [vmem:[#allocation2 + $0x40] sm:$0xff]
      %v5817 = vld [vmem:[#allocation2 + $0x48] sm:$0xff]
      %v5818 = vld [vmem:[#allocation2 + $0x50] sm:$0xff]
      %v5819 = vld [vmem:[#allocation2 + $0x58] sm:$0xff]
      %v5820 = vld [vmem:[#allocation2 + $0x60] sm:$0xff]
      %v5821 = vld [vmem:[#allocation2 + $0x68] sm:$0xff]
      %v5822 = vld [vmem:[#allocation2 + $0x70] sm:$0xff]
      %v5823 = vld [vmem:[#allocation2 + $0x78] sm:$0xff]
      %v5824 = vld [vmem:[#allocation2 + $0x80] sm:$0xff]
      %v5825 = vld [vmem:[#allocation2 + $0x88] sm:$0xff]
      %v5826 = vld [vmem:[#allocation2 + $0x90] sm:$0xff]
      %v5827 = vld [vmem:[#allocation2 + $0x98] sm:$0xff]
      %v5828 = vld [vmem:[#allocation2 + $0xa0] sm:$0xff]
      %v5829 = vld [vmem:[#allocation2 + $0xa8] sm:$0xff]
      %v5830 = vld [vmem:[#allocation2 + $0xb0] sm:$0xff]
      %v5831 = vld [vmem:[#allocation2 + $0xb8] sm:$0xff]
      %v5832 = vld [vmem:[#allocation2 + $0xc0] sm:$0xff]
      %v5833 = vld [vmem:[#allocation2 + $0xc8] sm:$0xff]
      %v5834 = vld [vmem:[#allocation2 + $0xd0] sm:$0xff]
      %v5835 = vld [vmem:[#allocation2 + $0xd8] sm:$0xff]
      %v5836 = vld [vmem:[#allocation2 + $0xe0] sm:$0xff]
      %v5837 = vld [vmem:[#allocation2 + $0xe8] sm:$0xff]
      %v5838 = vld [vmem:[#allocation2 + $0xf0] sm:$0xff]
      %v5839 = vld [vmem:[#allocation2 + $0xf8] sm:$0xff]
      %v5840 = vld [vmem:[#allocation2 + $0x100] sm:$0xff]
      %v5841 = vld [vmem:[#allocation2 + $0x108] sm:$0xff]
      %v5842 = vld [vmem:[#allocation2 + $0x110] sm:$0xff]
      %v5843 = vld [vmem:[#allocation2 + $0x118] sm:$0xff]
      %v5844 = vld [vmem:[#allocation2 + $0x120] sm:$0xff]
      %v5845 = vpack.c.bf16 %v5814, %v5813
      %v5846 = vpack.c.bf16 %v5816, %v5815
      %v5847 = vpack.c.bf16 %v5818, %v5817
      %v5848 = vpack.c.bf16 %v5820, %v5819
      %v5849 = vpack.c.bf16 %v5822, %v5821
      %v5850 = vpack.c.bf16 %v5824, %v5823
      %v5851 = vpack.c.bf16 %v5826, %v5825
      %v5852 = vpack.c.bf16 %v5828, %v5827
      %v5853 = vpack.c.bf16 %v5830, %v5829
      %v5854 = vpack.c.bf16 %v5832, %v5831
      %v5855 = vpack.c.bf16 %v5834, %v5833
      %v5856 = vpack.c.bf16 %v5836, %v5835
      %v5857 = vpack.c.bf16 %v5838, %v5837
      %v5858 = vpack.c.bf16 %v5840, %v5839
      %v5859 = vpack.c.bf16 %v5842, %v5841
      %v5860 = vpack.c.bf16 %v5844, %v5843
      %s5861 = scalar_lea.vmem %s5, 240
      %v5862 = vld [vmem:[%s5861] sm:$0xf]
      %v5863 = vld [vmem:[%s5861 + $0x4] sm:$0xf]
      %v5864 = vld [vmem:[%s5861 + $0x8] sm:$0xf]
      %v5865 = vld [vmem:[%s5861 + $0xc] sm:$0xf]
      %v5866 = vld [vmem:[%s5861 + $0x10] sm:$0x3]
      %v5872 = vunpack.c.l.b16 %v5862
      %v5873 = vunpack.c.l.b16 %v5863
      %v5874 = vunpack.c.l.b16 %v5864
      %v5875 = vunpack.c.l.b16 %v5865
      %v5876 = vunpack.c.l.b16 %v5866
      %v5877 = vpack.c.b16 %v5873, %v5872
      %v5878 = vpack.c.b16 %v5875, %v5874
      %v5879 = vpack.c.b16 %v5876, %v5876
      %v5883 = vsel %vm1405, %v5845, 0
      %v5886 = vsel %vm1405, %v5846, 0
      %v5889 = vsel %vm1405, %v5847, 0
      %v5892 = vsel %vm1405, %v5848, 0
      %v5895 = vsel %vm1405, %v5849, 0
      %v5898 = vsel %vm1405, %v5850, 0
      %v5901 = vsel %vm1405, %v5851, 0
      %v5904 = vsel %vm1405, %v5852, 0
      %v5907 = vsel %vm1405, %v5853, 0
      %v5910 = vsel %vm1405, %v5854, 0
      %v5913 = vsel %vm1405, %v5855, 0
      %v5916 = vsel %vm1405, %v5856, 0
      %v5919 = vsel %vm1405, %v5857, 0
      %v5922 = vsel %vm1405, %v5858, 0
      %v5925 = vsel %vm1405, %v5859, 0
      %v5928 = vsel %vm1405, %v5860, 0
      %v5931 = vsel %vm2771, %v5879, 0
      %5933 = vmatpush.bf16.msra.mxu0 0
      %5934 = vmatpush.bf16.msra.mxu0 0
      %5935 = vmatpush.bf16.msra.mxu0 0
      %5936 = vmatpush.bf16.msra.mxu0 0
      %5937 = vmatpush.bf16.msra.mxu0 0
      %5938 = vmatpush.bf16.msra.mxu0 %v5931
      %5939 = vmatpush.bf16.msra.mxu0 %v5878
      %5940 = vmatpush.bf16.msra.mxu0 %v5877
      %5941 = vmatmul.bf16.gmra.mxu0 %v5883
      %v5942 = vpop.f32.mrf.mxu0
      %v5943 = vadd.f32 0.0, %v5942
      %v5944 = vpop.f32.mrf.mxu0
      %v5945 = vadd.f32 0.0, %v5944
      %5946 = vmatmul.bf16.gmra.mxu0 %v5886
      %v5947 = vpop.f32.mrf.mxu0
      %v5948 = vadd.f32 0.0, %v5947
      %v5949 = vpop.f32.mrf.mxu0
      %v5950 = vadd.f32 0.0, %v5949
      %5951 = vmatmul.bf16.gmra.mxu0 %v5889
      %v5952 = vpop.f32.mrf.mxu0
      %v5953 = vadd.f32 0.0, %v5952
      %v5954 = vpop.f32.mrf.mxu0
      %v5955 = vadd.f32 0.0, %v5954
      %5956 = vmatmul.bf16.gmra.mxu0 %v5892
      %v5957 = vpop.f32.mrf.mxu0
      %v5958 = vadd.f32 0.0, %v5957
      %v5959 = vpop.f32.mrf.mxu0
      %v5960 = vadd.f32 0.0, %v5959
      %5961 = vmatmul.bf16.gmra.mxu0 %v5895
      %v5962 = vpop.f32.mrf.mxu0
      %v5963 = vadd.f32 0.0, %v5962
      %v5964 = vpop.f32.mrf.mxu0
      %v5965 = vadd.f32 0.0, %v5964
      %5966 = vmatmul.bf16.gmra.mxu0 %v5898
      %v5967 = vpop.f32.mrf.mxu0
      %v5968 = vadd.f32 0.0, %v5967
      %v5969 = vpop.f32.mrf.mxu0
      %v5970 = vadd.f32 0.0, %v5969
      %5971 = vmatmul.bf16.gmra.mxu0 %v5901
      %v5972 = vpop.f32.mrf.mxu0
      %v5973 = vadd.f32 0.0, %v5972
      %v5974 = vpop.f32.mrf.mxu0
      %v5975 = vadd.f32 0.0, %v5974
      %5976 = vmatmul.bf16.gmra.mxu0 %v5904
      %v5977 = vpop.f32.mrf.mxu0
      %v5978 = vadd.f32 0.0, %v5977
      %v5979 = vpop.f32.mrf.mxu0
      %v5980 = vadd.f32 0.0, %v5979
      %5981 = vmatmul.bf16.gmra.mxu0 %v5907
      %v5982 = vpop.f32.mrf.mxu0
      %v5983 = vadd.f32 0.0, %v5982
      %v5984 = vpop.f32.mrf.mxu0
      %v5985 = vadd.f32 0.0, %v5984
      %5986 = vmatmul.bf16.gmra.mxu0 %v5910
      %v5987 = vpop.f32.mrf.mxu0
      %v5988 = vadd.f32 0.0, %v5987
      %v5989 = vpop.f32.mrf.mxu0
      %v5990 = vadd.f32 0.0, %v5989
      %5991 = vmatmul.bf16.gmra.mxu0 %v5913
      %v5992 = vpop.f32.mrf.mxu0
      %v5993 = vadd.f32 0.0, %v5992
      %v5994 = vpop.f32.mrf.mxu0
      %v5995 = vadd.f32 0.0, %v5994
      %5996 = vmatmul.bf16.gmra.mxu0 %v5916
      %v5997 = vpop.f32.mrf.mxu0
      %v5998 = vadd.f32 0.0, %v5997
      %v5999 = vpop.f32.mrf.mxu0
      %v6000 = vadd.f32 0.0, %v5999
      %6001 = vmatmul.bf16.gmra.mxu0 %v5919
      %v6002 = vpop.f32.mrf.mxu0
      %v6003 = vadd.f32 0.0, %v6002
      %v6004 = vpop.f32.mrf.mxu0
      %v6005 = vadd.f32 0.0, %v6004
      %6006 = vmatmul.bf16.gmra.mxu0 %v5922
      %v6007 = vpop.f32.mrf.mxu0
      %v6008 = vadd.f32 0.0, %v6007
      %v6009 = vpop.f32.mrf.mxu0
      %v6010 = vadd.f32 0.0, %v6009
      %6011 = vmatmul.bf16.gmra.mxu0 %v5925
      %v6012 = vpop.f32.mrf.mxu0
      %v6013 = vadd.f32 0.0, %v6012
      %v6014 = vpop.f32.mrf.mxu0
      %v6015 = vadd.f32 0.0, %v6014
      %6016 = vmatmul.bf16.gmra.mxu0 %v5928
      %v6017 = vpop.f32.mrf.mxu0
      %v6018 = vadd.f32 0.0, %v6017
      %v6019 = vpop.f32.mrf.mxu0
      %v6020 = vadd.f32 0.0, %v6019
      %6021 = vdwg.mxu0
      %v6022 = vadd.f32 %v5781, %v5943
      %v6023 = vadd.f32 %v5782, %v5945
      %v6024 = vadd.f32 %v5783, %v5948
      %v6025 = vadd.f32 %v5784, %v5950
      %v6026 = vadd.f32 %v5785, %v5953
      %v6027 = vadd.f32 %v5786, %v5955
      %v6028 = vadd.f32 %v5787, %v5958
      %v6029 = vadd.f32 %v5788, %v5960
      %v6030 = vadd.f32 %v5789, %v5963
      %v6031 = vadd.f32 %v5790, %v5965
      %v6032 = vadd.f32 %v5791, %v5968
      %v6033 = vadd.f32 %v5792, %v5970
      %v6034 = vadd.f32 %v5793, %v5973
      %v6035 = vadd.f32 %v5794, %v5975
      %v6036 = vadd.f32 %v5795, %v5978
      %v6037 = vadd.f32 %v5796, %v5980
      %v6038 = vadd.f32 %v5797, %v5983
      %v6039 = vadd.f32 %v5798, %v5985
      %v6040 = vadd.f32 %v5799, %v5988
      %v6041 = vadd.f32 %v5800, %v5990
      %v6042 = vadd.f32 %v5801, %v5993
      %v6043 = vadd.f32 %v5802, %v5995
      %v6044 = vadd.f32 %v5803, %v5998
      %v6045 = vadd.f32 %v5804, %v6000
      %v6046 = vadd.f32 %v5805, %v6003
      %v6047 = vadd.f32 %v5806, %v6005
      %v6048 = vadd.f32 %v5807, %v6008
      %v6049 = vadd.f32 %v5808, %v6010
      %v6050 = vadd.f32 %v5809, %v6013
      %v6051 = vadd.f32 %v5810, %v6015
      %v6052 = vadd.f32 %v5811, %v6018
      %v6053 = vadd.f32 %v5812, %v6020
      %v6054 = vld [vmem:[#allocation2 + $0x29] sm:$0xff]
      %v6055 = vld [vmem:[#allocation2 + $0x31] sm:$0xff]
      %v6056 = vld [vmem:[#allocation2 + $0x39] sm:$0xff]
      %v6057 = vld [vmem:[#allocation2 + $0x41] sm:$0xff]
      %v6058 = vld [vmem:[#allocation2 + $0x49] sm:$0xff]
      %v6059 = vld [vmem:[#allocation2 + $0x51] sm:$0xff]
      %v6060 = vld [vmem:[#allocation2 + $0x59] sm:$0xff]
      %v6061 = vld [vmem:[#allocation2 + $0x61] sm:$0xff]
      %v6062 = vld [vmem:[#allocation2 + $0x69] sm:$0xff]
      %v6063 = vld [vmem:[#allocation2 + $0x71] sm:$0xff]
      %v6064 = vld [vmem:[#allocation2 + $0x79] sm:$0xff]
      %v6065 = vld [vmem:[#allocation2 + $0x81] sm:$0xff]
      %v6066 = vld [vmem:[#allocation2 + $0x89] sm:$0xff]
      %v6067 = vld [vmem:[#allocation2 + $0x91] sm:$0xff]
      %v6068 = vld [vmem:[#allocation2 + $0x99] sm:$0xff]
      %v6069 = vld [vmem:[#allocation2 + $0xa1] sm:$0xff]
      %v6070 = vld [vmem:[#allocation2 + $0xa9] sm:$0xff]
      %v6071 = vld [vmem:[#allocation2 + $0xb1] sm:$0xff]
      %v6072 = vld [vmem:[#allocation2 + $0xb9] sm:$0xff]
      %v6073 = vld [vmem:[#allocation2 + $0xc1] sm:$0xff]
      %v6074 = vld [vmem:[#allocation2 + $0xc9] sm:$0xff]
      %v6075 = vld [vmem:[#allocation2 + $0xd1] sm:$0xff]
      %v6076 = vld [vmem:[#allocation2 + $0xd9] sm:$0xff]
      %v6077 = vld [vmem:[#allocation2 + $0xe1] sm:$0xff]
      %v6078 = vld [vmem:[#allocation2 + $0xe9] sm:$0xff]
      %v6079 = vld [vmem:[#allocation2 + $0xf1] sm:$0xff]
      %v6080 = vld [vmem:[#allocation2 + $0xf9] sm:$0xff]
      %v6081 = vld [vmem:[#allocation2 + $0x101] sm:$0xff]
      %v6082 = vld [vmem:[#allocation2 + $0x109] sm:$0xff]
      %v6083 = vld [vmem:[#allocation2 + $0x111] sm:$0xff]
      %v6084 = vld [vmem:[#allocation2 + $0x119] sm:$0xff]
      %v6085 = vld [vmem:[#allocation2 + $0x121] sm:$0xff]
      %v6086 = vsel %vm3324, %v6054, 0.0
      %v6087 = vsel %vm3325, %v6055, 0.0
      %v6088 = vsel %vm3326, %v6056, 0.0
      %v6089 = vsel %vm3327, %v6057, 0.0
      %v6090 = vsel %vm3328, %v6058, 0.0
      %v6091 = vsel %vm3329, %v6059, 0.0
      %v6092 = vsel %vm3330, %v6060, 0.0
      %v6093 = vsel %vm3331, %v6061, 0.0
      %v6094 = vsel %vm3332, %v6062, 0.0
      %v6095 = vsel %vm3333, %v6063, 0.0
      %v6096 = vsel %vm3334, %v6064, 0.0
      %v6097 = vsel %vm3335, %v6065, 0.0
      %v6098 = vsel %vm3336, %v6066, 0.0
      %v6099 = vsel %vm3337, %v6067, 0.0
      %v6100 = vsel %vm3338, %v6068, 0.0
      %v6101 = vsel %vm3339, %v6069, 0.0
      %v6102 = vsel %vm3340, %v6070, 0.0
      %v6103 = vsel %vm3341, %v6071, 0.0
      %v6104 = vsel %vm3342, %v6072, 0.0
      %v6105 = vsel %vm3343, %v6073, 0.0
      %v6106 = vsel %vm3344, %v6074, 0.0
      %v6107 = vsel %vm3345, %v6075, 0.0
      %v6108 = vsel %vm3346, %v6076, 0.0
      %v6109 = vsel %vm3347, %v6077, 0.0
      %v6110 = vsel %vm3348, %v6078, 0.0
      %v6111 = vsel %vm3349, %v6079, 0.0
      %v6112 = vsel %vm3350, %v6080, 0.0
      %v6113 = vsel %vm3351, %v6081, 0.0
      %v6114 = vsel %vm3352, %v6082, 0.0
      %v6115 = vsel %vm3353, %v6083, 0.0
      %v6116 = vsel %vm3354, %v6084, 0.0
      %v6117 = vsel %vm3355, %v6085, 0.0
      %v6118 = vpack.c.bf16 %v6087, %v6086
      %v6119 = vpack.c.bf16 %v6089, %v6088
      %v6120 = vpack.c.bf16 %v6091, %v6090
      %v6121 = vpack.c.bf16 %v6093, %v6092
      %v6122 = vpack.c.bf16 %v6095, %v6094
      %v6123 = vpack.c.bf16 %v6097, %v6096
      %v6124 = vpack.c.bf16 %v6099, %v6098
      %v6125 = vpack.c.bf16 %v6101, %v6100
      %v6126 = vpack.c.bf16 %v6103, %v6102
      %v6127 = vpack.c.bf16 %v6105, %v6104
      %v6128 = vpack.c.bf16 %v6107, %v6106
      %v6129 = vpack.c.bf16 %v6109, %v6108
      %v6130 = vpack.c.bf16 %v6111, %v6110
      %v6131 = vpack.c.bf16 %v6113, %v6112
      %v6132 = vpack.c.bf16 %v6115, %v6114
      %v6133 = vpack.c.bf16 %v6117, %v6116
      %s6134 = scalar_lea.vmem %s5, 260
      %v6135 = vld [vmem:[%s6134] sm:$0xf]
      %v6136 = vld [vmem:[%s6134 + $0x4] sm:$0xf]
      %v6137 = vld [vmem:[%s6134 + $0x8] sm:$0xf]
      %v6138 = vld [vmem:[%s6134 + $0xc] sm:$0xf]
      %v6139 = vld [vmem:[%s6134 + $0x10] sm:$0x3]
      %v6145 = vunpack.c.l.b16 %v6135
      %v6146 = vunpack.c.l.b16 %v6136
      %v6147 = vunpack.c.l.b16 %v6137
      %v6148 = vunpack.c.l.b16 %v6138
      %v6149 = vunpack.c.l.b16 %v6139
      %v6150 = vpack.c.b16 %v6146, %v6145
      %v6151 = vpack.c.b16 %v6148, %v6147
      %v6152 = vpack.c.b16 %v6149, %v6149
      %v6156 = vsel %vm1405, %v6118, 0
      %v6159 = vsel %vm1405, %v6119, 0
      %v6162 = vsel %vm1405, %v6120, 0
      %v6165 = vsel %vm1405, %v6121, 0
      %v6168 = vsel %vm1405, %v6122, 0
      %v6171 = vsel %vm1405, %v6123, 0
      %v6174 = vsel %vm1405, %v6124, 0
      %v6177 = vsel %vm1405, %v6125, 0
      %v6180 = vsel %vm1405, %v6126, 0
      %v6183 = vsel %vm1405, %v6127, 0
      %v6186 = vsel %vm1405, %v6128, 0
      %v6189 = vsel %vm1405, %v6129, 0
      %v6192 = vsel %vm1405, %v6130, 0
      %v6195 = vsel %vm1405, %v6131, 0
      %v6198 = vsel %vm1405, %v6132, 0
      %v6201 = vsel %vm1405, %v6133, 0
      %v6204 = vsel %vm2771, %v6152, 0
      %6206 = vmatpush.bf16.msra.mxu0 0
      %6207 = vmatpush.bf16.msra.mxu0 0
      %6208 = vmatpush.bf16.msra.mxu0 0
      %6209 = vmatpush.bf16.msra.mxu0 0
      %6210 = vmatpush.bf16.msra.mxu0 0
      %6211 = vmatpush.bf16.msra.mxu0 %v6204
      %6212 = vmatpush.bf16.msra.mxu0 %v6151
      %6213 = vmatpush.bf16.msra.mxu0 %v6150
      %6214 = vmatmul.bf16.gmra.mxu0 %v6156
      %v6215 = vpop.f32.mrf.mxu0
      %v6216 = vadd.f32 0.0, %v6215
      %v6217 = vpop.f32.mrf.mxu0
      %v6218 = vadd.f32 0.0, %v6217
      %6219 = vmatmul.bf16.gmra.mxu0 %v6159
      %v6220 = vpop.f32.mrf.mxu0
      %v6221 = vadd.f32 0.0, %v6220
      %v6222 = vpop.f32.mrf.mxu0
      %v6223 = vadd.f32 0.0, %v6222
      %6224 = vmatmul.bf16.gmra.mxu0 %v6162
      %v6225 = vpop.f32.mrf.mxu0
      %v6226 = vadd.f32 0.0, %v6225
      %v6227 = vpop.f32.mrf.mxu0
      %v6228 = vadd.f32 0.0, %v6227
      %6229 = vmatmul.bf16.gmra.mxu0 %v6165
      %v6230 = vpop.f32.mrf.mxu0
      %v6231 = vadd.f32 0.0, %v6230
      %v6232 = vpop.f32.mrf.mxu0
      %v6233 = vadd.f32 0.0, %v6232
      %6234 = vmatmul.bf16.gmra.mxu0 %v6168
      %v6235 = vpop.f32.mrf.mxu0
      %v6236 = vadd.f32 0.0, %v6235
      %v6237 = vpop.f32.mrf.mxu0
      %v6238 = vadd.f32 0.0, %v6237
      %6239 = vmatmul.bf16.gmra.mxu0 %v6171
      %v6240 = vpop.f32.mrf.mxu0
      %v6241 = vadd.f32 0.0, %v6240
      %v6242 = vpop.f32.mrf.mxu0
      %v6243 = vadd.f32 0.0, %v6242
      %6244 = vmatmul.bf16.gmra.mxu0 %v6174
      %v6245 = vpop.f32.mrf.mxu0
      %v6246 = vadd.f32 0.0, %v6245
      %v6247 = vpop.f32.mrf.mxu0
      %v6248 = vadd.f32 0.0, %v6247
      %6249 = vmatmul.bf16.gmra.mxu0 %v6177
      %v6250 = vpop.f32.mrf.mxu0
      %v6251 = vadd.f32 0.0, %v6250
      %v6252 = vpop.f32.mrf.mxu0
      %v6253 = vadd.f32 0.0, %v6252
      %6254 = vmatmul.bf16.gmra.mxu0 %v6180
      %v6255 = vpop.f32.mrf.mxu0
      %v6256 = vadd.f32 0.0, %v6255
      %v6257 = vpop.f32.mrf.mxu0
      %v6258 = vadd.f32 0.0, %v6257
      %6259 = vmatmul.bf16.gmra.mxu0 %v6183
      %v6260 = vpop.f32.mrf.mxu0
      %v6261 = vadd.f32 0.0, %v6260
      %v6262 = vpop.f32.mrf.mxu0
      %v6263 = vadd.f32 0.0, %v6262
      %6264 = vmatmul.bf16.gmra.mxu0 %v6186
      %v6265 = vpop.f32.mrf.mxu0
      %v6266 = vadd.f32 0.0, %v6265
      %v6267 = vpop.f32.mrf.mxu0
      %v6268 = vadd.f32 0.0, %v6267
      %6269 = vmatmul.bf16.gmra.mxu0 %v6189
      %v6270 = vpop.f32.mrf.mxu0
      %v6271 = vadd.f32 0.0, %v6270
      %v6272 = vpop.f32.mrf.mxu0
      %v6273 = vadd.f32 0.0, %v6272
      %6274 = vmatmul.bf16.gmra.mxu0 %v6192
      %v6275 = vpop.f32.mrf.mxu0
      %v6276 = vadd.f32 0.0, %v6275
      %v6277 = vpop.f32.mrf.mxu0
      %v6278 = vadd.f32 0.0, %v6277
      %6279 = vmatmul.bf16.gmra.mxu0 %v6195
      %v6280 = vpop.f32.mrf.mxu0
      %v6281 = vadd.f32 0.0, %v6280
      %v6282 = vpop.f32.mrf.mxu0
      %v6283 = vadd.f32 0.0, %v6282
      %6284 = vmatmul.bf16.gmra.mxu0 %v6198
      %v6285 = vpop.f32.mrf.mxu0
      %v6286 = vadd.f32 0.0, %v6285
      %v6287 = vpop.f32.mrf.mxu0
      %v6288 = vadd.f32 0.0, %v6287
      %6289 = vmatmul.bf16.gmra.mxu0 %v6201
      %v6290 = vpop.f32.mrf.mxu0
      %v6291 = vadd.f32 0.0, %v6290
      %v6292 = vpop.f32.mrf.mxu0
      %v6293 = vadd.f32 0.0, %v6292
      %6294 = vdwg.mxu0
      %v6295 = vadd.f32 %v6022, %v6216
      %v6296 = vadd.f32 %v6023, %v6218
      %v6297 = vadd.f32 %v6024, %v6221
      %v6298 = vadd.f32 %v6025, %v6223
      %v6299 = vadd.f32 %v6026, %v6226
      %v6300 = vadd.f32 %v6027, %v6228
      %v6301 = vadd.f32 %v6028, %v6231
      %v6302 = vadd.f32 %v6029, %v6233
      %v6303 = vadd.f32 %v6030, %v6236
      %v6304 = vadd.f32 %v6031, %v6238
      %v6305 = vadd.f32 %v6032, %v6241
      %v6306 = vadd.f32 %v6033, %v6243
      %v6307 = vadd.f32 %v6034, %v6246
      %v6308 = vadd.f32 %v6035, %v6248
      %v6309 = vadd.f32 %v6036, %v6251
      %v6310 = vadd.f32 %v6037, %v6253
      %v6311 = vadd.f32 %v6038, %v6256
      %v6312 = vadd.f32 %v6039, %v6258
      %v6313 = vadd.f32 %v6040, %v6261
      %v6314 = vadd.f32 %v6041, %v6263
      %v6315 = vadd.f32 %v6042, %v6266
      %v6316 = vadd.f32 %v6043, %v6268
      %v6317 = vadd.f32 %v6044, %v6271
      %v6318 = vadd.f32 %v6045, %v6273
      %v6319 = vadd.f32 %v6046, %v6276
      %v6320 = vadd.f32 %v6047, %v6278
      %v6321 = vadd.f32 %v6048, %v6281
      %v6322 = vadd.f32 %v6049, %v6283
      %v6323 = vadd.f32 %v6050, %v6286
      %v6324 = vadd.f32 %v6051, %v6288
      %v6325 = vadd.f32 %v6052, %v6291
      %v6326 = vadd.f32 %v6053, %v6293
      %v6327 = vld [vmem:[#allocation2 + $0x2a] sm:$0xff]
      %v6328 = vld [vmem:[#allocation2 + $0x32] sm:$0xff]
      %v6329 = vld [vmem:[#allocation2 + $0x3a] sm:$0xff]
      %v6330 = vld [vmem:[#allocation2 + $0x42] sm:$0xff]
      %v6331 = vld [vmem:[#allocation2 + $0x4a] sm:$0xff]
      %v6332 = vld [vmem:[#allocation2 + $0x52] sm:$0xff]
      %v6333 = vld [vmem:[#allocation2 + $0x5a] sm:$0xff]
      %v6334 = vld [vmem:[#allocation2 + $0x62] sm:$0xff]
      %v6335 = vld [vmem:[#allocation2 + $0x6a] sm:$0xff]
      %v6336 = vld [vmem:[#allocation2 + $0x72] sm:$0xff]
      %v6337 = vld [vmem:[#allocation2 + $0x7a] sm:$0xff]
      %v6338 = vld [vmem:[#allocation2 + $0x82] sm:$0xff]
      %v6339 = vld [vmem:[#allocation2 + $0x8a] sm:$0xff]
      %v6340 = vld [vmem:[#allocation2 + $0x92] sm:$0xff]
      %v6341 = vld [vmem:[#allocation2 + $0x9a] sm:$0xff]
      %v6342 = vld [vmem:[#allocation2 + $0xa2] sm:$0xff]
      %v6343 = vld [vmem:[#allocation2 + $0xaa] sm:$0xff]
      %v6344 = vld [vmem:[#allocation2 + $0xb2] sm:$0xff]
      %v6345 = vld [vmem:[#allocation2 + $0xba] sm:$0xff]
      %v6346 = vld [vmem:[#allocation2 + $0xc2] sm:$0xff]
      %v6347 = vld [vmem:[#allocation2 + $0xca] sm:$0xff]
      %v6348 = vld [vmem:[#allocation2 + $0xd2] sm:$0xff]
      %v6349 = vld [vmem:[#allocation2 + $0xda] sm:$0xff]
      %v6350 = vld [vmem:[#allocation2 + $0xe2] sm:$0xff]
      %v6351 = vld [vmem:[#allocation2 + $0xea] sm:$0xff]
      %v6352 = vld [vmem:[#allocation2 + $0xf2] sm:$0xff]
      %v6353 = vld [vmem:[#allocation2 + $0xfa] sm:$0xff]
      %v6354 = vld [vmem:[#allocation2 + $0x102] sm:$0xff]
      %v6355 = vld [vmem:[#allocation2 + $0x10a] sm:$0xff]
      %v6356 = vld [vmem:[#allocation2 + $0x112] sm:$0xff]
      %v6357 = vld [vmem:[#allocation2 + $0x11a] sm:$0xff]
      %v6358 = vld [vmem:[#allocation2 + $0x122] sm:$0xff]
      %v6359 = vsel %vm3661, %v6327, 0.0
      %v6360 = vsel %vm3662, %v6328, 0.0
      %v6361 = vsel %vm3663, %v6329, 0.0
      %v6362 = vsel %vm3664, %v6330, 0.0
      %v6363 = vsel %vm3665, %v6331, 0.0
      %v6364 = vsel %vm3666, %v6332, 0.0
      %v6365 = vsel %vm3667, %v6333, 0.0
      %v6366 = vsel %vm3668, %v6334, 0.0
      %v6367 = vsel %vm3669, %v6335, 0.0
      %v6368 = vsel %vm3670, %v6336, 0.0
      %v6369 = vsel %vm3671, %v6337, 0.0
      %v6370 = vsel %vm3672, %v6338, 0.0
      %v6371 = vsel %vm3673, %v6339, 0.0
      %v6372 = vsel %vm3674, %v6340, 0.0
      %v6373 = vsel %vm3675, %v6341, 0.0
      %v6374 = vsel %vm3676, %v6342, 0.0
      %v6375 = vsel %vm3677, %v6343, 0.0
      %v6376 = vsel %vm3678, %v6344, 0.0
      %v6377 = vsel %vm3679, %v6345, 0.0
      %v6378 = vsel %vm3680, %v6346, 0.0
      %v6379 = vsel %vm3681, %v6347, 0.0
      %v6380 = vsel %vm3682, %v6348, 0.0
      %v6381 = vsel %vm3683, %v6349, 0.0
      %v6382 = vsel %vm3684, %v6350, 0.0
      %v6383 = vsel %vm3685, %v6351, 0.0
      %v6384 = vsel %vm3686, %v6352, 0.0
      %v6385 = vsel %vm3687, %v6353, 0.0
      %v6386 = vsel %vm3688, %v6354, 0.0
      %v6387 = vsel %vm3689, %v6355, 0.0
      %v6388 = vsel %vm3690, %v6356, 0.0
      %v6389 = vsel %vm3691, %v6357, 0.0
      %v6390 = vsel %vm3692, %v6358, 0.0
      %v6391 = vpack.c.bf16 %v6360, %v6359
      %v6392 = vpack.c.bf16 %v6362, %v6361
      %v6393 = vpack.c.bf16 %v6364, %v6363
      %v6394 = vpack.c.bf16 %v6366, %v6365
      %v6395 = vpack.c.bf16 %v6368, %v6367
      %v6396 = vpack.c.bf16 %v6370, %v6369
      %v6397 = vpack.c.bf16 %v6372, %v6371
      %v6398 = vpack.c.bf16 %v6374, %v6373
      %v6399 = vpack.c.bf16 %v6376, %v6375
      %v6400 = vpack.c.bf16 %v6378, %v6377
      %v6401 = vpack.c.bf16 %v6380, %v6379
      %v6402 = vpack.c.bf16 %v6382, %v6381
      %v6403 = vpack.c.bf16 %v6384, %v6383
      %v6404 = vpack.c.bf16 %v6386, %v6385
      %v6405 = vpack.c.bf16 %v6388, %v6387
      %v6406 = vpack.c.bf16 %v6390, %v6389
      %s6407 = scalar_lea.vmem %s5, 280
      %v6408 = vld [vmem:[%s6407] sm:$0xf]
      %v6409 = vld [vmem:[%s6407 + $0x4] sm:$0xf]
      %v6410 = vld [vmem:[%s6407 + $0x8] sm:$0xf]
      %v6411 = vld [vmem:[%s6407 + $0xc] sm:$0xf]
      %v6412 = vld [vmem:[%s6407 + $0x10] sm:$0x3]
      %v6418 = vunpack.c.l.b16 %v6408
      %v6419 = vunpack.c.l.b16 %v6409
      %v6420 = vunpack.c.l.b16 %v6410
      %v6421 = vunpack.c.l.b16 %v6411
      %v6422 = vunpack.c.l.b16 %v6412
      %v6423 = vpack.c.b16 %v6419, %v6418
      %v6424 = vpack.c.b16 %v6421, %v6420
      %v6425 = vpack.c.b16 %v6422, %v6422
      %v6429 = vsel %vm1405, %v6391, 0
      %v6432 = vsel %vm1405, %v6392, 0
      %v6435 = vsel %vm1405, %v6393, 0
      %v6438 = vsel %vm1405, %v6394, 0
      %v6441 = vsel %vm1405, %v6395, 0
      %v6444 = vsel %vm1405, %v6396, 0
      %v6447 = vsel %vm1405, %v6397, 0
      %v6450 = vsel %vm1405, %v6398, 0
      %v6453 = vsel %vm1405, %v6399, 0
      %v6456 = vsel %vm1405, %v6400, 0
      %v6459 = vsel %vm1405, %v6401, 0
      %v6462 = vsel %vm1405, %v6402, 0
      %v6465 = vsel %vm1405, %v6403, 0
      %v6468 = vsel %vm1405, %v6404, 0
      %v6471 = vsel %vm1405, %v6405, 0
      %v6474 = vsel %vm1405, %v6406, 0
      %v6477 = vsel %vm2771, %v6425, 0
      %6479 = vmatpush.bf16.msra.mxu0 0
      %6480 = vmatpush.bf16.msra.mxu0 0
      %6481 = vmatpush.bf16.msra.mxu0 0
      %6482 = vmatpush.bf16.msra.mxu0 0
      %6483 = vmatpush.bf16.msra.mxu0 0
      %6484 = vmatpush.bf16.msra.mxu0 %v6477
      %6485 = vmatpush.bf16.msra.mxu0 %v6424
      %6486 = vmatpush.bf16.msra.mxu0 %v6423
      %6487 = vmatmul.bf16.gmra.mxu0 %v6429
      %v6488 = vpop.f32.mrf.mxu0
      %v6489 = vadd.f32 0.0, %v6488
      %v6490 = vpop.f32.mrf.mxu0
      %v6491 = vadd.f32 0.0, %v6490
      %6492 = vmatmul.bf16.gmra.mxu0 %v6432
      %v6493 = vpop.f32.mrf.mxu0
      %v6494 = vadd.f32 0.0, %v6493
      %v6495 = vpop.f32.mrf.mxu0
      %v6496 = vadd.f32 0.0, %v6495
      %6497 = vmatmul.bf16.gmra.mxu0 %v6435
      %v6498 = vpop.f32.mrf.mxu0
      %v6499 = vadd.f32 0.0, %v6498
      %v6500 = vpop.f32.mrf.mxu0
      %v6501 = vadd.f32 0.0, %v6500
      %6502 = vmatmul.bf16.gmra.mxu0 %v6438
      %v6503 = vpop.f32.mrf.mxu0
      %v6504 = vadd.f32 0.0, %v6503
      %v6505 = vpop.f32.mrf.mxu0
      %v6506 = vadd.f32 0.0, %v6505
      %6507 = vmatmul.bf16.gmra.mxu0 %v6441
      %v6508 = vpop.f32.mrf.mxu0
      %v6509 = vadd.f32 0.0, %v6508
      %v6510 = vpop.f32.mrf.mxu0
      %v6511 = vadd.f32 0.0, %v6510
      %6512 = vmatmul.bf16.gmra.mxu0 %v6444
      %v6513 = vpop.f32.mrf.mxu0
      %v6514 = vadd.f32 0.0, %v6513
      %v6515 = vpop.f32.mrf.mxu0
      %v6516 = vadd.f32 0.0, %v6515
      %6517 = vmatmul.bf16.gmra.mxu0 %v6447
      %v6518 = vpop.f32.mrf.mxu0
      %v6519 = vadd.f32 0.0, %v6518
      %v6520 = vpop.f32.mrf.mxu0
      %v6521 = vadd.f32 0.0, %v6520
      %6522 = vmatmul.bf16.gmra.mxu0 %v6450
      %v6523 = vpop.f32.mrf.mxu0
      %v6524 = vadd.f32 0.0, %v6523
      %v6525 = vpop.f32.mrf.mxu0
      %v6526 = vadd.f32 0.0, %v6525
      %6527 = vmatmul.bf16.gmra.mxu0 %v6453
      %v6528 = vpop.f32.mrf.mxu0
      %v6529 = vadd.f32 0.0, %v6528
      %v6530 = vpop.f32.mrf.mxu0
      %v6531 = vadd.f32 0.0, %v6530
      %6532 = vmatmul.bf16.gmra.mxu0 %v6456
      %v6533 = vpop.f32.mrf.mxu0
      %v6534 = vadd.f32 0.0, %v6533
      %v6535 = vpop.f32.mrf.mxu0
      %v6536 = vadd.f32 0.0, %v6535
      %6537 = vmatmul.bf16.gmra.mxu0 %v6459
      %v6538 = vpop.f32.mrf.mxu0
      %v6539 = vadd.f32 0.0, %v6538
      %v6540 = vpop.f32.mrf.mxu0
      %v6541 = vadd.f32 0.0, %v6540
      %6542 = vmatmul.bf16.gmra.mxu0 %v6462
      %v6543 = vpop.f32.mrf.mxu0
      %v6544 = vadd.f32 0.0, %v6543
      %v6545 = vpop.f32.mrf.mxu0
      %v6546 = vadd.f32 0.0, %v6545
      %6547 = vmatmul.bf16.gmra.mxu0 %v6465
      %v6548 = vpop.f32.mrf.mxu0
      %v6549 = vadd.f32 0.0, %v6548
      %v6550 = vpop.f32.mrf.mxu0
      %v6551 = vadd.f32 0.0, %v6550
      %6552 = vmatmul.bf16.gmra.mxu0 %v6468
      %v6553 = vpop.f32.mrf.mxu0
      %v6554 = vadd.f32 0.0, %v6553
      %v6555 = vpop.f32.mrf.mxu0
      %v6556 = vadd.f32 0.0, %v6555
      %6557 = vmatmul.bf16.gmra.mxu0 %v6471
      %v6558 = vpop.f32.mrf.mxu0
      %v6559 = vadd.f32 0.0, %v6558
      %v6560 = vpop.f32.mrf.mxu0
      %v6561 = vadd.f32 0.0, %v6560
      %6562 = vmatmul.bf16.gmra.mxu0 %v6474
      %v6563 = vpop.f32.mrf.mxu0
      %v6564 = vadd.f32 0.0, %v6563
      %v6565 = vpop.f32.mrf.mxu0
      %v6566 = vadd.f32 0.0, %v6565
      %6567 = vdwg.mxu0
      %v6568 = vadd.f32 %v6295, %v6489
      %v6569 = vadd.f32 %v6296, %v6491
      %v6570 = vadd.f32 %v6297, %v6494
      %v6571 = vadd.f32 %v6298, %v6496
      %v6572 = vadd.f32 %v6299, %v6499
      %v6573 = vadd.f32 %v6300, %v6501
      %v6574 = vadd.f32 %v6301, %v6504
      %v6575 = vadd.f32 %v6302, %v6506
      %v6576 = vadd.f32 %v6303, %v6509
      %v6577 = vadd.f32 %v6304, %v6511
      %v6578 = vadd.f32 %v6305, %v6514
      %v6579 = vadd.f32 %v6306, %v6516
      %v6580 = vadd.f32 %v6307, %v6519
      %v6581 = vadd.f32 %v6308, %v6521
      %v6582 = vadd.f32 %v6309, %v6524
      %v6583 = vadd.f32 %v6310, %v6526
      %v6584 = vadd.f32 %v6311, %v6529
      %v6585 = vadd.f32 %v6312, %v6531
      %v6586 = vadd.f32 %v6313, %v6534
      %v6587 = vadd.f32 %v6314, %v6536
      %v6588 = vadd.f32 %v6315, %v6539
      %v6589 = vadd.f32 %v6316, %v6541
      %v6590 = vadd.f32 %v6317, %v6544
      %v6591 = vadd.f32 %v6318, %v6546
      %v6592 = vadd.f32 %v6319, %v6549
      %v6593 = vadd.f32 %v6320, %v6551
      %v6594 = vadd.f32 %v6321, %v6554
      %v6595 = vadd.f32 %v6322, %v6556
      %v6596 = vadd.f32 %v6323, %v6559
      %v6597 = vadd.f32 %v6324, %v6561
      %v6598 = vadd.f32 %v6325, %v6564
      %v6599 = vadd.f32 %v6326, %v6566
      %v6600 = vld [vmem:[#allocation2 + $0x36] sm:$0xff]
      %v6601 = vld [vmem:[#allocation2 + $0x3e] sm:$0xff]
      %v6602 = vld [vmem:[#allocation2 + $0x46] sm:$0xff]
      %v6603 = vld [vmem:[#allocation2 + $0x4e] sm:$0xff]
      %v6604 = vld [vmem:[#allocation2 + $0x56] sm:$0xff]
      %v6605 = vld [vmem:[#allocation2 + $0x5e] sm:$0xff]
      %v6606 = vld [vmem:[#allocation2 + $0x66] sm:$0xff]
      %v6607 = vld [vmem:[#allocation2 + $0x6e] sm:$0xff]
      %v6608 = vld [vmem:[#allocation2 + $0x76] sm:$0xff]
      %v6609 = vld [vmem:[#allocation2 + $0x7e] sm:$0xff]
      %v6610 = vld [vmem:[#allocation2 + $0x86] sm:$0xff]
      %v6611 = vld [vmem:[#allocation2 + $0x8e] sm:$0xff]
      %v6612 = vld [vmem:[#allocation2 + $0x96] sm:$0xff]
      %v6613 = vld [vmem:[#allocation2 + $0x9e] sm:$0xff]
      %v6614 = vld [vmem:[#allocation2 + $0xa6] sm:$0xff]
      %v6615 = vld [vmem:[#allocation2 + $0xae] sm:$0xff]
      %v6616 = vld [vmem:[#allocation2 + $0xb6] sm:$0xff]
      %v6617 = vld [vmem:[#allocation2 + $0xbe] sm:$0xff]
      %v6618 = vld [vmem:[#allocation2 + $0xc6] sm:$0xff]
      %v6619 = vld [vmem:[#allocation2 + $0xce] sm:$0xff]
      %v6620 = vld [vmem:[#allocation2 + $0xd6] sm:$0xff]
      %v6621 = vld [vmem:[#allocation2 + $0xde] sm:$0xff]
      %v6622 = vld [vmem:[#allocation2 + $0xe6] sm:$0xff]
      %v6623 = vld [vmem:[#allocation2 + $0xee] sm:$0xff]
      %v6624 = vld [vmem:[#allocation2 + $0xf6] sm:$0xff]
      %v6625 = vld [vmem:[#allocation2 + $0xfe] sm:$0xff]
      %v6626 = vld [vmem:[#allocation2 + $0x106] sm:$0xff]
      %v6627 = vld [vmem:[#allocation2 + $0x10e] sm:$0xff]
      %v6628 = vld [vmem:[#allocation2 + $0x116] sm:$0xff]
      %v6629 = vld [vmem:[#allocation2 + $0x11e] sm:$0xff]
      %v6630 = vld [vmem:[#allocation2 + $0x126] sm:$0xff]
      %v6631 = vld [vmem:[#allocation2 + $0x12e] sm:$0xff]
      %v6632 = vsel %vm2473, %v6600, 0.0
      %v6633 = vsel %vm2474, %v6601, 0.0
      %v6634 = vsel %vm2475, %v6602, 0.0
      %v6635 = vsel %vm2476, %v6603, 0.0
      %v6636 = vsel %vm2477, %v6604, 0.0
      %v6637 = vsel %vm2478, %v6605, 0.0
      %v6638 = vsel %vm2479, %v6606, 0.0
      %v6639 = vsel %vm2480, %v6607, 0.0
      %v6640 = vsel %vm2481, %v6608, 0.0
      %v6641 = vsel %vm2482, %v6609, 0.0
      %v6642 = vsel %vm2483, %v6610, 0.0
      %v6643 = vsel %vm2484, %v6611, 0.0
      %v6644 = vsel %vm2485, %v6612, 0.0
      %v6645 = vsel %vm2486, %v6613, 0.0
      %v6646 = vsel %vm2487, %v6614, 0.0
      %v6647 = vsel %vm2488, %v6615, 0.0
      %v6648 = vsel %vm2489, %v6616, 0.0
      %v6649 = vsel %vm2490, %v6617, 0.0
      %v6650 = vsel %vm2491, %v6618, 0.0
      %v6651 = vsel %vm2492, %v6619, 0.0
      %v6652 = vsel %vm2493, %v6620, 0.0
      %v6653 = vsel %vm2494, %v6621, 0.0
      %v6654 = vsel %vm2495, %v6622, 0.0
      %v6655 = vsel %vm2496, %v6623, 0.0
      %v6656 = vsel %vm2497, %v6624, 0.0
      %v6657 = vsel %vm2498, %v6625, 0.0
      %v6658 = vsel %vm2499, %v6626, 0.0
      %v6659 = vsel %vm2500, %v6627, 0.0
      %v6660 = vsel %vm2501, %v6628, 0.0
      %v6661 = vsel %vm2502, %v6629, 0.0
      %v6662 = vsel %vm2503, %v6630, 0.0
      %v6663 = vsel %vm2504, %v6631, 0.0
      %v6664 = vpack.c.bf16 %v6633, %v6632
      %v6665 = vpack.c.bf16 %v6635, %v6634
      %v6666 = vpack.c.bf16 %v6637, %v6636
      %v6667 = vpack.c.bf16 %v6639, %v6638
      %v6668 = vpack.c.bf16 %v6641, %v6640
      %v6669 = vpack.c.bf16 %v6643, %v6642
      %v6670 = vpack.c.bf16 %v6645, %v6644
      %v6671 = vpack.c.bf16 %v6647, %v6646
      %v6672 = vpack.c.bf16 %v6649, %v6648
      %v6673 = vpack.c.bf16 %v6651, %v6650
      %v6674 = vpack.c.bf16 %v6653, %v6652
      %v6675 = vpack.c.bf16 %v6655, %v6654
      %v6676 = vpack.c.bf16 %v6657, %v6656
      %v6677 = vpack.c.bf16 %v6659, %v6658
      %v6678 = vpack.c.bf16 %v6661, %v6660
      %v6679 = vpack.c.bf16 %v6663, %v6662
      %s6680 = scalar_lea.vmem %s5, 300
      %v6681 = vld [vmem:[%s6680] sm:$0xf]
      %v6682 = vld [vmem:[%s6680 + $0x4] sm:$0xf]
      %v6683 = vld [vmem:[%s6680 + $0x8] sm:$0xf]
      %v6684 = vld [vmem:[%s6680 + $0xc] sm:$0xf]
      %v6685 = vld [vmem:[%s6680 + $0x10] sm:$0x3]
      %v6691 = vunpack.c.l.b16 %v6681
      %v6692 = vunpack.c.l.b16 %v6682
      %v6693 = vunpack.c.l.b16 %v6683
      %v6694 = vunpack.c.l.b16 %v6684
      %v6695 = vunpack.c.l.b16 %v6685
      %v6696 = vpack.c.b16 %v6692, %v6691
      %v6697 = vpack.c.b16 %v6694, %v6693
      %v6698 = vpack.c.b16 %v6695, %v6695
      %v6702 = vsel %vm1405, %v6664, 0
      %v6705 = vsel %vm1405, %v6665, 0
      %v6708 = vsel %vm1405, %v6666, 0
      %v6711 = vsel %vm1405, %v6667, 0
      %v6714 = vsel %vm1405, %v6668, 0
      %v6717 = vsel %vm1405, %v6669, 0
      %v6720 = vsel %vm1405, %v6670, 0
      %v6723 = vsel %vm1405, %v6671, 0
      %v6726 = vsel %vm1405, %v6672, 0
      %v6729 = vsel %vm1405, %v6673, 0
      %v6732 = vsel %vm1405, %v6674, 0
      %v6735 = vsel %vm1405, %v6675, 0
      %v6738 = vsel %vm1405, %v6676, 0
      %v6741 = vsel %vm1405, %v6677, 0
      %v6744 = vsel %vm1405, %v6678, 0
      %v6747 = vsel %vm1405, %v6679, 0
      %v6750 = vsel %vm2771, %v6698, 0
      %6752 = vmatpush.bf16.msra.mxu0 0
      %6753 = vmatpush.bf16.msra.mxu0 0
      %6754 = vmatpush.bf16.msra.mxu0 0
      %6755 = vmatpush.bf16.msra.mxu0 0
      %6756 = vmatpush.bf16.msra.mxu0 0
      %6757 = vmatpush.bf16.msra.mxu0 %v6750
      %6758 = vmatpush.bf16.msra.mxu0 %v6697
      %6759 = vmatpush.bf16.msra.mxu0 %v6696
      %6760 = vmatmul.bf16.gmra.mxu0 %v6702
      %v6761 = vpop.f32.mrf.mxu0
      %v6762 = vadd.f32 0.0, %v6761
      %v6763 = vpop.f32.mrf.mxu0
      %v6764 = vadd.f32 0.0, %v6763
      %6765 = vmatmul.bf16.gmra.mxu0 %v6705
      %v6766 = vpop.f32.mrf.mxu0
      %v6767 = vadd.f32 0.0, %v6766
      %v6768 = vpop.f32.mrf.mxu0
      %v6769 = vadd.f32 0.0, %v6768
      %6770 = vmatmul.bf16.gmra.mxu0 %v6708
      %v6771 = vpop.f32.mrf.mxu0
      %v6772 = vadd.f32 0.0, %v6771
      %v6773 = vpop.f32.mrf.mxu0
      %v6774 = vadd.f32 0.0, %v6773
      %6775 = vmatmul.bf16.gmra.mxu0 %v6711
      %v6776 = vpop.f32.mrf.mxu0
      %v6777 = vadd.f32 0.0, %v6776
      %v6778 = vpop.f32.mrf.mxu0
      %v6779 = vadd.f32 0.0, %v6778
      %6780 = vmatmul.bf16.gmra.mxu0 %v6714
      %v6781 = vpop.f32.mrf.mxu0
      %v6782 = vadd.f32 0.0, %v6781
      %v6783 = vpop.f32.mrf.mxu0
      %v6784 = vadd.f32 0.0, %v6783
      %6785 = vmatmul.bf16.gmra.mxu0 %v6717
      %v6786 = vpop.f32.mrf.mxu0
      %v6787 = vadd.f32 0.0, %v6786
      %v6788 = vpop.f32.mrf.mxu0
      %v6789 = vadd.f32 0.0, %v6788
      %6790 = vmatmul.bf16.gmra.mxu0 %v6720
      %v6791 = vpop.f32.mrf.mxu0
      %v6792 = vadd.f32 0.0, %v6791
      %v6793 = vpop.f32.mrf.mxu0
      %v6794 = vadd.f32 0.0, %v6793
      %6795 = vmatmul.bf16.gmra.mxu0 %v6723
      %v6796 = vpop.f32.mrf.mxu0
      %v6797 = vadd.f32 0.0, %v6796
      %v6798 = vpop.f32.mrf.mxu0
      %v6799 = vadd.f32 0.0, %v6798
      %6800 = vmatmul.bf16.gmra.mxu0 %v6726
      %v6801 = vpop.f32.mrf.mxu0
      %v6802 = vadd.f32 0.0, %v6801
      %v6803 = vpop.f32.mrf.mxu0
      %v6804 = vadd.f32 0.0, %v6803
      %6805 = vmatmul.bf16.gmra.mxu0 %v6729
      %v6806 = vpop.f32.mrf.mxu0
      %v6807 = vadd.f32 0.0, %v6806
      %v6808 = vpop.f32.mrf.mxu0
      %v6809 = vadd.f32 0.0, %v6808
      %6810 = vmatmul.bf16.gmra.mxu0 %v6732
      %v6811 = vpop.f32.mrf.mxu0
      %v6812 = vadd.f32 0.0, %v6811
      %v6813 = vpop.f32.mrf.mxu0
      %v6814 = vadd.f32 0.0, %v6813
      %6815 = vmatmul.bf16.gmra.mxu0 %v6735
      %v6816 = vpop.f32.mrf.mxu0
      %v6817 = vadd.f32 0.0, %v6816
      %v6818 = vpop.f32.mrf.mxu0
      %v6819 = vadd.f32 0.0, %v6818
      %6820 = vmatmul.bf16.gmra.mxu0 %v6738
      %v6821 = vpop.f32.mrf.mxu0
      %v6822 = vadd.f32 0.0, %v6821
      %v6823 = vpop.f32.mrf.mxu0
      %v6824 = vadd.f32 0.0, %v6823
      %6825 = vmatmul.bf16.gmra.mxu0 %v6741
      %v6826 = vpop.f32.mrf.mxu0
      %v6827 = vadd.f32 0.0, %v6826
      %v6828 = vpop.f32.mrf.mxu0
      %v6829 = vadd.f32 0.0, %v6828
      %6830 = vmatmul.bf16.gmra.mxu0 %v6744
      %v6831 = vpop.f32.mrf.mxu0
      %v6832 = vadd.f32 0.0, %v6831
      %v6833 = vpop.f32.mrf.mxu0
      %v6834 = vadd.f32 0.0, %v6833
      %6835 = vmatmul.bf16.gmra.mxu0 %v6747
      %v6836 = vpop.f32.mrf.mxu0
      %v6837 = vadd.f32 0.0, %v6836
      %v6838 = vpop.f32.mrf.mxu0
      %v6839 = vadd.f32 0.0, %v6838
      %6840 = vdwg.mxu0
      %v6841 = vadd.f32 %v6568, %v6762
      %v6842 = vadd.f32 %v6569, %v6764
      %v6843 = vadd.f32 %v6570, %v6767
      %v6844 = vadd.f32 %v6571, %v6769
      %v6845 = vadd.f32 %v6572, %v6772
      %v6846 = vadd.f32 %v6573, %v6774
      %v6847 = vadd.f32 %v6574, %v6777
      %v6848 = vadd.f32 %v6575, %v6779
      %v6849 = vadd.f32 %v6576, %v6782
      %v6850 = vadd.f32 %v6577, %v6784
      %v6851 = vadd.f32 %v6578, %v6787
      %v6852 = vadd.f32 %v6579, %v6789
      %v6853 = vadd.f32 %v6580, %v6792
      %v6854 = vadd.f32 %v6581, %v6794
      %v6855 = vadd.f32 %v6582, %v6797
      %v6856 = vadd.f32 %v6583, %v6799
      %v6857 = vadd.f32 %v6584, %v6802
      %v6858 = vadd.f32 %v6585, %v6804
      %v6859 = vadd.f32 %v6586, %v6807
      %v6860 = vadd.f32 %v6587, %v6809
      %v6861 = vadd.f32 %v6588, %v6812
      %v6862 = vadd.f32 %v6589, %v6814
      %v6863 = vadd.f32 %v6590, %v6817
      %v6864 = vadd.f32 %v6591, %v6819
      %v6865 = vadd.f32 %v6592, %v6822
      %v6866 = vadd.f32 %v6593, %v6824
      %v6867 = vadd.f32 %v6594, %v6827
      %v6868 = vadd.f32 %v6595, %v6829
      %v6869 = vadd.f32 %v6596, %v6832
      %v6870 = vadd.f32 %v6597, %v6834
      %v6871 = vadd.f32 %v6598, %v6837
      %v6872 = vadd.f32 %v6599, %v6839
      %v6873 = vld [vmem:[#allocation2 + $0x37] sm:$0xff]
      %v6874 = vld [vmem:[#allocation2 + $0x3f] sm:$0xff]
      %v6875 = vld [vmem:[#allocation2 + $0x47] sm:$0xff]
      %v6876 = vld [vmem:[#allocation2 + $0x4f] sm:$0xff]
      %v6877 = vld [vmem:[#allocation2 + $0x57] sm:$0xff]
      %v6878 = vld [vmem:[#allocation2 + $0x5f] sm:$0xff]
      %v6879 = vld [vmem:[#allocation2 + $0x67] sm:$0xff]
      %v6880 = vld [vmem:[#allocation2 + $0x6f] sm:$0xff]
      %v6881 = vld [vmem:[#allocation2 + $0x77] sm:$0xff]
      %v6882 = vld [vmem:[#allocation2 + $0x7f] sm:$0xff]
      %v6883 = vld [vmem:[#allocation2 + $0x87] sm:$0xff]
      %v6884 = vld [vmem:[#allocation2 + $0x8f] sm:$0xff]
      %v6885 = vld [vmem:[#allocation2 + $0x97] sm:$0xff]
      %v6886 = vld [vmem:[#allocation2 + $0x9f] sm:$0xff]
      %v6887 = vld [vmem:[#allocation2 + $0xa7] sm:$0xff]
      %v6888 = vld [vmem:[#allocation2 + $0xaf] sm:$0xff]
      %v6889 = vld [vmem:[#allocation2 + $0xb7] sm:$0xff]
      %v6890 = vld [vmem:[#allocation2 + $0xbf] sm:$0xff]
      %v6891 = vld [vmem:[#allocation2 + $0xc7] sm:$0xff]
      %v6892 = vld [vmem:[#allocation2 + $0xcf] sm:$0xff]
      %v6893 = vld [vmem:[#allocation2 + $0xd7] sm:$0xff]
      %v6894 = vld [vmem:[#allocation2 + $0xdf] sm:$0xff]
      %v6895 = vld [vmem:[#allocation2 + $0xe7] sm:$0xff]
      %v6896 = vld [vmem:[#allocation2 + $0xef] sm:$0xff]
      %v6897 = vld [vmem:[#allocation2 + $0xf7] sm:$0xff]
      %v6898 = vld [vmem:[#allocation2 + $0xff] sm:$0xff]
      %v6899 = vld [vmem:[#allocation2 + $0x107] sm:$0xff]
      %v6900 = vld [vmem:[#allocation2 + $0x10f] sm:$0xff]
      %v6901 = vld [vmem:[#allocation2 + $0x117] sm:$0xff]
      %v6902 = vld [vmem:[#allocation2 + $0x11f] sm:$0xff]
      %v6903 = vld [vmem:[#allocation2 + $0x127] sm:$0xff]
      %v6904 = vld [vmem:[#allocation2 + $0x12f] sm:$0xff]
      %v6905 = vsel %vm2622, %v6873, 0.0
      %v6906 = vsel %vm2623, %v6874, 0.0
      %v6907 = vsel %vm2624, %v6875, 0.0
      %v6908 = vsel %vm2625, %v6876, 0.0
      %v6909 = vsel %vm2626, %v6877, 0.0
      %v6910 = vsel %vm2627, %v6878, 0.0
      %v6911 = vsel %vm2628, %v6879, 0.0
      %v6912 = vsel %vm2629, %v6880, 0.0
      %v6913 = vsel %vm2630, %v6881, 0.0
      %v6914 = vsel %vm2631, %v6882, 0.0
      %v6915 = vsel %vm2632, %v6883, 0.0
      %v6916 = vsel %vm2633, %v6884, 0.0
      %v6917 = vsel %vm2634, %v6885, 0.0
      %v6918 = vsel %vm2635, %v6886, 0.0
      %v6919 = vsel %vm2636, %v6887, 0.0
      %v6920 = vsel %vm2637, %v6888, 0.0
      %v6921 = vsel %vm2638, %v6889, 0.0
      %v6922 = vsel %vm2639, %v6890, 0.0
      %v6923 = vsel %vm2640, %v6891, 0.0
      %v6924 = vsel %vm2641, %v6892, 0.0
      %v6925 = vsel %vm2642, %v6893, 0.0
      %v6926 = vsel %vm2643, %v6894, 0.0
      %v6927 = vsel %vm2644, %v6895, 0.0
      %v6928 = vsel %vm2645, %v6896, 0.0
      %v6929 = vsel %vm2646, %v6897, 0.0
      %v6930 = vsel %vm2647, %v6898, 0.0
      %v6931 = vsel %vm2648, %v6899, 0.0
      %v6932 = vsel %vm2649, %v6900, 0.0
      %v6933 = vsel %vm2650, %v6901, 0.0
      %v6934 = vsel %vm2651, %v6902, 0.0
      %v6935 = vsel %vm2652, %v6903, 0.0
      %v6936 = vsel %vm2653, %v6904, 0.0
      %v6937 = vpack.c.bf16 %v6906, %v6905
      %v6938 = vpack.c.bf16 %v6908, %v6907
      %v6939 = vpack.c.bf16 %v6910, %v6909
      %v6940 = vpack.c.bf16 %v6912, %v6911
      %v6941 = vpack.c.bf16 %v6914, %v6913
      %v6942 = vpack.c.bf16 %v6916, %v6915
      %v6943 = vpack.c.bf16 %v6918, %v6917
      %v6944 = vpack.c.bf16 %v6920, %v6919
      %v6945 = vpack.c.bf16 %v6922, %v6921
      %v6946 = vpack.c.bf16 %v6924, %v6923
      %v6947 = vpack.c.bf16 %v6926, %v6925
      %v6948 = vpack.c.bf16 %v6928, %v6927
      %v6949 = vpack.c.bf16 %v6930, %v6929
      %v6950 = vpack.c.bf16 %v6932, %v6931
      %v6951 = vpack.c.bf16 %v6934, %v6933
      %v6952 = vpack.c.bf16 %v6936, %v6935
      %s6953 = scalar_lea.vmem %s5, 320
      %v6954 = vld [vmem:[%s6953] sm:$0xf]
      %v6955 = vld [vmem:[%s6953 + $0x4] sm:$0xf]
      %v6956 = vld [vmem:[%s6953 + $0x8] sm:$0xf]
      %v6957 = vld [vmem:[%s6953 + $0xc] sm:$0xf]
      %v6958 = vld [vmem:[%s6953 + $0x10] sm:$0x3]
      %v6964 = vunpack.c.l.b16 %v6954
      %v6965 = vunpack.c.l.b16 %v6955
      %v6966 = vunpack.c.l.b16 %v6956
      %v6967 = vunpack.c.l.b16 %v6957
      %v6968 = vunpack.c.l.b16 %v6958
      %v6969 = vpack.c.b16 %v6965, %v6964
      %v6970 = vpack.c.b16 %v6967, %v6966
      %v6971 = vpack.c.b16 %v6968, %v6968
      %v6975 = vsel %vm1405, %v6937, 0
      %v6978 = vsel %vm1405, %v6938, 0
      %v6981 = vsel %vm1405, %v6939, 0
      %v6984 = vsel %vm1405, %v6940, 0
      %v6987 = vsel %vm1405, %v6941, 0
      %v6990 = vsel %vm1405, %v6942, 0
      %v6993 = vsel %vm1405, %v6943, 0
      %v6996 = vsel %vm1405, %v6944, 0
      %v6999 = vsel %vm1405, %v6945, 0
      %v7002 = vsel %vm1405, %v6946, 0
      %v7005 = vsel %vm1405, %v6947, 0
      %v7008 = vsel %vm1405, %v6948, 0
      %v7011 = vsel %vm1405, %v6949, 0
      %v7014 = vsel %vm1405, %v6950, 0
      %v7017 = vsel %vm1405, %v6951, 0
      %v7020 = vsel %vm1405, %v6952, 0
      %v7023 = vsel %vm2771, %v6971, 0
      %7025 = vmatpush.bf16.msra.mxu0 0
      %7026 = vmatpush.bf16.msra.mxu0 0
      %7027 = vmatpush.bf16.msra.mxu0 0
      %7028 = vmatpush.bf16.msra.mxu0 0
      %7029 = vmatpush.bf16.msra.mxu0 0
      %7030 = vmatpush.bf16.msra.mxu0 %v7023
      %7031 = vmatpush.bf16.msra.mxu0 %v6970
      %7032 = vmatpush.bf16.msra.mxu0 %v6969
      %7033 = vmatmul.bf16.gmra.mxu0 %v6975
      %v7034 = vpop.f32.mrf.mxu0
      %v7035 = vadd.f32 0.0, %v7034
      %v7036 = vpop.f32.mrf.mxu0
      %v7037 = vadd.f32 0.0, %v7036
      %7038 = vmatmul.bf16.gmra.mxu0 %v6978
      %v7039 = vpop.f32.mrf.mxu0
      %v7040 = vadd.f32 0.0, %v7039
      %v7041 = vpop.f32.mrf.mxu0
      %v7042 = vadd.f32 0.0, %v7041
      %7043 = vmatmul.bf16.gmra.mxu0 %v6981
      %v7044 = vpop.f32.mrf.mxu0
      %v7045 = vadd.f32 0.0, %v7044
      %v7046 = vpop.f32.mrf.mxu0
      %v7047 = vadd.f32 0.0, %v7046
      %7048 = vmatmul.bf16.gmra.mxu0 %v6984
      %v7049 = vpop.f32.mrf.mxu0
      %v7050 = vadd.f32 0.0, %v7049
      %v7051 = vpop.f32.mrf.mxu0
      %v7052 = vadd.f32 0.0, %v7051
      %7053 = vmatmul.bf16.gmra.mxu0 %v6987
      %v7054 = vpop.f32.mrf.mxu0
      %v7055 = vadd.f32 0.0, %v7054
      %v7056 = vpop.f32.mrf.mxu0
      %v7057 = vadd.f32 0.0, %v7056
      %7058 = vmatmul.bf16.gmra.mxu0 %v6990
      %v7059 = vpop.f32.mrf.mxu0
      %v7060 = vadd.f32 0.0, %v7059
      %v7061 = vpop.f32.mrf.mxu0
      %v7062 = vadd.f32 0.0, %v7061
      %7063 = vmatmul.bf16.gmra.mxu0 %v6993
      %v7064 = vpop.f32.mrf.mxu0
      %v7065 = vadd.f32 0.0, %v7064
      %v7066 = vpop.f32.mrf.mxu0
      %v7067 = vadd.f32 0.0, %v7066
      %7068 = vmatmul.bf16.gmra.mxu0 %v6996
      %v7069 = vpop.f32.mrf.mxu0
      %v7070 = vadd.f32 0.0, %v7069
      %v7071 = vpop.f32.mrf.mxu0
      %v7072 = vadd.f32 0.0, %v7071
      %7073 = vmatmul.bf16.gmra.mxu0 %v6999
      %v7074 = vpop.f32.mrf.mxu0
      %v7075 = vadd.f32 0.0, %v7074
      %v7076 = vpop.f32.mrf.mxu0
      %v7077 = vadd.f32 0.0, %v7076
      %7078 = vmatmul.bf16.gmra.mxu0 %v7002
      %v7079 = vpop.f32.mrf.mxu0
      %v7080 = vadd.f32 0.0, %v7079
      %v7081 = vpop.f32.mrf.mxu0
      %v7082 = vadd.f32 0.0, %v7081
      %7083 = vmatmul.bf16.gmra.mxu0 %v7005
      %v7084 = vpop.f32.mrf.mxu0
      %v7085 = vadd.f32 0.0, %v7084
      %v7086 = vpop.f32.mrf.mxu0
      %v7087 = vadd.f32 0.0, %v7086
      %7088 = vmatmul.bf16.gmra.mxu0 %v7008
      %v7089 = vpop.f32.mrf.mxu0
      %v7090 = vadd.f32 0.0, %v7089
      %v7091 = vpop.f32.mrf.mxu0
      %v7092 = vadd.f32 0.0, %v7091
      %7093 = vmatmul.bf16.gmra.mxu0 %v7011
      %v7094 = vpop.f32.mrf.mxu0
      %v7095 = vadd.f32 0.0, %v7094
      %v7096 = vpop.f32.mrf.mxu0
      %v7097 = vadd.f32 0.0, %v7096
      %7098 = vmatmul.bf16.gmra.mxu0 %v7014
      %v7099 = vpop.f32.mrf.mxu0
      %v7100 = vadd.f32 0.0, %v7099
      %v7101 = vpop.f32.mrf.mxu0
      %v7102 = vadd.f32 0.0, %v7101
      %7103 = vmatmul.bf16.gmra.mxu0 %v7017
      %v7104 = vpop.f32.mrf.mxu0
      %v7105 = vadd.f32 0.0, %v7104
      %v7106 = vpop.f32.mrf.mxu0
      %v7107 = vadd.f32 0.0, %v7106
      %7108 = vmatmul.bf16.gmra.mxu0 %v7020
      %v7109 = vpop.f32.mrf.mxu0
      %v7110 = vadd.f32 0.0, %v7109
      %v7111 = vpop.f32.mrf.mxu0
      %v7112 = vadd.f32 0.0, %v7111
      %7113 = vdwg.mxu0
      %v7114 = vadd.f32 %v6841, %v7035
      %v7115 = vadd.f32 %v6842, %v7037
      %v7116 = vadd.f32 %v6843, %v7040
      %v7117 = vadd.f32 %v6844, %v7042
      %v7118 = vadd.f32 %v6845, %v7045
      %v7119 = vadd.f32 %v6846, %v7047
      %v7120 = vadd.f32 %v6847, %v7050
      %v7121 = vadd.f32 %v6848, %v7052
      %v7122 = vadd.f32 %v6849, %v7055
      %v7123 = vadd.f32 %v6850, %v7057
      %v7124 = vadd.f32 %v6851, %v7060
      %v7125 = vadd.f32 %v6852, %v7062
      %v7126 = vadd.f32 %v6853, %v7065
      %v7127 = vadd.f32 %v6854, %v7067
      %v7128 = vadd.f32 %v6855, %v7070
      %v7129 = vadd.f32 %v6856, %v7072
      %v7130 = vadd.f32 %v6857, %v7075
      %v7131 = vadd.f32 %v6858, %v7077
      %v7132 = vadd.f32 %v6859, %v7080
      %v7133 = vadd.f32 %v6860, %v7082
      %v7134 = vadd.f32 %v6861, %v7085
      %v7135 = vadd.f32 %v6862, %v7087
      %v7136 = vadd.f32 %v6863, %v7090
      %v7137 = vadd.f32 %v6864, %v7092
      %v7138 = vadd.f32 %v6865, %v7095
      %v7139 = vadd.f32 %v6866, %v7097
      %v7140 = vadd.f32 %v6867, %v7100
      %v7141 = vadd.f32 %v6868, %v7102
      %v7142 = vadd.f32 %v6869, %v7105
      %v7143 = vadd.f32 %v6870, %v7107
      %v7144 = vadd.f32 %v6871, %v7110
      %v7145 = vadd.f32 %v6872, %v7112
      %v7146 = vld [vmem:[#allocation2 + $0x38] sm:$0xff]
      %v7147 = vld [vmem:[#allocation2 + $0x40] sm:$0xff]
      %v7148 = vld [vmem:[#allocation2 + $0x48] sm:$0xff]
      %v7149 = vld [vmem:[#allocation2 + $0x50] sm:$0xff]
      %v7150 = vld [vmem:[#allocation2 + $0x58] sm:$0xff]
      %v7151 = vld [vmem:[#allocation2 + $0x60] sm:$0xff]
      %v7152 = vld [vmem:[#allocation2 + $0x68] sm:$0xff]
      %v7153 = vld [vmem:[#allocation2 + $0x70] sm:$0xff]
      %v7154 = vld [vmem:[#allocation2 + $0x78] sm:$0xff]
      %v7155 = vld [vmem:[#allocation2 + $0x80] sm:$0xff]
      %v7156 = vld [vmem:[#allocation2 + $0x88] sm:$0xff]
      %v7157 = vld [vmem:[#allocation2 + $0x90] sm:$0xff]
      %v7158 = vld [vmem:[#allocation2 + $0x98] sm:$0xff]
      %v7159 = vld [vmem:[#allocation2 + $0xa0] sm:$0xff]
      %v7160 = vld [vmem:[#allocation2 + $0xa8] sm:$0xff]
      %v7161 = vld [vmem:[#allocation2 + $0xb0] sm:$0xff]
      %v7162 = vld [vmem:[#allocation2 + $0xb8] sm:$0xff]
      %v7163 = vld [vmem:[#allocation2 + $0xc0] sm:$0xff]
      %v7164 = vld [vmem:[#allocation2 + $0xc8] sm:$0xff]
      %v7165 = vld [vmem:[#allocation2 + $0xd0] sm:$0xff]
      %v7166 = vld [vmem:[#allocation2 + $0xd8] sm:$0xff]
      %v7167 = vld [vmem:[#allocation2 + $0xe0] sm:$0xff]
      %v7168 = vld [vmem:[#allocation2 + $0xe8] sm:$0xff]
      %v7169 = vld [vmem:[#allocation2 + $0xf0] sm:$0xff]
      %v7170 = vld [vmem:[#allocation2 + $0xf8] sm:$0xff]
      %v7171 = vld [vmem:[#allocation2 + $0x100] sm:$0xff]
      %v7172 = vld [vmem:[#allocation2 + $0x108] sm:$0xff]
      %v7173 = vld [vmem:[#allocation2 + $0x110] sm:$0xff]
      %v7174 = vld [vmem:[#allocation2 + $0x118] sm:$0xff]
      %v7175 = vld [vmem:[#allocation2 + $0x120] sm:$0xff]
      %v7176 = vld [vmem:[#allocation2 + $0x128] sm:$0xff]
      %v7177 = vld [vmem:[#allocation2 + $0x130] sm:$0xff]
      %v7178 = vpack.c.bf16 %v7147, %v7146
      %v7179 = vpack.c.bf16 %v7149, %v7148
      %v7180 = vpack.c.bf16 %v7151, %v7150
      %v7181 = vpack.c.bf16 %v7153, %v7152
      %v7182 = vpack.c.bf16 %v7155, %v7154
      %v7183 = vpack.c.bf16 %v7157, %v7156
      %v7184 = vpack.c.bf16 %v7159, %v7158
      %v7185 = vpack.c.bf16 %v7161, %v7160
      %v7186 = vpack.c.bf16 %v7163, %v7162
      %v7187 = vpack.c.bf16 %v7165, %v7164
      %v7188 = vpack.c.bf16 %v7167, %v7166
      %v7189 = vpack.c.bf16 %v7169, %v7168
      %v7190 = vpack.c.bf16 %v7171, %v7170
      %v7191 = vpack.c.bf16 %v7173, %v7172
      %v7192 = vpack.c.bf16 %v7175, %v7174
      %v7193 = vpack.c.bf16 %v7177, %v7176
      %s7194 = scalar_lea.vmem %s5, 340
      %v7195 = vld [vmem:[%s7194] sm:$0xf]
      %v7196 = vld [vmem:[%s7194 + $0x4] sm:$0xf]
      %v7197 = vld [vmem:[%s7194 + $0x8] sm:$0xf]
      %v7198 = vld [vmem:[%s7194 + $0xc] sm:$0xf]
      %v7199 = vld [vmem:[%s7194 + $0x10] sm:$0x3]
      %v7205 = vunpack.c.l.b16 %v7195
      %v7206 = vunpack.c.l.b16 %v7196
      %v7207 = vunpack.c.l.b16 %v7197
      %v7208 = vunpack.c.l.b16 %v7198
      %v7209 = vunpack.c.l.b16 %v7199
      %v7210 = vpack.c.b16 %v7206, %v7205
      %v7211 = vpack.c.b16 %v7208, %v7207
      %v7212 = vpack.c.b16 %v7209, %v7209
      %v7216 = vsel %vm1405, %v7178, 0
      %v7219 = vsel %vm1405, %v7179, 0
      %v7222 = vsel %vm1405, %v7180, 0
      %v7225 = vsel %vm1405, %v7181, 0
      %v7228 = vsel %vm1405, %v7182, 0
      %v7231 = vsel %vm1405, %v7183, 0
      %v7234 = vsel %vm1405, %v7184, 0
      %v7237 = vsel %vm1405, %v7185, 0
      %v7240 = vsel %vm1405, %v7186, 0
      %v7243 = vsel %vm1405, %v7187, 0
      %v7246 = vsel %vm1405, %v7188, 0
      %v7249 = vsel %vm1405, %v7189, 0
      %v7252 = vsel %vm1405, %v7190, 0
      %v7255 = vsel %vm1405, %v7191, 0
      %v7258 = vsel %vm1405, %v7192, 0
      %v7261 = vsel %vm1405, %v7193, 0
      %v7264 = vsel %vm2771, %v7212, 0
      %7266 = vmatpush.bf16.msra.mxu0 0
      %7267 = vmatpush.bf16.msra.mxu0 0
      %7268 = vmatpush.bf16.msra.mxu0 0
      %7269 = vmatpush.bf16.msra.mxu0 0
      %7270 = vmatpush.bf16.msra.mxu0 0
      %7271 = vmatpush.bf16.msra.mxu0 %v7264
      %7272 = vmatpush.bf16.msra.mxu0 %v7211
      %7273 = vmatpush.bf16.msra.mxu0 %v7210
      %7274 = vmatmul.bf16.gmra.mxu0 %v7216
      %v7275 = vpop.f32.mrf.mxu0
      %v7276 = vadd.f32 0.0, %v7275
      %v7277 = vpop.f32.mrf.mxu0
      %v7278 = vadd.f32 0.0, %v7277
      %7279 = vmatmul.bf16.gmra.mxu0 %v7219
      %v7280 = vpop.f32.mrf.mxu0
      %v7281 = vadd.f32 0.0, %v7280
      %v7282 = vpop.f32.mrf.mxu0
      %v7283 = vadd.f32 0.0, %v7282
      %7284 = vmatmul.bf16.gmra.mxu0 %v7222
      %v7285 = vpop.f32.mrf.mxu0
      %v7286 = vadd.f32 0.0, %v7285
      %v7287 = vpop.f32.mrf.mxu0
      %v7288 = vadd.f32 0.0, %v7287
      %7289 = vmatmul.bf16.gmra.mxu0 %v7225
      %v7290 = vpop.f32.mrf.mxu0
      %v7291 = vadd.f32 0.0, %v7290
      %v7292 = vpop.f32.mrf.mxu0
      %v7293 = vadd.f32 0.0, %v7292
      %7294 = vmatmul.bf16.gmra.mxu0 %v7228
      %v7295 = vpop.f32.mrf.mxu0
      %v7296 = vadd.f32 0.0, %v7295
      %v7297 = vpop.f32.mrf.mxu0
      %v7298 = vadd.f32 0.0, %v7297
      %7299 = vmatmul.bf16.gmra.mxu0 %v7231
      %v7300 = vpop.f32.mrf.mxu0
      %v7301 = vadd.f32 0.0, %v7300
      %v7302 = vpop.f32.mrf.mxu0
      %v7303 = vadd.f32 0.0, %v7302
      %7304 = vmatmul.bf16.gmra.mxu0 %v7234
      %v7305 = vpop.f32.mrf.mxu0
      %v7306 = vadd.f32 0.0, %v7305
      %v7307 = vpop.f32.mrf.mxu0
      %v7308 = vadd.f32 0.0, %v7307
      %7309 = vmatmul.bf16.gmra.mxu0 %v7237
      %v7310 = vpop.f32.mrf.mxu0
      %v7311 = vadd.f32 0.0, %v7310
      %v7312 = vpop.f32.mrf.mxu0
      %v7313 = vadd.f32 0.0, %v7312
      %7314 = vmatmul.bf16.gmra.mxu0 %v7240
      %v7315 = vpop.f32.mrf.mxu0
      %v7316 = vadd.f32 0.0, %v7315
      %v7317 = vpop.f32.mrf.mxu0
      %v7318 = vadd.f32 0.0, %v7317
      %7319 = vmatmul.bf16.gmra.mxu0 %v7243
      %v7320 = vpop.f32.mrf.mxu0
      %v7321 = vadd.f32 0.0, %v7320
      %v7322 = vpop.f32.mrf.mxu0
      %v7323 = vadd.f32 0.0, %v7322
      %7324 = vmatmul.bf16.gmra.mxu0 %v7246
      %v7325 = vpop.f32.mrf.mxu0
      %v7326 = vadd.f32 0.0, %v7325
      %v7327 = vpop.f32.mrf.mxu0
      %v7328 = vadd.f32 0.0, %v7327
      %7329 = vmatmul.bf16.gmra.mxu0 %v7249
      %v7330 = vpop.f32.mrf.mxu0
      %v7331 = vadd.f32 0.0, %v7330
      %v7332 = vpop.f32.mrf.mxu0
      %v7333 = vadd.f32 0.0, %v7332
      %7334 = vmatmul.bf16.gmra.mxu0 %v7252
      %v7335 = vpop.f32.mrf.mxu0
      %v7336 = vadd.f32 0.0, %v7335
      %v7337 = vpop.f32.mrf.mxu0
      %v7338 = vadd.f32 0.0, %v7337
      %7339 = vmatmul.bf16.gmra.mxu0 %v7255
      %v7340 = vpop.f32.mrf.mxu0
      %v7341 = vadd.f32 0.0, %v7340
      %v7342 = vpop.f32.mrf.mxu0
      %v7343 = vadd.f32 0.0, %v7342
      %7344 = vmatmul.bf16.gmra.mxu0 %v7258
      %v7345 = vpop.f32.mrf.mxu0
      %v7346 = vadd.f32 0.0, %v7345
      %v7347 = vpop.f32.mrf.mxu0
      %v7348 = vadd.f32 0.0, %v7347
      %7349 = vmatmul.bf16.gmra.mxu0 %v7261
      %v7350 = vpop.f32.mrf.mxu0
      %v7351 = vadd.f32 0.0, %v7350
      %v7352 = vpop.f32.mrf.mxu0
      %v7353 = vadd.f32 0.0, %v7352
      %7354 = vdwg.mxu0
      %v7355 = vadd.f32 %v7114, %v7276
      %v7356 = vadd.f32 %v7115, %v7278
      %v7357 = vadd.f32 %v7116, %v7281
      %v7358 = vadd.f32 %v7117, %v7283
      %v7359 = vadd.f32 %v7118, %v7286
      %v7360 = vadd.f32 %v7119, %v7288
      %v7361 = vadd.f32 %v7120, %v7291
      %v7362 = vadd.f32 %v7121, %v7293
      %v7363 = vadd.f32 %v7122, %v7296
      %v7364 = vadd.f32 %v7123, %v7298
      %v7365 = vadd.f32 %v7124, %v7301
      %v7366 = vadd.f32 %v7125, %v7303
      %v7367 = vadd.f32 %v7126, %v7306
      %v7368 = vadd.f32 %v7127, %v7308
      %v7369 = vadd.f32 %v7128, %v7311
      %v7370 = vadd.f32 %v7129, %v7313
      %v7371 = vadd.f32 %v7130, %v7316
      %v7372 = vadd.f32 %v7131, %v7318
      %v7373 = vadd.f32 %v7132, %v7321
      %v7374 = vadd.f32 %v7133, %v7323
      %v7375 = vadd.f32 %v7134, %v7326
      %v7376 = vadd.f32 %v7135, %v7328
      %v7377 = vadd.f32 %v7136, %v7331
      %v7378 = vadd.f32 %v7137, %v7333
      %v7379 = vadd.f32 %v7138, %v7336
      %v7380 = vadd.f32 %v7139, %v7338
      %v7381 = vadd.f32 %v7140, %v7341
      %v7382 = vadd.f32 %v7141, %v7343
      %v7383 = vadd.f32 %v7142, %v7346
      %v7384 = vadd.f32 %v7143, %v7348
      %v7385 = vadd.f32 %v7144, %v7351
      %v7386 = vadd.f32 %v7145, %v7353
      %v7387 = vld [vmem:[#allocation2 + $0x39] sm:$0xff]
      %v7388 = vld [vmem:[#allocation2 + $0x41] sm:$0xff]
      %v7389 = vld [vmem:[#allocation2 + $0x49] sm:$0xff]
      %v7390 = vld [vmem:[#allocation2 + $0x51] sm:$0xff]
      %v7391 = vld [vmem:[#allocation2 + $0x59] sm:$0xff]
      %v7392 = vld [vmem:[#allocation2 + $0x61] sm:$0xff]
      %v7393 = vld [vmem:[#allocation2 + $0x69] sm:$0xff]
      %v7394 = vld [vmem:[#allocation2 + $0x71] sm:$0xff]
      %v7395 = vld [vmem:[#allocation2 + $0x79] sm:$0xff]
      %v7396 = vld [vmem:[#allocation2 + $0x81] sm:$0xff]
      %v7397 = vld [vmem:[#allocation2 + $0x89] sm:$0xff]
      %v7398 = vld [vmem:[#allocation2 + $0x91] sm:$0xff]
      %v7399 = vld [vmem:[#allocation2 + $0x99] sm:$0xff]
      %v7400 = vld [vmem:[#allocation2 + $0xa1] sm:$0xff]
      %v7401 = vld [vmem:[#allocation2 + $0xa9] sm:$0xff]
      %v7402 = vld [vmem:[#allocation2 + $0xb1] sm:$0xff]
      %v7403 = vld [vmem:[#allocation2 + $0xb9] sm:$0xff]
      %v7404 = vld [vmem:[#allocation2 + $0xc1] sm:$0xff]
      %v7405 = vld [vmem:[#allocation2 + $0xc9] sm:$0xff]
      %v7406 = vld [vmem:[#allocation2 + $0xd1] sm:$0xff]
      %v7407 = vld [vmem:[#allocation2 + $0xd9] sm:$0xff]
      %v7408 = vld [vmem:[#allocation2 + $0xe1] sm:$0xff]
      %v7409 = vld [vmem:[#allocation2 + $0xe9] sm:$0xff]
      %v7410 = vld [vmem:[#allocation2 + $0xf1] sm:$0xff]
      %v7411 = vld [vmem:[#allocation2 + $0xf9] sm:$0xff]
      %v7412 = vld [vmem:[#allocation2 + $0x101] sm:$0xff]
      %v7413 = vld [vmem:[#allocation2 + $0x109] sm:$0xff]
      %v7414 = vld [vmem:[#allocation2 + $0x111] sm:$0xff]
      %v7415 = vld [vmem:[#allocation2 + $0x119] sm:$0xff]
      %v7416 = vld [vmem:[#allocation2 + $0x121] sm:$0xff]
      %v7417 = vld [vmem:[#allocation2 + $0x129] sm:$0xff]
      %v7418 = vld [vmem:[#allocation2 + $0x131] sm:$0xff]
      %v7419 = vsel %vm3324, %v7387, 0.0
      %v7420 = vsel %vm3325, %v7388, 0.0
      %v7421 = vsel %vm3326, %v7389, 0.0
      %v7422 = vsel %vm3327, %v7390, 0.0
      %v7423 = vsel %vm3328, %v7391, 0.0
      %v7424 = vsel %vm3329, %v7392, 0.0
      %v7425 = vsel %vm3330, %v7393, 0.0
      %v7426 = vsel %vm3331, %v7394, 0.0
      %v7427 = vsel %vm3332, %v7395, 0.0
      %v7428 = vsel %vm3333, %v7396, 0.0
      %v7429 = vsel %vm3334, %v7397, 0.0
      %v7430 = vsel %vm3335, %v7398, 0.0
      %v7431 = vsel %vm3336, %v7399, 0.0
      %v7432 = vsel %vm3337, %v7400, 0.0
      %v7433 = vsel %vm3338, %v7401, 0.0
      %v7434 = vsel %vm3339, %v7402, 0.0
      %v7435 = vsel %vm3340, %v7403, 0.0
      %v7436 = vsel %vm3341, %v7404, 0.0
      %v7437 = vsel %vm3342, %v7405, 0.0
      %v7438 = vsel %vm3343, %v7406, 0.0
      %v7439 = vsel %vm3344, %v7407, 0.0
      %v7440 = vsel %vm3345, %v7408, 0.0
      %v7441 = vsel %vm3346, %v7409, 0.0
      %v7442 = vsel %vm3347, %v7410, 0.0
      %v7443 = vsel %vm3348, %v7411, 0.0
      %v7444 = vsel %vm3349, %v7412, 0.0
      %v7445 = vsel %vm3350, %v7413, 0.0
      %v7446 = vsel %vm3351, %v7414, 0.0
      %v7447 = vsel %vm3352, %v7415, 0.0
      %v7448 = vsel %vm3353, %v7416, 0.0
      %v7449 = vsel %vm3354, %v7417, 0.0
      %v7450 = vsel %vm3355, %v7418, 0.0
      %v7451 = vpack.c.bf16 %v7420, %v7419
      %v7452 = vpack.c.bf16 %v7422, %v7421
      %v7453 = vpack.c.bf16 %v7424, %v7423
      %v7454 = vpack.c.bf16 %v7426, %v7425
      %v7455 = vpack.c.bf16 %v7428, %v7427
      %v7456 = vpack.c.bf16 %v7430, %v7429
      %v7457 = vpack.c.bf16 %v7432, %v7431
      %v7458 = vpack.c.bf16 %v7434, %v7433
      %v7459 = vpack.c.bf16 %v7436, %v7435
      %v7460 = vpack.c.bf16 %v7438, %v7437
      %v7461 = vpack.c.bf16 %v7440, %v7439
      %v7462 = vpack.c.bf16 %v7442, %v7441
      %v7463 = vpack.c.bf16 %v7444, %v7443
      %v7464 = vpack.c.bf16 %v7446, %v7445
      %v7465 = vpack.c.bf16 %v7448, %v7447
      %v7466 = vpack.c.bf16 %v7450, %v7449
      %s7467 = scalar_lea.vmem %s5, 360
      %v7468 = vld [vmem:[%s7467] sm:$0xf]
      %v7469 = vld [vmem:[%s7467 + $0x4] sm:$0xf]
      %v7470 = vld [vmem:[%s7467 + $0x8] sm:$0xf]
      %v7471 = vld [vmem:[%s7467 + $0xc] sm:$0xf]
      %v7472 = vld [vmem:[%s7467 + $0x10] sm:$0x3]
      %v7478 = vunpack.c.l.b16 %v7468
      %v7479 = vunpack.c.l.b16 %v7469
      %v7480 = vunpack.c.l.b16 %v7470
      %v7481 = vunpack.c.l.b16 %v7471
      %v7482 = vunpack.c.l.b16 %v7472
      %v7483 = vpack.c.b16 %v7479, %v7478
      %v7484 = vpack.c.b16 %v7481, %v7480
      %v7485 = vpack.c.b16 %v7482, %v7482
      %v7489 = vsel %vm1405, %v7451, 0
      %v7492 = vsel %vm1405, %v7452, 0
      %v7495 = vsel %vm1405, %v7453, 0
      %v7498 = vsel %vm1405, %v7454, 0
      %v7501 = vsel %vm1405, %v7455, 0
      %v7504 = vsel %vm1405, %v7456, 0
      %v7507 = vsel %vm1405, %v7457, 0
      %v7510 = vsel %vm1405, %v7458, 0
      %v7513 = vsel %vm1405, %v7459, 0
      %v7516 = vsel %vm1405, %v7460, 0
      %v7519 = vsel %vm1405, %v7461, 0
      %v7522 = vsel %vm1405, %v7462, 0
      %v7525 = vsel %vm1405, %v7463, 0
      %v7528 = vsel %vm1405, %v7464, 0
      %v7531 = vsel %vm1405, %v7465, 0
      %v7534 = vsel %vm1405, %v7466, 0
      %v7537 = vsel %vm2771, %v7485, 0
      %7539 = vmatpush.bf16.msra.mxu0 0
      %7540 = vmatpush.bf16.msra.mxu0 0
      %7541 = vmatpush.bf16.msra.mxu0 0
      %7542 = vmatpush.bf16.msra.mxu0 0
      %7543 = vmatpush.bf16.msra.mxu0 0
      %7544 = vmatpush.bf16.msra.mxu0 %v7537
      %7545 = vmatpush.bf16.msra.mxu0 %v7484
      %7546 = vmatpush.bf16.msra.mxu0 %v7483
      %7547 = vmatmul.bf16.gmra.mxu0 %v7489
      %v7548 = vpop.f32.mrf.mxu0
      %v7549 = vadd.f32 0.0, %v7548
      %v7550 = vpop.f32.mrf.mxu0
      %v7551 = vadd.f32 0.0, %v7550
      %7552 = vmatmul.bf16.gmra.mxu0 %v7492
      %v7553 = vpop.f32.mrf.mxu0
      %v7554 = vadd.f32 0.0, %v7553
      %v7555 = vpop.f32.mrf.mxu0
      %v7556 = vadd.f32 0.0, %v7555
      %7557 = vmatmul.bf16.gmra.mxu0 %v7495
      %v7558 = vpop.f32.mrf.mxu0
      %v7559 = vadd.f32 0.0, %v7558
      %v7560 = vpop.f32.mrf.mxu0
      %v7561 = vadd.f32 0.0, %v7560
      %7562 = vmatmul.bf16.gmra.mxu0 %v7498
      %v7563 = vpop.f32.mrf.mxu0
      %v7564 = vadd.f32 0.0, %v7563
      %v7565 = vpop.f32.mrf.mxu0
      %v7566 = vadd.f32 0.0, %v7565
      %7567 = vmatmul.bf16.gmra.mxu0 %v7501
      %v7568 = vpop.f32.mrf.mxu0
      %v7569 = vadd.f32 0.0, %v7568
      %v7570 = vpop.f32.mrf.mxu0
      %v7571 = vadd.f32 0.0, %v7570
      %7572 = vmatmul.bf16.gmra.mxu0 %v7504
      %v7573 = vpop.f32.mrf.mxu0
      %v7574 = vadd.f32 0.0, %v7573
      %v7575 = vpop.f32.mrf.mxu0
      %v7576 = vadd.f32 0.0, %v7575
      %7577 = vmatmul.bf16.gmra.mxu0 %v7507
      %v7578 = vpop.f32.mrf.mxu0
      %v7579 = vadd.f32 0.0, %v7578
      %v7580 = vpop.f32.mrf.mxu0
      %v7581 = vadd.f32 0.0, %v7580
      %7582 = vmatmul.bf16.gmra.mxu0 %v7510
      %v7583 = vpop.f32.mrf.mxu0
      %v7584 = vadd.f32 0.0, %v7583
      %v7585 = vpop.f32.mrf.mxu0
      %v7586 = vadd.f32 0.0, %v7585
      %7587 = vmatmul.bf16.gmra.mxu0 %v7513
      %v7588 = vpop.f32.mrf.mxu0
      %v7589 = vadd.f32 0.0, %v7588
      %v7590 = vpop.f32.mrf.mxu0
      %v7591 = vadd.f32 0.0, %v7590
      %7592 = vmatmul.bf16.gmra.mxu0 %v7516
      %v7593 = vpop.f32.mrf.mxu0
      %v7594 = vadd.f32 0.0, %v7593
      %v7595 = vpop.f32.mrf.mxu0
      %v7596 = vadd.f32 0.0, %v7595
      %7597 = vmatmul.bf16.gmra.mxu0 %v7519
      %v7598 = vpop.f32.mrf.mxu0
      %v7599 = vadd.f32 0.0, %v7598
      %v7600 = vpop.f32.mrf.mxu0
      %v7601 = vadd.f32 0.0, %v7600
      %7602 = vmatmul.bf16.gmra.mxu0 %v7522
      %v7603 = vpop.f32.mrf.mxu0
      %v7604 = vadd.f32 0.0, %v7603
      %v7605 = vpop.f32.mrf.mxu0
      %v7606 = vadd.f32 0.0, %v7605
      %7607 = vmatmul.bf16.gmra.mxu0 %v7525
      %v7608 = vpop.f32.mrf.mxu0
      %v7609 = vadd.f32 0.0, %v7608
      %v7610 = vpop.f32.mrf.mxu0
      %v7611 = vadd.f32 0.0, %v7610
      %7612 = vmatmul.bf16.gmra.mxu0 %v7528
      %v7613 = vpop.f32.mrf.mxu0
      %v7614 = vadd.f32 0.0, %v7613
      %v7615 = vpop.f32.mrf.mxu0
      %v7616 = vadd.f32 0.0, %v7615
      %7617 = vmatmul.bf16.gmra.mxu0 %v7531
      %v7618 = vpop.f32.mrf.mxu0
      %v7619 = vadd.f32 0.0, %v7618
      %v7620 = vpop.f32.mrf.mxu0
      %v7621 = vadd.f32 0.0, %v7620
      %7622 = vmatmul.bf16.gmra.mxu0 %v7534
      %v7623 = vpop.f32.mrf.mxu0
      %v7624 = vadd.f32 0.0, %v7623
      %v7625 = vpop.f32.mrf.mxu0
      %v7626 = vadd.f32 0.0, %v7625
      %7627 = vdwg.mxu0
      %v7628 = vadd.f32 %v7355, %v7549
      %v7629 = vadd.f32 %v7356, %v7551
      %v7630 = vadd.f32 %v7357, %v7554
      %v7631 = vadd.f32 %v7358, %v7556
      %v7632 = vadd.f32 %v7359, %v7559
      %v7633 = vadd.f32 %v7360, %v7561
      %v7634 = vadd.f32 %v7361, %v7564
      %v7635 = vadd.f32 %v7362, %v7566
      %v7636 = vadd.f32 %v7363, %v7569
      %v7637 = vadd.f32 %v7364, %v7571
      %v7638 = vadd.f32 %v7365, %v7574
      %v7639 = vadd.f32 %v7366, %v7576
      %v7640 = vadd.f32 %v7367, %v7579
      %v7641 = vadd.f32 %v7368, %v7581
      %v7642 = vadd.f32 %v7369, %v7584
      %v7643 = vadd.f32 %v7370, %v7586
      %v7644 = vadd.f32 %v7371, %v7589
      %v7645 = vadd.f32 %v7372, %v7591
      %v7646 = vadd.f32 %v7373, %v7594
      %v7647 = vadd.f32 %v7374, %v7596
      %v7648 = vadd.f32 %v7375, %v7599
      %v7649 = vadd.f32 %v7376, %v7601
      %v7650 = vadd.f32 %v7377, %v7604
      %v7651 = vadd.f32 %v7378, %v7606
      %v7652 = vadd.f32 %v7379, %v7609
      %v7653 = vadd.f32 %v7380, %v7611
      %v7654 = vadd.f32 %v7381, %v7614
      %v7655 = vadd.f32 %v7382, %v7616
      %v7656 = vadd.f32 %v7383, %v7619
      %v7657 = vadd.f32 %v7384, %v7621
      %v7658 = vadd.f32 %v7385, %v7624
      %v7659 = vadd.f32 %v7386, %v7626
      %v7660 = vld [vmem:[#allocation2 + $0x3a] sm:$0xff]
      %v7661 = vld [vmem:[#allocation2 + $0x42] sm:$0xff]
      %v7662 = vld [vmem:[#allocation2 + $0x4a] sm:$0xff]
      %v7663 = vld [vmem:[#allocation2 + $0x52] sm:$0xff]
      %v7664 = vld [vmem:[#allocation2 + $0x5a] sm:$0xff]
      %v7665 = vld [vmem:[#allocation2 + $0x62] sm:$0xff]
      %v7666 = vld [vmem:[#allocation2 + $0x6a] sm:$0xff]
      %v7667 = vld [vmem:[#allocation2 + $0x72] sm:$0xff]
      %v7668 = vld [vmem:[#allocation2 + $0x7a] sm:$0xff]
      %v7669 = vld [vmem:[#allocation2 + $0x82] sm:$0xff]
      %v7670 = vld [vmem:[#allocation2 + $0x8a] sm:$0xff]
      %v7671 = vld [vmem:[#allocation2 + $0x92] sm:$0xff]
      %v7672 = vld [vmem:[#allocation2 + $0x9a] sm:$0xff]
      %v7673 = vld [vmem:[#allocation2 + $0xa2] sm:$0xff]
      %v7674 = vld [vmem:[#allocation2 + $0xaa] sm:$0xff]
      %v7675 = vld [vmem:[#allocation2 + $0xb2] sm:$0xff]
      %v7676 = vld [vmem:[#allocation2 + $0xba] sm:$0xff]
      %v7677 = vld [vmem:[#allocation2 + $0xc2] sm:$0xff]
      %v7678 = vld [vmem:[#allocation2 + $0xca] sm:$0xff]
      %v7679 = vld [vmem:[#allocation2 + $0xd2] sm:$0xff]
      %v7680 = vld [vmem:[#allocation2 + $0xda] sm:$0xff]
      %v7681 = vld [vmem:[#allocation2 + $0xe2] sm:$0xff]
      %v7682 = vld [vmem:[#allocation2 + $0xea] sm:$0xff]
      %v7683 = vld [vmem:[#allocation2 + $0xf2] sm:$0xff]
      %v7684 = vld [vmem:[#allocation2 + $0xfa] sm:$0xff]
      %v7685 = vld [vmem:[#allocation2 + $0x102] sm:$0xff]
      %v7686 = vld [vmem:[#allocation2 + $0x10a] sm:$0xff]
      %v7687 = vld [vmem:[#allocation2 + $0x112] sm:$0xff]
      %v7688 = vld [vmem:[#allocation2 + $0x11a] sm:$0xff]
      %v7689 = vld [vmem:[#allocation2 + $0x122] sm:$0xff]
      %v7690 = vld [vmem:[#allocation2 + $0x12a] sm:$0xff]
      %v7691 = vld [vmem:[#allocation2 + $0x132] sm:$0xff]
      %v7692 = vsel %vm3661, %v7660, 0.0
      %v7693 = vsel %vm3662, %v7661, 0.0
      %v7694 = vsel %vm3663, %v7662, 0.0
      %v7695 = vsel %vm3664, %v7663, 0.0
      %v7696 = vsel %vm3665, %v7664, 0.0
      %v7697 = vsel %vm3666, %v7665, 0.0
      %v7698 = vsel %vm3667, %v7666, 0.0
      %v7699 = vsel %vm3668, %v7667, 0.0
      %v7700 = vsel %vm3669, %v7668, 0.0
      %v7701 = vsel %vm3670, %v7669, 0.0
      %v7702 = vsel %vm3671, %v7670, 0.0
      %v7703 = vsel %vm3672, %v7671, 0.0
      %v7704 = vsel %vm3673, %v7672, 0.0
      %v7705 = vsel %vm3674, %v7673, 0.0
      %v7706 = vsel %vm3675, %v7674, 0.0
      %v7707 = vsel %vm3676, %v7675, 0.0
      %v7708 = vsel %vm3677, %v7676, 0.0
      %v7709 = vsel %vm3678, %v7677, 0.0
      %v7710 = vsel %vm3679, %v7678, 0.0
      %v7711 = vsel %vm3680, %v7679, 0.0
      %v7712 = vsel %vm3681, %v7680, 0.0
      %v7713 = vsel %vm3682, %v7681, 0.0
      %v7714 = vsel %vm3683, %v7682, 0.0
      %v7715 = vsel %vm3684, %v7683, 0.0
      %v7716 = vsel %vm3685, %v7684, 0.0
      %v7717 = vsel %vm3686, %v7685, 0.0
      %v7718 = vsel %vm3687, %v7686, 0.0
      %v7719 = vsel %vm3688, %v7687, 0.0
      %v7720 = vsel %vm3689, %v7688, 0.0
      %v7721 = vsel %vm3690, %v7689, 0.0
      %v7722 = vsel %vm3691, %v7690, 0.0
      %v7723 = vsel %vm3692, %v7691, 0.0
      %v7724 = vpack.c.bf16 %v7693, %v7692
      %v7725 = vpack.c.bf16 %v7695, %v7694
      %v7726 = vpack.c.bf16 %v7697, %v7696
      %v7727 = vpack.c.bf16 %v7699, %v7698
      %v7728 = vpack.c.bf16 %v7701, %v7700
      %v7729 = vpack.c.bf16 %v7703, %v7702
      %v7730 = vpack.c.bf16 %v7705, %v7704
      %v7731 = vpack.c.bf16 %v7707, %v7706
      %v7732 = vpack.c.bf16 %v7709, %v7708
      %v7733 = vpack.c.bf16 %v7711, %v7710
      %v7734 = vpack.c.bf16 %v7713, %v7712
      %v7735 = vpack.c.bf16 %v7715, %v7714
      %v7736 = vpack.c.bf16 %v7717, %v7716
      %v7737 = vpack.c.bf16 %v7719, %v7718
      %v7738 = vpack.c.bf16 %v7721, %v7720
      %v7739 = vpack.c.bf16 %v7723, %v7722
      %s7740 = scalar_lea.vmem %s5, 380
      %v7741 = vld [vmem:[%s7740] sm:$0xf]
      %v7742 = vld [vmem:[%s7740 + $0x4] sm:$0xf]
      %v7743 = vld [vmem:[%s7740 + $0x8] sm:$0xf]
      %v7744 = vld [vmem:[%s7740 + $0xc] sm:$0xf]
      %v7745 = vld [vmem:[%s7740 + $0x10] sm:$0x3]
      %v7751 = vunpack.c.l.b16 %v7741
      %v7752 = vunpack.c.l.b16 %v7742
      %v7753 = vunpack.c.l.b16 %v7743
      %v7754 = vunpack.c.l.b16 %v7744
      %v7755 = vunpack.c.l.b16 %v7745
      %v7756 = vpack.c.b16 %v7752, %v7751
      %v7757 = vpack.c.b16 %v7754, %v7753
      %v7758 = vpack.c.b16 %v7755, %v7755
      %v7762 = vsel %vm1405, %v7724, 0
      %v7765 = vsel %vm1405, %v7725, 0
      %v7768 = vsel %vm1405, %v7726, 0
      %v7771 = vsel %vm1405, %v7727, 0
      %v7774 = vsel %vm1405, %v7728, 0
      %v7777 = vsel %vm1405, %v7729, 0
      %v7780 = vsel %vm1405, %v7730, 0
      %v7783 = vsel %vm1405, %v7731, 0
      %v7786 = vsel %vm1405, %v7732, 0
      %v7789 = vsel %vm1405, %v7733, 0
      %v7792 = vsel %vm1405, %v7734, 0
      %v7795 = vsel %vm1405, %v7735, 0
      %v7798 = vsel %vm1405, %v7736, 0
      %v7801 = vsel %vm1405, %v7737, 0
      %v7804 = vsel %vm1405, %v7738, 0
      %v7807 = vsel %vm1405, %v7739, 0
      %v7810 = vsel %vm2771, %v7758, 0
      %7812 = vmatpush.bf16.msra.mxu0 0
      %7813 = vmatpush.bf16.msra.mxu0 0
      %7814 = vmatpush.bf16.msra.mxu0 0
      %7815 = vmatpush.bf16.msra.mxu0 0
      %7816 = vmatpush.bf16.msra.mxu0 0
      %7817 = vmatpush.bf16.msra.mxu0 %v7810
      %7818 = vmatpush.bf16.msra.mxu0 %v7757
      %7819 = vmatpush.bf16.msra.mxu0 %v7756
      %7820 = vmatmul.bf16.gmra.mxu0 %v7762
      %v7821 = vpop.f32.mrf.mxu0
      %v7822 = vadd.f32 0.0, %v7821
      %v7823 = vpop.f32.mrf.mxu0
      %v7824 = vadd.f32 0.0, %v7823
      %7825 = vmatmul.bf16.gmra.mxu0 %v7765
      %v7826 = vpop.f32.mrf.mxu0
      %v7827 = vadd.f32 0.0, %v7826
      %v7828 = vpop.f32.mrf.mxu0
      %v7829 = vadd.f32 0.0, %v7828
      %7830 = vmatmul.bf16.gmra.mxu0 %v7768
      %v7831 = vpop.f32.mrf.mxu0
      %v7832 = vadd.f32 0.0, %v7831
      %v7833 = vpop.f32.mrf.mxu0
      %v7834 = vadd.f32 0.0, %v7833
      %7835 = vmatmul.bf16.gmra.mxu0 %v7771
      %v7836 = vpop.f32.mrf.mxu0
      %v7837 = vadd.f32 0.0, %v7836
      %v7838 = vpop.f32.mrf.mxu0
      %v7839 = vadd.f32 0.0, %v7838
      %7840 = vmatmul.bf16.gmra.mxu0 %v7774
      %v7841 = vpop.f32.mrf.mxu0
      %v7842 = vadd.f32 0.0, %v7841
      %v7843 = vpop.f32.mrf.mxu0
      %v7844 = vadd.f32 0.0, %v7843
      %7845 = vmatmul.bf16.gmra.mxu0 %v7777
      %v7846 = vpop.f32.mrf.mxu0
      %v7847 = vadd.f32 0.0, %v7846
      %v7848 = vpop.f32.mrf.mxu0
      %v7849 = vadd.f32 0.0, %v7848
      %7850 = vmatmul.bf16.gmra.mxu0 %v7780
      %v7851 = vpop.f32.mrf.mxu0
      %v7852 = vadd.f32 0.0, %v7851
      %v7853 = vpop.f32.mrf.mxu0
      %v7854 = vadd.f32 0.0, %v7853
      %7855 = vmatmul.bf16.gmra.mxu0 %v7783
      %v7856 = vpop.f32.mrf.mxu0
      %v7857 = vadd.f32 0.0, %v7856
      %v7858 = vpop.f32.mrf.mxu0
      %v7859 = vadd.f32 0.0, %v7858
      %7860 = vmatmul.bf16.gmra.mxu0 %v7786
      %v7861 = vpop.f32.mrf.mxu0
      %v7862 = vadd.f32 0.0, %v7861
      %v7863 = vpop.f32.mrf.mxu0
      %v7864 = vadd.f32 0.0, %v7863
      %7865 = vmatmul.bf16.gmra.mxu0 %v7789
      %v7866 = vpop.f32.mrf.mxu0
      %v7867 = vadd.f32 0.0, %v7866
      %v7868 = vpop.f32.mrf.mxu0
      %v7869 = vadd.f32 0.0, %v7868
      %7870 = vmatmul.bf16.gmra.mxu0 %v7792
      %v7871 = vpop.f32.mrf.mxu0
      %v7872 = vadd.f32 0.0, %v7871
      %v7873 = vpop.f32.mrf.mxu0
      %v7874 = vadd.f32 0.0, %v7873
      %7875 = vmatmul.bf16.gmra.mxu0 %v7795
      %v7876 = vpop.f32.mrf.mxu0
      %v7877 = vadd.f32 0.0, %v7876
      %v7878 = vpop.f32.mrf.mxu0
      %v7879 = vadd.f32 0.0, %v7878
      %7880 = vmatmul.bf16.gmra.mxu0 %v7798
      %v7881 = vpop.f32.mrf.mxu0
      %v7882 = vadd.f32 0.0, %v7881
      %v7883 = vpop.f32.mrf.mxu0
      %v7884 = vadd.f32 0.0, %v7883
      %7885 = vmatmul.bf16.gmra.mxu0 %v7801
      %v7886 = vpop.f32.mrf.mxu0
      %v7887 = vadd.f32 0.0, %v7886
      %v7888 = vpop.f32.mrf.mxu0
      %v7889 = vadd.f32 0.0, %v7888
      %7890 = vmatmul.bf16.gmra.mxu0 %v7804
      %v7891 = vpop.f32.mrf.mxu0
      %v7892 = vadd.f32 0.0, %v7891
      %v7893 = vpop.f32.mrf.mxu0
      %v7894 = vadd.f32 0.0, %v7893
      %7895 = vmatmul.bf16.gmra.mxu0 %v7807
      %v7896 = vpop.f32.mrf.mxu0
      %v7897 = vadd.f32 0.0, %v7896
      %v7898 = vpop.f32.mrf.mxu0
      %v7899 = vadd.f32 0.0, %v7898
      %7900 = vdwg.mxu0
      %v7901 = vadd.f32 %v7628, %v7822
      %v7902 = vadd.f32 %v7629, %v7824
      %v7903 = vadd.f32 %v7630, %v7827
      %v7904 = vadd.f32 %v7631, %v7829
      %v7905 = vadd.f32 %v7632, %v7832
      %v7906 = vadd.f32 %v7633, %v7834
      %v7907 = vadd.f32 %v7634, %v7837
      %v7908 = vadd.f32 %v7635, %v7839
      %v7909 = vadd.f32 %v7636, %v7842
      %v7910 = vadd.f32 %v7637, %v7844
      %v7911 = vadd.f32 %v7638, %v7847
      %v7912 = vadd.f32 %v7639, %v7849
      %v7913 = vadd.f32 %v7640, %v7852
      %v7914 = vadd.f32 %v7641, %v7854
      %v7915 = vadd.f32 %v7642, %v7857
      %v7916 = vadd.f32 %v7643, %v7859
      %v7917 = vadd.f32 %v7644, %v7862
      %v7918 = vadd.f32 %v7645, %v7864
      %v7919 = vadd.f32 %v7646, %v7867
      %v7920 = vadd.f32 %v7647, %v7869
      %v7921 = vadd.f32 %v7648, %v7872
      %v7922 = vadd.f32 %v7649, %v7874
      %v7923 = vadd.f32 %v7650, %v7877
      %v7924 = vadd.f32 %v7651, %v7879
      %v7925 = vadd.f32 %v7652, %v7882
      %v7926 = vadd.f32 %v7653, %v7884
      %v7927 = vadd.f32 %v7654, %v7887
      %v7928 = vadd.f32 %v7655, %v7889
      %v7929 = vadd.f32 %v7656, %v7892
      %v7930 = vadd.f32 %v7657, %v7894
      %v7931 = vadd.f32 %v7658, %v7897
      %v7932 = vadd.f32 %v7659, %v7899
      %v7933 = vld [vmem:[#allocation2 + $0x46] sm:$0xff]
      %v7934 = vld [vmem:[#allocation2 + $0x4e] sm:$0xff]
      %v7935 = vld [vmem:[#allocation2 + $0x56] sm:$0xff]
      %v7936 = vld [vmem:[#allocation2 + $0x5e] sm:$0xff]
      %v7937 = vld [vmem:[#allocation2 + $0x66] sm:$0xff]
      %v7938 = vld [vmem:[#allocation2 + $0x6e] sm:$0xff]
      %v7939 = vld [vmem:[#allocation2 + $0x76] sm:$0xff]
      %v7940 = vld [vmem:[#allocation2 + $0x7e] sm:$0xff]
      %v7941 = vld [vmem:[#allocation2 + $0x86] sm:$0xff]
      %v7942 = vld [vmem:[#allocation2 + $0x8e] sm:$0xff]
      %v7943 = vld [vmem:[#allocation2 + $0x96] sm:$0xff]
      %v7944 = vld [vmem:[#allocation2 + $0x9e] sm:$0xff]
      %v7945 = vld [vmem:[#allocation2 + $0xa6] sm:$0xff]
      %v7946 = vld [vmem:[#allocation2 + $0xae] sm:$0xff]
      %v7947 = vld [vmem:[#allocation2 + $0xb6] sm:$0xff]
      %v7948 = vld [vmem:[#allocation2 + $0xbe] sm:$0xff]
      %v7949 = vld [vmem:[#allocation2 + $0xc6] sm:$0xff]
      %v7950 = vld [vmem:[#allocation2 + $0xce] sm:$0xff]
      %v7951 = vld [vmem:[#allocation2 + $0xd6] sm:$0xff]
      %v7952 = vld [vmem:[#allocation2 + $0xde] sm:$0xff]
      %v7953 = vld [vmem:[#allocation2 + $0xe6] sm:$0xff]
      %v7954 = vld [vmem:[#allocation2 + $0xee] sm:$0xff]
      %v7955 = vld [vmem:[#allocation2 + $0xf6] sm:$0xff]
      %v7956 = vld [vmem:[#allocation2 + $0xfe] sm:$0xff]
      %v7957 = vld [vmem:[#allocation2 + $0x106] sm:$0xff]
      %v7958 = vld [vmem:[#allocation2 + $0x10e] sm:$0xff]
      %v7959 = vld [vmem:[#allocation2 + $0x116] sm:$0xff]
      %v7960 = vld [vmem:[#allocation2 + $0x11e] sm:$0xff]
      %v7961 = vld [vmem:[#allocation2 + $0x126] sm:$0xff]
      %v7962 = vld [vmem:[#allocation2 + $0x12e] sm:$0xff]
      %v7963 = vld [vmem:[#allocation2 + $0x136] sm:$0xff]
      %v7964 = vld [vmem:[#allocation2 + $0x13e] sm:$0xff]
      %v7965 = vsel %vm2473, %v7933, 0.0
      %v7966 = vsel %vm2474, %v7934, 0.0
      %v7967 = vsel %vm2475, %v7935, 0.0
      %v7968 = vsel %vm2476, %v7936, 0.0
      %v7969 = vsel %vm2477, %v7937, 0.0
      %v7970 = vsel %vm2478, %v7938, 0.0
      %v7971 = vsel %vm2479, %v7939, 0.0
      %v7972 = vsel %vm2480, %v7940, 0.0
      %v7973 = vsel %vm2481, %v7941, 0.0
      %v7974 = vsel %vm2482, %v7942, 0.0
      %v7975 = vsel %vm2483, %v7943, 0.0
      %v7976 = vsel %vm2484, %v7944, 0.0
      %v7977 = vsel %vm2485, %v7945, 0.0
      %v7978 = vsel %vm2486, %v7946, 0.0
      %v7979 = vsel %vm2487, %v7947, 0.0
      %v7980 = vsel %vm2488, %v7948, 0.0
      %v7981 = vsel %vm2489, %v7949, 0.0
      %v7982 = vsel %vm2490, %v7950, 0.0
      %v7983 = vsel %vm2491, %v7951, 0.0
      %v7984 = vsel %vm2492, %v7952, 0.0
      %v7985 = vsel %vm2493, %v7953, 0.0
      %v7986 = vsel %vm2494, %v7954, 0.0
      %v7987 = vsel %vm2495, %v7955, 0.0
      %v7988 = vsel %vm2496, %v7956, 0.0
      %v7989 = vsel %vm2497, %v7957, 0.0
      %v7990 = vsel %vm2498, %v7958, 0.0
      %v7991 = vsel %vm2499, %v7959, 0.0
      %v7992 = vsel %vm2500, %v7960, 0.0
      %v7993 = vsel %vm2501, %v7961, 0.0
      %v7994 = vsel %vm2502, %v7962, 0.0
      %v7995 = vsel %vm2503, %v7963, 0.0
      %v7996 = vsel %vm2504, %v7964, 0.0
      %v7997 = vpack.c.bf16 %v7966, %v7965
      %v7998 = vpack.c.bf16 %v7968, %v7967
      %v7999 = vpack.c.bf16 %v7970, %v7969
      %v8000 = vpack.c.bf16 %v7972, %v7971
      %v8001 = vpack.c.bf16 %v7974, %v7973
      %v8002 = vpack.c.bf16 %v7976, %v7975
      %v8003 = vpack.c.bf16 %v7978, %v7977
      %v8004 = vpack.c.bf16 %v7980, %v7979
      %v8005 = vpack.c.bf16 %v7982, %v7981
      %v8006 = vpack.c.bf16 %v7984, %v7983
      %v8007 = vpack.c.bf16 %v7986, %v7985
      %v8008 = vpack.c.bf16 %v7988, %v7987
      %v8009 = vpack.c.bf16 %v7990, %v7989
      %v8010 = vpack.c.bf16 %v7992, %v7991
      %v8011 = vpack.c.bf16 %v7994, %v7993
      %v8012 = vpack.c.bf16 %v7996, %v7995
      %s8013 = scalar_lea.vmem %s5, 400
      %v8014 = vld [vmem:[%s8013] sm:$0xf]
      %v8015 = vld [vmem:[%s8013 + $0x4] sm:$0xf]
      %v8016 = vld [vmem:[%s8013 + $0x8] sm:$0xf]
      %v8017 = vld [vmem:[%s8013 + $0xc] sm:$0xf]
      %v8018 = vld [vmem:[%s8013 + $0x10] sm:$0x3]
      %v8024 = vunpack.c.l.b16 %v8014
      %v8025 = vunpack.c.l.b16 %v8015
      %v8026 = vunpack.c.l.b16 %v8016
      %v8027 = vunpack.c.l.b16 %v8017
      %v8028 = vunpack.c.l.b16 %v8018
      %v8029 = vpack.c.b16 %v8025, %v8024
      %v8030 = vpack.c.b16 %v8027, %v8026
      %v8031 = vpack.c.b16 %v8028, %v8028
      %v8035 = vsel %vm1405, %v7997, 0
      %v8038 = vsel %vm1405, %v7998, 0
      %v8041 = vsel %vm1405, %v7999, 0
      %v8044 = vsel %vm1405, %v8000, 0
      %v8047 = vsel %vm1405, %v8001, 0
      %v8050 = vsel %vm1405, %v8002, 0
      %v8053 = vsel %vm1405, %v8003, 0
      %v8056 = vsel %vm1405, %v8004, 0
      %v8059 = vsel %vm1405, %v8005, 0
      %v8062 = vsel %vm1405, %v8006, 0
      %v8065 = vsel %vm1405, %v8007, 0
      %v8068 = vsel %vm1405, %v8008, 0
      %v8071 = vsel %vm1405, %v8009, 0
      %v8074 = vsel %vm1405, %v8010, 0
      %v8077 = vsel %vm1405, %v8011, 0
      %v8080 = vsel %vm1405, %v8012, 0
      %v8083 = vsel %vm2771, %v8031, 0
      %8085 = vmatpush.bf16.msra.mxu0 0
      %8086 = vmatpush.bf16.msra.mxu0 0
      %8087 = vmatpush.bf16.msra.mxu0 0
      %8088 = vmatpush.bf16.msra.mxu0 0
      %8089 = vmatpush.bf16.msra.mxu0 0
      %8090 = vmatpush.bf16.msra.mxu0 %v8083
      %8091 = vmatpush.bf16.msra.mxu0 %v8030
      %8092 = vmatpush.bf16.msra.mxu0 %v8029
      %8093 = vmatmul.bf16.gmra.mxu0 %v8035
      %v8094 = vpop.f32.mrf.mxu0
      %v8095 = vadd.f32 0.0, %v8094
      %v8096 = vpop.f32.mrf.mxu0
      %v8097 = vadd.f32 0.0, %v8096
      %8098 = vmatmul.bf16.gmra.mxu0 %v8038
      %v8099 = vpop.f32.mrf.mxu0
      %v8100 = vadd.f32 0.0, %v8099
      %v8101 = vpop.f32.mrf.mxu0
      %v8102 = vadd.f32 0.0, %v8101
      %8103 = vmatmul.bf16.gmra.mxu0 %v8041
      %v8104 = vpop.f32.mrf.mxu0
      %v8105 = vadd.f32 0.0, %v8104
      %v8106 = vpop.f32.mrf.mxu0
      %v8107 = vadd.f32 0.0, %v8106
      %8108 = vmatmul.bf16.gmra.mxu0 %v8044
      %v8109 = vpop.f32.mrf.mxu0
      %v8110 = vadd.f32 0.0, %v8109
      %v8111 = vpop.f32.mrf.mxu0
      %v8112 = vadd.f32 0.0, %v8111
      %8113 = vmatmul.bf16.gmra.mxu0 %v8047
      %v8114 = vpop.f32.mrf.mxu0
      %v8115 = vadd.f32 0.0, %v8114
      %v8116 = vpop.f32.mrf.mxu0
      %v8117 = vadd.f32 0.0, %v8116
      %8118 = vmatmul.bf16.gmra.mxu0 %v8050
      %v8119 = vpop.f32.mrf.mxu0
      %v8120 = vadd.f32 0.0, %v8119
      %v8121 = vpop.f32.mrf.mxu0
      %v8122 = vadd.f32 0.0, %v8121
      %8123 = vmatmul.bf16.gmra.mxu0 %v8053
      %v8124 = vpop.f32.mrf.mxu0
      %v8125 = vadd.f32 0.0, %v8124
      %v8126 = vpop.f32.mrf.mxu0
      %v8127 = vadd.f32 0.0, %v8126
      %8128 = vmatmul.bf16.gmra.mxu0 %v8056
      %v8129 = vpop.f32.mrf.mxu0
      %v8130 = vadd.f32 0.0, %v8129
      %v8131 = vpop.f32.mrf.mxu0
      %v8132 = vadd.f32 0.0, %v8131
      %8133 = vmatmul.bf16.gmra.mxu0 %v8059
      %v8134 = vpop.f32.mrf.mxu0
      %v8135 = vadd.f32 0.0, %v8134
      %v8136 = vpop.f32.mrf.mxu0
      %v8137 = vadd.f32 0.0, %v8136
      %8138 = vmatmul.bf16.gmra.mxu0 %v8062
      %v8139 = vpop.f32.mrf.mxu0
      %v8140 = vadd.f32 0.0, %v8139
      %v8141 = vpop.f32.mrf.mxu0
      %v8142 = vadd.f32 0.0, %v8141
      %8143 = vmatmul.bf16.gmra.mxu0 %v8065
      %v8144 = vpop.f32.mrf.mxu0
      %v8145 = vadd.f32 0.0, %v8144
      %v8146 = vpop.f32.mrf.mxu0
      %v8147 = vadd.f32 0.0, %v8146
      %8148 = vmatmul.bf16.gmra.mxu0 %v8068
      %v8149 = vpop.f32.mrf.mxu0
      %v8150 = vadd.f32 0.0, %v8149
      %v8151 = vpop.f32.mrf.mxu0
      %v8152 = vadd.f32 0.0, %v8151
      %8153 = vmatmul.bf16.gmra.mxu0 %v8071
      %v8154 = vpop.f32.mrf.mxu0
      %v8155 = vadd.f32 0.0, %v8154
      %v8156 = vpop.f32.mrf.mxu0
      %v8157 = vadd.f32 0.0, %v8156
      %8158 = vmatmul.bf16.gmra.mxu0 %v8074
      %v8159 = vpop.f32.mrf.mxu0
      %v8160 = vadd.f32 0.0, %v8159
      %v8161 = vpop.f32.mrf.mxu0
      %v8162 = vadd.f32 0.0, %v8161
      %8163 = vmatmul.bf16.gmra.mxu0 %v8077
      %v8164 = vpop.f32.mrf.mxu0
      %v8165 = vadd.f32 0.0, %v8164
      %v8166 = vpop.f32.mrf.mxu0
      %v8167 = vadd.f32 0.0, %v8166
      %8168 = vmatmul.bf16.gmra.mxu0 %v8080
      %v8169 = vpop.f32.mrf.mxu0
      %v8170 = vadd.f32 0.0, %v8169
      %v8171 = vpop.f32.mrf.mxu0
      %v8172 = vadd.f32 0.0, %v8171
      %8173 = vdwg.mxu0
      %v8174 = vadd.f32 %v7901, %v8095
      %v8175 = vadd.f32 %v7902, %v8097
      %v8176 = vadd.f32 %v7903, %v8100
      %v8177 = vadd.f32 %v7904, %v8102
      %v8178 = vadd.f32 %v7905, %v8105
      %v8179 = vadd.f32 %v7906, %v8107
      %v8180 = vadd.f32 %v7907, %v8110
      %v8181 = vadd.f32 %v7908, %v8112
      %v8182 = vadd.f32 %v7909, %v8115
      %v8183 = vadd.f32 %v7910, %v8117
      %v8184 = vadd.f32 %v7911, %v8120
      %v8185 = vadd.f32 %v7912, %v8122
      %v8186 = vadd.f32 %v7913, %v8125
      %v8187 = vadd.f32 %v7914, %v8127
      %v8188 = vadd.f32 %v7915, %v8130
      %v8189 = vadd.f32 %v7916, %v8132
      %v8190 = vadd.f32 %v7917, %v8135
      %v8191 = vadd.f32 %v7918, %v8137
      %v8192 = vadd.f32 %v7919, %v8140
      %v8193 = vadd.f32 %v7920, %v8142
      %v8194 = vadd.f32 %v7921, %v8145
      %v8195 = vadd.f32 %v7922, %v8147
      %v8196 = vadd.f32 %v7923, %v8150
      %v8197 = vadd.f32 %v7924, %v8152
      %v8198 = vadd.f32 %v7925, %v8155
      %v8199 = vadd.f32 %v7926, %v8157
      %v8200 = vadd.f32 %v7927, %v8160
      %v8201 = vadd.f32 %v7928, %v8162
      %v8202 = vadd.f32 %v7929, %v8165
      %v8203 = vadd.f32 %v7930, %v8167
      %v8204 = vadd.f32 %v7931, %v8170
      %v8205 = vadd.f32 %v7932, %v8172
      %v8206 = vld [vmem:[#allocation2 + $0x47] sm:$0xff]
      %v8207 = vld [vmem:[#allocation2 + $0x4f] sm:$0xff]
      %v8208 = vld [vmem:[#allocation2 + $0x57] sm:$0xff]
      %v8209 = vld [vmem:[#allocation2 + $0x5f] sm:$0xff]
      %v8210 = vld [vmem:[#allocation2 + $0x67] sm:$0xff]
      %v8211 = vld [vmem:[#allocation2 + $0x6f] sm:$0xff]
      %v8212 = vld [vmem:[#allocation2 + $0x77] sm:$0xff]
      %v8213 = vld [vmem:[#allocation2 + $0x7f] sm:$0xff]
      %v8214 = vld [vmem:[#allocation2 + $0x87] sm:$0xff]
      %v8215 = vld [vmem:[#allocation2 + $0x8f] sm:$0xff]
      %v8216 = vld [vmem:[#allocation2 + $0x97] sm:$0xff]
      %v8217 = vld [vmem:[#allocation2 + $0x9f] sm:$0xff]
      %v8218 = vld [vmem:[#allocation2 + $0xa7] sm:$0xff]
      %v8219 = vld [vmem:[#allocation2 + $0xaf] sm:$0xff]
      %v8220 = vld [vmem:[#allocation2 + $0xb7] sm:$0xff]
      %v8221 = vld [vmem:[#allocation2 + $0xbf] sm:$0xff]
      %v8222 = vld [vmem:[#allocation2 + $0xc7] sm:$0xff]
      %v8223 = vld [vmem:[#allocation2 + $0xcf] sm:$0xff]
      %v8224 = vld [vmem:[#allocation2 + $0xd7] sm:$0xff]
      %v8225 = vld [vmem:[#allocation2 + $0xdf] sm:$0xff]
      %v8226 = vld [vmem:[#allocation2 + $0xe7] sm:$0xff]
      %v8227 = vld [vmem:[#allocation2 + $0xef] sm:$0xff]
      %v8228 = vld [vmem:[#allocation2 + $0xf7] sm:$0xff]
      %v8229 = vld [vmem:[#allocation2 + $0xff] sm:$0xff]
      %v8230 = vld [vmem:[#allocation2 + $0x107] sm:$0xff]
      %v8231 = vld [vmem:[#allocation2 + $0x10f] sm:$0xff]
      %v8232 = vld [vmem:[#allocation2 + $0x117] sm:$0xff]
      %v8233 = vld [vmem:[#allocation2 + $0x11f] sm:$0xff]
      %v8234 = vld [vmem:[#allocation2 + $0x127] sm:$0xff]
      %v8235 = vld [vmem:[#allocation2 + $0x12f] sm:$0xff]
      %v8236 = vld [vmem:[#allocation2 + $0x137] sm:$0xff]
      %v8237 = vld [vmem:[#allocation2 + $0x13f] sm:$0xff]
      %v8238 = vsel %vm2622, %v8206, 0.0
      %v8239 = vsel %vm2623, %v8207, 0.0
      %v8240 = vsel %vm2624, %v8208, 0.0
      %v8241 = vsel %vm2625, %v8209, 0.0
      %v8242 = vsel %vm2626, %v8210, 0.0
      %v8243 = vsel %vm2627, %v8211, 0.0
      %v8244 = vsel %vm2628, %v8212, 0.0
      %v8245 = vsel %vm2629, %v8213, 0.0
      %v8246 = vsel %vm2630, %v8214, 0.0
      %v8247 = vsel %vm2631, %v8215, 0.0
      %v8248 = vsel %vm2632, %v8216, 0.0
      %v8249 = vsel %vm2633, %v8217, 0.0
      %v8250 = vsel %vm2634, %v8218, 0.0
      %v8251 = vsel %vm2635, %v8219, 0.0
      %v8252 = vsel %vm2636, %v8220, 0.0
      %v8253 = vsel %vm2637, %v8221, 0.0
      %v8254 = vsel %vm2638, %v8222, 0.0
      %v8255 = vsel %vm2639, %v8223, 0.0
      %v8256 = vsel %vm2640, %v8224, 0.0
      %v8257 = vsel %vm2641, %v8225, 0.0
      %v8258 = vsel %vm2642, %v8226, 0.0
      %v8259 = vsel %vm2643, %v8227, 0.0
      %v8260 = vsel %vm2644, %v8228, 0.0
      %v8261 = vsel %vm2645, %v8229, 0.0
      %v8262 = vsel %vm2646, %v8230, 0.0
      %v8263 = vsel %vm2647, %v8231, 0.0
      %v8264 = vsel %vm2648, %v8232, 0.0
      %v8265 = vsel %vm2649, %v8233, 0.0
      %v8266 = vsel %vm2650, %v8234, 0.0
      %v8267 = vsel %vm2651, %v8235, 0.0
      %v8268 = vsel %vm2652, %v8236, 0.0
      %v8269 = vsel %vm2653, %v8237, 0.0
      %v8270 = vpack.c.bf16 %v8239, %v8238
      %v8271 = vpack.c.bf16 %v8241, %v8240
      %v8272 = vpack.c.bf16 %v8243, %v8242
      %v8273 = vpack.c.bf16 %v8245, %v8244
      %v8274 = vpack.c.bf16 %v8247, %v8246
      %v8275 = vpack.c.bf16 %v8249, %v8248
      %v8276 = vpack.c.bf16 %v8251, %v8250
      %v8277 = vpack.c.bf16 %v8253, %v8252
      %v8278 = vpack.c.bf16 %v8255, %v8254
      %v8279 = vpack.c.bf16 %v8257, %v8256
      %v8280 = vpack.c.bf16 %v8259, %v8258
      %v8281 = vpack.c.bf16 %v8261, %v8260
      %v8282 = vpack.c.bf16 %v8263, %v8262
      %v8283 = vpack.c.bf16 %v8265, %v8264
      %v8284 = vpack.c.bf16 %v8267, %v8266
      %v8285 = vpack.c.bf16 %v8269, %v8268
      %s8286 = scalar_lea.vmem %s5, 420
      %v8287 = vld [vmem:[%s8286] sm:$0xf]
      %v8288 = vld [vmem:[%s8286 + $0x4] sm:$0xf]
      %v8289 = vld [vmem:[%s8286 + $0x8] sm:$0xf]
      %v8290 = vld [vmem:[%s8286 + $0xc] sm:$0xf]
      %v8291 = vld [vmem:[%s8286 + $0x10] sm:$0x3]
      %v8297 = vunpack.c.l.b16 %v8287
      %v8298 = vunpack.c.l.b16 %v8288
      %v8299 = vunpack.c.l.b16 %v8289
      %v8300 = vunpack.c.l.b16 %v8290
      %v8301 = vunpack.c.l.b16 %v8291
      %v8302 = vpack.c.b16 %v8298, %v8297
      %v8303 = vpack.c.b16 %v8300, %v8299
      %v8304 = vpack.c.b16 %v8301, %v8301
      %v8308 = vsel %vm1405, %v8270, 0
      %v8311 = vsel %vm1405, %v8271, 0
      %v8314 = vsel %vm1405, %v8272, 0
      %v8317 = vsel %vm1405, %v8273, 0
      %v8320 = vsel %vm1405, %v8274, 0
      %v8323 = vsel %vm1405, %v8275, 0
      %v8326 = vsel %vm1405, %v8276, 0
      %v8329 = vsel %vm1405, %v8277, 0
      %v8332 = vsel %vm1405, %v8278, 0
      %v8335 = vsel %vm1405, %v8279, 0
      %v8338 = vsel %vm1405, %v8280, 0
      %v8341 = vsel %vm1405, %v8281, 0
      %v8344 = vsel %vm1405, %v8282, 0
      %v8347 = vsel %vm1405, %v8283, 0
      %v8350 = vsel %vm1405, %v8284, 0
      %v8353 = vsel %vm1405, %v8285, 0
      %v8356 = vsel %vm2771, %v8304, 0
      %8358 = vmatpush.bf16.msra.mxu0 0
      %8359 = vmatpush.bf16.msra.mxu0 0
      %8360 = vmatpush.bf16.msra.mxu0 0
      %8361 = vmatpush.bf16.msra.mxu0 0
      %8362 = vmatpush.bf16.msra.mxu0 0
      %8363 = vmatpush.bf16.msra.mxu0 %v8356
      %8364 = vmatpush.bf16.msra.mxu0 %v8303
      %8365 = vmatpush.bf16.msra.mxu0 %v8302
      %8366 = vmatmul.bf16.gmra.mxu0 %v8308
      %v8367 = vpop.f32.mrf.mxu0
      %v8368 = vadd.f32 0.0, %v8367
      %v8369 = vpop.f32.mrf.mxu0
      %v8370 = vadd.f32 0.0, %v8369
      %8371 = vmatmul.bf16.gmra.mxu0 %v8311
      %v8372 = vpop.f32.mrf.mxu0
      %v8373 = vadd.f32 0.0, %v8372
      %v8374 = vpop.f32.mrf.mxu0
      %v8375 = vadd.f32 0.0, %v8374
      %8376 = vmatmul.bf16.gmra.mxu0 %v8314
      %v8377 = vpop.f32.mrf.mxu0
      %v8378 = vadd.f32 0.0, %v8377
      %v8379 = vpop.f32.mrf.mxu0
      %v8380 = vadd.f32 0.0, %v8379
      %8381 = vmatmul.bf16.gmra.mxu0 %v8317
      %v8382 = vpop.f32.mrf.mxu0
      %v8383 = vadd.f32 0.0, %v8382
      %v8384 = vpop.f32.mrf.mxu0
      %v8385 = vadd.f32 0.0, %v8384
      %8386 = vmatmul.bf16.gmra.mxu0 %v8320
      %v8387 = vpop.f32.mrf.mxu0
      %v8388 = vadd.f32 0.0, %v8387
      %v8389 = vpop.f32.mrf.mxu0
      %v8390 = vadd.f32 0.0, %v8389
      %8391 = vmatmul.bf16.gmra.mxu0 %v8323
      %v8392 = vpop.f32.mrf.mxu0
      %v8393 = vadd.f32 0.0, %v8392
      %v8394 = vpop.f32.mrf.mxu0
      %v8395 = vadd.f32 0.0, %v8394
      %8396 = vmatmul.bf16.gmra.mxu0 %v8326
      %v8397 = vpop.f32.mrf.mxu0
      %v8398 = vadd.f32 0.0, %v8397
      %v8399 = vpop.f32.mrf.mxu0
      %v8400 = vadd.f32 0.0, %v8399
      %8401 = vmatmul.bf16.gmra.mxu0 %v8329
      %v8402 = vpop.f32.mrf.mxu0
      %v8403 = vadd.f32 0.0, %v8402
      %v8404 = vpop.f32.mrf.mxu0
      %v8405 = vadd.f32 0.0, %v8404
      %8406 = vmatmul.bf16.gmra.mxu0 %v8332
      %v8407 = vpop.f32.mrf.mxu0
      %v8408 = vadd.f32 0.0, %v8407
      %v8409 = vpop.f32.mrf.mxu0
      %v8410 = vadd.f32 0.0, %v8409
      %8411 = vmatmul.bf16.gmra.mxu0 %v8335
      %v8412 = vpop.f32.mrf.mxu0
      %v8413 = vadd.f32 0.0, %v8412
      %v8414 = vpop.f32.mrf.mxu0
      %v8415 = vadd.f32 0.0, %v8414
      %8416 = vmatmul.bf16.gmra.mxu0 %v8338
      %v8417 = vpop.f32.mrf.mxu0
      %v8418 = vadd.f32 0.0, %v8417
      %v8419 = vpop.f32.mrf.mxu0
      %v8420 = vadd.f32 0.0, %v8419
      %8421 = vmatmul.bf16.gmra.mxu0 %v8341
      %v8422 = vpop.f32.mrf.mxu0
      %v8423 = vadd.f32 0.0, %v8422
      %v8424 = vpop.f32.mrf.mxu0
      %v8425 = vadd.f32 0.0, %v8424
      %8426 = vmatmul.bf16.gmra.mxu0 %v8344
      %v8427 = vpop.f32.mrf.mxu0
      %v8428 = vadd.f32 0.0, %v8427
      %v8429 = vpop.f32.mrf.mxu0
      %v8430 = vadd.f32 0.0, %v8429
      %8431 = vmatmul.bf16.gmra.mxu0 %v8347
      %v8432 = vpop.f32.mrf.mxu0
      %v8433 = vadd.f32 0.0, %v8432
      %v8434 = vpop.f32.mrf.mxu0
      %v8435 = vadd.f32 0.0, %v8434
      %8436 = vmatmul.bf16.gmra.mxu0 %v8350
      %v8437 = vpop.f32.mrf.mxu0
      %v8438 = vadd.f32 0.0, %v8437
      %v8439 = vpop.f32.mrf.mxu0
      %v8440 = vadd.f32 0.0, %v8439
      %8441 = vmatmul.bf16.gmra.mxu0 %v8353
      %v8442 = vpop.f32.mrf.mxu0
      %v8443 = vadd.f32 0.0, %v8442
      %v8444 = vpop.f32.mrf.mxu0
      %v8445 = vadd.f32 0.0, %v8444
      %8446 = vdwg.mxu0
      %v8447 = vadd.f32 %v8174, %v8368
      %v8448 = vadd.f32 %v8175, %v8370
      %v8449 = vadd.f32 %v8176, %v8373
      %v8450 = vadd.f32 %v8177, %v8375
      %v8451 = vadd.f32 %v8178, %v8378
      %v8452 = vadd.f32 %v8179, %v8380
      %v8453 = vadd.f32 %v8180, %v8383
      %v8454 = vadd.f32 %v8181, %v8385
      %v8455 = vadd.f32 %v8182, %v8388
      %v8456 = vadd.f32 %v8183, %v8390
      %v8457 = vadd.f32 %v8184, %v8393
      %v8458 = vadd.f32 %v8185, %v8395
      %v8459 = vadd.f32 %v8186, %v8398
      %v8460 = vadd.f32 %v8187, %v8400
      %v8461 = vadd.f32 %v8188, %v8403
      %v8462 = vadd.f32 %v8189, %v8405
      %v8463 = vadd.f32 %v8190, %v8408
      %v8464 = vadd.f32 %v8191, %v8410
      %v8465 = vadd.f32 %v8192, %v8413
      %v8466 = vadd.f32 %v8193, %v8415
      %v8467 = vadd.f32 %v8194, %v8418
      %v8468 = vadd.f32 %v8195, %v8420
      %v8469 = vadd.f32 %v8196, %v8423
      %v8470 = vadd.f32 %v8197, %v8425
      %v8471 = vadd.f32 %v8198, %v8428
      %v8472 = vadd.f32 %v8199, %v8430
      %v8473 = vadd.f32 %v8200, %v8433
      %v8474 = vadd.f32 %v8201, %v8435
      %v8475 = vadd.f32 %v8202, %v8438
      %v8476 = vadd.f32 %v8203, %v8440
      %v8477 = vadd.f32 %v8204, %v8443
      %v8478 = vadd.f32 %v8205, %v8445
      %v8479 = vld [vmem:[#allocation2 + $0x48] sm:$0xff]
      %v8480 = vld [vmem:[#allocation2 + $0x50] sm:$0xff]
      %v8481 = vld [vmem:[#allocation2 + $0x58] sm:$0xff]
      %v8482 = vld [vmem:[#allocation2 + $0x60] sm:$0xff]
      %v8483 = vld [vmem:[#allocation2 + $0x68] sm:$0xff]
      %v8484 = vld [vmem:[#allocation2 + $0x70] sm:$0xff]
      %v8485 = vld [vmem:[#allocation2 + $0x78] sm:$0xff]
      %v8486 = vld [vmem:[#allocation2 + $0x80] sm:$0xff]
      %v8487 = vld [vmem:[#allocation2 + $0x88] sm:$0xff]
      %v8488 = vld [vmem:[#allocation2 + $0x90] sm:$0xff]
      %v8489 = vld [vmem:[#allocation2 + $0x98] sm:$0xff]
      %v8490 = vld [vmem:[#allocation2 + $0xa0] sm:$0xff]
      %v8491 = vld [vmem:[#allocation2 + $0xa8] sm:$0xff]
      %v8492 = vld [vmem:[#allocation2 + $0xb0] sm:$0xff]
      %v8493 = vld [vmem:[#allocation2 + $0xb8] sm:$0xff]
      %v8494 = vld [vmem:[#allocation2 + $0xc0] sm:$0xff]
      %v8495 = vld [vmem:[#allocation2 + $0xc8] sm:$0xff]
      %v8496 = vld [vmem:[#allocation2 + $0xd0] sm:$0xff]
      %v8497 = vld [vmem:[#allocation2 + $0xd8] sm:$0xff]
      %v8498 = vld [vmem:[#allocation2 + $0xe0] sm:$0xff]
      %v8499 = vld [vmem:[#allocation2 + $0xe8] sm:$0xff]
      %v8500 = vld [vmem:[#allocation2 + $0xf0] sm:$0xff]
      %v8501 = vld [vmem:[#allocation2 + $0xf8] sm:$0xff]
      %v8502 = vld [vmem:[#allocation2 + $0x100] sm:$0xff]
      %v8503 = vld [vmem:[#allocation2 + $0x108] sm:$0xff]
      %v8504 = vld [vmem:[#allocation2 + $0x110] sm:$0xff]
      %v8505 = vld [vmem:[#allocation2 + $0x118] sm:$0xff]
      %v8506 = vld [vmem:[#allocation2 + $0x120] sm:$0xff]
      %v8507 = vld [vmem:[#allocation2 + $0x128] sm:$0xff]
      %v8508 = vld [vmem:[#allocation2 + $0x130] sm:$0xff]
      %v8509 = vld [vmem:[#allocation2 + $0x138] sm:$0xff]
      %v8510 = vld [vmem:[#allocation2 + $0x140] sm:$0xff]
      %v8511 = vpack.c.bf16 %v8480, %v8479
      %v8512 = vpack.c.bf16 %v8482, %v8481
      %v8513 = vpack.c.bf16 %v8484, %v8483
      %v8514 = vpack.c.bf16 %v8486, %v8485
      %v8515 = vpack.c.bf16 %v8488, %v8487
      %v8516 = vpack.c.bf16 %v8490, %v8489
      %v8517 = vpack.c.bf16 %v8492, %v8491
      %v8518 = vpack.c.bf16 %v8494, %v8493
      %v8519 = vpack.c.bf16 %v8496, %v8495
      %v8520 = vpack.c.bf16 %v8498, %v8497
      %v8521 = vpack.c.bf16 %v8500, %v8499
      %v8522 = vpack.c.bf16 %v8502, %v8501
      %v8523 = vpack.c.bf16 %v8504, %v8503
      %v8524 = vpack.c.bf16 %v8506, %v8505
      %v8525 = vpack.c.bf16 %v8508, %v8507
      %v8526 = vpack.c.bf16 %v8510, %v8509
      %s8527 = scalar_lea.vmem %s5, 440
      %v8528 = vld [vmem:[%s8527] sm:$0xf]
      %v8529 = vld [vmem:[%s8527 + $0x4] sm:$0xf]
      %v8530 = vld [vmem:[%s8527 + $0x8] sm:$0xf]
      %v8531 = vld [vmem:[%s8527 + $0xc] sm:$0xf]
      %v8532 = vld [vmem:[%s8527 + $0x10] sm:$0x3]
      %v8538 = vunpack.c.l.b16 %v8528
      %v8539 = vunpack.c.l.b16 %v8529
      %v8540 = vunpack.c.l.b16 %v8530
      %v8541 = vunpack.c.l.b16 %v8531
      %v8542 = vunpack.c.l.b16 %v8532
      %v8543 = vpack.c.b16 %v8539, %v8538
      %v8544 = vpack.c.b16 %v8541, %v8540
      %v8545 = vpack.c.b16 %v8542, %v8542
      %v8549 = vsel %vm1405, %v8511, 0
      %v8552 = vsel %vm1405, %v8512, 0
      %v8555 = vsel %vm1405, %v8513, 0
      %v8558 = vsel %vm1405, %v8514, 0
      %v8561 = vsel %vm1405, %v8515, 0
      %v8564 = vsel %vm1405, %v8516, 0
      %v8567 = vsel %vm1405, %v8517, 0
      %v8570 = vsel %vm1405, %v8518, 0
      %v8573 = vsel %vm1405, %v8519, 0
      %v8576 = vsel %vm1405, %v8520, 0
      %v8579 = vsel %vm1405, %v8521, 0
      %v8582 = vsel %vm1405, %v8522, 0
      %v8585 = vsel %vm1405, %v8523, 0
      %v8588 = vsel %vm1405, %v8524, 0
      %v8591 = vsel %vm1405, %v8525, 0
      %v8594 = vsel %vm1405, %v8526, 0
      %v8597 = vsel %vm2771, %v8545, 0
      %8599 = vmatpush.bf16.msra.mxu0 0
      %8600 = vmatpush.bf16.msra.mxu0 0
      %8601 = vmatpush.bf16.msra.mxu0 0
      %8602 = vmatpush.bf16.msra.mxu0 0
      %8603 = vmatpush.bf16.msra.mxu0 0
      %8604 = vmatpush.bf16.msra.mxu0 %v8597
      %8605 = vmatpush.bf16.msra.mxu0 %v8544
      %8606 = vmatpush.bf16.msra.mxu0 %v8543
      %8607 = vmatmul.bf16.gmra.mxu0 %v8549
      %v8608 = vpop.f32.mrf.mxu0
      %v8609 = vadd.f32 0.0, %v8608
      %v8610 = vpop.f32.mrf.mxu0
      %v8611 = vadd.f32 0.0, %v8610
      %8612 = vmatmul.bf16.gmra.mxu0 %v8552
      %v8613 = vpop.f32.mrf.mxu0
      %v8614 = vadd.f32 0.0, %v8613
      %v8615 = vpop.f32.mrf.mxu0
      %v8616 = vadd.f32 0.0, %v8615
      %8617 = vmatmul.bf16.gmra.mxu0 %v8555
      %v8618 = vpop.f32.mrf.mxu0
      %v8619 = vadd.f32 0.0, %v8618
      %v8620 = vpop.f32.mrf.mxu0
      %v8621 = vadd.f32 0.0, %v8620
      %8622 = vmatmul.bf16.gmra.mxu0 %v8558
      %v8623 = vpop.f32.mrf.mxu0
      %v8624 = vadd.f32 0.0, %v8623
      %v8625 = vpop.f32.mrf.mxu0
      %v8626 = vadd.f32 0.0, %v8625
      %8627 = vmatmul.bf16.gmra.mxu0 %v8561
      %v8628 = vpop.f32.mrf.mxu0
      %v8629 = vadd.f32 0.0, %v8628
      %v8630 = vpop.f32.mrf.mxu0
      %v8631 = vadd.f32 0.0, %v8630
      %8632 = vmatmul.bf16.gmra.mxu0 %v8564
      %v8633 = vpop.f32.mrf.mxu0
      %v8634 = vadd.f32 0.0, %v8633
      %v8635 = vpop.f32.mrf.mxu0
      %v8636 = vadd.f32 0.0, %v8635
      %8637 = vmatmul.bf16.gmra.mxu0 %v8567
      %v8638 = vpop.f32.mrf.mxu0
      %v8639 = vadd.f32 0.0, %v8638
      %v8640 = vpop.f32.mrf.mxu0
      %v8641 = vadd.f32 0.0, %v8640
      %8642 = vmatmul.bf16.gmra.mxu0 %v8570
      %v8643 = vpop.f32.mrf.mxu0
      %v8644 = vadd.f32 0.0, %v8643
      %v8645 = vpop.f32.mrf.mxu0
      %v8646 = vadd.f32 0.0, %v8645
      %8647 = vmatmul.bf16.gmra.mxu0 %v8573
      %v8648 = vpop.f32.mrf.mxu0
      %v8649 = vadd.f32 0.0, %v8648
      %v8650 = vpop.f32.mrf.mxu0
      %v8651 = vadd.f32 0.0, %v8650
      %8652 = vmatmul.bf16.gmra.mxu0 %v8576
      %v8653 = vpop.f32.mrf.mxu0
      %v8654 = vadd.f32 0.0, %v8653
      %v8655 = vpop.f32.mrf.mxu0
      %v8656 = vadd.f32 0.0, %v8655
      %8657 = vmatmul.bf16.gmra.mxu0 %v8579
      %v8658 = vpop.f32.mrf.mxu0
      %v8659 = vadd.f32 0.0, %v8658
      %v8660 = vpop.f32.mrf.mxu0
      %v8661 = vadd.f32 0.0, %v8660
      %8662 = vmatmul.bf16.gmra.mxu0 %v8582
      %v8663 = vpop.f32.mrf.mxu0
      %v8664 = vadd.f32 0.0, %v8663
      %v8665 = vpop.f32.mrf.mxu0
      %v8666 = vadd.f32 0.0, %v8665
      %8667 = vmatmul.bf16.gmra.mxu0 %v8585
      %v8668 = vpop.f32.mrf.mxu0
      %v8669 = vadd.f32 0.0, %v8668
      %v8670 = vpop.f32.mrf.mxu0
      %v8671 = vadd.f32 0.0, %v8670
      %8672 = vmatmul.bf16.gmra.mxu0 %v8588
      %v8673 = vpop.f32.mrf.mxu0
      %v8674 = vadd.f32 0.0, %v8673
      %v8675 = vpop.f32.mrf.mxu0
      %v8676 = vadd.f32 0.0, %v8675
      %8677 = vmatmul.bf16.gmra.mxu0 %v8591
      %v8678 = vpop.f32.mrf.mxu0
      %v8679 = vadd.f32 0.0, %v8678
      %v8680 = vpop.f32.mrf.mxu0
      %v8681 = vadd.f32 0.0, %v8680
      %8682 = vmatmul.bf16.gmra.mxu0 %v8594
      %v8683 = vpop.f32.mrf.mxu0
      %v8684 = vadd.f32 0.0, %v8683
      %v8685 = vpop.f32.mrf.mxu0
      %v8686 = vadd.f32 0.0, %v8685
      %8687 = vdwg.mxu0
      %v8688 = vadd.f32 %v8447, %v8609
      %v8689 = vadd.f32 %v8448, %v8611
      %v8690 = vadd.f32 %v8449, %v8614
      %v8691 = vadd.f32 %v8450, %v8616
      %v8692 = vadd.f32 %v8451, %v8619
      %v8693 = vadd.f32 %v8452, %v8621
      %v8694 = vadd.f32 %v8453, %v8624
      %v8695 = vadd.f32 %v8454, %v8626
      %v8696 = vadd.f32 %v8455, %v8629
      %v8697 = vadd.f32 %v8456, %v8631
      %v8698 = vadd.f32 %v8457, %v8634
      %v8699 = vadd.f32 %v8458, %v8636
      %v8700 = vadd.f32 %v8459, %v8639
      %v8701 = vadd.f32 %v8460, %v8641
      %v8702 = vadd.f32 %v8461, %v8644
      %v8703 = vadd.f32 %v8462, %v8646
      %v8704 = vadd.f32 %v8463, %v8649
      %v8705 = vadd.f32 %v8464, %v8651
      %v8706 = vadd.f32 %v8465, %v8654
      %v8707 = vadd.f32 %v8466, %v8656
      %v8708 = vadd.f32 %v8467, %v8659
      %v8709 = vadd.f32 %v8468, %v8661
      %v8710 = vadd.f32 %v8469, %v8664
      %v8711 = vadd.f32 %v8470, %v8666
      %v8712 = vadd.f32 %v8471, %v8669
      %v8713 = vadd.f32 %v8472, %v8671
      %v8714 = vadd.f32 %v8473, %v8674
      %v8715 = vadd.f32 %v8474, %v8676
      %v8716 = vadd.f32 %v8475, %v8679
      %v8717 = vadd.f32 %v8476, %v8681
      %v8718 = vadd.f32 %v8477, %v8684
      %v8719 = vadd.f32 %v8478, %v8686
      %v8720 = vld [vmem:[#allocation2 + $0x49] sm:$0xff]
      %v8721 = vld [vmem:[#allocation2 + $0x51] sm:$0xff]
      %v8722 = vld [vmem:[#allocation2 + $0x59] sm:$0xff]
      %v8723 = vld [vmem:[#allocation2 + $0x61] sm:$0xff]
      %v8724 = vld [vmem:[#allocation2 + $0x69] sm:$0xff]
      %v8725 = vld [vmem:[#allocation2 + $0x71] sm:$0xff]
      %v8726 = vld [vmem:[#allocation2 + $0x79] sm:$0xff]
      %v8727 = vld [vmem:[#allocation2 + $0x81] sm:$0xff]
      %v8728 = vld [vmem:[#allocation2 + $0x89] sm:$0xff]
      %v8729 = vld [vmem:[#allocation2 + $0x91] sm:$0xff]
      %v8730 = vld [vmem:[#allocation2 + $0x99] sm:$0xff]
      %v8731 = vld [vmem:[#allocation2 + $0xa1] sm:$0xff]
      %v8732 = vld [vmem:[#allocation2 + $0xa9] sm:$0xff]
      %v8733 = vld [vmem:[#allocation2 + $0xb1] sm:$0xff]
      %v8734 = vld [vmem:[#allocation2 + $0xb9] sm:$0xff]
      %v8735 = vld [vmem:[#allocation2 + $0xc1] sm:$0xff]
      %v8736 = vld [vmem:[#allocation2 + $0xc9] sm:$0xff]
      %v8737 = vld [vmem:[#allocation2 + $0xd1] sm:$0xff]
      %v8738 = vld [vmem:[#allocation2 + $0xd9] sm:$0xff]
      %v8739 = vld [vmem:[#allocation2 + $0xe1] sm:$0xff]
      %v8740 = vld [vmem:[#allocation2 + $0xe9] sm:$0xff]
      %v8741 = vld [vmem:[#allocation2 + $0xf1] sm:$0xff]
      %v8742 = vld [vmem:[#allocation2 + $0xf9] sm:$0xff]
      %v8743 = vld [vmem:[#allocation2 + $0x101] sm:$0xff]
      %v8744 = vld [vmem:[#allocation2 + $0x109] sm:$0xff]
      %v8745 = vld [vmem:[#allocation2 + $0x111] sm:$0xff]
      %v8746 = vld [vmem:[#allocation2 + $0x119] sm:$0xff]
      %v8747 = vld [vmem:[#allocation2 + $0x121] sm:$0xff]
      %v8748 = vld [vmem:[#allocation2 + $0x129] sm:$0xff]
      %v8749 = vld [vmem:[#allocation2 + $0x131] sm:$0xff]
      %v8750 = vld [vmem:[#allocation2 + $0x139] sm:$0xff]
      %v8751 = vld [vmem:[#allocation2 + $0x141] sm:$0xff]
      %v8752 = vsel %vm3324, %v8720, 0.0
      %v8753 = vsel %vm3325, %v8721, 0.0
      %v8754 = vsel %vm3326, %v8722, 0.0
      %v8755 = vsel %vm3327, %v8723, 0.0
      %v8756 = vsel %vm3328, %v8724, 0.0
      %v8757 = vsel %vm3329, %v8725, 0.0
      %v8758 = vsel %vm3330, %v8726, 0.0
      %v8759 = vsel %vm3331, %v8727, 0.0
      %v8760 = vsel %vm3332, %v8728, 0.0
      %v8761 = vsel %vm3333, %v8729, 0.0
      %v8762 = vsel %vm3334, %v8730, 0.0
      %v8763 = vsel %vm3335, %v8731, 0.0
      %v8764 = vsel %vm3336, %v8732, 0.0
      %v8765 = vsel %vm3337, %v8733, 0.0
      %v8766 = vsel %vm3338, %v8734, 0.0
      %v8767 = vsel %vm3339, %v8735, 0.0
      %v8768 = vsel %vm3340, %v8736, 0.0
      %v8769 = vsel %vm3341, %v8737, 0.0
      %v8770 = vsel %vm3342, %v8738, 0.0
      %v8771 = vsel %vm3343, %v8739, 0.0
      %v8772 = vsel %vm3344, %v8740, 0.0
      %v8773 = vsel %vm3345, %v8741, 0.0
      %v8774 = vsel %vm3346, %v8742, 0.0
      %v8775 = vsel %vm3347, %v8743, 0.0
      %v8776 = vsel %vm3348, %v8744, 0.0
      %v8777 = vsel %vm3349, %v8745, 0.0
      %v8778 = vsel %vm3350, %v8746, 0.0
      %v8779 = vsel %vm3351, %v8747, 0.0
      %v8780 = vsel %vm3352, %v8748, 0.0
      %v8781 = vsel %vm3353, %v8749, 0.0
      %v8782 = vsel %vm3354, %v8750, 0.0
      %v8783 = vsel %vm3355, %v8751, 0.0
      %v8784 = vpack.c.bf16 %v8753, %v8752
      %v8785 = vpack.c.bf16 %v8755, %v8754
      %v8786 = vpack.c.bf16 %v8757, %v8756
      %v8787 = vpack.c.bf16 %v8759, %v8758
      %v8788 = vpack.c.bf16 %v8761, %v8760
      %v8789 = vpack.c.bf16 %v8763, %v8762
      %v8790 = vpack.c.bf16 %v8765, %v8764
      %v8791 = vpack.c.bf16 %v8767, %v8766
      %v8792 = vpack.c.bf16 %v8769, %v8768
      %v8793 = vpack.c.bf16 %v8771, %v8770
      %v8794 = vpack.c.bf16 %v8773, %v8772
      %v8795 = vpack.c.bf16 %v8775, %v8774
      %v8796 = vpack.c.bf16 %v8777, %v8776
      %v8797 = vpack.c.bf16 %v8779, %v8778
      %v8798 = vpack.c.bf16 %v8781, %v8780
      %v8799 = vpack.c.bf16 %v8783, %v8782
      %s8800 = scalar_lea.vmem %s5, 460
      %v8801 = vld [vmem:[%s8800] sm:$0xf]
      %v8802 = vld [vmem:[%s8800 + $0x4] sm:$0xf]
      %v8803 = vld [vmem:[%s8800 + $0x8] sm:$0xf]
      %v8804 = vld [vmem:[%s8800 + $0xc] sm:$0xf]
      %v8805 = vld [vmem:[%s8800 + $0x10] sm:$0x3]
      %v8811 = vunpack.c.l.b16 %v8801
      %v8812 = vunpack.c.l.b16 %v8802
      %v8813 = vunpack.c.l.b16 %v8803
      %v8814 = vunpack.c.l.b16 %v8804
      %v8815 = vunpack.c.l.b16 %v8805
      %v8816 = vpack.c.b16 %v8812, %v8811
      %v8817 = vpack.c.b16 %v8814, %v8813
      %v8818 = vpack.c.b16 %v8815, %v8815
      %v8822 = vsel %vm1405, %v8784, 0
      %v8825 = vsel %vm1405, %v8785, 0
      %v8828 = vsel %vm1405, %v8786, 0
      %v8831 = vsel %vm1405, %v8787, 0
      %v8834 = vsel %vm1405, %v8788, 0
      %v8837 = vsel %vm1405, %v8789, 0
      %v8840 = vsel %vm1405, %v8790, 0
      %v8843 = vsel %vm1405, %v8791, 0
      %v8846 = vsel %vm1405, %v8792, 0
      %v8849 = vsel %vm1405, %v8793, 0
      %v8852 = vsel %vm1405, %v8794, 0
      %v8855 = vsel %vm1405, %v8795, 0
      %v8858 = vsel %vm1405, %v8796, 0
      %v8861 = vsel %vm1405, %v8797, 0
      %v8864 = vsel %vm1405, %v8798, 0
      %v8867 = vsel %vm1405, %v8799, 0
      %v8870 = vsel %vm2771, %v8818, 0
      %8872 = vmatpush.bf16.msra.mxu0 0
      %8873 = vmatpush.bf16.msra.mxu0 0
      %8874 = vmatpush.bf16.msra.mxu0 0
      %8875 = vmatpush.bf16.msra.mxu0 0
      %8876 = vmatpush.bf16.msra.mxu0 0
      %8877 = vmatpush.bf16.msra.mxu0 %v8870
      %8878 = vmatpush.bf16.msra.mxu0 %v8817
      %8879 = vmatpush.bf16.msra.mxu0 %v8816
      %8880 = vmatmul.bf16.gmra.mxu0 %v8822
      %v8881 = vpop.f32.mrf.mxu0
      %v8882 = vadd.f32 0.0, %v8881
      %v8883 = vpop.f32.mrf.mxu0
      %v8884 = vadd.f32 0.0, %v8883
      %8885 = vmatmul.bf16.gmra.mxu0 %v8825
      %v8886 = vpop.f32.mrf.mxu0
      %v8887 = vadd.f32 0.0, %v8886
      %v8888 = vpop.f32.mrf.mxu0
      %v8889 = vadd.f32 0.0, %v8888
      %8890 = vmatmul.bf16.gmra.mxu0 %v8828
      %v8891 = vpop.f32.mrf.mxu0
      %v8892 = vadd.f32 0.0, %v8891
      %v8893 = vpop.f32.mrf.mxu0
      %v8894 = vadd.f32 0.0, %v8893
      %8895 = vmatmul.bf16.gmra.mxu0 %v8831
      %v8896 = vpop.f32.mrf.mxu0
      %v8897 = vadd.f32 0.0, %v8896
      %v8898 = vpop.f32.mrf.mxu0
      %v8899 = vadd.f32 0.0, %v8898
      %8900 = vmatmul.bf16.gmra.mxu0 %v8834
      %v8901 = vpop.f32.mrf.mxu0
      %v8902 = vadd.f32 0.0, %v8901
      %v8903 = vpop.f32.mrf.mxu0
      %v8904 = vadd.f32 0.0, %v8903
      %8905 = vmatmul.bf16.gmra.mxu0 %v8837
      %v8906 = vpop.f32.mrf.mxu0
      %v8907 = vadd.f32 0.0, %v8906
      %v8908 = vpop.f32.mrf.mxu0
      %v8909 = vadd.f32 0.0, %v8908
      %8910 = vmatmul.bf16.gmra.mxu0 %v8840
      %v8911 = vpop.f32.mrf.mxu0
      %v8912 = vadd.f32 0.0, %v8911
      %v8913 = vpop.f32.mrf.mxu0
      %v8914 = vadd.f32 0.0, %v8913
      %8915 = vmatmul.bf16.gmra.mxu0 %v8843
      %v8916 = vpop.f32.mrf.mxu0
      %v8917 = vadd.f32 0.0, %v8916
      %v8918 = vpop.f32.mrf.mxu0
      %v8919 = vadd.f32 0.0, %v8918
      %8920 = vmatmul.bf16.gmra.mxu0 %v8846
      %v8921 = vpop.f32.mrf.mxu0
      %v8922 = vadd.f32 0.0, %v8921
      %v8923 = vpop.f32.mrf.mxu0
      %v8924 = vadd.f32 0.0, %v8923
      %8925 = vmatmul.bf16.gmra.mxu0 %v8849
      %v8926 = vpop.f32.mrf.mxu0
      %v8927 = vadd.f32 0.0, %v8926
      %v8928 = vpop.f32.mrf.mxu0
      %v8929 = vadd.f32 0.0, %v8928
      %8930 = vmatmul.bf16.gmra.mxu0 %v8852
      %v8931 = vpop.f32.mrf.mxu0
      %v8932 = vadd.f32 0.0, %v8931
      %v8933 = vpop.f32.mrf.mxu0
      %v8934 = vadd.f32 0.0, %v8933
      %8935 = vmatmul.bf16.gmra.mxu0 %v8855
      %v8936 = vpop.f32.mrf.mxu0
      %v8937 = vadd.f32 0.0, %v8936
      %v8938 = vpop.f32.mrf.mxu0
      %v8939 = vadd.f32 0.0, %v8938
      %8940 = vmatmul.bf16.gmra.mxu0 %v8858
      %v8941 = vpop.f32.mrf.mxu0
      %v8942 = vadd.f32 0.0, %v8941
      %v8943 = vpop.f32.mrf.mxu0
      %v8944 = vadd.f32 0.0, %v8943
      %8945 = vmatmul.bf16.gmra.mxu0 %v8861
      %v8946 = vpop.f32.mrf.mxu0
      %v8947 = vadd.f32 0.0, %v8946
      %v8948 = vpop.f32.mrf.mxu0
      %v8949 = vadd.f32 0.0, %v8948
      %8950 = vmatmul.bf16.gmra.mxu0 %v8864
      %v8951 = vpop.f32.mrf.mxu0
      %v8952 = vadd.f32 0.0, %v8951
      %v8953 = vpop.f32.mrf.mxu0
      %v8954 = vadd.f32 0.0, %v8953
      %8955 = vmatmul.bf16.gmra.mxu0 %v8867
      %v8956 = vpop.f32.mrf.mxu0
      %v8957 = vadd.f32 0.0, %v8956
      %v8958 = vpop.f32.mrf.mxu0
      %v8959 = vadd.f32 0.0, %v8958
      %8960 = vdwg.mxu0
      %v8961 = vadd.f32 %v8688, %v8882
      %v8962 = vadd.f32 %v8689, %v8884
      %v8963 = vadd.f32 %v8690, %v8887
      %v8964 = vadd.f32 %v8691, %v8889
      %v8965 = vadd.f32 %v8692, %v8892
      %v8966 = vadd.f32 %v8693, %v8894
      %v8967 = vadd.f32 %v8694, %v8897
      %v8968 = vadd.f32 %v8695, %v8899
      %v8969 = vadd.f32 %v8696, %v8902
      %v8970 = vadd.f32 %v8697, %v8904
      %v8971 = vadd.f32 %v8698, %v8907
      %v8972 = vadd.f32 %v8699, %v8909
      %v8973 = vadd.f32 %v8700, %v8912
      %v8974 = vadd.f32 %v8701, %v8914
      %v8975 = vadd.f32 %v8702, %v8917
      %v8976 = vadd.f32 %v8703, %v8919
      %v8977 = vadd.f32 %v8704, %v8922
      %v8978 = vadd.f32 %v8705, %v8924
      %v8979 = vadd.f32 %v8706, %v8927
      %v8980 = vadd.f32 %v8707, %v8929
      %v8981 = vadd.f32 %v8708, %v8932
      %v8982 = vadd.f32 %v8709, %v8934
      %v8983 = vadd.f32 %v8710, %v8937
      %v8984 = vadd.f32 %v8711, %v8939
      %v8985 = vadd.f32 %v8712, %v8942
      %v8986 = vadd.f32 %v8713, %v8944
      %v8987 = vadd.f32 %v8714, %v8947
      %v8988 = vadd.f32 %v8715, %v8949
      %v8989 = vadd.f32 %v8716, %v8952
      %v8990 = vadd.f32 %v8717, %v8954
      %v8991 = vadd.f32 %v8718, %v8957
      %v8992 = vadd.f32 %v8719, %v8959
      %v8993 = vld [vmem:[#allocation2 + $0x4a] sm:$0xff]
      %v8994 = vld [vmem:[#allocation2 + $0x52] sm:$0xff]
      %v8995 = vld [vmem:[#allocation2 + $0x5a] sm:$0xff]
      %v8996 = vld [vmem:[#allocation2 + $0x62] sm:$0xff]
      %v8997 = vld [vmem:[#allocation2 + $0x6a] sm:$0xff]
      %v8998 = vld [vmem:[#allocation2 + $0x72] sm:$0xff]
      %v8999 = vld [vmem:[#allocation2 + $0x7a] sm:$0xff]
      %v9000 = vld [vmem:[#allocation2 + $0x82] sm:$0xff]
      %v9001 = vld [vmem:[#allocation2 + $0x8a] sm:$0xff]
      %v9002 = vld [vmem:[#allocation2 + $0x92] sm:$0xff]
      %v9003 = vld [vmem:[#allocation2 + $0x9a] sm:$0xff]
      %v9004 = vld [vmem:[#allocation2 + $0xa2] sm:$0xff]
      %v9005 = vld [vmem:[#allocation2 + $0xaa] sm:$0xff]
      %v9006 = vld [vmem:[#allocation2 + $0xb2] sm:$0xff]
      %v9007 = vld [vmem:[#allocation2 + $0xba] sm:$0xff]
      %v9008 = vld [vmem:[#allocation2 + $0xc2] sm:$0xff]
      %v9009 = vld [vmem:[#allocation2 + $0xca] sm:$0xff]
      %v9010 = vld [vmem:[#allocation2 + $0xd2] sm:$0xff]
      %v9011 = vld [vmem:[#allocation2 + $0xda] sm:$0xff]
      %v9012 = vld [vmem:[#allocation2 + $0xe2] sm:$0xff]
      %v9013 = vld [vmem:[#allocation2 + $0xea] sm:$0xff]
      %v9014 = vld [vmem:[#allocation2 + $0xf2] sm:$0xff]
      %v9015 = vld [vmem:[#allocation2 + $0xfa] sm:$0xff]
      %v9016 = vld [vmem:[#allocation2 + $0x102] sm:$0xff]
      %v9017 = vld [vmem:[#allocation2 + $0x10a] sm:$0xff]
      %v9018 = vld [vmem:[#allocation2 + $0x112] sm:$0xff]
      %v9019 = vld [vmem:[#allocation2 + $0x11a] sm:$0xff]
      %v9020 = vld [vmem:[#allocation2 + $0x122] sm:$0xff]
      %v9021 = vld [vmem:[#allocation2 + $0x12a] sm:$0xff]
      %v9022 = vld [vmem:[#allocation2 + $0x132] sm:$0xff]
      %v9023 = vld [vmem:[#allocation2 + $0x13a] sm:$0xff]
      %v9024 = vld [vmem:[#allocation2 + $0x142] sm:$0xff]
      %v9025 = vsel %vm3661, %v8993, 0.0
      %v9026 = vsel %vm3662, %v8994, 0.0
      %v9027 = vsel %vm3663, %v8995, 0.0
      %v9028 = vsel %vm3664, %v8996, 0.0
      %v9029 = vsel %vm3665, %v8997, 0.0
      %v9030 = vsel %vm3666, %v8998, 0.0
      %v9031 = vsel %vm3667, %v8999, 0.0
      %v9032 = vsel %vm3668, %v9000, 0.0
      %v9033 = vsel %vm3669, %v9001, 0.0
      %v9034 = vsel %vm3670, %v9002, 0.0
      %v9035 = vsel %vm3671, %v9003, 0.0
      %v9036 = vsel %vm3672, %v9004, 0.0
      %v9037 = vsel %vm3673, %v9005, 0.0
      %v9038 = vsel %vm3674, %v9006, 0.0
      %v9039 = vsel %vm3675, %v9007, 0.0
      %v9040 = vsel %vm3676, %v9008, 0.0
      %v9041 = vsel %vm3677, %v9009, 0.0
      %v9042 = vsel %vm3678, %v9010, 0.0
      %v9043 = vsel %vm3679, %v9011, 0.0
      %v9044 = vsel %vm3680, %v9012, 0.0
      %v9045 = vsel %vm3681, %v9013, 0.0
      %v9046 = vsel %vm3682, %v9014, 0.0
      %v9047 = vsel %vm3683, %v9015, 0.0
      %v9048 = vsel %vm3684, %v9016, 0.0
      %v9049 = vsel %vm3685, %v9017, 0.0
      %v9050 = vsel %vm3686, %v9018, 0.0
      %v9051 = vsel %vm3687, %v9019, 0.0
      %v9052 = vsel %vm3688, %v9020, 0.0
      %v9053 = vsel %vm3689, %v9021, 0.0
      %v9054 = vsel %vm3690, %v9022, 0.0
      %v9055 = vsel %vm3691, %v9023, 0.0
      %v9056 = vsel %vm3692, %v9024, 0.0
      %v9057 = vpack.c.bf16 %v9026, %v9025
      %v9058 = vpack.c.bf16 %v9028, %v9027
      %v9059 = vpack.c.bf16 %v9030, %v9029
      %v9060 = vpack.c.bf16 %v9032, %v9031
      %v9061 = vpack.c.bf16 %v9034, %v9033
      %v9062 = vpack.c.bf16 %v9036, %v9035
      %v9063 = vpack.c.bf16 %v9038, %v9037
      %v9064 = vpack.c.bf16 %v9040, %v9039
      %v9065 = vpack.c.bf16 %v9042, %v9041
      %v9066 = vpack.c.bf16 %v9044, %v9043
      %v9067 = vpack.c.bf16 %v9046, %v9045
      %v9068 = vpack.c.bf16 %v9048, %v9047
      %v9069 = vpack.c.bf16 %v9050, %v9049
      %v9070 = vpack.c.bf16 %v9052, %v9051
      %v9071 = vpack.c.bf16 %v9054, %v9053
      %v9072 = vpack.c.bf16 %v9056, %v9055
      %s9073 = scalar_lea.vmem %s5, 480
      %v9074 = vld [vmem:[%s9073] sm:$0xf]
      %v9075 = vld [vmem:[%s9073 + $0x4] sm:$0xf]
      %v9076 = vld [vmem:[%s9073 + $0x8] sm:$0xf]
      %v9077 = vld [vmem:[%s9073 + $0xc] sm:$0xf]
      %v9078 = vld [vmem:[%s9073 + $0x10] sm:$0x3]
      %v9084 = vunpack.c.l.b16 %v9074
      %v9085 = vunpack.c.l.b16 %v9075
      %v9086 = vunpack.c.l.b16 %v9076
      %v9087 = vunpack.c.l.b16 %v9077
      %v9088 = vunpack.c.l.b16 %v9078
      %v9089 = vpack.c.b16 %v9085, %v9084
      %v9090 = vpack.c.b16 %v9087, %v9086
      %v9091 = vpack.c.b16 %v9088, %v9088
      %v9095 = vsel %vm1405, %v9057, 0
      %v9098 = vsel %vm1405, %v9058, 0
      %v9101 = vsel %vm1405, %v9059, 0
      %v9104 = vsel %vm1405, %v9060, 0
      %v9107 = vsel %vm1405, %v9061, 0
      %v9110 = vsel %vm1405, %v9062, 0
      %v9113 = vsel %vm1405, %v9063, 0
      %v9116 = vsel %vm1405, %v9064, 0
      %v9119 = vsel %vm1405, %v9065, 0
      %v9122 = vsel %vm1405, %v9066, 0
      %v9125 = vsel %vm1405, %v9067, 0
      %v9128 = vsel %vm1405, %v9068, 0
      %v9131 = vsel %vm1405, %v9069, 0
      %v9134 = vsel %vm1405, %v9070, 0
      %v9137 = vsel %vm1405, %v9071, 0
      %v9140 = vsel %vm1405, %v9072, 0
      %v9143 = vsel %vm2771, %v9091, 0
      %9145 = vmatpush.bf16.msra.mxu0 0
      %9146 = vmatpush.bf16.msra.mxu0 0
      %9147 = vmatpush.bf16.msra.mxu0 0
      %9148 = vmatpush.bf16.msra.mxu0 0
      %9149 = vmatpush.bf16.msra.mxu0 0
      %9150 = vmatpush.bf16.msra.mxu0 %v9143
      %9151 = vmatpush.bf16.msra.mxu0 %v9090
      %9152 = vmatpush.bf16.msra.mxu0 %v9089
      %9153 = vmatmul.bf16.gmra.mxu0 %v9095
      %v9154 = vpop.f32.mrf.mxu0
      %v9155 = vadd.f32 0.0, %v9154
      %v9156 = vpop.f32.mrf.mxu0
      %v9157 = vadd.f32 0.0, %v9156
      %9158 = vmatmul.bf16.gmra.mxu0 %v9098
      %v9159 = vpop.f32.mrf.mxu0
      %v9160 = vadd.f32 0.0, %v9159
      %v9161 = vpop.f32.mrf.mxu0
      %v9162 = vadd.f32 0.0, %v9161
      %9163 = vmatmul.bf16.gmra.mxu0 %v9101
      %v9164 = vpop.f32.mrf.mxu0
      %v9165 = vadd.f32 0.0, %v9164
      %v9166 = vpop.f32.mrf.mxu0
      %v9167 = vadd.f32 0.0, %v9166
      %9168 = vmatmul.bf16.gmra.mxu0 %v9104
      %v9169 = vpop.f32.mrf.mxu0
      %v9170 = vadd.f32 0.0, %v9169
      %v9171 = vpop.f32.mrf.mxu0
      %v9172 = vadd.f32 0.0, %v9171
      %9173 = vmatmul.bf16.gmra.mxu0 %v9107
      %v9174 = vpop.f32.mrf.mxu0
      %v9175 = vadd.f32 0.0, %v9174
      %v9176 = vpop.f32.mrf.mxu0
      %v9177 = vadd.f32 0.0, %v9176
      %9178 = vmatmul.bf16.gmra.mxu0 %v9110
      %v9179 = vpop.f32.mrf.mxu0
      %v9180 = vadd.f32 0.0, %v9179
      %v9181 = vpop.f32.mrf.mxu0
      %v9182 = vadd.f32 0.0, %v9181
      %9183 = vmatmul.bf16.gmra.mxu0 %v9113
      %v9184 = vpop.f32.mrf.mxu0
      %v9185 = vadd.f32 0.0, %v9184
      %v9186 = vpop.f32.mrf.mxu0
      %v9187 = vadd.f32 0.0, %v9186
      %9188 = vmatmul.bf16.gmra.mxu0 %v9116
      %v9189 = vpop.f32.mrf.mxu0
      %v9190 = vadd.f32 0.0, %v9189
      %v9191 = vpop.f32.mrf.mxu0
      %v9192 = vadd.f32 0.0, %v9191
      %9193 = vmatmul.bf16.gmra.mxu0 %v9119
      %v9194 = vpop.f32.mrf.mxu0
      %v9195 = vadd.f32 0.0, %v9194
      %v9196 = vpop.f32.mrf.mxu0
      %v9197 = vadd.f32 0.0, %v9196
      %9198 = vmatmul.bf16.gmra.mxu0 %v9122
      %v9199 = vpop.f32.mrf.mxu0
      %v9200 = vadd.f32 0.0, %v9199
      %v9201 = vpop.f32.mrf.mxu0
      %v9202 = vadd.f32 0.0, %v9201
      %9203 = vmatmul.bf16.gmra.mxu0 %v9125
      %v9204 = vpop.f32.mrf.mxu0
      %v9205 = vadd.f32 0.0, %v9204
      %v9206 = vpop.f32.mrf.mxu0
      %v9207 = vadd.f32 0.0, %v9206
      %9208 = vmatmul.bf16.gmra.mxu0 %v9128
      %v9209 = vpop.f32.mrf.mxu0
      %v9210 = vadd.f32 0.0, %v9209
      %v9211 = vpop.f32.mrf.mxu0
      %v9212 = vadd.f32 0.0, %v9211
      %9213 = vmatmul.bf16.gmra.mxu0 %v9131
      %v9214 = vpop.f32.mrf.mxu0
      %v9215 = vadd.f32 0.0, %v9214
      %v9216 = vpop.f32.mrf.mxu0
      %v9217 = vadd.f32 0.0, %v9216
      %9218 = vmatmul.bf16.gmra.mxu0 %v9134
      %v9219 = vpop.f32.mrf.mxu0
      %v9220 = vadd.f32 0.0, %v9219
      %v9221 = vpop.f32.mrf.mxu0
      %v9222 = vadd.f32 0.0, %v9221
      %9223 = vmatmul.bf16.gmra.mxu0 %v9137
      %v9224 = vpop.f32.mrf.mxu0
      %v9225 = vadd.f32 0.0, %v9224
      %v9226 = vpop.f32.mrf.mxu0
      %v9227 = vadd.f32 0.0, %v9226
      %9228 = vmatmul.bf16.gmra.mxu0 %v9140
      %v9229 = vpop.f32.mrf.mxu0
      %v9230 = vadd.f32 0.0, %v9229
      %v9231 = vpop.f32.mrf.mxu0
      %v9232 = vadd.f32 0.0, %v9231
      %9233 = vdwg.mxu0
      %v9234 = vadd.f32 %v8961, %v9155
      %v9235 = vadd.f32 %v8962, %v9157
      %v9236 = vadd.f32 %v8963, %v9160
      %v9237 = vadd.f32 %v8964, %v9162
      %v9238 = vadd.f32 %v8965, %v9165
      %v9239 = vadd.f32 %v8966, %v9167
      %v9240 = vadd.f32 %v8967, %v9170
      %v9241 = vadd.f32 %v8968, %v9172
      %v9242 = vadd.f32 %v8969, %v9175
      %v9243 = vadd.f32 %v8970, %v9177
      %v9244 = vadd.f32 %v8971, %v9180
      %v9245 = vadd.f32 %v8972, %v9182
      %v9246 = vadd.f32 %v8973, %v9185
      %v9247 = vadd.f32 %v8974, %v9187
      %v9248 = vadd.f32 %v8975, %v9190
      %v9249 = vadd.f32 %v8976, %v9192
      %v9250 = vadd.f32 %v8977, %v9195
      %v9251 = vadd.f32 %v8978, %v9197
      %v9252 = vadd.f32 %v8979, %v9200
      %v9253 = vadd.f32 %v8980, %v9202
      %v9254 = vadd.f32 %v8981, %v9205
      %v9255 = vadd.f32 %v8982, %v9207
      %v9256 = vadd.f32 %v8983, %v9210
      %v9257 = vadd.f32 %v8984, %v9212
      %v9258 = vadd.f32 %v8985, %v9215
      %v9259 = vadd.f32 %v8986, %v9217
      %v9260 = vadd.f32 %v8987, %v9220
      %v9261 = vadd.f32 %v8988, %v9222
      %v9262 = vadd.f32 %v8989, %v9225
      %v9263 = vadd.f32 %v8990, %v9227
      %v9264 = vadd.f32 %v8991, %v9230
      %v9265 = vadd.f32 %v8992, %v9232
      %v9266 = vld [vmem:[%s6] sm:$0x1]
      %v9268 = vperm.slane %v9266, 0
      %v9270 = vadd.f32 %v9234, %v9268
      %v9271 = vadd.f32 %v9235, %v9268
      %v9272 = vadd.f32 %v9236, %v9268
      %v9273 = vadd.f32 %v9237, %v9268
      %v9274 = vadd.f32 %v9238, %v9268
      %v9275 = vadd.f32 %v9239, %v9268
      %v9276 = vadd.f32 %v9240, %v9268
      %v9277 = vadd.f32 %v9241, %v9268
      %v9278 = vadd.f32 %v9242, %v9268
      %v9279 = vadd.f32 %v9243, %v9268
      %v9280 = vadd.f32 %v9244, %v9268
      %v9281 = vadd.f32 %v9245, %v9268
      %v9282 = vadd.f32 %v9246, %v9268
      %v9283 = vadd.f32 %v9247, %v9268
      %v9284 = vadd.f32 %v9248, %v9268
      %v9285 = vadd.f32 %v9249, %v9268
      %v9286 = vadd.f32 %v9250, %v9268
      %v9287 = vadd.f32 %v9251, %v9268
      %v9288 = vadd.f32 %v9252, %v9268
      %v9289 = vadd.f32 %v9253, %v9268
      %v9290 = vadd.f32 %v9254, %v9268
      %v9291 = vadd.f32 %v9255, %v9268
      %v9292 = vadd.f32 %v9256, %v9268
      %v9293 = vadd.f32 %v9257, %v9268
      %v9294 = vadd.f32 %v9258, %v9268
      %v9295 = vadd.f32 %v9259, %v9268
      %v9296 = vadd.f32 %v9260, %v9268
      %v9297 = vadd.f32 %v9261, %v9268
      %v9298 = vadd.f32 %v9262, %v9268
      %v9299 = vadd.f32 %v9263, %v9268
      %v9300 = vadd.f32 %v9264, %v9268
      %v9301 = vadd.f32 %v9265, %v9268
      %v9302 = vsub.f32 0.0, %v9270
      %v9303 = vsub.f32 0.0, %v9271
      %v9304 = vsub.f32 0.0, %v9272
      %v9305 = vsub.f32 0.0, %v9273
      %v9306 = vsub.f32 0.0, %v9274
      %v9307 = vsub.f32 0.0, %v9275
      %v9308 = vsub.f32 0.0, %v9276
      %v9309 = vsub.f32 0.0, %v9277
      %v9310 = vsub.f32 0.0, %v9278
      %v9311 = vsub.f32 0.0, %v9279
      %v9312 = vsub.f32 0.0, %v9280
      %v9313 = vsub.f32 0.0, %v9281
      %v9314 = vsub.f32 0.0, %v9282
      %v9315 = vsub.f32 0.0, %v9283
      %v9316 = vsub.f32 0.0, %v9284
      %v9317 = vsub.f32 0.0, %v9285
      %v9318 = vsub.f32 0.0, %v9286
      %v9319 = vsub.f32 0.0, %v9287
      %v9320 = vsub.f32 0.0, %v9288
      %v9321 = vsub.f32 0.0, %v9289
      %v9322 = vsub.f32 0.0, %v9290
      %v9323 = vsub.f32 0.0, %v9291
      %v9324 = vsub.f32 0.0, %v9292
      %v9325 = vsub.f32 0.0, %v9293
      %v9326 = vsub.f32 0.0, %v9294
      %v9327 = vsub.f32 0.0, %v9295
      %v9328 = vsub.f32 0.0, %v9296
      %v9329 = vsub.f32 0.0, %v9297
      %v9330 = vsub.f32 0.0, %v9298
      %v9331 = vsub.f32 0.0, %v9299
      %v9332 = vsub.f32 0.0, %v9300
      %v9333 = vsub.f32 0.0, %v9301
      %v9334 = vmul.f32 %v9302, 1.442695
      %v9335 = vpow.pop %v9334
      %v9336 = vmul.f32 %v9303, 1.442695
      %v9337 = vpow.pop %v9336
      %v9338 = vmul.f32 %v9304, 1.442695
      %v9339 = vpow.pop %v9338
      %v9340 = vmul.f32 %v9305, 1.442695
      %v9341 = vpow.pop %v9340
      %v9342 = vmul.f32 %v9306, 1.442695
      %v9343 = vpow.pop %v9342
      %v9344 = vmul.f32 %v9307, 1.442695
      %v9345 = vpow.pop %v9344
      %v9346 = vmul.f32 %v9308, 1.442695
      %v9347 = vpow.pop %v9346
      %v9348 = vmul.f32 %v9309, 1.442695
      %v9349 = vpow.pop %v9348
      %v9350 = vmul.f32 %v9310, 1.442695
      %v9351 = vpow.pop %v9350
      %v9352 = vmul.f32 %v9311, 1.442695
      %v9353 = vpow.pop %v9352
      %v9354 = vmul.f32 %v9312, 1.442695
      %v9355 = vpow.pop %v9354
      %v9356 = vmul.f32 %v9313, 1.442695
      %v9357 = vpow.pop %v9356
      %v9358 = vmul.f32 %v9314, 1.442695
      %v9359 = vpow.pop %v9358
      %v9360 = vmul.f32 %v9315, 1.442695
      %v9361 = vpow.pop %v9360
      %v9362 = vmul.f32 %v9316, 1.442695
      %v9363 = vpow.pop %v9362
      %v9364 = vmul.f32 %v9317, 1.442695
      %v9365 = vpow.pop %v9364
      %v9366 = vmul.f32 %v9318, 1.442695
      %v9367 = vpow.pop %v9366
      %v9368 = vmul.f32 %v9319, 1.442695
      %v9369 = vpow.pop %v9368
      %v9370 = vmul.f32 %v9320, 1.442695
      %v9371 = vpow.pop %v9370
      %v9372 = vmul.f32 %v9321, 1.442695
      %v9373 = vpow.pop %v9372
      %v9374 = vmul.f32 %v9322, 1.442695
      %v9375 = vpow.pop %v9374
      %v9376 = vmul.f32 %v9323, 1.442695
      %v9377 = vpow.pop %v9376
      %v9378 = vmul.f32 %v9324, 1.442695
      %v9379 = vpow.pop %v9378
      %v9380 = vmul.f32 %v9325, 1.442695
      %v9381 = vpow.pop %v9380
      %v9382 = vmul.f32 %v9326, 1.442695
      %v9383 = vpow.pop %v9382
      %v9384 = vmul.f32 %v9327, 1.442695
      %v9385 = vpow.pop %v9384
      %v9386 = vmul.f32 %v9328, 1.442695
      %v9387 = vpow.pop %v9386
      %v9388 = vmul.f32 %v9329, 1.442695
      %v9389 = vpow.pop %v9388
      %v9390 = vmul.f32 %v9330, 1.442695
      %v9391 = vpow.pop %v9390
      %v9392 = vmul.f32 %v9331, 1.442695
      %v9393 = vpow.pop %v9392
      %v9394 = vmul.f32 %v9332, 1.442695
      %v9395 = vpow.pop %v9394
      %v9396 = vmul.f32 %v9333, 1.442695
      %v9397 = vpow.pop %v9396
      %v9398 = vadd.f32 %v9335, 1.0
      %v9399 = vadd.f32 %v9337, 1.0
      %v9400 = vadd.f32 %v9339, 1.0
      %v9401 = vadd.f32 %v9341, 1.0
      %v9402 = vadd.f32 %v9343, 1.0
      %v9403 = vadd.f32 %v9345, 1.0
      %v9404 = vadd.f32 %v9347, 1.0
      %v9405 = vadd.f32 %v9349, 1.0
      %v9406 = vadd.f32 %v9351, 1.0
      %v9407 = vadd.f32 %v9353, 1.0
      %v9408 = vadd.f32 %v9355, 1.0
      %v9409 = vadd.f32 %v9357, 1.0
      %v9410 = vadd.f32 %v9359, 1.0
      %v9411 = vadd.f32 %v9361, 1.0
      %v9412 = vadd.f32 %v9363, 1.0
      %v9413 = vadd.f32 %v9365, 1.0
      %v9414 = vadd.f32 %v9367, 1.0
      %v9415 = vadd.f32 %v9369, 1.0
      %v9416 = vadd.f32 %v9371, 1.0
      %v9417 = vadd.f32 %v9373, 1.0
      %v9418 = vadd.f32 %v9375, 1.0
      %v9419 = vadd.f32 %v9377, 1.0
      %v9420 = vadd.f32 %v9379, 1.0
      %v9421 = vadd.f32 %v9381, 1.0
      %v9422 = vadd.f32 %v9383, 1.0
      %v9423 = vadd.f32 %v9385, 1.0
      %v9424 = vadd.f32 %v9387, 1.0
      %v9425 = vadd.f32 %v9389, 1.0
      %v9426 = vadd.f32 %v9391, 1.0
      %v9427 = vadd.f32 %v9393, 1.0
      %v9428 = vadd.f32 %v9395, 1.0
      %v9429 = vadd.f32 %v9397, 1.0
      %v9430 = vrcp.pop %v9398
      %v9431 = vrcp.pop %v9399
      %v9432 = vrcp.pop %v9400
      %v9433 = vrcp.pop %v9401
      %v9434 = vrcp.pop %v9402
      %v9435 = vrcp.pop %v9403
      %v9436 = vrcp.pop %v9404
      %v9437 = vrcp.pop %v9405
      %v9438 = vrcp.pop %v9406
      %v9439 = vrcp.pop %v9407
      %v9440 = vrcp.pop %v9408
      %v9441 = vrcp.pop %v9409
      %v9442 = vrcp.pop %v9410
      %v9443 = vrcp.pop %v9411
      %v9444 = vrcp.pop %v9412
      %v9445 = vrcp.pop %v9413
      %v9446 = vrcp.pop %v9414
      %v9447 = vrcp.pop %v9415
      %v9448 = vrcp.pop %v9416
      %v9449 = vrcp.pop %v9417
      %v9450 = vrcp.pop %v9418
      %v9451 = vrcp.pop %v9419
      %v9452 = vrcp.pop %v9420
      %v9453 = vrcp.pop %v9421
      %v9454 = vrcp.pop %v9422
      %v9455 = vrcp.pop %v9423
      %v9456 = vrcp.pop %v9424
      %v9457 = vrcp.pop %v9425
      %v9458 = vrcp.pop %v9426
      %v9459 = vrcp.pop %v9427
      %v9460 = vrcp.pop %v9428
      %v9461 = vrcp.pop %v9429
      %v9462 = vtanh.pop %v9270
      %v9463 = vtanh.pop %v9271
      %v9464 = vtanh.pop %v9272
      %v9465 = vtanh.pop %v9273
      %v9466 = vtanh.pop %v9274
      %v9467 = vtanh.pop %v9275
      %v9468 = vtanh.pop %v9276
      %v9469 = vtanh.pop %v9277
      %v9470 = vtanh.pop %v9278
      %v9471 = vtanh.pop %v9279
      %v9472 = vtanh.pop %v9280
      %v9473 = vtanh.pop %v9281
      %v9474 = vtanh.pop %v9282
      %v9475 = vtanh.pop %v9283
      %v9476 = vtanh.pop %v9284
      %v9477 = vtanh.pop %v9285
      %v9478 = vtanh.pop %v9286
      %v9479 = vtanh.pop %v9287
      %v9480 = vtanh.pop %v9288
      %v9481 = vtanh.pop %v9289
      %v9482 = vtanh.pop %v9290
      %v9483 = vtanh.pop %v9291
      %v9484 = vtanh.pop %v9292
      %v9485 = vtanh.pop %v9293
      %v9486 = vtanh.pop %v9294
      %v9487 = vtanh.pop %v9295
      %v9488 = vtanh.pop %v9296
      %v9489 = vtanh.pop %v9297
      %v9490 = vtanh.pop %v9298
      %v9491 = vtanh.pop %v9299
      %v9492 = vtanh.pop %v9300
      %v9493 = vtanh.pop %v9301
      %9494 = vrot.lane.b32.xlu0 %v890, 104
      %v9495 = vpop.permute.xlu0 %9494
      %9496 = vrot.lane.b32.xlu0 %v891, 104
      %v9497 = vpop.permute.xlu0 %9496
      %9498 = vrot.lane.b32.xlu0 %v892, 104
      %v9499 = vpop.permute.xlu0 %9498
      %9500 = vrot.lane.b32.xlu0 %v893, 104
      %v9501 = vpop.permute.xlu0 %9500
      %9502 = vrot.lane.b32.xlu0 %v894, 104
      %v9503 = vpop.permute.xlu0 %9502
      %9504 = vrot.lane.b32.xlu0 %v895, 104
      %v9505 = vpop.permute.xlu0 %9504
      %9506 = vrot.lane.b32.xlu0 %v896, 104
      %v9507 = vpop.permute.xlu0 %9506
      %9508 = vrot.lane.b32.xlu0 %v897, 104
      %v9509 = vpop.permute.xlu0 %9508
      %9510 = vrot.lane.b32.xlu0 %v898, 104
      %v9511 = vpop.permute.xlu0 %9510
      %9512 = vrot.lane.b32.xlu0 %v899, 104
      %v9513 = vpop.permute.xlu0 %9512
      %9514 = vrot.lane.b32.xlu0 %v900, 104
      %v9515 = vpop.permute.xlu0 %9514
      %9516 = vrot.lane.b32.xlu0 %v901, 104
      %v9517 = vpop.permute.xlu0 %9516
      %9518 = vrot.lane.b32.xlu0 %v902, 104
      %v9519 = vpop.permute.xlu0 %9518
      %9520 = vrot.lane.b32.xlu0 %v903, 104
      %v9521 = vpop.permute.xlu0 %9520
      %9522 = vrot.lane.b32.xlu0 %v904, 104
      %v9523 = vpop.permute.xlu0 %9522
      %9524 = vrot.lane.b32.xlu0 %v905, 104
      %v9525 = vpop.permute.xlu0 %9524
      %9526 = vrot.lane.b32.xlu0 %v906, 104
      %v9527 = vpop.permute.xlu0 %9526
      %9528 = vrot.lane.b32.xlu0 %v907, 104
      %v9529 = vpop.permute.xlu0 %9528
      %9530 = vrot.lane.b32.xlu0 %v908, 104
      %v9531 = vpop.permute.xlu0 %9530
      %9532 = vrot.lane.b32.xlu0 %v909, 104
      %v9533 = vpop.permute.xlu0 %9532
      %9534 = vrot.lane.b32.xlu0 %v910, 104
      %v9535 = vpop.permute.xlu0 %9534
      %9536 = vrot.lane.b32.xlu0 %v911, 104
      %v9537 = vpop.permute.xlu0 %9536
      %9538 = vrot.lane.b32.xlu0 %v912, 104
      %v9539 = vpop.permute.xlu0 %9538
      %9540 = vrot.lane.b32.xlu0 %v913, 104
      %v9541 = vpop.permute.xlu0 %9540
      %9542 = vrot.lane.b32.xlu0 %v914, 104
      %v9543 = vpop.permute.xlu0 %9542
      %9544 = vrot.lane.b32.xlu0 %v915, 104
      %v9545 = vpop.permute.xlu0 %9544
      %9546 = vrot.lane.b32.xlu0 %v916, 104
      %v9547 = vpop.permute.xlu0 %9546
      %9548 = vrot.lane.b32.xlu0 %v917, 104
      %v9549 = vpop.permute.xlu0 %9548
      %9550 = vrot.lane.b32.xlu0 %v918, 104
      %v9551 = vpop.permute.xlu0 %9550
      %9552 = vrot.lane.b32.xlu0 %v919, 104
      %v9553 = vpop.permute.xlu0 %9552
      %9554 = vrot.lane.b32.xlu0 %v920, 104
      %v9555 = vpop.permute.xlu0 %9554
      %9556 = vrot.lane.b32.xlu0 %v921, 104
      %v9557 = vpop.permute.xlu0 %9556
      %v9590 = vmul.f32 %v9430, %v9495
      %v9591 = vmul.f32 %v9431, %v9497
      %v9592 = vmul.f32 %v9432, %v9499
      %v9593 = vmul.f32 %v9433, %v9501
      %v9594 = vmul.f32 %v9434, %v9503
      %v9595 = vmul.f32 %v9435, %v9505
      %v9596 = vmul.f32 %v9436, %v9507
      %v9597 = vmul.f32 %v9437, %v9509
      %v9598 = vmul.f32 %v9438, %v9511
      %v9599 = vmul.f32 %v9439, %v9513
      %v9600 = vmul.f32 %v9440, %v9515
      %v9601 = vmul.f32 %v9441, %v9517
      %v9602 = vmul.f32 %v9442, %v9519
      %v9603 = vmul.f32 %v9443, %v9521
      %v9604 = vmul.f32 %v9444, %v9523
      %v9605 = vmul.f32 %v9445, %v9525
      %v9606 = vmul.f32 %v9446, %v9527
      %v9607 = vmul.f32 %v9447, %v9529
      %v9608 = vmul.f32 %v9448, %v9531
      %v9609 = vmul.f32 %v9449, %v9533
      %v9610 = vmul.f32 %v9450, %v9535
      %v9611 = vmul.f32 %v9451, %v9537
      %v9612 = vmul.f32 %v9452, %v9539
      %v9613 = vmul.f32 %v9453, %v9541
      %v9614 = vmul.f32 %v9454, %v9543
      %v9615 = vmul.f32 %v9455, %v9545
      %v9616 = vmul.f32 %v9456, %v9547
      %v9617 = vmul.f32 %v9457, %v9549
      %v9618 = vmul.f32 %v9458, %v9551
      %v9619 = vmul.f32 %v9459, %v9553
      %v9620 = vmul.f32 %v9460, %v9555
      %v9621 = vmul.f32 %v9461, %v9557
      %9654 = vrot.lane.b32.xlu0 %v9462, 112
      %v9655 = vpop.permute.xlu0 %9654
      %9656 = vrot.lane.b32.xlu0 %v9463, 112
      %v9657 = vpop.permute.xlu0 %9656
      %9658 = vrot.lane.b32.xlu0 %v9464, 112
      %v9659 = vpop.permute.xlu0 %9658
      %9660 = vrot.lane.b32.xlu0 %v9465, 112
      %v9661 = vpop.permute.xlu0 %9660
      %9662 = vrot.lane.b32.xlu0 %v9466, 112
      %v9663 = vpop.permute.xlu0 %9662
      %9664 = vrot.lane.b32.xlu0 %v9467, 112
      %v9665 = vpop.permute.xlu0 %9664
      %9666 = vrot.lane.b32.xlu0 %v9468, 112
      %v9667 = vpop.permute.xlu0 %9666
      %9668 = vrot.lane.b32.xlu0 %v9469, 112
      %v9669 = vpop.permute.xlu0 %9668
      %9670 = vrot.lane.b32.xlu0 %v9470, 112
      %v9671 = vpop.permute.xlu0 %9670
      %9672 = vrot.lane.b32.xlu0 %v9471, 112
      %v9673 = vpop.permute.xlu0 %9672
      %9674 = vrot.lane.b32.xlu0 %v9472, 112
      %v9675 = vpop.permute.xlu0 %9674
      %9676 = vrot.lane.b32.xlu0 %v9473, 112
      %v9677 = vpop.permute.xlu0 %9676
      %9678 = vrot.lane.b32.xlu0 %v9474, 112
      %v9679 = vpop.permute.xlu0 %9678
      %9680 = vrot.lane.b32.xlu0 %v9475, 112
      %v9681 = vpop.permute.xlu0 %9680
      %9682 = vrot.lane.b32.xlu0 %v9476, 112
      %v9683 = vpop.permute.xlu0 %9682
      %9684 = vrot.lane.b32.xlu0 %v9477, 112
      %v9685 = vpop.permute.xlu0 %9684
      %9686 = vrot.lane.b32.xlu0 %v9478, 112
      %v9687 = vpop.permute.xlu0 %9686
      %9688 = vrot.lane.b32.xlu0 %v9479, 112
      %v9689 = vpop.permute.xlu0 %9688
      %9690 = vrot.lane.b32.xlu0 %v9480, 112
      %v9691 = vpop.permute.xlu0 %9690
      %9692 = vrot.lane.b32.xlu0 %v9481, 112
      %v9693 = vpop.permute.xlu0 %9692
      %9694 = vrot.lane.b32.xlu0 %v9482, 112
      %v9695 = vpop.permute.xlu0 %9694
      %9696 = vrot.lane.b32.xlu0 %v9483, 112
      %v9697 = vpop.permute.xlu0 %9696
      %9698 = vrot.lane.b32.xlu0 %v9484, 112
      %v9699 = vpop.permute.xlu0 %9698
      %9700 = vrot.lane.b32.xlu0 %v9485, 112
      %v9701 = vpop.permute.xlu0 %9700
      %9702 = vrot.lane.b32.xlu0 %v9486, 112
      %v9703 = vpop.permute.xlu0 %9702
      %9704 = vrot.lane.b32.xlu0 %v9487, 112
      %v9705 = vpop.permute.xlu0 %9704
      %9706 = vrot.lane.b32.xlu0 %v9488, 112
      %v9707 = vpop.permute.xlu0 %9706
      %9708 = vrot.lane.b32.xlu0 %v9489, 112
      %v9709 = vpop.permute.xlu0 %9708
      %9710 = vrot.lane.b32.xlu0 %v9490, 112
      %v9711 = vpop.permute.xlu0 %9710
      %9712 = vrot.lane.b32.xlu0 %v9491, 112
      %v9713 = vpop.permute.xlu0 %9712
      %9714 = vrot.lane.b32.xlu0 %v9492, 112
      %v9715 = vpop.permute.xlu0 %9714
      %9716 = vrot.lane.b32.xlu0 %v9493, 112
      %v9717 = vpop.permute.xlu0 %9716
      %v9750 = vmul.f32 %v9430, %v9655
      %v9751 = vmul.f32 %v9431, %v9657
      %v9752 = vmul.f32 %v9432, %v9659
      %v9753 = vmul.f32 %v9433, %v9661
      %v9754 = vmul.f32 %v9434, %v9663
      %v9755 = vmul.f32 %v9435, %v9665
      %v9756 = vmul.f32 %v9436, %v9667
      %v9757 = vmul.f32 %v9437, %v9669
      %v9758 = vmul.f32 %v9438, %v9671
      %v9759 = vmul.f32 %v9439, %v9673
      %v9760 = vmul.f32 %v9440, %v9675
      %v9761 = vmul.f32 %v9441, %v9677
      %v9762 = vmul.f32 %v9442, %v9679
      %v9763 = vmul.f32 %v9443, %v9681
      %v9764 = vmul.f32 %v9444, %v9683
      %v9765 = vmul.f32 %v9445, %v9685
      %v9766 = vmul.f32 %v9446, %v9687
      %v9767 = vmul.f32 %v9447, %v9689
      %v9768 = vmul.f32 %v9448, %v9691
      %v9769 = vmul.f32 %v9449, %v9693
      %v9770 = vmul.f32 %v9450, %v9695
      %v9771 = vmul.f32 %v9451, %v9697
      %v9772 = vmul.f32 %v9452, %v9699
      %v9773 = vmul.f32 %v9453, %v9701
      %v9774 = vmul.f32 %v9454, %v9703
      %v9775 = vmul.f32 %v9455, %v9705
      %v9776 = vmul.f32 %v9456, %v9707
      %v9777 = vmul.f32 %v9457, %v9709
      %v9778 = vmul.f32 %v9458, %v9711
      %v9779 = vmul.f32 %v9459, %v9713
      %v9780 = vmul.f32 %v9460, %v9715
      %v9781 = vmul.f32 %v9461, %v9717
      %9814 = vrot.lane.b32.xlu0 %v9750, 120
      %v9815 = vpop.permute.xlu0 %9814
      %9816 = vrot.lane.b32.xlu0 %v9751, 120
      %v9817 = vpop.permute.xlu0 %9816
      %9818 = vrot.lane.b32.xlu0 %v9752, 120
      %v9819 = vpop.permute.xlu0 %9818
      %9820 = vrot.lane.b32.xlu0 %v9753, 120
      %v9821 = vpop.permute.xlu0 %9820
      %9822 = vrot.lane.b32.xlu0 %v9754, 120
      %v9823 = vpop.permute.xlu0 %9822
      %9824 = vrot.lane.b32.xlu0 %v9755, 120
      %v9825 = vpop.permute.xlu0 %9824
      %9826 = vrot.lane.b32.xlu0 %v9756, 120
      %v9827 = vpop.permute.xlu0 %9826
      %9828 = vrot.lane.b32.xlu0 %v9757, 120
      %v9829 = vpop.permute.xlu0 %9828
      %9830 = vrot.lane.b32.xlu0 %v9758, 120
      %v9831 = vpop.permute.xlu0 %9830
      %9832 = vrot.lane.b32.xlu0 %v9759, 120
      %v9833 = vpop.permute.xlu0 %9832
      %9834 = vrot.lane.b32.xlu0 %v9760, 120
      %v9835 = vpop.permute.xlu0 %9834
      %9836 = vrot.lane.b32.xlu0 %v9761, 120
      %v9837 = vpop.permute.xlu0 %9836
      %9838 = vrot.lane.b32.xlu0 %v9762, 120
      %v9839 = vpop.permute.xlu0 %9838
      %9840 = vrot.lane.b32.xlu0 %v9763, 120
      %v9841 = vpop.permute.xlu0 %9840
      %9842 = vrot.lane.b32.xlu0 %v9764, 120
      %v9843 = vpop.permute.xlu0 %9842
      %9844 = vrot.lane.b32.xlu0 %v9765, 120
      %v9845 = vpop.permute.xlu0 %9844
      %9846 = vrot.lane.b32.xlu0 %v9766, 120
      %v9847 = vpop.permute.xlu0 %9846
      %9848 = vrot.lane.b32.xlu0 %v9767, 120
      %v9849 = vpop.permute.xlu0 %9848
      %9850 = vrot.lane.b32.xlu0 %v9768, 120
      %v9851 = vpop.permute.xlu0 %9850
      %9852 = vrot.lane.b32.xlu0 %v9769, 120
      %v9853 = vpop.permute.xlu0 %9852
      %9854 = vrot.lane.b32.xlu0 %v9770, 120
      %v9855 = vpop.permute.xlu0 %9854
      %9856 = vrot.lane.b32.xlu0 %v9771, 120
      %v9857 = vpop.permute.xlu0 %9856
      %9858 = vrot.lane.b32.xlu0 %v9772, 120
      %v9859 = vpop.permute.xlu0 %9858
      %9860 = vrot.lane.b32.xlu0 %v9773, 120
      %v9861 = vpop.permute.xlu0 %9860
      %9862 = vrot.lane.b32.xlu0 %v9774, 120
      %v9863 = vpop.permute.xlu0 %9862
      %9864 = vrot.lane.b32.xlu0 %v9775, 120
      %v9865 = vpop.permute.xlu0 %9864
      %9866 = vrot.lane.b32.xlu0 %v9776, 120
      %v9867 = vpop.permute.xlu0 %9866
      %9868 = vrot.lane.b32.xlu0 %v9777, 120
      %v9869 = vpop.permute.xlu0 %9868
      %9870 = vrot.lane.b32.xlu0 %v9778, 120
      %v9871 = vpop.permute.xlu0 %9870
      %9872 = vrot.lane.b32.xlu0 %v9779, 120
      %v9873 = vpop.permute.xlu0 %9872
      %9874 = vrot.lane.b32.xlu0 %v9780, 120
      %v9875 = vpop.permute.xlu0 %9874
      %9876 = vrot.lane.b32.xlu0 %v9781, 120
      %v9877 = vpop.permute.xlu0 %9876
      %v9910 = vadd.f32 %v9590, %v9815
      %v9911 = vadd.f32 %v9591, %v9817
      %v9912 = vadd.f32 %v9592, %v9819
      %v9913 = vadd.f32 %v9593, %v9821
      %v9914 = vadd.f32 %v9594, %v9823
      %v9915 = vadd.f32 %v9595, %v9825
      %v9916 = vadd.f32 %v9596, %v9827
      %v9917 = vadd.f32 %v9597, %v9829
      %v9918 = vadd.f32 %v9598, %v9831
      %v9919 = vadd.f32 %v9599, %v9833
      %v9920 = vadd.f32 %v9600, %v9835
      %v9921 = vadd.f32 %v9601, %v9837
      %v9922 = vadd.f32 %v9602, %v9839
      %v9923 = vadd.f32 %v9603, %v9841
      %v9924 = vadd.f32 %v9604, %v9843
      %v9925 = vadd.f32 %v9605, %v9845
      %v9926 = vadd.f32 %v9606, %v9847
      %v9927 = vadd.f32 %v9607, %v9849
      %v9928 = vadd.f32 %v9608, %v9851
      %v9929 = vadd.f32 %v9609, %v9853
      %v9930 = vadd.f32 %v9610, %v9855
      %v9931 = vadd.f32 %v9611, %v9857
      %v9932 = vadd.f32 %v9612, %v9859
      %v9933 = vadd.f32 %v9613, %v9861
      %v9934 = vadd.f32 %v9614, %v9863
      %v9935 = vadd.f32 %v9615, %v9865
      %v9936 = vadd.f32 %v9616, %v9867
      %v9937 = vadd.f32 %v9617, %v9869
      %v9938 = vadd.f32 %v9618, %v9871
      %v9939 = vadd.f32 %v9619, %v9873
      %v9940 = vadd.f32 %v9620, %v9875
      %v9941 = vadd.f32 %v9621, %v9877
      %v9942 = vtanh.pop %v9910
      %v9943 = vtanh.pop %v9911
      %v9944 = vtanh.pop %v9912
      %v9945 = vtanh.pop %v9913
      %v9946 = vtanh.pop %v9914
      %v9947 = vtanh.pop %v9915
      %v9948 = vtanh.pop %v9916
      %v9949 = vtanh.pop %v9917
      %v9950 = vtanh.pop %v9918
      %v9951 = vtanh.pop %v9919
      %v9952 = vtanh.pop %v9920
      %v9953 = vtanh.pop %v9921
      %v9954 = vtanh.pop %v9922
      %v9955 = vtanh.pop %v9923
      %v9956 = vtanh.pop %v9924
      %v9957 = vtanh.pop %v9925
      %v9958 = vtanh.pop %v9926
      %v9959 = vtanh.pop %v9927
      %v9960 = vtanh.pop %v9928
      %v9961 = vtanh.pop %v9929
      %v9962 = vtanh.pop %v9930
      %v9963 = vtanh.pop %v9931
      %v9964 = vtanh.pop %v9932
      %v9965 = vtanh.pop %v9933
      %v9966 = vtanh.pop %v9934
      %v9967 = vtanh.pop %v9935
      %v9968 = vtanh.pop %v9936
      %v9969 = vtanh.pop %v9937
      %v9970 = vtanh.pop %v9938
      %v9971 = vtanh.pop %v9939
      %v9972 = vtanh.pop %v9940
      %v9973 = vtanh.pop %v9941
      %10006 = vrot.lane.b32.xlu0 %v9942, 16
      %v10007 = vpop.permute.xlu0 %10006
      %10008 = vrot.lane.b32.xlu0 %v9943, 16
      %v10009 = vpop.permute.xlu0 %10008
      %10010 = vrot.lane.b32.xlu0 %v9944, 16
      %v10011 = vpop.permute.xlu0 %10010
      %10012 = vrot.lane.b32.xlu0 %v9945, 16
      %v10013 = vpop.permute.xlu0 %10012
      %10014 = vrot.lane.b32.xlu0 %v9946, 16
      %v10015 = vpop.permute.xlu0 %10014
      %10016 = vrot.lane.b32.xlu0 %v9947, 16
      %v10017 = vpop.permute.xlu0 %10016
      %10018 = vrot.lane.b32.xlu0 %v9948, 16
      %v10019 = vpop.permute.xlu0 %10018
      %10020 = vrot.lane.b32.xlu0 %v9949, 16
      %v10021 = vpop.permute.xlu0 %10020
      %10022 = vrot.lane.b32.xlu0 %v9950, 16
      %v10023 = vpop.permute.xlu0 %10022
      %10024 = vrot.lane.b32.xlu0 %v9951, 16
      %v10025 = vpop.permute.xlu0 %10024
      %10026 = vrot.lane.b32.xlu0 %v9952, 16
      %v10027 = vpop.permute.xlu0 %10026
      %10028 = vrot.lane.b32.xlu0 %v9953, 16
      %v10029 = vpop.permute.xlu0 %10028
      %10030 = vrot.lane.b32.xlu0 %v9954, 16
      %v10031 = vpop.permute.xlu0 %10030
      %10032 = vrot.lane.b32.xlu0 %v9955, 16
      %v10033 = vpop.permute.xlu0 %10032
      %10034 = vrot.lane.b32.xlu0 %v9956, 16
      %v10035 = vpop.permute.xlu0 %10034
      %10036 = vrot.lane.b32.xlu0 %v9957, 16
      %v10037 = vpop.permute.xlu0 %10036
      %10038 = vrot.lane.b32.xlu0 %v9958, 16
      %v10039 = vpop.permute.xlu0 %10038
      %10040 = vrot.lane.b32.xlu0 %v9959, 16
      %v10041 = vpop.permute.xlu0 %10040
      %10042 = vrot.lane.b32.xlu0 %v9960, 16
      %v10043 = vpop.permute.xlu0 %10042
      %10044 = vrot.lane.b32.xlu0 %v9961, 16
      %v10045 = vpop.permute.xlu0 %10044
      %10046 = vrot.lane.b32.xlu0 %v9962, 16
      %v10047 = vpop.permute.xlu0 %10046
      %10048 = vrot.lane.b32.xlu0 %v9963, 16
      %v10049 = vpop.permute.xlu0 %10048
      %10050 = vrot.lane.b32.xlu0 %v9964, 16
      %v10051 = vpop.permute.xlu0 %10050
      %10052 = vrot.lane.b32.xlu0 %v9965, 16
      %v10053 = vpop.permute.xlu0 %10052
      %10054 = vrot.lane.b32.xlu0 %v9966, 16
      %v10055 = vpop.permute.xlu0 %10054
      %10056 = vrot.lane.b32.xlu0 %v9967, 16
      %v10057 = vpop.permute.xlu0 %10056
      %10058 = vrot.lane.b32.xlu0 %v9968, 16
      %v10059 = vpop.permute.xlu0 %10058
      %10060 = vrot.lane.b32.xlu0 %v9969, 16
      %v10061 = vpop.permute.xlu0 %10060
      %10062 = vrot.lane.b32.xlu0 %v9970, 16
      %v10063 = vpop.permute.xlu0 %10062
      %10064 = vrot.lane.b32.xlu0 %v9971, 16
      %v10065 = vpop.permute.xlu0 %10064
      %10066 = vrot.lane.b32.xlu0 %v9972, 16
      %v10067 = vpop.permute.xlu0 %10066
      %10068 = vrot.lane.b32.xlu0 %v9973, 16
      %v10069 = vpop.permute.xlu0 %10068
      %v10102 = vmul.f32 %v9430, %v10007
      %v10103 = vmul.f32 %v9431, %v10009
      %v10104 = vmul.f32 %v9432, %v10011
      %v10105 = vmul.f32 %v9433, %v10013
      %v10106 = vmul.f32 %v9434, %v10015
      %v10107 = vmul.f32 %v9435, %v10017
      %v10108 = vmul.f32 %v9436, %v10019
      %v10109 = vmul.f32 %v9437, %v10021
      %v10110 = vmul.f32 %v9438, %v10023
      %v10111 = vmul.f32 %v9439, %v10025
      %v10112 = vmul.f32 %v9440, %v10027
      %v10113 = vmul.f32 %v9441, %v10029
      %v10114 = vmul.f32 %v9442, %v10031
      %v10115 = vmul.f32 %v9443, %v10033
      %v10116 = vmul.f32 %v9444, %v10035
      %v10117 = vmul.f32 %v9445, %v10037
      %v10118 = vmul.f32 %v9446, %v10039
      %v10119 = vmul.f32 %v9447, %v10041
      %v10120 = vmul.f32 %v9448, %v10043
      %v10121 = vmul.f32 %v9449, %v10045
      %v10122 = vmul.f32 %v9450, %v10047
      %v10123 = vmul.f32 %v9451, %v10049
      %v10124 = vmul.f32 %v9452, %v10051
      %v10125 = vmul.f32 %v9453, %v10053
      %v10126 = vmul.f32 %v9454, %v10055
      %v10127 = vmul.f32 %v9455, %v10057
      %v10128 = vmul.f32 %v9456, %v10059
      %v10129 = vmul.f32 %v9457, %v10061
      %v10130 = vmul.f32 %v9458, %v10063
      %v10131 = vmul.f32 %v9459, %v10065
      %v10132 = vmul.f32 %v9460, %v10067
      %v10133 = vmul.f32 %v9461, %v10069
      %10166 = vrot.lane.b32.xlu0 %v10102, 120
      %v10167 = vpop.permute.xlu0 %10166
      %10168 = vrot.lane.b32.xlu0 %v10103, 120
      %v10169 = vpop.permute.xlu0 %10168
      %10170 = vrot.lane.b32.xlu0 %v10104, 120
      %v10171 = vpop.permute.xlu0 %10170
      %10172 = vrot.lane.b32.xlu0 %v10105, 120
      %v10173 = vpop.permute.xlu0 %10172
      %10174 = vrot.lane.b32.xlu0 %v10106, 120
      %v10175 = vpop.permute.xlu0 %10174
      %10176 = vrot.lane.b32.xlu0 %v10107, 120
      %v10177 = vpop.permute.xlu0 %10176
      %10178 = vrot.lane.b32.xlu0 %v10108, 120
      %v10179 = vpop.permute.xlu0 %10178
      %10180 = vrot.lane.b32.xlu0 %v10109, 120
      %v10181 = vpop.permute.xlu0 %10180
      %10182 = vrot.lane.b32.xlu0 %v10110, 120
      %v10183 = vpop.permute.xlu0 %10182
      %10184 = vrot.lane.b32.xlu0 %v10111, 120
      %v10185 = vpop.permute.xlu0 %10184
      %10186 = vrot.lane.b32.xlu0 %v10112, 120
      %v10187 = vpop.permute.xlu0 %10186
      %10188 = vrot.lane.b32.xlu0 %v10113, 120
      %v10189 = vpop.permute.xlu0 %10188
      %10190 = vrot.lane.b32.xlu0 %v10114, 120
      %v10191 = vpop.permute.xlu0 %10190
      %10192 = vrot.lane.b32.xlu0 %v10115, 120
      %v10193 = vpop.permute.xlu0 %10192
      %10194 = vrot.lane.b32.xlu0 %v10116, 120
      %v10195 = vpop.permute.xlu0 %10194
      %10196 = vrot.lane.b32.xlu0 %v10117, 120
      %v10197 = vpop.permute.xlu0 %10196
      %10198 = vrot.lane.b32.xlu0 %v10118, 120
      %v10199 = vpop.permute.xlu0 %10198
      %10200 = vrot.lane.b32.xlu0 %v10119, 120
      %v10201 = vpop.permute.xlu0 %10200
      %10202 = vrot.lane.b32.xlu0 %v10120, 120
      %v10203 = vpop.permute.xlu0 %10202
      %10204 = vrot.lane.b32.xlu0 %v10121, 120
      %v10205 = vpop.permute.xlu0 %10204
      %10206 = vrot.lane.b32.xlu0 %v10122, 120
      %v10207 = vpop.permute.xlu0 %10206
      %10208 = vrot.lane.b32.xlu0 %v10123, 120
      %v10209 = vpop.permute.xlu0 %10208
      %10210 = vrot.lane.b32.xlu0 %v10124, 120
      %v10211 = vpop.permute.xlu0 %10210
      %10212 = vrot.lane.b32.xlu0 %v10125, 120
      %v10213 = vpop.permute.xlu0 %10212
      %10214 = vrot.lane.b32.xlu0 %v10126, 120
      %v10215 = vpop.permute.xlu0 %10214
      %10216 = vrot.lane.b32.xlu0 %v10127, 120
      %v10217 = vpop.permute.xlu0 %10216
      %10218 = vrot.lane.b32.xlu0 %v10128, 120
      %v10219 = vpop.permute.xlu0 %10218
      %10220 = vrot.lane.b32.xlu0 %v10129, 120
      %v10221 = vpop.permute.xlu0 %10220
      %10222 = vrot.lane.b32.xlu0 %v10130, 120
      %v10223 = vpop.permute.xlu0 %10222
      %10224 = vrot.lane.b32.xlu0 %v10131, 120
      %v10225 = vpop.permute.xlu0 %10224
      %10226 = vrot.lane.b32.xlu0 %v10132, 120
      %v10227 = vpop.permute.xlu0 %10226
      %10228 = vrot.lane.b32.xlu0 %v10133, 120
      %v10229 = vpop.permute.xlu0 %10228
      %v10262 = vsel %vm1306, %v9910, %v10167
      %v10263 = vsel %vm1306, %v9911, %v10169
      %v10264 = vsel %vm1306, %v9912, %v10171
      %v10265 = vsel %vm1306, %v9913, %v10173
      %v10266 = vsel %vm1306, %v9914, %v10175
      %v10267 = vsel %vm1306, %v9915, %v10177
      %v10268 = vsel %vm1306, %v9916, %v10179
      %v10269 = vsel %vm1306, %v9917, %v10181
      %v10270 = vsel %vm1306, %v9918, %v10183
      %v10271 = vsel %vm1306, %v9919, %v10185
      %v10272 = vsel %vm1306, %v9920, %v10187
      %v10273 = vsel %vm1306, %v9921, %v10189
      %v10274 = vsel %vm1306, %v9922, %v10191
      %v10275 = vsel %vm1306, %v9923, %v10193
      %v10276 = vsel %vm1306, %v9924, %v10195
      %v10277 = vsel %vm1306, %v9925, %v10197
      %v10278 = vsel %vm1306, %v9926, %v10199
      %v10279 = vsel %vm1306, %v9927, %v10201
      %v10280 = vsel %vm1306, %v9928, %v10203
      %v10281 = vsel %vm1306, %v9929, %v10205
      %v10282 = vsel %vm1306, %v9930, %v10207
      %v10283 = vsel %vm1306, %v9931, %v10209
      %v10284 = vsel %vm1306, %v9932, %v10211
      %v10285 = vsel %vm1306, %v9933, %v10213
      %v10286 = vsel %vm1306, %v9934, %v10215
      %v10287 = vsel %vm1306, %v9935, %v10217
      %v10288 = vsel %vm1306, %v9936, %v10219
      %v10289 = vsel %vm1306, %v9937, %v10221
      %v10290 = vsel %vm1306, %v9938, %v10223
      %v10291 = vsel %vm1306, %v9939, %v10225
      %v10292 = vsel %vm1306, %v9940, %v10227
      %v10293 = vsel %vm1306, %v9941, %v10229
      %vm10294 = vcmask 130048
      %10295 = vst.msk [vmem:[%s324] sm:$0xff] %vm10294, %v10262
      %10296 = vst.msk [vmem:[%s324 + $0x8] sm:$0xff] %vm10294, %v10263
      %10297 = vst.msk [vmem:[%s324 + $0x10] sm:$0xff] %vm10294, %v10264
      %10298 = vst.msk [vmem:[%s324 + $0x18] sm:$0xff] %vm10294, %v10265
      %10299 = vst.msk [vmem:[%s324 + $0x20] sm:$0xff] %vm10294, %v10266
      %10300 = vst.msk [vmem:[%s324 + $0x28] sm:$0xff] %vm10294, %v10267
      %10301 = vst.msk [vmem:[%s324 + $0x30] sm:$0xff] %vm10294, %v10268
      %10302 = vst.msk [vmem:[%s324 + $0x38] sm:$0xff] %vm10294, %v10269
      %10303 = vst.msk [vmem:[%s324 + $0x40] sm:$0xff] %vm10294, %v10270
      %10304 = vst.msk [vmem:[%s324 + $0x48] sm:$0xff] %vm10294, %v10271
      %10305 = vst.msk [vmem:[%s324 + $0x50] sm:$0xff] %vm10294, %v10272
      %10306 = vst.msk [vmem:[%s324 + $0x58] sm:$0xff] %vm10294, %v10273
      %10307 = vst.msk [vmem:[%s324 + $0x60] sm:$0xff] %vm10294, %v10274
      %10308 = vst.msk [vmem:[%s324 + $0x68] sm:$0xff] %vm10294, %v10275
      %10309 = vst.msk [vmem:[%s324 + $0x70] sm:$0xff] %vm10294, %v10276
      %10310 = vst.msk [vmem:[%s324 + $0x78] sm:$0xff] %vm10294, %v10277
      %10311 = vst.msk [vmem:[%s324 + $0x80] sm:$0xff] %vm10294, %v10278
      %10312 = vst.msk [vmem:[%s324 + $0x88] sm:$0xff] %vm10294, %v10279
      %10313 = vst.msk [vmem:[%s324 + $0x90] sm:$0xff] %vm10294, %v10280
      %10314 = vst.msk [vmem:[%s324 + $0x98] sm:$0xff] %vm10294, %v10281
      %10315 = vst.msk [vmem:[%s324 + $0xa0] sm:$0xff] %vm10294, %v10282
      %10316 = vst.msk [vmem:[%s324 + $0xa8] sm:$0xff] %vm10294, %v10283
      %10317 = vst.msk [vmem:[%s324 + $0xb0] sm:$0xff] %vm10294, %v10284
      %10318 = vst.msk [vmem:[%s324 + $0xb8] sm:$0xff] %vm10294, %v10285
      %10319 = vst.msk [vmem:[%s324 + $0xc0] sm:$0xff] %vm10294, %v10286
      %10320 = vst.msk [vmem:[%s324 + $0xc8] sm:$0xff] %vm10294, %v10287
      %10321 = vst.msk [vmem:[%s324 + $0xd0] sm:$0xff] %vm10294, %v10288
      %10322 = vst.msk [vmem:[%s324 + $0xd8] sm:$0xff] %vm10294, %v10289
      %10323 = vst.msk [vmem:[%s324 + $0xe0] sm:$0xff] %vm10294, %v10290
      %10324 = vst.msk [vmem:[%s324 + $0xe8] sm:$0xff] %vm10294, %v10291
      %10325 = vst.msk [vmem:[%s324 + $0xf0] sm:$0xff] %vm10294, %v10292
      %10326 = vst.msk [vmem:[%s324 + $0xf8] sm:$0xff] %vm10294, %v10293
      %s10327 = smul.u32 32, %s18
      %p10328 = scmp.lt.s32.totalorder %s10327, 63
      %s10329 = scalar_select %p10328, %s10327, 63
      %s10330 = smul.addr %s10329, 8
      %s10331 = scalar_lea.vmem %s7, %s10330
      // Predicated region
      $region49: #{inference_core_forward.1} parent=47 // pred_check
        %p10332 = pneg %p198
      $region50: #{inference_core_forward.1} parent=47 // pred_check_branch
        %10334 = sbr.rel (%p10332) target = $region52
      $region51: #{inference_core_forward.1} parent=47 // pred_region
        %s10335 = smul.u32 32, %s18
      $region52: #{inference_core_forward.1} parent=47 // pred_fallthru
        _
    $region48: #{inference_core_forward.1} parent=5 // pred_fallthru
      _
    %p10336 = scmp.le.s32.totalorder 2, %s13
    // Predicated region
    $region53: #{inference_core_forward.1} parent=5 // pred_check
      %p10337 = pneg %p10336
    $region54: #{inference_core_forward.1} parent=5 // pred_check_branch
      %10339 = sbr.rel (%p10337) target = $region56
    $region55: #{inference_core_forward.1} parent=5 // pred_region
      %s10340 = ssub.s32 %s13, 2
      // Predicated region
      $region57: #{inference_core_forward.1} parent=55 // pred_check
        %p10341 = pneg %p204
      $region58: #{inference_core_forward.1} parent=55 // pred_check_branch
        %10343 = sbr.rel (%p10341) target = $region60
      $region59: #{inference_core_forward.1} parent=55 // pred_region
        %s10344 = smul.u32 32, %s19
        %p10345 = scmp.lt.s32.totalorder %s10344, 63
        %s10346 = scalar_select %p10345, %s10344, 63
        %s10347 = smul.addr %s10346, 8
        %s10348 = scalar_lea.vmem %s7, %s10347
      $region60: #{inference_core_forward.1} parent=55 // pred_fallthru
        _
    $region56: #{inference_core_forward.1} parent=5 // pred_fallthru
      _
  $region6: #{inference_core_forward.1} parent=0 // loop_footer
    %s17 = sadd.s32 1, %s13
  $region7: #{inference_core_forward.1} parent=0 // loop_footer_branch
    %12 = sbr.rel target = $region3
  $region8: #{inference_core_forward.1} parent=0 // loop_exit
    _

</llo_original>
